<compile_context>
chip_gen: v5e
topology: v5e:2x2
jax: 0.10.0
libtpu: 0.0.40
codegen_flags: <defaults>
</compile_context>

<pallas_src>
import math
import functools

import jax
import jax.numpy as jnp
from jax import lax
from jax.experimental import pallas as pl
from jax.experimental.pallas import tpu as pltpu

EMBED = 64            # small embed_size (module default is 512)
HEADS = 8             # small num_heads (module default is 32), head_dim = 8
GROUPS = 4
EXPANSION = 4
HEAD_DIM = EMBED // HEADS            # 8
GD = GROUPS * HEAD_DIM               # 32
FF = EMBED * EXPANSION               # 256
MLP_H = 128                          # TimeModel/ConstModel hidden, head hidden
QKV_W = EMBED + 2 * GD               # 128 (lane-dense fused QKV width)
N_ENC_LAYERS = 1
N_DEC_LAYERS = 1
N_BLOCKS = N_ENC_LAYERS + N_DEC_LAYERS
EPS_FANCY = 0.005
S_ENC = 48
S_DEC = 48

# ---- packed-parameter slab layouts (row offsets) ----
# vec64: (VEC64_ROWS, EMBED)
R_HRV_W, R_HRV_B, R_POW_W, R_POW_B = 0, 1, 2, 3
R_TIME_EMB, R_CST_POS, R_TIME_B2, R_CST_B2 = 4, 5, 6, 7
R_ENC_POS = 8                        # 12 rows
R_DEC_POS = 24                       # 48 rows (rows 20..23 are zero padding)
R_BLK = 72                           # 8 rows / block: ln1_g, ln1_b, ln2_g, ln2_b, bo, b2
VEC64_ROWS = R_BLK + 8 * N_BLOCKS    # 88

# vec128: (8, 128)
V128_TIME_B1, V128_CST_B1, V128_HEAD1_B, V128_HEAD2_W = 0, 1, 2, 3
V128_BQKV = 4                        # one row per block
VEC128_ROWS = 8


# ----------------------------- in-kernel helpers -----------------------------

def _layer_norm(x, g, b, eps=1e-5):
    mu = jnp.mean(x, axis=-1, keepdims=True)
    var = jnp.mean(jnp.square(x - mu), axis=-1, keepdims=True)
    return (x - mu) * lax.rsqrt(var + eps) * g + b


def _silu(x):
    return x * jax.nn.sigmoid(x)


def _dot(a, b):
    return jnp.dot(a, b, preferred_element_type=jnp.float32)


# ----------------------- the single fused forward kernel -----------------------

def _fused_forward_kernel(scal_ref, powt_ref, time_ref, cst_ref,
                          vec64_ref, vec128_ref, bff1_ref,
                          w_in8_ref, w_hid_ref,
                          w_qkv_ref, w_o_ref, w_ff1_ref, w_ff2_ref,
                          head1_ref, smt_ref,
                          o_ref,
                          *, heads, groups, enc_gamma, dec_gamma, fancy_eps):
    E = vec64_ref.shape[1]
    D = E // heads
    gd = groups * D
    rep = heads // groups
    scale = 1.0 / math.sqrt(D)

    def v64(r, n=1):
        return vec64_ref[r:r + n, :]

    def v128(r):
        return vec128_ref[r:r + 1, :]

    # ---------------- input embeddings ----------------
    scal = scal_ref[0]                         # (12, 2): [pooled hrv | power]
    pooled = scal[:, 0:1]                      # (12, 1)
    pw = scal[:, 1:2]                          # (12, 1)

    enc_pos = v64(R_ENC_POS, 12)               # (12, E)
    dec_pos = v64(R_DEC_POS, 48)               # (48, E)

    # TODO(synk): ConvNet was not provided; stand-in = spatial mean pool + Linear(1->E)
    # (pooling itself is done in the wrapper; here it is the K=1 linear as a broadcast).
    hrv_tok = pooled * v64(R_HRV_W) + v64(R_HRV_B) + enc_pos        # (12, E)
    pow_tok = pw * v64(R_POW_W) + v64(R_POW_B) + enc_pos            # (12, E)

    # time_model: 2-layer SiLU MLP over all 60 steps (12 enc + 48 dec)
    t_h = _silu(_dot(time_ref[0], w_in8_ref[0:8, :]) + v128(V128_TIME_B1))   # (60, 128)
    t_e = _silu(_dot(t_h, w_hid_ref[0:MLP_H, :]) + v64(R_TIME_B2))           # (60, E)
    enc_time = t_e[:12] + v64(R_TIME_EMB) + enc_pos                 # (12, E)
    dec_x = t_e[12:] + dec_pos                                      # (48, E)

    # cst_model: input was zero-padded 6 -> 8 features (padded weight rows are zero)
    c_h = _silu(_dot(cst_ref[0], w_in8_ref[8:16, :]) + v128(V128_CST_B1))    # (12, 128)
    c_e = _silu(_dot(c_h, w_hid_ref[MLP_H:2 * MLP_H, :]) + v64(R_CST_B2))    # (12, E)
    cst_tok = c_e + v64(R_CST_POS)                                  # (12, E)

    enc_x = jnp.concatenate([hrv_tok, pow_tok, enc_time, cst_tok], axis=0)   # (48, E)

    # ---------------- fused pre-LN GQA block ----------------
    # TODO(synk): SelfGQA_Block / CrossGQA_Block definitions were not provided; this is
    # a standard pre-LN GQA block with gamma-scaled residuals (dropout = identity, eval).
    def gqa_block(x, src, blk, gamma, cross):
        base = R_BLK + 8 * blk
        ln1_g, ln1_b = v64(base + 0), v64(base + 1)
        ln2_g, ln2_b = v64(base + 2), v64(base + 3)
        bo, b2 = v64(base + 4), v64(base + 5)
        bqkv = v128(V128_BQKV + blk)                   # (1, E + 2*gd)
        wqkv = w_qkv_ref[blk]                          # (E, E + 2*gd)  lane-dense fused QKV
        wo = w_o_ref[blk]                              # (E, E)
        w1 = w_ff1_ref[blk]                            # (E, FF)
        b1 = bff1_ref[blk:blk + 1, :]                  # (1, FF)
        w2 = w_ff2_ref[blk]                            # (FF, E)

        h = _layer_norm(x, ln1_g, ln1_b)
        if cross:
            q = _dot(h, wqkv[:, :E]) + bqkv[:, :E]                  # (Sq, E)
            kv = _dot(src, wqkv[:, E:]) + bqkv[:, E:]               # (Sk, 2*gd)
            k = kv[:, :gd]
            v = kv[:, gd:]
        else:
            qkv = _dot(h, wqkv) + bqkv                              # one (Sq, 128) matmul
            q = qkv[:, :E]
            k = qkv[:, E:E + gd]
            v = qkv[:, E + gd:]

        # GQA: K/V sliced once per group; per-head outputs accumulated through WO
        # (aligned 8-row sublane slices) -- no jnp.repeat, no lane concatenation.
        acc = jnp.zeros((x.shape[0], E), jnp.float32)
        for g in range(groups):
            k_g = k[:, g * D:(g + 1) * D]              # (Sk, D)
            v_g = v[:, g * D:(g + 1) * D]              # (Sk, D)
            for r in range(rep):
                hd = g * rep + r
                q_h = q[:, hd * D:(hd + 1) * D]        # (Sq, D)
                s = _dot(q_h, k_g.T) * scale           # (Sq, Sk)
                s = s - jnp.max(s, axis=-1, keepdims=True)
                e = jnp.exp(s)
                p = e * pl.reciprocal(jnp.sum(e, axis=-1, keepdims=True), approx=True)
                o_h = _dot(p, v_g)                     # (Sq, D)
                acc = acc + _dot(o_h, wo[hd * D:(hd + 1) * D, :])
        x = x + gamma * (acc + bo)

        h2 = _layer_norm(x, ln2_g, ln2_b)
        f = _silu(_dot(h2, w1) + b1)
        f = _dot(f, w2) + b2
        return x + gamma * f

    enc_out = enc_x
    for i in range(N_ENC_LAYERS):
        enc_out = gqa_block(enc_out, None, i, enc_gamma, cross=False)

    dec_out = dec_x
    for i in range(N_DEC_LAYERS):
        dec_out = gqa_block(dec_out, enc_out, N_ENC_LAYERS + i, dec_gamma, cross=True)

    # ---------------- output head (linear1 + SiLU + linear2) + FancyActivation ----------------
    hh = _silu(_dot(dec_out, head1_ref[...]) + v128(V128_HEAD1_B))           # (48, 128)
    logit = jnp.sum(hh * v128(V128_HEAD2_W), axis=-1, keepdims=True)         # (48, 1), no bias

    xm = jnp.sum(smt_ref[...] * powt_ref[0], axis=-1, keepdims=True)         # (48, 1)
    xm = jnp.clip(xm, fancy_eps, 1.0 - fancy_eps)
    n = -xm / (xm - 1.0)
    o_ref[0] = n / (n + jnp.exp(-logit))                                      # (48, 1)


# ----------------------------- forward wrapper -----------------------------

def transformer_forward(pp, hrv, power, time_ftrs, cst_ftrs):
    B = hrv.shape[0]
    enc_gamma = (math.log(N_DEC_LAYERS * 3.0) * math.log(N_ENC_LAYERS * 2.0) / 3.0) ** 0.5
    dec_gamma = math.log(N_DEC_LAYERS * 3.0) ** 0.5

    # --- tiny layout prep (plain XLA ops) ---
    # TODO(synk): ConvNet not provided; stand-in pooling over spatial dims done here.
    pooled = jnp.mean(hrv, axis=(2, 3))                                    # (B, 12)
    scal = jnp.stack([pooled, power[..., 0]], axis=-1)                     # (B, 12, 2)
    powt = jnp.swapaxes(power, 1, 2)                                       # (B, 1, 12)
    cst_pad = jnp.concatenate(
        [cst_ftrs, jnp.zeros(cst_ftrs.shape[:-1] + (2,), cst_ftrs.dtype)], axis=-1)  # (B,12,8)
    smt = jax.nn.softmax(pp["fancy_skip"], axis=0).T                       # (48, 12)

    kern = functools.partial(_fused_forward_kernel,
                             heads=HEADS, groups=GROUPS,
                             enc_gamma=enc_gamma, dec_gamma=dec_gamma,
                             fancy_eps=EPS_FANCY)

    def batch_spec(a):
        nd = a.ndim
        return pl.BlockSpec((1,) + a.shape[1:], lambda b: (b,) + (0,) * (nd - 1))

    def const_spec(a):
        nd = a.ndim
        return pl.BlockSpec(a.shape, lambda b: (0,) * nd)

    out = pl.pallas_call(
        kern,
        out_shape=jax.ShapeDtypeStruct((B, S_DEC, 1), jnp.float32),
        grid=(B,),
        in_specs=[
            batch_spec(scal),
            batch_spec(powt),
            batch_spec(time_ftrs),
            batch_spec(cst_pad),
            const_spec(pp["vec64"]),
            const_spec(pp["vec128"]),
            const_spec(pp["b_ff1"]),
            const_spec(pp["w_in8"]),
            const_spec(pp["w_hid"]),
            const_spec(pp["w_qkv"]),
            const_spec(pp["w_o"]),
            const_spec(pp["w_ff1"]),
            const_spec(pp["w_ff2"]),
            const_spec(pp["head1_w"]),
            const_spec(smt),
        ],
        out_specs=pl.BlockSpec((1, S_DEC, 1), lambda b: (b, 0, 0)),
        compiler_params=pltpu.CompilerParams(dimension_semantics=("parallel",)),
    )(scal, powt, time_ftrs, cst_pad,
      pp["vec64"], pp["vec128"], pp["b_ff1"],
      pp["w_in8"], pp["w_hid"], pp["w_qkv"], pp["w_o"], pp["w_ff1"], pp["w_ff2"],
      pp["head1_w"], smt)

    # TODO(synk): original broadcasts a (B,48,1) against (B,48); trailing singleton
    # squeezed here per the FancyActivation docstring intent -> (B, 48).
    return out[..., 0]


# ----------------------------- parameters -----------------------------

def init_params(key, embed=EMBED, heads=HEADS, groups=GROUPS, expansion=EXPANSION):
    D = embed // heads
    gd = groups * D
    keys = iter(jax.random.split(key, 64))
    nk = lambda: next(keys)

    def dense(fan_in, fan_out):
        w = jax.random.normal(nk(), (fan_in, fan_out), jnp.float32) * 0.02
        b = jnp.zeros((1, fan_out), jnp.float32)
        return w, b

    p = {}
    # TODO(synk): ConvNet definition was not provided; stand-in = per-frame global
    # mean-pool + Linear(1 -> embed), matching the (B, E, 12, 1, 1)-equivalent output.
    p["hrv_w"], p["hrv_b"] = dense(1, embed)
    p["power_w"], p["power_b"] = dense(1, embed)                 # PowerModel.linear
    p["time_w1"], p["time_b1"] = dense(8, MLP_H)                 # TimeModel.linear1
    p["time_w2"], p["time_b2"] = dense(MLP_H, embed)             # TimeModel.linear2
    p["cst_w1"], p["cst_b1"] = dense(6, MLP_H)                   # ConstModel.linear1
    p["cst_w2"], p["cst_b2"] = dense(MLP_H, embed)               # ConstModel.linear2
    p["cst_pos"] = jax.random.normal(nk(), (1, 1, embed), jnp.float32) * 0.02
    p["time_enc_emb"] = jax.random.normal(nk(), (1, 1, embed), jnp.float32) * 0.02
    p["enc_pos"] = jax.random.normal(nk(), (1, 12, embed), jnp.float32) * 0.02
    p["dec_pos"] = jax.random.normal(nk(), (1, 48, embed), jnp.float32) * 0.02
    p["head1_w"], p["head1_b"] = dense(embed, MLP_H)             # Transformer.linear1
    p["head2_wt"] = jax.random.normal(nk(), (1, MLP_H), jnp.float32) * 0.02  # linear2 (no bias)
    p["fancy_skip"] = jnp.zeros((12, 48), jnp.float32)           # FancyActivation.skip_parameter

    def block():
        lp = {}
        lp["ln1_g"] = jnp.ones((1, embed), jnp.float32)
        lp["ln1_b"] = jnp.zeros((1, embed), jnp.float32)
        lp["ln2_g"] = jnp.ones((1, embed), jnp.float32)
        lp["ln2_b"] = jnp.zeros((1, embed), jnp.float32)
        lp["wq"], lp["bq"] = dense(embed, embed)
        lp["wk"], lp["bk"] = dense(embed, gd)
        lp["wv"], lp["bv"] = dense(embed, gd)
        lp["wo"], lp["bo"] = dense(embed, embed)
        lp["w1"], lp["b1"] = dense(embed, embed * expansion)
        lp["w2"], lp["b2"] = dense(embed * expansion, embed)
        return lp

    p["enc_layers"] = [block() for _ in range(N_ENC_LAYERS)]
    p["dec_layers"] = [block() for _ in range(N_DEC_LAYERS)]
    return p


def pack_params(p):
    """Pack the many tiny parameters into a few slabs (done once, outside jit)."""
    E = EMBED
    blocks = p["enc_layers"] + p["dec_layers"]

    vec64 = jnp.zeros((VEC64_ROWS, E), jnp.float32)
    rows = [
        (R_HRV_W, p["hrv_w"]), (R_HRV_B, p["hrv_b"]),
        (R_POW_W, p["power_w"]), (R_POW_B, p["power_b"]),
        (R_TIME_EMB, p["time_enc_emb"].reshape(1, E)),
        (R_CST_POS, p["cst_pos"].reshape(1, E)),
        (R_TIME_B2, p["time_b2"]), (R_CST_B2, p["cst_b2"]),
        (R_ENC_POS, p["enc_pos"].reshape(12, E)),
        (R_DEC_POS, p["dec_pos"].reshape(48, E)),
    ]
    for i, lp in enumerate(blocks):
        base = R_BLK + 8 * i
        rows += [(base + 0, lp["ln1_g"]), (base + 1, lp["ln1_b"]),
                 (base + 2, lp["ln2_g"]), (base + 3, lp["ln2_b"]),
                 (base + 4, lp["bo"]), (base + 5, lp["b2"])]
    for r, v in rows:
        vec64 = vec64.at[r:r + v.shape[0]].set(v)

    vec128 = jnp.zeros((VEC128_ROWS, 128), jnp.float32)
    vec128 = vec128.at[V128_TIME_B1].set(p["time_b1"][0])
    vec128 = vec128.at[V128_CST_B1].set(p["cst_b1"][0])
    vec128 = vec128.at[V128_HEAD1_B].set(p["head1_b"][0])
    vec128 = vec128.at[V128_HEAD2_W].set(p["head2_wt"][0])
    for i, lp in enumerate(blocks):
        bqkv = jnp.concatenate([lp["bq"], lp["bk"], lp["bv"]], axis=1)[0]   # (128,)
        vec128 = vec128.at[V128_BQKV + i].set(bqkv)

    w_in8 = jnp.zeros((16, MLP_H), jnp.float32)
    w_in8 = w_in8.at[0:8].set(p["time_w1"])
    w_in8 = w_in8.at[8:14].set(p["cst_w1"])                                 # cst padded 6->8

    w_hid = jnp.concatenate([p["time_w2"], p["cst_w2"]], axis=0)            # (256, E)

    w_qkv = jnp.stack([jnp.concatenate([lp["wq"], lp["wk"], lp["wv"]], axis=1)
                       for lp in blocks])                                   # (nblk, E, 128)
    w_o = jnp.stack([lp["wo"] for lp in blocks])                            # (nblk, E, E)
    w_ff1 = jnp.stack([lp["w1"] for lp in blocks])                          # (nblk, E, FF)
    w_ff2 = jnp.stack([lp["w2"] for lp in blocks])                          # (nblk, FF, E)
    b_ff1 = jnp.concatenate([lp["b1"] for lp in blocks], axis=0)            # (nblk, FF)

    return dict(vec64=vec64, vec128=vec128, b_ff1=b_ff1,
                w_in8=w_in8, w_hid=w_hid,
                w_qkv=w_qkv, w_o=w_o, w_ff1=w_ff1, w_ff2=w_ff2,
                head1_w=p["head1_w"], fancy_skip=p["fancy_skip"])


# ----------------------------- driver -----------------------------

if __name__ == "__main__":
    key = jax.random.PRNGKey(0)
    pk, k1, k2, k3, k4 = jax.random.split(key, 5)
    params = init_params(pk)
    packed = pack_params(params)

    B = 2
    hrv = jax.random.normal(k1, (B, 12, 16, 16), jnp.float32)        # NCHW, 12 frames
    power = jax.random.uniform(k2, (B, 12, 1), jnp.float32)          # PV in (0, 1)
    time_ftrs = jax.random.normal(k3, (B, 60, 8), jnp.float32)       # 12 enc + 48 dec steps
    cst_ftrs = jax.random.normal(k4, (B, 12, 6), jnp.float32)

    fwd = jax.jit(transformer_forward)
    out = jax.block_until_ready(fwd(packed, hrv, power, time_ftrs, cst_ftrs))
    assert out.shape == (B, 48), out.shape
    assert bool(jnp.all(jnp.isfinite(out)))
    assert bool(jnp.all((out > 0.0) & (out < 1.0)))   # FancyActivation range property
    print("KERNEL_OK")
</pallas_src>

<mosaic_0001>
module attributes {stable_mosaic.version = 11 : i64} {
  func.func @_fused_forward_kernel(%arg0: i32, %arg1: memref<1x12x2xf32, #tpu.memory_space<vmem>>, %arg2: memref<1x1x12xf32, #tpu.memory_space<vmem>>, %arg3: memref<1x60x8xf32, #tpu.memory_space<vmem>>, %arg4: memref<1x12x8xf32, #tpu.memory_space<vmem>>, %arg5: memref<88x64xf32, #tpu.memory_space<vmem>>, %arg6: memref<8x128xf32, #tpu.memory_space<vmem>>, %arg7: memref<2x256xf32, #tpu.memory_space<vmem>>, %arg8: memref<16x128xf32, #tpu.memory_space<vmem>>, %arg9: memref<256x64xf32, #tpu.memory_space<vmem>>, %arg10: memref<2x64x128xf32, #tpu.memory_space<vmem>>, %arg11: memref<2x64x64xf32, #tpu.memory_space<vmem>>, %arg12: memref<2x64x256xf32, #tpu.memory_space<vmem>>, %arg13: memref<2x256x64xf32, #tpu.memory_space<vmem>>, %arg14: memref<64x128xf32, #tpu.memory_space<vmem>>, %arg15: memref<48x12xf32, #tpu.memory_space<vmem>>, %arg16: memref<1x48x1xf32, #tpu.memory_space<vmem>>) attributes {dimension_semantics = [#tpu.dimension_semantics<parallel>], iteration_bounds = array<i64: 2>, scalar_prefetch = 0 : i64, scratch_operands = 0 : i64, tpu.core_type = #tpu.core_type<tc>, window_params = [{transform_indices = @transform_0, window_bounds = array<i64: 1, 12, 2>}, {transform_indices = @transform_1, window_bounds = array<i64: 1, 1, 12>}, {transform_indices = @transform_2, window_bounds = array<i64: 1, 60, 8>}, {transform_indices = @transform_3, window_bounds = array<i64: 1, 12, 8>}, {pipeline_mode = #tpu.pipeline_mode<synchronous>, transform_indices = @transform_4, window_bounds = array<i64: 88, 64>}, {pipeline_mode = #tpu.pipeline_mode<synchronous>, transform_indices = @transform_5, window_bounds = array<i64: 8, 128>}, {pipeline_mode = #tpu.pipeline_mode<synchronous>, transform_indices = @transform_6, window_bounds = array<i64: 2, 256>}, {pipeline_mode = #tpu.pipeline_mode<synchronous>, transform_indices = @transform_7, window_bounds = array<i64: 16, 128>}, {pipeline_mode = #tpu.pipeline_mode<synchronous>, transform_indices = @transform_8, window_bounds = array<i64: 256, 64>}, {pipeline_mode = #tpu.pipeline_mode<synchronous>, transform_indices = @transform_9, window_bounds = array<i64: 2, 64, 128>}, {pipeline_mode = #tpu.pipeline_mode<synchronous>, transform_indices = @transform_10, window_bounds = array<i64: 2, 64, 64>}, {pipeline_mode = #tpu.pipeline_mode<synchronous>, transform_indices = @transform_11, window_bounds = array<i64: 2, 64, 256>}, {pipeline_mode = #tpu.pipeline_mode<synchronous>, transform_indices = @transform_12, window_bounds = array<i64: 2, 256, 64>}, {pipeline_mode = #tpu.pipeline_mode<synchronous>, transform_indices = @transform_13, window_bounds = array<i64: 64, 128>}, {pipeline_mode = #tpu.pipeline_mode<synchronous>, transform_indices = @transform_14, window_bounds = array<i64: 48, 12>}, {transform_indices = @transform_15, window_bounds = array<i64: 1, 48, 1>}]} {
    %c0 = arith.constant 0 : index
    %c0_0 = arith.constant 0 : index
    %c0_1 = arith.constant 0 : index
    %0 = vector.load %arg1[%c0, %c0_0, %c0_1] : memref<1x12x2xf32, #tpu.memory_space<vmem>>, vector<1x12x2xf32>
    %1 = vector.shape_cast %0 : vector<1x12x2xf32> to vector<12x2xf32>
    %2 = vector.extract_strided_slice %1 {offsets = [0, 0], sizes = [12, 1], strides = [1, 1]} : vector<12x2xf32> to vector<12x1xf32>
    %3 = vector.extract_strided_slice %1 {offsets = [0, 1], sizes = [12, 1], strides = [1, 1]} : vector<12x2xf32> to vector<12x1xf32>
    %c8 = arith.constant 8 : index
    %c0_2 = arith.constant 0 : index
    %4 = vector.load %arg5[%c8, %c0_2] : memref<88x64xf32, #tpu.memory_space<vmem>>, vector<12x64xf32>
    %c24 = arith.constant 24 : index
    %c0_3 = arith.constant 0 : index
    %5 = vector.load %arg5[%c24, %c0_3] : memref<88x64xf32, #tpu.memory_space<vmem>>, vector<48x64xf32>
    %c0_4 = arith.constant 0 : index
    %c0_5 = arith.constant 0 : index
    %6 = vector.load %arg5[%c0_4, %c0_5] : memref<88x64xf32, #tpu.memory_space<vmem>>, vector<1x64xf32>
    %7 = vector.broadcast %2 : vector<12x1xf32> to vector<12x64xf32>
    %8 = vector.broadcast %6 : vector<1x64xf32> to vector<12x64xf32>
    %9 = arith.mulf %7, %8 : vector<12x64xf32>
    %c1 = arith.constant 1 : index
    %c0_6 = arith.constant 0 : index
    %10 = vector.load %arg5[%c1, %c0_6] : memref<88x64xf32, #tpu.memory_space<vmem>>, vector<1x64xf32>
    %11 = vector.broadcast %10 : vector<1x64xf32> to vector<12x64xf32>
    %12 = arith.addf %9, %11 : vector<12x64xf32>
    %13 = arith.addf %12, %4 : vector<12x64xf32>
    %c2 = arith.constant 2 : index
    %c0_7 = arith.constant 0 : index
    %14 = vector.load %arg5[%c2, %c0_7] : memref<88x64xf32, #tpu.memory_space<vmem>>, vector<1x64xf32>
    %15 = vector.broadcast %3 : vector<12x1xf32> to vector<12x64xf32>
    %16 = vector.broadcast %14 : vector<1x64xf32> to vector<12x64xf32>
    %17 = arith.mulf %15, %16 : vector<12x64xf32>
    %c3 = arith.constant 3 : index
    %c0_8 = arith.constant 0 : index
    %18 = vector.load %arg5[%c3, %c0_8] : memref<88x64xf32, #tpu.memory_space<vmem>>, vector<1x64xf32>
    %19 = vector.broadcast %18 : vector<1x64xf32> to vector<12x64xf32>
    %20 = arith.addf %17, %19 : vector<12x64xf32>
    %21 = arith.addf %20, %4 : vector<12x64xf32>
    %c0_9 = arith.constant 0 : index
    %c0_10 = arith.constant 0 : index
    %c0_11 = arith.constant 0 : index
    %22 = vector.load %arg3[%c0_9, %c0_10, %c0_11] : memref<1x60x8xf32, #tpu.memory_space<vmem>>, vector<1x60x8xf32>
    %23 = vector.shape_cast %22 : vector<1x60x8xf32> to vector<60x8xf32>
    %c0_12 = arith.constant 0 : index
    %c0_13 = arith.constant 0 : index
    %24 = vector.load %arg8[%c0_12, %c0_13] : memref<16x128xf32, #tpu.memory_space<vmem>>, vector<8x128xf32>
    %cst = arith.constant dense<0.000000e+00> : vector<60x128xf32>
    %25 = tpu.matmul %23, %24, %cst {dimension_numbers = #tpu.dot_dimension_numbers<[1], [0], [0], [1], [0, 0, 1, 1], [], []>} : vector<60x8xf32>, vector<8x128xf32>, vector<60x128xf32> -> vector<60x128xf32>
    %c0_14 = arith.constant 0 : index
    %c0_15 = arith.constant 0 : index
    %26 = vector.load %arg6[%c0_14, %c0_15] : memref<8x128xf32, #tpu.memory_space<vmem>>, vector<1x128xf32>
    %27 = vector.broadcast %26 : vector<1x128xf32> to vector<60x128xf32>
    %28 = arith.addf %25, %27 : vector<60x128xf32>
    %29 = arith.negf %28 : vector<60x128xf32>
    %30 = math.exp %29 : vector<60x128xf32>
    %cst_16 = arith.constant 1.000000e+00 : f32
    %31 = vector.broadcast %cst_16 : f32 to vector<60x128xf32>
    %32 = arith.addf %31, %30 : vector<60x128xf32>
    %33 = arith.divf %31, %32 : vector<60x128xf32>
    %34 = arith.mulf %28, %33 : vector<60x128xf32>
    %c0_17 = arith.constant 0 : index
    %c0_18 = arith.constant 0 : index
    %35 = vector.load %arg9[%c0_17, %c0_18] : memref<256x64xf32, #tpu.memory_space<vmem>>, vector<128x64xf32>
    %cst_19 = arith.constant dense<0.000000e+00> : vector<60x64xf32>
    %36 = tpu.matmul %34, %35, %cst_19 {dimension_numbers = #tpu.dot_dimension_numbers<[1], [0], [0], [1], [0, 0, 1, 1], [], []>} : vector<60x128xf32>, vector<128x64xf32>, vector<60x64xf32> -> vector<60x64xf32>
    %c6 = arith.constant 6 : index
    %c0_20 = arith.constant 0 : index
    %37 = vector.load %arg5[%c6, %c0_20] : memref<88x64xf32, #tpu.memory_space<vmem>>, vector<1x64xf32>
    %38 = vector.broadcast %37 : vector<1x64xf32> to vector<60x64xf32>
    %39 = arith.addf %36, %38 : vector<60x64xf32>
    %40 = arith.negf %39 : vector<60x64xf32>
    %41 = math.exp %40 : vector<60x64xf32>
    %cst_21 = arith.constant 1.000000e+00 : f32
    %42 = vector.broadcast %cst_21 : f32 to vector<60x64xf32>
    %43 = arith.addf %42, %41 : vector<60x64xf32>
    %44 = arith.divf %42, %43 : vector<60x64xf32>
    %45 = arith.mulf %39, %44 : vector<60x64xf32>
    %46 = vector.extract_strided_slice %45 {offsets = [0, 0], sizes = [12, 64], strides = [1, 1]} : vector<60x64xf32> to vector<12x64xf32>
    %c4 = arith.constant 4 : index
    %c0_22 = arith.constant 0 : index
    %47 = vector.load %arg5[%c4, %c0_22] : memref<88x64xf32, #tpu.memory_space<vmem>>, vector<1x64xf32>
    %48 = vector.broadcast %47 : vector<1x64xf32> to vector<12x64xf32>
    %49 = arith.addf %46, %48 : vector<12x64xf32>
    %50 = arith.addf %49, %4 : vector<12x64xf32>
    %51 = vector.extract_strided_slice %45 {offsets = [12, 0], sizes = [48, 64], strides = [1, 1]} : vector<60x64xf32> to vector<48x64xf32>
    %52 = arith.addf %51, %5 : vector<48x64xf32>
    %c0_23 = arith.constant 0 : index
    %c0_24 = arith.constant 0 : index
    %c0_25 = arith.constant 0 : index
    %53 = vector.load %arg4[%c0_23, %c0_24, %c0_25] : memref<1x12x8xf32, #tpu.memory_space<vmem>>, vector<1x12x8xf32>
    %54 = vector.shape_cast %53 : vector<1x12x8xf32> to vector<12x8xf32>
    %c8_26 = arith.constant 8 : index
    %c0_27 = arith.constant 0 : index
    %55 = vector.load %arg8[%c8_26, %c0_27] : memref<16x128xf32, #tpu.memory_space<vmem>>, vector<8x128xf32>
    %cst_28 = arith.constant dense<0.000000e+00> : vector<12x128xf32>
    %56 = tpu.matmul %54, %55, %cst_28 {dimension_numbers = #tpu.dot_dimension_numbers<[1], [0], [0], [1], [0, 0, 1, 1], [], []>} : vector<12x8xf32>, vector<8x128xf32>, vector<12x128xf32> -> vector<12x128xf32>
    %c1_29 = arith.constant 1 : index
    %c0_30 = arith.constant 0 : index
    %57 = vector.load %arg6[%c1_29, %c0_30] : memref<8x128xf32, #tpu.memory_space<vmem>>, vector<1x128xf32>
    %58 = vector.broadcast %57 : vector<1x128xf32> to vector<12x128xf32>
    %59 = arith.addf %56, %58 : vector<12x128xf32>
    %60 = arith.negf %59 : vector<12x128xf32>
    %61 = math.exp %60 : vector<12x128xf32>
    %cst_31 = arith.constant 1.000000e+00 : f32
    %62 = vector.broadcast %cst_31 : f32 to vector<12x128xf32>
    %63 = arith.addf %62, %61 : vector<12x128xf32>
    %64 = arith.divf %62, %63 : vector<12x128xf32>
    %65 = arith.mulf %59, %64 : vector<12x128xf32>
    %c128 = arith.constant 128 : index
    %c0_32 = arith.constant 0 : index
    %66 = vector.load %arg9[%c128, %c0_32] : memref<256x64xf32, #tpu.memory_space<vmem>>, vector<128x64xf32>
    %cst_33 = arith.constant dense<0.000000e+00> : vector<12x64xf32>
    %67 = tpu.matmul %65, %66, %cst_33 {dimension_numbers = #tpu.dot_dimension_numbers<[1], [0], [0], [1], [0, 0, 1, 1], [], []>} : vector<12x128xf32>, vector<128x64xf32>, vector<12x64xf32> -> vector<12x64xf32>
    %c7 = arith.constant 7 : index
    %c0_34 = arith.constant 0 : index
    %68 = vector.load %arg5[%c7, %c0_34] : memref<88x64xf32, #tpu.memory_space<vmem>>, vector<1x64xf32>
    %69 = vector.broadcast %68 : vector<1x64xf32> to vector<12x64xf32>
    %70 = arith.addf %67, %69 : vector<12x64xf32>
    %71 = arith.negf %70 : vector<12x64xf32>
    %72 = math.exp %71 : vector<12x64xf32>
    %cst_35 = arith.constant 1.000000e+00 : f32
    %73 = vector.broadcast %cst_35 : f32 to vector<12x64xf32>
    %74 = arith.addf %73, %72 : vector<12x64xf32>
    %75 = arith.divf %73, %74 : vector<12x64xf32>
    %76 = arith.mulf %70, %75 : vector<12x64xf32>
    %c5 = arith.constant 5 : index
    %c0_36 = arith.constant 0 : index
    %77 = vector.load %arg5[%c5, %c0_36] : memref<88x64xf32, #tpu.memory_space<vmem>>, vector<1x64xf32>
    %78 = vector.broadcast %77 : vector<1x64xf32> to vector<12x64xf32>
    %79 = arith.addf %76, %78 : vector<12x64xf32>
    %80 = tpu.concatenate %13, %21, %50, %79 in 0 : vector<12x64xf32>, vector<12x64xf32>, vector<12x64xf32>, vector<12x64xf32> -> vector<48x64xf32>
    %c72 = arith.constant 72 : index
    %c0_37 = arith.constant 0 : index
    %81 = vector.load %arg5[%c72, %c0_37] : memref<88x64xf32, #tpu.memory_space<vmem>>, vector<1x64xf32>
    %c73 = arith.constant 73 : index
    %c0_38 = arith.constant 0 : index
    %82 = vector.load %arg5[%c73, %c0_38] : memref<88x64xf32, #tpu.memory_space<vmem>>, vector<1x64xf32>
    %c74 = arith.constant 74 : index
    %c0_39 = arith.constant 0 : index
    %83 = vector.load %arg5[%c74, %c0_39] : memref<88x64xf32, #tpu.memory_space<vmem>>, vector<1x64xf32>
    %c75 = arith.constant 75 : index
    %c0_40 = arith.constant 0 : index
    %84 = vector.load %arg5[%c75, %c0_40] : memref<88x64xf32, #tpu.memory_space<vmem>>, vector<1x64xf32>
    %c76 = arith.constant 76 : index
    %c0_41 = arith.constant 0 : index
    %85 = vector.load %arg5[%c76, %c0_41] : memref<88x64xf32, #tpu.memory_space<vmem>>, vector<1x64xf32>
    %c77 = arith.constant 77 : index
    %c0_42 = arith.constant 0 : index
    %86 = vector.load %arg5[%c77, %c0_42] : memref<88x64xf32, #tpu.memory_space<vmem>>, vector<1x64xf32>
    %c4_43 = arith.constant 4 : index
    %c0_44 = arith.constant 0 : index
    %87 = vector.load %arg6[%c4_43, %c0_44] : memref<8x128xf32, #tpu.memory_space<vmem>>, vector<1x128xf32>
    %c0_45 = arith.constant 0 : index
    %c0_46 = arith.constant 0 : index
    %c0_47 = arith.constant 0 : index
    %88 = vector.load %arg10[%c0_45, %c0_46, %c0_47] : memref<2x64x128xf32, #tpu.memory_space<vmem>>, vector<1x64x128xf32>
    %89 = vector.shape_cast %88 : vector<1x64x128xf32> to vector<64x128xf32>
    %c0_48 = arith.constant 0 : index
    %c0_49 = arith.constant 0 : index
    %c0_50 = arith.constant 0 : index
    %90 = vector.load %arg11[%c0_48, %c0_49, %c0_50] : memref<2x64x64xf32, #tpu.memory_space<vmem>>, vector<1x64x64xf32>
    %91 = vector.shape_cast %90 : vector<1x64x64xf32> to vector<64x64xf32>
    %c0_51 = arith.constant 0 : index
    %c0_52 = arith.constant 0 : index
    %c0_53 = arith.constant 0 : index
    %92 = vector.load %arg12[%c0_51, %c0_52, %c0_53] : memref<2x64x256xf32, #tpu.memory_space<vmem>>, vector<1x64x256xf32>
    %93 = vector.shape_cast %92 : vector<1x64x256xf32> to vector<64x256xf32>
    %c0_54 = arith.constant 0 : index
    %c0_55 = arith.constant 0 : index
    %94 = vector.load %arg7[%c0_54, %c0_55] : memref<2x256xf32, #tpu.memory_space<vmem>>, vector<1x256xf32>
    %c0_56 = arith.constant 0 : index
    %c0_57 = arith.constant 0 : index
    %c0_58 = arith.constant 0 : index
    %95 = vector.load %arg13[%c0_56, %c0_57, %c0_58] : memref<2x256x64xf32, #tpu.memory_space<vmem>>, vector<1x256x64xf32>
    %96 = vector.shape_cast %95 : vector<1x256x64xf32> to vector<256x64xf32>
    %cst_59 = arith.constant dense<0.000000e+00> : vector<48xf32>
    %97 = vector.multi_reduction <add>, %80, %cst_59 [1] : vector<48x64xf32> to vector<48xf32>
    %98 = vector.shape_cast %97 : vector<48xf32> to vector<48x1xf32>
    %cst_60 = arith.constant 6.400000e+01 : f32
    %99 = vector.broadcast %cst_60 : f32 to vector<48x1xf32>
    %100 = arith.divf %98, %99 : vector<48x1xf32>
    %101 = vector.broadcast %100 : vector<48x1xf32> to vector<48x64xf32>
    %102 = arith.subf %80, %101 : vector<48x64xf32>
    %103 = arith.mulf %102, %102 : vector<48x64xf32>
    %cst_61 = arith.constant dense<0.000000e+00> : vector<48xf32>
    %104 = vector.multi_reduction <add>, %103, %cst_61 [1] : vector<48x64xf32> to vector<48xf32>
    %105 = vector.shape_cast %104 : vector<48xf32> to vector<48x1xf32>
    %cst_62 = arith.constant 6.400000e+01 : f32
    %106 = vector.broadcast %cst_62 : f32 to vector<48x1xf32>
    %107 = arith.divf %105, %106 : vector<48x1xf32>
    %108 = vector.broadcast %100 : vector<48x1xf32> to vector<48x64xf32>
    %109 = arith.subf %80, %108 : vector<48x64xf32>
    %cst_63 = arith.constant 9.99999974E-6 : f32
    %110 = vector.broadcast %cst_63 : f32 to vector<48x1xf32>
    %111 = arith.addf %107, %110 : vector<48x1xf32>
    %112 = math.rsqrt %111 : vector<48x1xf32>
    %113 = vector.broadcast %112 : vector<48x1xf32> to vector<48x64xf32>
    %114 = arith.mulf %109, %113 : vector<48x64xf32>
    %115 = vector.broadcast %81 : vector<1x64xf32> to vector<48x64xf32>
    %116 = arith.mulf %114, %115 : vector<48x64xf32>
    %117 = vector.broadcast %82 : vector<1x64xf32> to vector<48x64xf32>
    %118 = arith.addf %116, %117 : vector<48x64xf32>
    %cst_64 = arith.constant dense<0.000000e+00> : vector<48x128xf32>
    %119 = tpu.matmul %118, %89, %cst_64 {dimension_numbers = #tpu.dot_dimension_numbers<[1], [0], [0], [1], [0, 0, 1, 1], [], []>} : vector<48x64xf32>, vector<64x128xf32>, vector<48x128xf32> -> vector<48x128xf32>
    %120 = vector.broadcast %87 : vector<1x128xf32> to vector<48x128xf32>
    %121 = arith.addf %119, %120 : vector<48x128xf32>
    %122 = vector.extract_strided_slice %121 {offsets = [0, 0], sizes = [48, 64], strides = [1, 1]} : vector<48x128xf32> to vector<48x64xf32>
    %123 = vector.extract_strided_slice %121 {offsets = [0, 64], sizes = [48, 32], strides = [1, 1]} : vector<48x128xf32> to vector<48x32xf32>
    %124 = vector.extract_strided_slice %121 {offsets = [0, 96], sizes = [48, 32], strides = [1, 1]} : vector<48x128xf32> to vector<48x32xf32>
    %cst_65 = arith.constant 0.000000e+00 : f32
    %125 = vector.broadcast %cst_65 : f32 to vector<48x64xf32>
    %126 = vector.extract_strided_slice %123 {offsets = [0, 0], sizes = [48, 8], strides = [1, 1]} : vector<48x32xf32> to vector<48x8xf32>
    %127 = vector.extract_strided_slice %124 {offsets = [0, 0], sizes = [48, 8], strides = [1, 1]} : vector<48x32xf32> to vector<48x8xf32>
    %128 = vector.extract_strided_slice %122 {offsets = [0, 0], sizes = [48, 8], strides = [1, 1]} : vector<48x64xf32> to vector<48x8xf32>
    %129 = tpu.transpose %126, [1, 0] : vector<48x8xf32> -> vector<8x48xf32>
    %cst_66 = arith.constant dense<0.000000e+00> : vector<48x48xf32>
    %130 = tpu.matmul %128, %129, %cst_66 {dimension_numbers = #tpu.dot_dimension_numbers<[1], [0], [0], [1], [0, 0, 1, 1], [], []>} : vector<48x8xf32>, vector<8x48xf32>, vector<48x48xf32> -> vector<48x48xf32>
    %cst_67 = arith.constant 0.353553385 : f32
    %131 = vector.broadcast %cst_67 : f32 to vector<48x48xf32>
    %132 = arith.mulf %130, %131 : vector<48x48xf32>
    %cst_68 = arith.constant dense<0xFF800000> : vector<48xf32>
    %133 = vector.multi_reduction <maximumf>, %132, %cst_68 [1] : vector<48x48xf32> to vector<48xf32>
    %134 = vector.shape_cast %133 : vector<48xf32> to vector<48x1xf32>
    %135 = vector.broadcast %134 : vector<48x1xf32> to vector<48x48xf32>
    %136 = arith.subf %132, %135 : vector<48x48xf32>
    %137 = math.exp %136 : vector<48x48xf32>
    %cst_69 = arith.constant dense<0.000000e+00> : vector<48xf32>
    %138 = vector.multi_reduction <add>, %137, %cst_69 [1] : vector<48x48xf32> to vector<48xf32>
    %139 = vector.shape_cast %138 : vector<48xf32> to vector<48x1xf32>
    %140 = tpu.reciprocal %139 {approx = true} : vector<48x1xf32> -> vector<48x1xf32>
    %141 = vector.broadcast %140 : vector<48x1xf32> to vector<48x48xf32>
    %142 = arith.mulf %137, %141 : vector<48x48xf32>
    %cst_70 = arith.constant dense<0.000000e+00> : vector<48x8xf32>
    %143 = tpu.matmul %142, %127, %cst_70 {dimension_numbers = #tpu.dot_dimension_numbers<[1], [0], [0], [1], [0, 0, 1, 1], [], []>} : vector<48x48xf32>, vector<48x8xf32>, vector<48x8xf32> -> vector<48x8xf32>
    %144 = vector.extract_strided_slice %91 {offsets = [0, 0], sizes = [8, 64], strides = [1, 1]} : vector<64x64xf32> to vector<8x64xf32>
    %cst_71 = arith.constant dense<0.000000e+00> : vector<48x64xf32>
    %145 = tpu.matmul %143, %144, %cst_71 {dimension_numbers = #tpu.dot_dimension_numbers<[1], [0], [0], [1], [0, 0, 1, 1], [], []>} : vector<48x8xf32>, vector<8x64xf32>, vector<48x64xf32> -> vector<48x64xf32>
    %146 = arith.addf %125, %145 : vector<48x64xf32>
    %147 = vector.extract_strided_slice %122 {offsets = [0, 8], sizes = [48, 8], strides = [1, 1]} : vector<48x64xf32> to vector<48x8xf32>
    %148 = tpu.transpose %126, [1, 0] : vector<48x8xf32> -> vector<8x48xf32>
    %cst_72 = arith.constant dense<0.000000e+00> : vector<48x48xf32>
    %149 = tpu.matmul %147, %148, %cst_72 {dimension_numbers = #tpu.dot_dimension_numbers<[1], [0], [0], [1], [0, 0, 1, 1], [], []>} : vector<48x8xf32>, vector<8x48xf32>, vector<48x48xf32> -> vector<48x48xf32>
    %cst_73 = arith.constant 0.353553385 : f32
    %150 = vector.broadcast %cst_73 : f32 to vector<48x48xf32>
    %151 = arith.mulf %149, %150 : vector<48x48xf32>
    %cst_74 = arith.constant dense<0xFF800000> : vector<48xf32>
    %152 = vector.multi_reduction <maximumf>, %151, %cst_74 [1] : vector<48x48xf32> to vector<48xf32>
    %153 = vector.shape_cast %152 : vector<48xf32> to vector<48x1xf32>
    %154 = vector.broadcast %153 : vector<48x1xf32> to vector<48x48xf32>
    %155 = arith.subf %151, %154 : vector<48x48xf32>
    %156 = math.exp %155 : vector<48x48xf32>
    %cst_75 = arith.constant dense<0.000000e+00> : vector<48xf32>
    %157 = vector.multi_reduction <add>, %156, %cst_75 [1] : vector<48x48xf32> to vector<48xf32>
    %158 = vector.shape_cast %157 : vector<48xf32> to vector<48x1xf32>
    %159 = tpu.reciprocal %158 {approx = true} : vector<48x1xf32> -> vector<48x1xf32>
    %160 = vector.broadcast %159 : vector<48x1xf32> to vector<48x48xf32>
    %161 = arith.mulf %156, %160 : vector<48x48xf32>
    %cst_76 = arith.constant dense<0.000000e+00> : vector<48x8xf32>
    %162 = tpu.matmul %161, %127, %cst_76 {dimension_numbers = #tpu.dot_dimension_numbers<[1], [0], [0], [1], [0, 0, 1, 1], [], []>} : vector<48x48xf32>, vector<48x8xf32>, vector<48x8xf32> -> vector<48x8xf32>
    %163 = vector.extract_strided_slice %91 {offsets = [8, 0], sizes = [8, 64], strides = [1, 1]} : vector<64x64xf32> to vector<8x64xf32>
    %cst_77 = arith.constant dense<0.000000e+00> : vector<48x64xf32>
    %164 = tpu.matmul %162, %163, %cst_77 {dimension_numbers = #tpu.dot_dimension_numbers<[1], [0], [0], [1], [0, 0, 1, 1], [], []>} : vector<48x8xf32>, vector<8x64xf32>, vector<48x64xf32> -> vector<48x64xf32>
    %165 = arith.addf %146, %164 : vector<48x64xf32>
    %166 = vector.extract_strided_slice %123 {offsets = [0, 8], sizes = [48, 8], strides = [1, 1]} : vector<48x32xf32> to vector<48x8xf32>
    %167 = vector.extract_strided_slice %124 {offsets = [0, 8], sizes = [48, 8], strides = [1, 1]} : vector<48x32xf32> to vector<48x8xf32>
    %168 = vector.extract_strided_slice %122 {offsets = [0, 16], sizes = [48, 8], strides = [1, 1]} : vector<48x64xf32> to vector<48x8xf32>
    %169 = tpu.transpose %166, [1, 0] : vector<48x8xf32> -> vector<8x48xf32>
    %cst_78 = arith.constant dense<0.000000e+00> : vector<48x48xf32>
    %170 = tpu.matmul %168, %169, %cst_78 {dimension_numbers = #tpu.dot_dimension_numbers<[1], [0], [0], [1], [0, 0, 1, 1], [], []>} : vector<48x8xf32>, vector<8x48xf32>, vector<48x48xf32> -> vector<48x48xf32>
    %cst_79 = arith.constant 0.353553385 : f32
    %171 = vector.broadcast %cst_79 : f32 to vector<48x48xf32>
    %172 = arith.mulf %170, %171 : vector<48x48xf32>
    %cst_80 = arith.constant dense<0xFF800000> : vector<48xf32>
    %173 = vector.multi_reduction <maximumf>, %172, %cst_80 [1] : vector<48x48xf32> to vector<48xf32>
    %174 = vector.shape_cast %173 : vector<48xf32> to vector<48x1xf32>
    %175 = vector.broadcast %174 : vector<48x1xf32> to vector<48x48xf32>
    %176 = arith.subf %172, %175 : vector<48x48xf32>
    %177 = math.exp %176 : vector<48x48xf32>
    %cst_81 = arith.constant dense<0.000000e+00> : vector<48xf32>
    %178 = vector.multi_reduction <add>, %177, %cst_81 [1] : vector<48x48xf32> to vector<48xf32>
    %179 = vector.shape_cast %178 : vector<48xf32> to vector<48x1xf32>
    %180 = tpu.reciprocal %179 {approx = true} : vector<48x1xf32> -> vector<48x1xf32>
    %181 = vector.broadcast %180 : vector<48x1xf32> to vector<48x48xf32>
    %182 = arith.mulf %177, %181 : vector<48x48xf32>
    %cst_82 = arith.constant dense<0.000000e+00> : vector<48x8xf32>
    %183 = tpu.matmul %182, %167, %cst_82 {dimension_numbers = #tpu.dot_dimension_numbers<[1], [0], [0], [1], [0, 0, 1, 1], [], []>} : vector<48x48xf32>, vector<48x8xf32>, vector<48x8xf32> -> vector<48x8xf32>
    %184 = vector.extract_strided_slice %91 {offsets = [16, 0], sizes = [8, 64], strides = [1, 1]} : vector<64x64xf32> to vector<8x64xf32>
    %cst_83 = arith.constant dense<0.000000e+00> : vector<48x64xf32>
    %185 = tpu.matmul %183, %184, %cst_83 {dimension_numbers = #tpu.dot_dimension_numbers<[1], [0], [0], [1], [0, 0, 1, 1], [], []>} : vector<48x8xf32>, vector<8x64xf32>, vector<48x64xf32> -> vector<48x64xf32>
    %186 = arith.addf %165, %185 : vector<48x64xf32>
    %187 = vector.extract_strided_slice %122 {offsets = [0, 24], sizes = [48, 8], strides = [1, 1]} : vector<48x64xf32> to vector<48x8xf32>
    %188 = tpu.transpose %166, [1, 0] : vector<48x8xf32> -> vector<8x48xf32>
    %cst_84 = arith.constant dense<0.000000e+00> : vector<48x48xf32>
    %189 = tpu.matmul %187, %188, %cst_84 {dimension_numbers = #tpu.dot_dimension_numbers<[1], [0], [0], [1], [0, 0, 1, 1], [], []>} : vector<48x8xf32>, vector<8x48xf32>, vector<48x48xf32> -> vector<48x48xf32>
    %cst_85 = arith.constant 0.353553385 : f32
    %190 = vector.broadcast %cst_85 : f32 to vector<48x48xf32>
    %191 = arith.mulf %189, %190 : vector<48x48xf32>
    %cst_86 = arith.constant dense<0xFF800000> : vector<48xf32>
    %192 = vector.multi_reduction <maximumf>, %191, %cst_86 [1] : vector<48x48xf32> to vector<48xf32>
    %193 = vector.shape_cast %192 : vector<48xf32> to vector<48x1xf32>
    %194 = vector.broadcast %193 : vector<48x1xf32> to vector<48x48xf32>
    %195 = arith.subf %191, %194 : vector<48x48xf32>
    %196 = math.exp %195 : vector<48x48xf32>
    %cst_87 = arith.constant dense<0.000000e+00> : vector<48xf32>
    %197 = vector.multi_reduction <add>, %196, %cst_87 [1] : vector<48x48xf32> to vector<48xf32>
    %198 = vector.shape_cast %197 : vector<48xf32> to vector<48x1xf32>
    %199 = tpu.reciprocal %198 {approx = true} : vector<48x1xf32> -> vector<48x1xf32>
    %200 = vector.broadcast %199 : vector<48x1xf32> to vector<48x48xf32>
    %201 = arith.mulf %196, %200 : vector<48x48xf32>
    %cst_88 = arith.constant dense<0.000000e+00> : vector<48x8xf32>
    %202 = tpu.matmul %201, %167, %cst_88 {dimension_numbers = #tpu.dot_dimension_numbers<[1], [0], [0], [1], [0, 0, 1, 1], [], []>} : vector<48x48xf32>, vector<48x8xf32>, vector<48x8xf32> -> vector<48x8xf32>
    %203 = vector.extract_strided_slice %91 {offsets = [24, 0], sizes = [8, 64], strides = [1, 1]} : vector<64x64xf32> to vector<8x64xf32>
    %cst_89 = arith.constant dense<0.000000e+00> : vector<48x64xf32>
    %204 = tpu.matmul %202, %203, %cst_89 {dimension_numbers = #tpu.dot_dimension_numbers<[1], [0], [0], [1], [0, 0, 1, 1], [], []>} : vector<48x8xf32>, vector<8x64xf32>, vector<48x64xf32> -> vector<48x64xf32>
    %205 = arith.addf %186, %204 : vector<48x64xf32>
    %206 = vector.extract_strided_slice %123 {offsets = [0, 16], sizes = [48, 8], strides = [1, 1]} : vector<48x32xf32> to vector<48x8xf32>
    %207 = vector.extract_strided_slice %124 {offsets = [0, 16], sizes = [48, 8], strides = [1, 1]} : vector<48x32xf32> to vector<48x8xf32>
    %208 = vector.extract_strided_slice %122 {offsets = [0, 32], sizes = [48, 8], strides = [1, 1]} : vector<48x64xf32> to vector<48x8xf32>
    %209 = tpu.transpose %206, [1, 0] : vector<48x8xf32> -> vector<8x48xf32>
    %cst_90 = arith.constant dense<0.000000e+00> : vector<48x48xf32>
    %210 = tpu.matmul %208, %209, %cst_90 {dimension_numbers = #tpu.dot_dimension_numbers<[1], [0], [0], [1], [0, 0, 1, 1], [], []>} : vector<48x8xf32>, vector<8x48xf32>, vector<48x48xf32> -> vector<48x48xf32>
    %cst_91 = arith.constant 0.353553385 : f32
    %211 = vector.broadcast %cst_91 : f32 to vector<48x48xf32>
    %212 = arith.mulf %210, %211 : vector<48x48xf32>
    %cst_92 = arith.constant dense<0xFF800000> : vector<48xf32>
    %213 = vector.multi_reduction <maximumf>, %212, %cst_92 [1] : vector<48x48xf32> to vector<48xf32>
    %214 = vector.shape_cast %213 : vector<48xf32> to vector<48x1xf32>
    %215 = vector.broadcast %214 : vector<48x1xf32> to vector<48x48xf32>
    %216 = arith.subf %212, %215 : vector<48x48xf32>
    %217 = math.exp %216 : vector<48x48xf32>
    %cst_93 = arith.constant dense<0.000000e+00> : vector<48xf32>
    %218 = vector.multi_reduction <add>, %217, %cst_93 [1] : vector<48x48xf32> to vector<48xf32>
    %219 = vector.shape_cast %218 : vector<48xf32> to vector<48x1xf32>
    %220 = tpu.reciprocal %219 {approx = true} : vector<48x1xf32> -> vector<48x1xf32>
    %221 = vector.broadcast %220 : vector<48x1xf32> to vector<48x48xf32>
    %222 = arith.mulf %217, %221 : vector<48x48xf32>
    %cst_94 = arith.constant dense<0.000000e+00> : vector<48x8xf32>
    %223 = tpu.matmul %222, %207, %cst_94 {dimension_numbers = #tpu.dot_dimension_numbers<[1], [0], [0], [1], [0, 0, 1, 1], [], []>} : vector<48x48xf32>, vector<48x8xf32>, vector<48x8xf32> -> vector<48x8xf32>
    %224 = vector.extract_strided_slice %91 {offsets = [32, 0], sizes = [8, 64], strides = [1, 1]} : vector<64x64xf32> to vector<8x64xf32>
    %cst_95 = arith.constant dense<0.000000e+00> : vector<48x64xf32>
    %225 = tpu.matmul %223, %224, %cst_95 {dimension_numbers = #tpu.dot_dimension_numbers<[1], [0], [0], [1], [0, 0, 1, 1], [], []>} : vector<48x8xf32>, vector<8x64xf32>, vector<48x64xf32> -> vector<48x64xf32>
    %226 = arith.addf %205, %225 : vector<48x64xf32>
    %227 = vector.extract_strided_slice %122 {offsets = [0, 40], sizes = [48, 8], strides = [1, 1]} : vector<48x64xf32> to vector<48x8xf32>
    %228 = tpu.transpose %206, [1, 0] : vector<48x8xf32> -> vector<8x48xf32>
    %cst_96 = arith.constant dense<0.000000e+00> : vector<48x48xf32>
    %229 = tpu.matmul %227, %228, %cst_96 {dimension_numbers = #tpu.dot_dimension_numbers<[1], [0], [0], [1], [0, 0, 1, 1], [], []>} : vector<48x8xf32>, vector<8x48xf32>, vector<48x48xf32> -> vector<48x48xf32>
    %cst_97 = arith.constant 0.353553385 : f32
    %230 = vector.broadcast %cst_97 : f32 to vector<48x48xf32>
    %231 = arith.mulf %229, %230 : vector<48x48xf32>
    %cst_98 = arith.constant dense<0xFF800000> : vector<48xf32>
    %232 = vector.multi_reduction <maximumf>, %231, %cst_98 [1] : vector<48x48xf32> to vector<48xf32>
    %233 = vector.shape_cast %232 : vector<48xf32> to vector<48x1xf32>
    %234 = vector.broadcast %233 : vector<48x1xf32> to vector<48x48xf32>
    %235 = arith.subf %231, %234 : vector<48x48xf32>
    %236 = math.exp %235 : vector<48x48xf32>
    %cst_99 = arith.constant dense<0.000000e+00> : vector<48xf32>
    %237 = vector.multi_reduction <add>, %236, %cst_99 [1] : vector<48x48xf32> to vector<48xf32>
    %238 = vector.shape_cast %237 : vector<48xf32> to vector<48x1xf32>
    %239 = tpu.reciprocal %238 {approx = true} : vector<48x1xf32> -> vector<48x1xf32>
    %240 = vector.broadcast %239 : vector<48x1xf32> to vector<48x48xf32>
    %241 = arith.mulf %236, %240 : vector<48x48xf32>
    %cst_100 = arith.constant dense<0.000000e+00> : vector<48x8xf32>
    %242 = tpu.matmul %241, %207, %cst_100 {dimension_numbers = #tpu.dot_dimension_numbers<[1], [0], [0], [1], [0, 0, 1, 1], [], []>} : vector<48x48xf32>, vector<48x8xf32>, vector<48x8xf32> -> vector<48x8xf32>
    %243 = vector.extract_strided_slice %91 {offsets = [40, 0], sizes = [8, 64], strides = [1, 1]} : vector<64x64xf32> to vector<8x64xf32>
    %cst_101 = arith.constant dense<0.000000e+00> : vector<48x64xf32>
    %244 = tpu.matmul %242, %243, %cst_101 {dimension_numbers = #tpu.dot_dimension_numbers<[1], [0], [0], [1], [0, 0, 1, 1], [], []>} : vector<48x8xf32>, vector<8x64xf32>, vector<48x64xf32> -> vector<48x64xf32>
    %245 = arith.addf %226, %244 : vector<48x64xf32>
    %246 = vector.extract_strided_slice %123 {offsets = [0, 24], sizes = [48, 8], strides = [1, 1]} : vector<48x32xf32> to vector<48x8xf32>
    %247 = vector.extract_strided_slice %124 {offsets = [0, 24], sizes = [48, 8], strides = [1, 1]} : vector<48x32xf32> to vector<48x8xf32>
    %248 = vector.extract_strided_slice %122 {offsets = [0, 48], sizes = [48, 8], strides = [1, 1]} : vector<48x64xf32> to vector<48x8xf32>
    %249 = tpu.transpose %246, [1, 0] : vector<48x8xf32> -> vector<8x48xf32>
    %cst_102 = arith.constant dense<0.000000e+00> : vector<48x48xf32>
    %250 = tpu.matmul %248, %249, %cst_102 {dimension_numbers = #tpu.dot_dimension_numbers<[1], [0], [0], [1], [0, 0, 1, 1], [], []>} : vector<48x8xf32>, vector<8x48xf32>, vector<48x48xf32> -> vector<48x48xf32>
    %cst_103 = arith.constant 0.353553385 : f32
    %251 = vector.broadcast %cst_103 : f32 to vector<48x48xf32>
    %252 = arith.mulf %250, %251 : vector<48x48xf32>
    %cst_104 = arith.constant dense<0xFF800000> : vector<48xf32>
    %253 = vector.multi_reduction <maximumf>, %252, %cst_104 [1] : vector<48x48xf32> to vector<48xf32>
    %254 = vector.shape_cast %253 : vector<48xf32> to vector<48x1xf32>
    %255 = vector.broadcast %254 : vector<48x1xf32> to vector<48x48xf32>
    %256 = arith.subf %252, %255 : vector<48x48xf32>
    %257 = math.exp %256 : vector<48x48xf32>
    %cst_105 = arith.constant dense<0.000000e+00> : vector<48xf32>
    %258 = vector.multi_reduction <add>, %257, %cst_105 [1] : vector<48x48xf32> to vector<48xf32>
    %259 = vector.shape_cast %258 : vector<48xf32> to vector<48x1xf32>
    %260 = tpu.reciprocal %259 {approx = true} : vector<48x1xf32> -> vector<48x1xf32>
    %261 = vector.broadcast %260 : vector<48x1xf32> to vector<48x48xf32>
    %262 = arith.mulf %257, %261 : vector<48x48xf32>
    %cst_106 = arith.constant dense<0.000000e+00> : vector<48x8xf32>
    %263 = tpu.matmul %262, %247, %cst_106 {dimension_numbers = #tpu.dot_dimension_numbers<[1], [0], [0], [1], [0, 0, 1, 1], [], []>} : vector<48x48xf32>, vector<48x8xf32>, vector<48x8xf32> -> vector<48x8xf32>
    %264 = vector.extract_strided_slice %91 {offsets = [48, 0], sizes = [8, 64], strides = [1, 1]} : vector<64x64xf32> to vector<8x64xf32>
    %cst_107 = arith.constant dense<0.000000e+00> : vector<48x64xf32>
    %265 = tpu.matmul %263, %264, %cst_107 {dimension_numbers = #tpu.dot_dimension_numbers<[1], [0], [0], [1], [0, 0, 1, 1], [], []>} : vector<48x8xf32>, vector<8x64xf32>, vector<48x64xf32> -> vector<48x64xf32>
    %266 = arith.addf %245, %265 : vector<48x64xf32>
    %267 = vector.extract_strided_slice %122 {offsets = [0, 56], sizes = [48, 8], strides = [1, 1]} : vector<48x64xf32> to vector<48x8xf32>
    %268 = tpu.transpose %246, [1, 0] : vector<48x8xf32> -> vector<8x48xf32>
    %cst_108 = arith.constant dense<0.000000e+00> : vector<48x48xf32>
    %269 = tpu.matmul %267, %268, %cst_108 {dimension_numbers = #tpu.dot_dimension_numbers<[1], [0], [0], [1], [0, 0, 1, 1], [], []>} : vector<48x8xf32>, vector<8x48xf32>, vector<48x48xf32> -> vector<48x48xf32>
    %cst_109 = arith.constant 0.353553385 : f32
    %270 = vector.broadcast %cst_109 : f32 to vector<48x48xf32>
    %271 = arith.mulf %269, %270 : vector<48x48xf32>
    %cst_110 = arith.constant dense<0xFF800000> : vector<48xf32>
    %272 = vector.multi_reduction <maximumf>, %271, %cst_110 [1] : vector<48x48xf32> to vector<48xf32>
    %273 = vector.shape_cast %272 : vector<48xf32> to vector<48x1xf32>
    %274 = vector.broadcast %273 : vector<48x1xf32> to vector<48x48xf32>
    %275 = arith.subf %271, %274 : vector<48x48xf32>
    %276 = math.exp %275 : vector<48x48xf32>
    %cst_111 = arith.constant dense<0.000000e+00> : vector<48xf32>
    %277 = vector.multi_reduction <add>, %276, %cst_111 [1] : vector<48x48xf32> to vector<48xf32>
    %278 = vector.shape_cast %277 : vector<48xf32> to vector<48x1xf32>
    %279 = tpu.reciprocal %278 {approx = true} : vector<48x1xf32> -> vector<48x1xf32>
    %280 = vector.broadcast %279 : vector<48x1xf32> to vector<48x48xf32>
    %281 = arith.mulf %276, %280 : vector<48x48xf32>
    %cst_112 = arith.constant dense<0.000000e+00> : vector<48x8xf32>
    %282 = tpu.matmul %281, %247, %cst_112 {dimension_numbers = #tpu.dot_dimension_numbers<[1], [0], [0], [1], [0, 0, 1, 1], [], []>} : vector<48x48xf32>, vector<48x8xf32>, vector<48x8xf32> -> vector<48x8xf32>
    %283 = vector.extract_strided_slice %91 {offsets = [56, 0], sizes = [8, 64], strides = [1, 1]} : vector<64x64xf32> to vector<8x64xf32>
    %cst_113 = arith.constant dense<0.000000e+00> : vector<48x64xf32>
    %284 = tpu.matmul %282, %283, %cst_113 {dimension_numbers = #tpu.dot_dimension_numbers<[1], [0], [0], [1], [0, 0, 1, 1], [], []>} : vector<48x8xf32>, vector<8x64xf32>, vector<48x64xf32> -> vector<48x64xf32>
    %285 = arith.addf %266, %284 : vector<48x64xf32>
    %286 = vector.broadcast %85 : vector<1x64xf32> to vector<48x64xf32>
    %287 = arith.addf %285, %286 : vector<48x64xf32>
    %cst_114 = arith.constant 0.50381875 : f32
    %288 = vector.broadcast %cst_114 : f32 to vector<48x64xf32>
    %289 = arith.mulf %288, %287 : vector<48x64xf32>
    %290 = arith.addf %80, %289 : vector<48x64xf32>
    %cst_115 = arith.constant dense<0.000000e+00> : vector<48xf32>
    %291 = vector.multi_reduction <add>, %290, %cst_115 [1] : vector<48x64xf32> to vector<48xf32>
    %292 = vector.shape_cast %291 : vector<48xf32> to vector<48x1xf32>
    %cst_116 = arith.constant 6.400000e+01 : f32
    %293 = vector.broadcast %cst_116 : f32 to vector<48x1xf32>
    %294 = arith.divf %292, %293 : vector<48x1xf32>
    %295 = vector.broadcast %294 : vector<48x1xf32> to vector<48x64xf32>
    %296 = arith.subf %290, %295 : vector<48x64xf32>
    %297 = arith.mulf %296, %296 : vector<48x64xf32>
    %cst_117 = arith.constant dense<0.000000e+00> : vector<48xf32>
    %298 = vector.multi_reduction <add>, %297, %cst_117 [1] : vector<48x64xf32> to vector<48xf32>
    %299 = vector.shape_cast %298 : vector<48xf32> to vector<48x1xf32>
    %cst_118 = arith.constant 6.400000e+01 : f32
    %300 = vector.broadcast %cst_118 : f32 to vector<48x1xf32>
    %301 = arith.divf %299, %300 : vector<48x1xf32>
    %302 = vector.broadcast %294 : vector<48x1xf32> to vector<48x64xf32>
    %303 = arith.subf %290, %302 : vector<48x64xf32>
    %cst_119 = arith.constant 9.99999974E-6 : f32
    %304 = vector.broadcast %cst_119 : f32 to vector<48x1xf32>
    %305 = arith.addf %301, %304 : vector<48x1xf32>
    %306 = math.rsqrt %305 : vector<48x1xf32>
    %307 = vector.broadcast %306 : vector<48x1xf32> to vector<48x64xf32>
    %308 = arith.mulf %303, %307 : vector<48x64xf32>
    %309 = vector.broadcast %83 : vector<1x64xf32> to vector<48x64xf32>
    %310 = arith.mulf %308, %309 : vector<48x64xf32>
    %311 = vector.broadcast %84 : vector<1x64xf32> to vector<48x64xf32>
    %312 = arith.addf %310, %311 : vector<48x64xf32>
    %cst_120 = arith.constant dense<0.000000e+00> : vector<48x256xf32>
    %313 = tpu.matmul %312, %93, %cst_120 {dimension_numbers = #tpu.dot_dimension_numbers<[1], [0], [0], [1], [0, 0, 1, 1], [], []>} : vector<48x64xf32>, vector<64x256xf32>, vector<48x256xf32> -> vector<48x256xf32>
    %314 = vector.broadcast %94 : vector<1x256xf32> to vector<48x256xf32>
    %315 = arith.addf %313, %314 : vector<48x256xf32>
    %316 = arith.negf %315 : vector<48x256xf32>
    %317 = math.exp %316 : vector<48x256xf32>
    %cst_121 = arith.constant 1.000000e+00 : f32
    %318 = vector.broadcast %cst_121 : f32 to vector<48x256xf32>
    %319 = arith.addf %318, %317 : vector<48x256xf32>
    %320 = arith.divf %318, %319 : vector<48x256xf32>
    %321 = arith.mulf %315, %320 : vector<48x256xf32>
    %cst_122 = arith.constant dense<0.000000e+00> : vector<48x64xf32>
    %322 = tpu.matmul %321, %96, %cst_122 {dimension_numbers = #tpu.dot_dimension_numbers<[1], [0], [0], [1], [0, 0, 1, 1], [], []>} : vector<48x256xf32>, vector<256x64xf32>, vector<48x64xf32> -> vector<48x64xf32>
    %323 = vector.broadcast %86 : vector<1x64xf32> to vector<48x64xf32>
    %324 = arith.addf %322, %323 : vector<48x64xf32>
    %cst_123 = arith.constant 0.50381875 : f32
    %325 = vector.broadcast %cst_123 : f32 to vector<48x64xf32>
    %326 = arith.mulf %325, %324 : vector<48x64xf32>
    %327 = arith.addf %290, %326 : vector<48x64xf32>
    %c80 = arith.constant 80 : index
    %c0_124 = arith.constant 0 : index
    %328 = vector.load %arg5[%c80, %c0_124] : memref<88x64xf32, #tpu.memory_space<vmem>>, vector<1x64xf32>
    %c81 = arith.constant 81 : index
    %c0_125 = arith.constant 0 : index
    %329 = vector.load %arg5[%c81, %c0_125] : memref<88x64xf32, #tpu.memory_space<vmem>>, vector<1x64xf32>
    %c82 = arith.constant 82 : index
    %c0_126 = arith.constant 0 : index
    %330 = vector.load %arg5[%c82, %c0_126] : memref<88x64xf32, #tpu.memory_space<vmem>>, vector<1x64xf32>
    %c83 = arith.constant 83 : index
    %c0_127 = arith.constant 0 : index
    %331 = vector.load %arg5[%c83, %c0_127] : memref<88x64xf32, #tpu.memory_space<vmem>>, vector<1x64xf32>
    %c84 = arith.constant 84 : index
    %c0_128 = arith.constant 0 : index
    %332 = vector.load %arg5[%c84, %c0_128] : memref<88x64xf32, #tpu.memory_space<vmem>>, vector<1x64xf32>
    %c85 = arith.constant 85 : index
    %c0_129 = arith.constant 0 : index
    %333 = vector.load %arg5[%c85, %c0_129] : memref<88x64xf32, #tpu.memory_space<vmem>>, vector<1x64xf32>
    %c5_130 = arith.constant 5 : index
    %c0_131 = arith.constant 0 : index
    %334 = vector.load %arg6[%c5_130, %c0_131] : memref<8x128xf32, #tpu.memory_space<vmem>>, vector<1x128xf32>
    %c1_132 = arith.constant 1 : index
    %c0_133 = arith.constant 0 : index
    %c0_134 = arith.constant 0 : index
    %335 = vector.load %arg10[%c1_132, %c0_133, %c0_134] : memref<2x64x128xf32, #tpu.memory_space<vmem>>, vector<1x64x128xf32>
    %336 = vector.shape_cast %335 : vector<1x64x128xf32> to vector<64x128xf32>
    %c1_135 = arith.constant 1 : index
    %c0_136 = arith.constant 0 : index
    %c0_137 = arith.constant 0 : index
    %337 = vector.load %arg11[%c1_135, %c0_136, %c0_137] : memref<2x64x64xf32, #tpu.memory_space<vmem>>, vector<1x64x64xf32>
    %338 = vector.shape_cast %337 : vector<1x64x64xf32> to vector<64x64xf32>
    %c1_138 = arith.constant 1 : index
    %c0_139 = arith.constant 0 : index
    %c0_140 = arith.constant 0 : index
    %339 = vector.load %arg12[%c1_138, %c0_139, %c0_140] : memref<2x64x256xf32, #tpu.memory_space<vmem>>, vector<1x64x256xf32>
    %340 = vector.shape_cast %339 : vector<1x64x256xf32> to vector<64x256xf32>
    %c1_141 = arith.constant 1 : index
    %c0_142 = arith.constant 0 : index
    %341 = vector.load %arg7[%c1_141, %c0_142] : memref<2x256xf32, #tpu.memory_space<vmem>>, vector<1x256xf32>
    %c1_143 = arith.constant 1 : index
    %c0_144 = arith.constant 0 : index
    %c0_145 = arith.constant 0 : index
    %342 = vector.load %arg13[%c1_143, %c0_144, %c0_145] : memref<2x256x64xf32, #tpu.memory_space<vmem>>, vector<1x256x64xf32>
    %343 = vector.shape_cast %342 : vector<1x256x64xf32> to vector<256x64xf32>
    %cst_146 = arith.constant dense<0.000000e+00> : vector<48xf32>
    %344 = vector.multi_reduction <add>, %52, %cst_146 [1] : vector<48x64xf32> to vector<48xf32>
    %345 = vector.shape_cast %344 : vector<48xf32> to vector<48x1xf32>
    %cst_147 = arith.constant 6.400000e+01 : f32
    %346 = vector.broadcast %cst_147 : f32 to vector<48x1xf32>
    %347 = arith.divf %345, %346 : vector<48x1xf32>
    %348 = vector.broadcast %347 : vector<48x1xf32> to vector<48x64xf32>
    %349 = arith.subf %52, %348 : vector<48x64xf32>
    %350 = arith.mulf %349, %349 : vector<48x64xf32>
    %cst_148 = arith.constant dense<0.000000e+00> : vector<48xf32>
    %351 = vector.multi_reduction <add>, %350, %cst_148 [1] : vector<48x64xf32> to vector<48xf32>
    %352 = vector.shape_cast %351 : vector<48xf32> to vector<48x1xf32>
    %cst_149 = arith.constant 6.400000e+01 : f32
    %353 = vector.broadcast %cst_149 : f32 to vector<48x1xf32>
    %354 = arith.divf %352, %353 : vector<48x1xf32>
    %355 = vector.broadcast %347 : vector<48x1xf32> to vector<48x64xf32>
    %356 = arith.subf %52, %355 : vector<48x64xf32>
    %cst_150 = arith.constant 9.99999974E-6 : f32
    %357 = vector.broadcast %cst_150 : f32 to vector<48x1xf32>
    %358 = arith.addf %354, %357 : vector<48x1xf32>
    %359 = math.rsqrt %358 : vector<48x1xf32>
    %360 = vector.broadcast %359 : vector<48x1xf32> to vector<48x64xf32>
    %361 = arith.mulf %356, %360 : vector<48x64xf32>
    %362 = vector.broadcast %328 : vector<1x64xf32> to vector<48x64xf32>
    %363 = arith.mulf %361, %362 : vector<48x64xf32>
    %364 = vector.broadcast %329 : vector<1x64xf32> to vector<48x64xf32>
    %365 = arith.addf %363, %364 : vector<48x64xf32>
    %366 = vector.extract_strided_slice %336 {offsets = [0, 0], sizes = [64, 64], strides = [1, 1]} : vector<64x128xf32> to vector<64x64xf32>
    %cst_151 = arith.constant dense<0.000000e+00> : vector<48x64xf32>
    %367 = tpu.matmul %365, %366, %cst_151 {dimension_numbers = #tpu.dot_dimension_numbers<[1], [0], [0], [1], [0, 0, 1, 1], [], []>} : vector<48x64xf32>, vector<64x64xf32>, vector<48x64xf32> -> vector<48x64xf32>
    %368 = vector.extract_strided_slice %334 {offsets = [0, 0], sizes = [1, 64], strides = [1, 1]} : vector<1x128xf32> to vector<1x64xf32>
    %369 = vector.broadcast %368 : vector<1x64xf32> to vector<48x64xf32>
    %370 = arith.addf %367, %369 : vector<48x64xf32>
    %371 = vector.extract_strided_slice %336 {offsets = [0, 64], sizes = [64, 64], strides = [1, 1]} : vector<64x128xf32> to vector<64x64xf32>
    %cst_152 = arith.constant dense<0.000000e+00> : vector<48x64xf32>
    %372 = tpu.matmul %327, %371, %cst_152 {dimension_numbers = #tpu.dot_dimension_numbers<[1], [0], [0], [1], [0, 0, 1, 1], [], []>} : vector<48x64xf32>, vector<64x64xf32>, vector<48x64xf32> -> vector<48x64xf32>
    %373 = vector.extract_strided_slice %334 {offsets = [0, 64], sizes = [1, 64], strides = [1, 1]} : vector<1x128xf32> to vector<1x64xf32>
    %374 = vector.broadcast %373 : vector<1x64xf32> to vector<48x64xf32>
    %375 = arith.addf %372, %374 : vector<48x64xf32>
    %376 = vector.extract_strided_slice %375 {offsets = [0, 0], sizes = [48, 32], strides = [1, 1]} : vector<48x64xf32> to vector<48x32xf32>
    %377 = vector.extract_strided_slice %375 {offsets = [0, 32], sizes = [48, 32], strides = [1, 1]} : vector<48x64xf32> to vector<48x32xf32>
    %cst_153 = arith.constant 0.000000e+00 : f32
    %378 = vector.broadcast %cst_153 : f32 to vector<48x64xf32>
    %379 = vector.extract_strided_slice %376 {offsets = [0, 0], sizes = [48, 8], strides = [1, 1]} : vector<48x32xf32> to vector<48x8xf32>
    %380 = vector.extract_strided_slice %377 {offsets = [0, 0], sizes = [48, 8], strides = [1, 1]} : vector<48x32xf32> to vector<48x8xf32>
    %381 = vector.extract_strided_slice %370 {offsets = [0, 0], sizes = [48, 8], strides = [1, 1]} : vector<48x64xf32> to vector<48x8xf32>
    %382 = tpu.transpose %379, [1, 0] : vector<48x8xf32> -> vector<8x48xf32>
    %cst_154 = arith.constant dense<0.000000e+00> : vector<48x48xf32>
    %383 = tpu.matmul %381, %382, %cst_154 {dimension_numbers = #tpu.dot_dimension_numbers<[1], [0], [0], [1], [0, 0, 1, 1], [], []>} : vector<48x8xf32>, vector<8x48xf32>, vector<48x48xf32> -> vector<48x48xf32>
    %cst_155 = arith.constant 0.353553385 : f32
    %384 = vector.broadcast %cst_155 : f32 to vector<48x48xf32>
    %385 = arith.mulf %383, %384 : vector<48x48xf32>
    %cst_156 = arith.constant dense<0xFF800000> : vector<48xf32>
    %386 = vector.multi_reduction <maximumf>, %385, %cst_156 [1] : vector<48x48xf32> to vector<48xf32>
    %387 = vector.shape_cast %386 : vector<48xf32> to vector<48x1xf32>
    %388 = vector.broadcast %387 : vector<48x1xf32> to vector<48x48xf32>
    %389 = arith.subf %385, %388 : vector<48x48xf32>
    %390 = math.exp %389 : vector<48x48xf32>
    %cst_157 = arith.constant dense<0.000000e+00> : vector<48xf32>
    %391 = vector.multi_reduction <add>, %390, %cst_157 [1] : vector<48x48xf32> to vector<48xf32>
    %392 = vector.shape_cast %391 : vector<48xf32> to vector<48x1xf32>
    %393 = tpu.reciprocal %392 {approx = true} : vector<48x1xf32> -> vector<48x1xf32>
    %394 = vector.broadcast %393 : vector<48x1xf32> to vector<48x48xf32>
    %395 = arith.mulf %390, %394 : vector<48x48xf32>
    %cst_158 = arith.constant dense<0.000000e+00> : vector<48x8xf32>
    %396 = tpu.matmul %395, %380, %cst_158 {dimension_numbers = #tpu.dot_dimension_numbers<[1], [0], [0], [1], [0, 0, 1, 1], [], []>} : vector<48x48xf32>, vector<48x8xf32>, vector<48x8xf32> -> vector<48x8xf32>
    %397 = vector.extract_strided_slice %338 {offsets = [0, 0], sizes = [8, 64], strides = [1, 1]} : vector<64x64xf32> to vector<8x64xf32>
    %cst_159 = arith.constant dense<0.000000e+00> : vector<48x64xf32>
    %398 = tpu.matmul %396, %397, %cst_159 {dimension_numbers = #tpu.dot_dimension_numbers<[1], [0], [0], [1], [0, 0, 1, 1], [], []>} : vector<48x8xf32>, vector<8x64xf32>, vector<48x64xf32> -> vector<48x64xf32>
    %399 = arith.addf %378, %398 : vector<48x64xf32>
    %400 = vector.extract_strided_slice %370 {offsets = [0, 8], sizes = [48, 8], strides = [1, 1]} : vector<48x64xf32> to vector<48x8xf32>
    %401 = tpu.transpose %379, [1, 0] : vector<48x8xf32> -> vector<8x48xf32>
    %cst_160 = arith.constant dense<0.000000e+00> : vector<48x48xf32>
    %402 = tpu.matmul %400, %401, %cst_160 {dimension_numbers = #tpu.dot_dimension_numbers<[1], [0], [0], [1], [0, 0, 1, 1], [], []>} : vector<48x8xf32>, vector<8x48xf32>, vector<48x48xf32> -> vector<48x48xf32>
    %cst_161 = arith.constant 0.353553385 : f32
    %403 = vector.broadcast %cst_161 : f32 to vector<48x48xf32>
    %404 = arith.mulf %402, %403 : vector<48x48xf32>
    %cst_162 = arith.constant dense<0xFF800000> : vector<48xf32>
    %405 = vector.multi_reduction <maximumf>, %404, %cst_162 [1] : vector<48x48xf32> to vector<48xf32>
    %406 = vector.shape_cast %405 : vector<48xf32> to vector<48x1xf32>
    %407 = vector.broadcast %406 : vector<48x1xf32> to vector<48x48xf32>
    %408 = arith.subf %404, %407 : vector<48x48xf32>
    %409 = math.exp %408 : vector<48x48xf32>
    %cst_163 = arith.constant dense<0.000000e+00> : vector<48xf32>
    %410 = vector.multi_reduction <add>, %409, %cst_163 [1] : vector<48x48xf32> to vector<48xf32>
    %411 = vector.shape_cast %410 : vector<48xf32> to vector<48x1xf32>
    %412 = tpu.reciprocal %411 {approx = true} : vector<48x1xf32> -> vector<48x1xf32>
    %413 = vector.broadcast %412 : vector<48x1xf32> to vector<48x48xf32>
    %414 = arith.mulf %409, %413 : vector<48x48xf32>
    %cst_164 = arith.constant dense<0.000000e+00> : vector<48x8xf32>
    %415 = tpu.matmul %414, %380, %cst_164 {dimension_numbers = #tpu.dot_dimension_numbers<[1], [0], [0], [1], [0, 0, 1, 1], [], []>} : vector<48x48xf32>, vector<48x8xf32>, vector<48x8xf32> -> vector<48x8xf32>
    %416 = vector.extract_strided_slice %338 {offsets = [8, 0], sizes = [8, 64], strides = [1, 1]} : vector<64x64xf32> to vector<8x64xf32>
    %cst_165 = arith.constant dense<0.000000e+00> : vector<48x64xf32>
    %417 = tpu.matmul %415, %416, %cst_165 {dimension_numbers = #tpu.dot_dimension_numbers<[1], [0], [0], [1], [0, 0, 1, 1], [], []>} : vector<48x8xf32>, vector<8x64xf32>, vector<48x64xf32> -> vector<48x64xf32>
    %418 = arith.addf %399, %417 : vector<48x64xf32>
    %419 = vector.extract_strided_slice %376 {offsets = [0, 8], sizes = [48, 8], strides = [1, 1]} : vector<48x32xf32> to vector<48x8xf32>
    %420 = vector.extract_strided_slice %377 {offsets = [0, 8], sizes = [48, 8], strides = [1, 1]} : vector<48x32xf32> to vector<48x8xf32>
    %421 = vector.extract_strided_slice %370 {offsets = [0, 16], sizes = [48, 8], strides = [1, 1]} : vector<48x64xf32> to vector<48x8xf32>
    %422 = tpu.transpose %419, [1, 0] : vector<48x8xf32> -> vector<8x48xf32>
    %cst_166 = arith.constant dense<0.000000e+00> : vector<48x48xf32>
    %423 = tpu.matmul %421, %422, %cst_166 {dimension_numbers = #tpu.dot_dimension_numbers<[1], [0], [0], [1], [0, 0, 1, 1], [], []>} : vector<48x8xf32>, vector<8x48xf32>, vector<48x48xf32> -> vector<48x48xf32>
    %cst_167 = arith.constant 0.353553385 : f32
    %424 = vector.broadcast %cst_167 : f32 to vector<48x48xf32>
    %425 = arith.mulf %423, %424 : vector<48x48xf32>
    %cst_168 = arith.constant dense<0xFF800000> : vector<48xf32>
    %426 = vector.multi_reduction <maximumf>, %425, %cst_168 [1] : vector<48x48xf32> to vector<48xf32>
    %427 = vector.shape_cast %426 : vector<48xf32> to vector<48x1xf32>
    %428 = vector.broadcast %427 : vector<48x1xf32> to vector<48x48xf32>
    %429 = arith.subf %425, %428 : vector<48x48xf32>
    %430 = math.exp %429 : vector<48x48xf32>
    %cst_169 = arith.constant dense<0.000000e+00> : vector<48xf32>
    %431 = vector.multi_reduction <add>, %430, %cst_169 [1] : vector<48x48xf32> to vector<48xf32>
    %432 = vector.shape_cast %431 : vector<48xf32> to vector<48x1xf32>
    %433 = tpu.reciprocal %432 {approx = true} : vector<48x1xf32> -> vector<48x1xf32>
    %434 = vector.broadcast %433 : vector<48x1xf32> to vector<48x48xf32>
    %435 = arith.mulf %430, %434 : vector<48x48xf32>
    %cst_170 = arith.constant dense<0.000000e+00> : vector<48x8xf32>
    %436 = tpu.matmul %435, %420, %cst_170 {dimension_numbers = #tpu.dot_dimension_numbers<[1], [0], [0], [1], [0, 0, 1, 1], [], []>} : vector<48x48xf32>, vector<48x8xf32>, vector<48x8xf32> -> vector<48x8xf32>
    %437 = vector.extract_strided_slice %338 {offsets = [16, 0], sizes = [8, 64], strides = [1, 1]} : vector<64x64xf32> to vector<8x64xf32>
    %cst_171 = arith.constant dense<0.000000e+00> : vector<48x64xf32>
    %438 = tpu.matmul %436, %437, %cst_171 {dimension_numbers = #tpu.dot_dimension_numbers<[1], [0], [0], [1], [0, 0, 1, 1], [], []>} : vector<48x8xf32>, vector<8x64xf32>, vector<48x64xf32> -> vector<48x64xf32>
    %439 = arith.addf %418, %438 : vector<48x64xf32>
    %440 = vector.extract_strided_slice %370 {offsets = [0, 24], sizes = [48, 8], strides = [1, 1]} : vector<48x64xf32> to vector<48x8xf32>
    %441 = tpu.transpose %419, [1, 0] : vector<48x8xf32> -> vector<8x48xf32>
    %cst_172 = arith.constant dense<0.000000e+00> : vector<48x48xf32>
    %442 = tpu.matmul %440, %441, %cst_172 {dimension_numbers = #tpu.dot_dimension_numbers<[1], [0], [0], [1], [0, 0, 1, 1], [], []>} : vector<48x8xf32>, vector<8x48xf32>, vector<48x48xf32> -> vector<48x48xf32>
    %cst_173 = arith.constant 0.353553385 : f32
    %443 = vector.broadcast %cst_173 : f32 to vector<48x48xf32>
    %444 = arith.mulf %442, %443 : vector<48x48xf32>
    %cst_174 = arith.constant dense<0xFF800000> : vector<48xf32>
    %445 = vector.multi_reduction <maximumf>, %444, %cst_174 [1] : vector<48x48xf32> to vector<48xf32>
    %446 = vector.shape_cast %445 : vector<48xf32> to vector<48x1xf32>
    %447 = vector.broadcast %446 : vector<48x1xf32> to vector<48x48xf32>
    %448 = arith.subf %444, %447 : vector<48x48xf32>
    %449 = math.exp %448 : vector<48x48xf32>
    %cst_175 = arith.constant dense<0.000000e+00> : vector<48xf32>
    %450 = vector.multi_reduction <add>, %449, %cst_175 [1] : vector<48x48xf32> to vector<48xf32>
    %451 = vector.shape_cast %450 : vector<48xf32> to vector<48x1xf32>
    %452 = tpu.reciprocal %451 {approx = true} : vector<48x1xf32> -> vector<48x1xf32>
    %453 = vector.broadcast %452 : vector<48x1xf32> to vector<48x48xf32>
    %454 = arith.mulf %449, %453 : vector<48x48xf32>
    %cst_176 = arith.constant dense<0.000000e+00> : vector<48x8xf32>
    %455 = tpu.matmul %454, %420, %cst_176 {dimension_numbers = #tpu.dot_dimension_numbers<[1], [0], [0], [1], [0, 0, 1, 1], [], []>} : vector<48x48xf32>, vector<48x8xf32>, vector<48x8xf32> -> vector<48x8xf32>
    %456 = vector.extract_strided_slice %338 {offsets = [24, 0], sizes = [8, 64], strides = [1, 1]} : vector<64x64xf32> to vector<8x64xf32>
    %cst_177 = arith.constant dense<0.000000e+00> : vector<48x64xf32>
    %457 = tpu.matmul %455, %456, %cst_177 {dimension_numbers = #tpu.dot_dimension_numbers<[1], [0], [0], [1], [0, 0, 1, 1], [], []>} : vector<48x8xf32>, vector<8x64xf32>, vector<48x64xf32> -> vector<48x64xf32>
    %458 = arith.addf %439, %457 : vector<48x64xf32>
    %459 = vector.extract_strided_slice %376 {offsets = [0, 16], sizes = [48, 8], strides = [1, 1]} : vector<48x32xf32> to vector<48x8xf32>
    %460 = vector.extract_strided_slice %377 {offsets = [0, 16], sizes = [48, 8], strides = [1, 1]} : vector<48x32xf32> to vector<48x8xf32>
    %461 = vector.extract_strided_slice %370 {offsets = [0, 32], sizes = [48, 8], strides = [1, 1]} : vector<48x64xf32> to vector<48x8xf32>
    %462 = tpu.transpose %459, [1, 0] : vector<48x8xf32> -> vector<8x48xf32>
    %cst_178 = arith.constant dense<0.000000e+00> : vector<48x48xf32>
    %463 = tpu.matmul %461, %462, %cst_178 {dimension_numbers = #tpu.dot_dimension_numbers<[1], [0], [0], [1], [0, 0, 1, 1], [], []>} : vector<48x8xf32>, vector<8x48xf32>, vector<48x48xf32> -> vector<48x48xf32>
    %cst_179 = arith.constant 0.353553385 : f32
    %464 = vector.broadcast %cst_179 : f32 to vector<48x48xf32>
    %465 = arith.mulf %463, %464 : vector<48x48xf32>
    %cst_180 = arith.constant dense<0xFF800000> : vector<48xf32>
    %466 = vector.multi_reduction <maximumf>, %465, %cst_180 [1] : vector<48x48xf32> to vector<48xf32>
    %467 = vector.shape_cast %466 : vector<48xf32> to vector<48x1xf32>
    %468 = vector.broadcast %467 : vector<48x1xf32> to vector<48x48xf32>
    %469 = arith.subf %465, %468 : vector<48x48xf32>
    %470 = math.exp %469 : vector<48x48xf32>
    %cst_181 = arith.constant dense<0.000000e+00> : vector<48xf32>
    %471 = vector.multi_reduction <add>, %470, %cst_181 [1] : vector<48x48xf32> to vector<48xf32>
    %472 = vector.shape_cast %471 : vector<48xf32> to vector<48x1xf32>
    %473 = tpu.reciprocal %472 {approx = true} : vector<48x1xf32> -> vector<48x1xf32>
    %474 = vector.broadcast %473 : vector<48x1xf32> to vector<48x48xf32>
    %475 = arith.mulf %470, %474 : vector<48x48xf32>
    %cst_182 = arith.constant dense<0.000000e+00> : vector<48x8xf32>
    %476 = tpu.matmul %475, %460, %cst_182 {dimension_numbers = #tpu.dot_dimension_numbers<[1], [0], [0], [1], [0, 0, 1, 1], [], []>} : vector<48x48xf32>, vector<48x8xf32>, vector<48x8xf32> -> vector<48x8xf32>
    %477 = vector.extract_strided_slice %338 {offsets = [32, 0], sizes = [8, 64], strides = [1, 1]} : vector<64x64xf32> to vector<8x64xf32>
    %cst_183 = arith.constant dense<0.000000e+00> : vector<48x64xf32>
    %478 = tpu.matmul %476, %477, %cst_183 {dimension_numbers = #tpu.dot_dimension_numbers<[1], [0], [0], [1], [0, 0, 1, 1], [], []>} : vector<48x8xf32>, vector<8x64xf32>, vector<48x64xf32> -> vector<48x64xf32>
    %479 = arith.addf %458, %478 : vector<48x64xf32>
    %480 = vector.extract_strided_slice %370 {offsets = [0, 40], sizes = [48, 8], strides = [1, 1]} : vector<48x64xf32> to vector<48x8xf32>
    %481 = tpu.transpose %459, [1, 0] : vector<48x8xf32> -> vector<8x48xf32>
    %cst_184 = arith.constant dense<0.000000e+00> : vector<48x48xf32>
    %482 = tpu.matmul %480, %481, %cst_184 {dimension_numbers = #tpu.dot_dimension_numbers<[1], [0], [0], [1], [0, 0, 1, 1], [], []>} : vector<48x8xf32>, vector<8x48xf32>, vector<48x48xf32> -> vector<48x48xf32>
    %cst_185 = arith.constant 0.353553385 : f32
    %483 = vector.broadcast %cst_185 : f32 to vector<48x48xf32>
    %484 = arith.mulf %482, %483 : vector<48x48xf32>
    %cst_186 = arith.constant dense<0xFF800000> : vector<48xf32>
    %485 = vector.multi_reduction <maximumf>, %484, %cst_186 [1] : vector<48x48xf32> to vector<48xf32>
    %486 = vector.shape_cast %485 : vector<48xf32> to vector<48x1xf32>
    %487 = vector.broadcast %486 : vector<48x1xf32> to vector<48x48xf32>
    %488 = arith.subf %484, %487 : vector<48x48xf32>
    %489 = math.exp %488 : vector<48x48xf32>
    %cst_187 = arith.constant dense<0.000000e+00> : vector<48xf32>
    %490 = vector.multi_reduction <add>, %489, %cst_187 [1] : vector<48x48xf32> to vector<48xf32>
    %491 = vector.shape_cast %490 : vector<48xf32> to vector<48x1xf32>
    %492 = tpu.reciprocal %491 {approx = true} : vector<48x1xf32> -> vector<48x1xf32>
    %493 = vector.broadcast %492 : vector<48x1xf32> to vector<48x48xf32>
    %494 = arith.mulf %489, %493 : vector<48x48xf32>
    %cst_188 = arith.constant dense<0.000000e+00> : vector<48x8xf32>
    %495 = tpu.matmul %494, %460, %cst_188 {dimension_numbers = #tpu.dot_dimension_numbers<[1], [0], [0], [1], [0, 0, 1, 1], [], []>} : vector<48x48xf32>, vector<48x8xf32>, vector<48x8xf32> -> vector<48x8xf32>
    %496 = vector.extract_strided_slice %338 {offsets = [40, 0], sizes = [8, 64], strides = [1, 1]} : vector<64x64xf32> to vector<8x64xf32>
    %cst_189 = arith.constant dense<0.000000e+00> : vector<48x64xf32>
    %497 = tpu.matmul %495, %496, %cst_189 {dimension_numbers = #tpu.dot_dimension_numbers<[1], [0], [0], [1], [0, 0, 1, 1], [], []>} : vector<48x8xf32>, vector<8x64xf32>, vector<48x64xf32> -> vector<48x64xf32>
    %498 = arith.addf %479, %497 : vector<48x64xf32>
    %499 = vector.extract_strided_slice %376 {offsets = [0, 24], sizes = [48, 8], strides = [1, 1]} : vector<48x32xf32> to vector<48x8xf32>
    %500 = vector.extract_strided_slice %377 {offsets = [0, 24], sizes = [48, 8], strides = [1, 1]} : vector<48x32xf32> to vector<48x8xf32>
    %501 = vector.extract_strided_slice %370 {offsets = [0, 48], sizes = [48, 8], strides = [1, 1]} : vector<48x64xf32> to vector<48x8xf32>
    %502 = tpu.transpose %499, [1, 0] : vector<48x8xf32> -> vector<8x48xf32>
    %cst_190 = arith.constant dense<0.000000e+00> : vector<48x48xf32>
    %503 = tpu.matmul %501, %502, %cst_190 {dimension_numbers = #tpu.dot_dimension_numbers<[1], [0], [0], [1], [0, 0, 1, 1], [], []>} : vector<48x8xf32>, vector<8x48xf32>, vector<48x48xf32> -> vector<48x48xf32>
    %cst_191 = arith.constant 0.353553385 : f32
    %504 = vector.broadcast %cst_191 : f32 to vector<48x48xf32>
    %505 = arith.mulf %503, %504 : vector<48x48xf32>
    %cst_192 = arith.constant dense<0xFF800000> : vector<48xf32>
    %506 = vector.multi_reduction <maximumf>, %505, %cst_192 [1] : vector<48x48xf32> to vector<48xf32>
    %507 = vector.shape_cast %506 : vector<48xf32> to vector<48x1xf32>
    %508 = vector.broadcast %507 : vector<48x1xf32> to vector<48x48xf32>
    %509 = arith.subf %505, %508 : vector<48x48xf32>
    %510 = math.exp %509 : vector<48x48xf32>
    %cst_193 = arith.constant dense<0.000000e+00> : vector<48xf32>
    %511 = vector.multi_reduction <add>, %510, %cst_193 [1] : vector<48x48xf32> to vector<48xf32>
    %512 = vector.shape_cast %511 : vector<48xf32> to vector<48x1xf32>
    %513 = tpu.reciprocal %512 {approx = true} : vector<48x1xf32> -> vector<48x1xf32>
    %514 = vector.broadcast %513 : vector<48x1xf32> to vector<48x48xf32>
    %515 = arith.mulf %510, %514 : vector<48x48xf32>
    %cst_194 = arith.constant dense<0.000000e+00> : vector<48x8xf32>
    %516 = tpu.matmul %515, %500, %cst_194 {dimension_numbers = #tpu.dot_dimension_numbers<[1], [0], [0], [1], [0, 0, 1, 1], [], []>} : vector<48x48xf32>, vector<48x8xf32>, vector<48x8xf32> -> vector<48x8xf32>
    %517 = vector.extract_strided_slice %338 {offsets = [48, 0], sizes = [8, 64], strides = [1, 1]} : vector<64x64xf32> to vector<8x64xf32>
    %cst_195 = arith.constant dense<0.000000e+00> : vector<48x64xf32>
    %518 = tpu.matmul %516, %517, %cst_195 {dimension_numbers = #tpu.dot_dimension_numbers<[1], [0], [0], [1], [0, 0, 1, 1], [], []>} : vector<48x8xf32>, vector<8x64xf32>, vector<48x64xf32> -> vector<48x64xf32>
    %519 = arith.addf %498, %518 : vector<48x64xf32>
    %520 = vector.extract_strided_slice %370 {offsets = [0, 56], sizes = [48, 8], strides = [1, 1]} : vector<48x64xf32> to vector<48x8xf32>
    %521 = tpu.transpose %499, [1, 0] : vector<48x8xf32> -> vector<8x48xf32>
    %cst_196 = arith.constant dense<0.000000e+00> : vector<48x48xf32>
    %522 = tpu.matmul %520, %521, %cst_196 {dimension_numbers = #tpu.dot_dimension_numbers<[1], [0], [0], [1], [0, 0, 1, 1], [], []>} : vector<48x8xf32>, vector<8x48xf32>, vector<48x48xf32> -> vector<48x48xf32>
    %cst_197 = arith.constant 0.353553385 : f32
    %523 = vector.broadcast %cst_197 : f32 to vector<48x48xf32>
    %524 = arith.mulf %522, %523 : vector<48x48xf32>
    %cst_198 = arith.constant dense<0xFF800000> : vector<48xf32>
    %525 = vector.multi_reduction <maximumf>, %524, %cst_198 [1] : vector<48x48xf32> to vector<48xf32>
    %526 = vector.shape_cast %525 : vector<48xf32> to vector<48x1xf32>
    %527 = vector.broadcast %526 : vector<48x1xf32> to vector<48x48xf32>
    %528 = arith.subf %524, %527 : vector<48x48xf32>
    %529 = math.exp %528 : vector<48x48xf32>
    %cst_199 = arith.constant dense<0.000000e+00> : vector<48xf32>
    %530 = vector.multi_reduction <add>, %529, %cst_199 [1] : vector<48x48xf32> to vector<48xf32>
    %531 = vector.shape_cast %530 : vector<48xf32> to vector<48x1xf32>
    %532 = tpu.reciprocal %531 {approx = true} : vector<48x1xf32> -> vector<48x1xf32>
    %533 = vector.broadcast %532 : vector<48x1xf32> to vector<48x48xf32>
    %534 = arith.mulf %529, %533 : vector<48x48xf32>
    %cst_200 = arith.constant dense<0.000000e+00> : vector<48x8xf32>
    %535 = tpu.matmul %534, %500, %cst_200 {dimension_numbers = #tpu.dot_dimension_numbers<[1], [0], [0], [1], [0, 0, 1, 1], [], []>} : vector<48x48xf32>, vector<48x8xf32>, vector<48x8xf32> -> vector<48x8xf32>
    %536 = vector.extract_strided_slice %338 {offsets = [56, 0], sizes = [8, 64], strides = [1, 1]} : vector<64x64xf32> to vector<8x64xf32>
    %cst_201 = arith.constant dense<0.000000e+00> : vector<48x64xf32>
    %537 = tpu.matmul %535, %536, %cst_201 {dimension_numbers = #tpu.dot_dimension_numbers<[1], [0], [0], [1], [0, 0, 1, 1], [], []>} : vector<48x8xf32>, vector<8x64xf32>, vector<48x64xf32> -> vector<48x64xf32>
    %538 = arith.addf %519, %537 : vector<48x64xf32>
    %539 = vector.broadcast %332 : vector<1x64xf32> to vector<48x64xf32>
    %540 = arith.addf %538, %539 : vector<48x64xf32>
    %cst_202 = arith.constant 1.04814708 : f32
    %541 = vector.broadcast %cst_202 : f32 to vector<48x64xf32>
    %542 = arith.mulf %541, %540 : vector<48x64xf32>
    %543 = arith.addf %52, %542 : vector<48x64xf32>
    %cst_203 = arith.constant dense<0.000000e+00> : vector<48xf32>
    %544 = vector.multi_reduction <add>, %543, %cst_203 [1] : vector<48x64xf32> to vector<48xf32>
    %545 = vector.shape_cast %544 : vector<48xf32> to vector<48x1xf32>
    %cst_204 = arith.constant 6.400000e+01 : f32
    %546 = vector.broadcast %cst_204 : f32 to vector<48x1xf32>
    %547 = arith.divf %545, %546 : vector<48x1xf32>
    %548 = vector.broadcast %547 : vector<48x1xf32> to vector<48x64xf32>
    %549 = arith.subf %543, %548 : vector<48x64xf32>
    %550 = arith.mulf %549, %549 : vector<48x64xf32>
    %cst_205 = arith.constant dense<0.000000e+00> : vector<48xf32>
    %551 = vector.multi_reduction <add>, %550, %cst_205 [1] : vector<48x64xf32> to vector<48xf32>
    %552 = vector.shape_cast %551 : vector<48xf32> to vector<48x1xf32>
    %cst_206 = arith.constant 6.400000e+01 : f32
    %553 = vector.broadcast %cst_206 : f32 to vector<48x1xf32>
    %554 = arith.divf %552, %553 : vector<48x1xf32>
    %555 = vector.broadcast %547 : vector<48x1xf32> to vector<48x64xf32>
    %556 = arith.subf %543, %555 : vector<48x64xf32>
    %cst_207 = arith.constant 9.99999974E-6 : f32
    %557 = vector.broadcast %cst_207 : f32 to vector<48x1xf32>
    %558 = arith.addf %554, %557 : vector<48x1xf32>
    %559 = math.rsqrt %558 : vector<48x1xf32>
    %560 = vector.broadcast %559 : vector<48x1xf32> to vector<48x64xf32>
    %561 = arith.mulf %556, %560 : vector<48x64xf32>
    %562 = vector.broadcast %330 : vector<1x64xf32> to vector<48x64xf32>
    %563 = arith.mulf %561, %562 : vector<48x64xf32>
    %564 = vector.broadcast %331 : vector<1x64xf32> to vector<48x64xf32>
    %565 = arith.addf %563, %564 : vector<48x64xf32>
    %cst_208 = arith.constant dense<0.000000e+00> : vector<48x256xf32>
    %566 = tpu.matmul %565, %340, %cst_208 {dimension_numbers = #tpu.dot_dimension_numbers<[1], [0], [0], [1], [0, 0, 1, 1], [], []>} : vector<48x64xf32>, vector<64x256xf32>, vector<48x256xf32> -> vector<48x256xf32>
    %567 = vector.broadcast %341 : vector<1x256xf32> to vector<48x256xf32>
    %568 = arith.addf %566, %567 : vector<48x256xf32>
    %569 = arith.negf %568 : vector<48x256xf32>
    %570 = math.exp %569 : vector<48x256xf32>
    %cst_209 = arith.constant 1.000000e+00 : f32
    %571 = vector.broadcast %cst_209 : f32 to vector<48x256xf32>
    %572 = arith.addf %571, %570 : vector<48x256xf32>
    %573 = arith.divf %571, %572 : vector<48x256xf32>
    %574 = arith.mulf %568, %573 : vector<48x256xf32>
    %cst_210 = arith.constant dense<0.000000e+00> : vector<48x64xf32>
    %575 = tpu.matmul %574, %343, %cst_210 {dimension_numbers = #tpu.dot_dimension_numbers<[1], [0], [0], [1], [0, 0, 1, 1], [], []>} : vector<48x256xf32>, vector<256x64xf32>, vector<48x64xf32> -> vector<48x64xf32>
    %576 = vector.broadcast %333 : vector<1x64xf32> to vector<48x64xf32>
    %577 = arith.addf %575, %576 : vector<48x64xf32>
    %cst_211 = arith.constant 1.04814708 : f32
    %578 = vector.broadcast %cst_211 : f32 to vector<48x64xf32>
    %579 = arith.mulf %578, %577 : vector<48x64xf32>
    %580 = arith.addf %543, %579 : vector<48x64xf32>
    %c0_212 = arith.constant 0 : index
    %c0_213 = arith.constant 0 : index
    %581 = vector.load %arg14[%c0_212, %c0_213] : memref<64x128xf32, #tpu.memory_space<vmem>>, vector<64x128xf32>
    %cst_214 = arith.constant dense<0.000000e+00> : vector<48x128xf32>
    %582 = tpu.matmul %580, %581, %cst_214 {dimension_numbers = #tpu.dot_dimension_numbers<[1], [0], [0], [1], [0, 0, 1, 1], [], []>} : vector<48x64xf32>, vector<64x128xf32>, vector<48x128xf32> -> vector<48x128xf32>
    %c2_215 = arith.constant 2 : index
    %c0_216 = arith.constant 0 : index
    %583 = vector.load %arg6[%c2_215, %c0_216] : memref<8x128xf32, #tpu.memory_space<vmem>>, vector<1x128xf32>
    %584 = vector.broadcast %583 : vector<1x128xf32> to vector<48x128xf32>
    %585 = arith.addf %582, %584 : vector<48x128xf32>
    %586 = arith.negf %585 : vector<48x128xf32>
    %587 = math.exp %586 : vector<48x128xf32>
    %cst_217 = arith.constant 1.000000e+00 : f32
    %588 = vector.broadcast %cst_217 : f32 to vector<48x128xf32>
    %589 = arith.addf %588, %587 : vector<48x128xf32>
    %590 = arith.divf %588, %589 : vector<48x128xf32>
    %591 = arith.mulf %585, %590 : vector<48x128xf32>
    %c3_218 = arith.constant 3 : index
    %c0_219 = arith.constant 0 : index
    %592 = vector.load %arg6[%c3_218, %c0_219] : memref<8x128xf32, #tpu.memory_space<vmem>>, vector<1x128xf32>
    %593 = vector.broadcast %592 : vector<1x128xf32> to vector<48x128xf32>
    %594 = arith.mulf %591, %593 : vector<48x128xf32>
    %cst_220 = arith.constant dense<0.000000e+00> : vector<48xf32>
    %595 = vector.multi_reduction <add>, %594, %cst_220 [1] : vector<48x128xf32> to vector<48xf32>
    %596 = vector.shape_cast %595 : vector<48xf32> to vector<48x1xf32>
    %c0_221 = arith.constant 0 : index
    %c0_222 = arith.constant 0 : index
    %597 = vector.load %arg15[%c0_221, %c0_222] : memref<48x12xf32, #tpu.memory_space<vmem>>, vector<48x12xf32>
    %c0_223 = arith.constant 0 : index
    %c0_224 = arith.constant 0 : index
    %c0_225 = arith.constant 0 : index
    %598 = vector.load %arg2[%c0_223, %c0_224, %c0_225] : memref<1x1x12xf32, #tpu.memory_space<vmem>>, vector<1x1x12xf32>
    %599 = vector.shape_cast %598 : vector<1x1x12xf32> to vector<1x12xf32>
    %600 = vector.broadcast %599 : vector<1x12xf32> to vector<48x12xf32>
    %601 = arith.mulf %597, %600 : vector<48x12xf32>
    %cst_226 = arith.constant dense<0.000000e+00> : vector<48xf32>
    %602 = vector.multi_reduction <add>, %601, %cst_226 [1] : vector<48x12xf32> to vector<48xf32>
    %603 = vector.shape_cast %602 : vector<48xf32> to vector<48x1xf32>
    %cst_227 = arith.constant 5.000000e-03 : f32
    %cst_228 = arith.constant 9.950000e-01 : f32
    %604 = vector.broadcast %cst_227 : f32 to vector<48x1xf32>
    %605 = arith.maximumf %604, %603 : vector<48x1xf32>
    %606 = vector.broadcast %cst_228 : f32 to vector<48x1xf32>
    %607 = arith.minimumf %606, %605 : vector<48x1xf32>
    %cst_229 = arith.constant 0.000000e+00 : f32
    %608 = vector.broadcast %cst_229 : f32 to vector<48x1xf32>
    %609 = arith.subf %608, %607 : vector<48x1xf32>
    %cst_230 = arith.constant 1.000000e+00 : f32
    %610 = vector.broadcast %cst_230 : f32 to vector<48x1xf32>
    %611 = arith.subf %607, %610 : vector<48x1xf32>
    %612 = arith.divf %609, %611 : vector<48x1xf32>
    %cst_231 = arith.constant 0.000000e+00 : f32
    %613 = vector.broadcast %cst_231 : f32 to vector<48x1xf32>
    %614 = arith.subf %613, %596 : vector<48x1xf32>
    %615 = math.exp %614 : vector<48x1xf32>
    %616 = arith.addf %612, %615 : vector<48x1xf32>
    %617 = arith.divf %612, %616 : vector<48x1xf32>
    %c0_232 = arith.constant 0 : index
    %c0_233 = arith.constant 0 : index
    %c0_234 = arith.constant 0 : index
    %618 = vector.load %arg16[%c0_232, %c0_233, %c0_234] : memref<1x48x1xf32, #tpu.memory_space<vmem>>, vector<1x48x1xf32>
    %619 = vector.shape_cast %618 : vector<1x48x1xf32> to vector<48x1xf32>
    %620 = vector.shape_cast %617 : vector<48x1xf32> to vector<1x48x1xf32>
    tpu.vector_store %arg16[%c0_232, %c0_233, %c0_234], %620 {strides = array<i32>} : memref<1x48x1xf32, #tpu.memory_space<vmem>>, vector<1x48x1xf32>,
    return
  }
  func.func @transform_0(%arg0: i32) -> (i32, i32, i32) {
    %c0_i32 = arith.constant 0 : i32
    %c0_i32_0 = arith.constant 0 : i32
    %c0_i32_1 = arith.constant 0 : i32
    return %arg0, %c0_i32, %c0_i32_0 : i32, i32, i32
  }
  func.func @transform_1(%arg0: i32) -> (i32, i32, i32) {
    %c0_i32 = arith.constant 0 : i32
    %c0_i32_0 = arith.constant 0 : i32
    %c0_i32_1 = arith.constant 0 : i32
    return %arg0, %c0_i32, %c0_i32_0 : i32, i32, i32
  }
  func.func @transform_2(%arg0: i32) -> (i32, i32, i32) {
    %c0_i32 = arith.constant 0 : i32
    %c0_i32_0 = arith.constant 0 : i32
    %c0_i32_1 = arith.constant 0 : i32
    return %arg0, %c0_i32, %c0_i32_0 : i32, i32, i32
  }
  func.func @transform_3(%arg0: i32) -> (i32, i32, i32) {
    %c0_i32 = arith.constant 0 : i32
    %c0_i32_0 = arith.constant 0 : i32
    %c0_i32_1 = arith.constant 0 : i32
    return %arg0, %c0_i32, %c0_i32_0 : i32, i32, i32
  }
  func.func @transform_4(%arg0: i32) -> (i32, i32) {
    %c0_i32 = arith.constant 0 : i32
    %c0_i32_0 = arith.constant 0 : i32
    %c0_i32_1 = arith.constant 0 : i32
    return %c0_i32, %c0_i32_0 : i32, i32
  }
  func.func @transform_5(%arg0: i32) -> (i32, i32) {
    %c0_i32 = arith.constant 0 : i32
    %c0_i32_0 = arith.constant 0 : i32
    %c0_i32_1 = arith.constant 0 : i32
    return %c0_i32, %c0_i32_0 : i32, i32
  }
  func.func @transform_6(%arg0: i32) -> (i32, i32) {
    %c0_i32 = arith.constant 0 : i32
    %c0_i32_0 = arith.constant 0 : i32
    %c0_i32_1 = arith.constant 0 : i32
    return %c0_i32, %c0_i32_0 : i32, i32
  }
  func.func @transform_7(%arg0: i32) -> (i32, i32) {
    %c0_i32 = arith.constant 0 : i32
    %c0_i32_0 = arith.constant 0 : i32
    %c0_i32_1 = arith.constant 0 : i32
    return %c0_i32, %c0_i32_0 : i32, i32
  }
  func.func @transform_8(%arg0: i32) -> (i32, i32) {
    %c0_i32 = arith.constant 0 : i32
    %c0_i32_0 = arith.constant 0 : i32
    %c0_i32_1 = arith.constant 0 : i32
    return %c0_i32, %c0_i32_0 : i32, i32
  }
  func.func @transform_9(%arg0: i32) -> (i32, i32, i32) {
    %c0_i32 = arith.constant 0 : i32
    %c0_i32_0 = arith.constant 0 : i32
    %c0_i32_1 = arith.constant 0 : i32
    %c0_i32_2 = arith.constant 0 : i32
    return %c0_i32, %c0_i32_0, %c0_i32_1 : i32, i32, i32
  }
  func.func @transform_10(%arg0: i32) -> (i32, i32, i32) {
    %c0_i32 = arith.constant 0 : i32
    %c0_i32_0 = arith.constant 0 : i32
    %c0_i32_1 = arith.constant 0 : i32
    %c0_i32_2 = arith.constant 0 : i32
    return %c0_i32, %c0_i32_0, %c0_i32_1 : i32, i32, i32
  }
  func.func @transform_11(%arg0: i32) -> (i32, i32, i32) {
    %c0_i32 = arith.constant 0 : i32
    %c0_i32_0 = arith.constant 0 : i32
    %c0_i32_1 = arith.constant 0 : i32
    %c0_i32_2 = arith.constant 0 : i32
    return %c0_i32, %c0_i32_0, %c0_i32_1 : i32, i32, i32
  }
  func.func @transform_12(%arg0: i32) -> (i32, i32, i32) {
    %c0_i32 = arith.constant 0 : i32
    %c0_i32_0 = arith.constant 0 : i32
    %c0_i32_1 = arith.constant 0 : i32
    %c0_i32_2 = arith.constant 0 : i32
    return %c0_i32, %c0_i32_0, %c0_i32_1 : i32, i32, i32
  }
  func.func @transform_13(%arg0: i32) -> (i32, i32) {
    %c0_i32 = arith.constant 0 : i32
    %c0_i32_0 = arith.constant 0 : i32
    %c0_i32_1 = arith.constant 0 : i32
    return %c0_i32, %c0_i32_0 : i32, i32
  }
  func.func @transform_14(%arg0: i32) -> (i32, i32) {
    %c0_i32 = arith.constant 0 : i32
    %c0_i32_0 = arith.constant 0 : i32
    %c0_i32_1 = arith.constant 0 : i32
    return %c0_i32, %c0_i32_0 : i32, i32
  }
  func.func @transform_15(%arg0: i32) -> (i32, i32, i32) {
    %c0_i32 = arith.constant 0 : i32
    %c0_i32_0 = arith.constant 0 : i32
    %c0_i32_1 = arith.constant 0 : i32
    return %arg0, %c0_i32, %c0_i32_0 : i32, i32, i32
  }
}

</mosaic_0001>

<llo_original>
// kernel: transformer_forward.1
$region0: #{transformer_forward.1}
  #allocation0 [shape = 'u32[]', space=smem, size = 0x4, offset = 0x4, fixed_abs, tag = 'smem constant byte address 0x4 - core index']
  #allocation1 [shape = 'u32[72,128]{1,0:T(1,128)}', space=vmem, size = 0x9000, scoped, tag = 'internal scratch']
  %s0 = inlined_call_operand.vmem [shape: f32[2,12,2], index: 0, kind: input, shape index: {}]
  %s1 = inlined_call_operand.vmem [shape: f32[2,1,12], index: 1, kind: input, shape index: {}]
  %s2 = inlined_call_operand.vmem [shape: f32[2,60,8], index: 2, kind: input, shape index: {}]
  %s3 = inlined_call_operand.vmem [shape: f32[2,12,8], index: 3, kind: input, shape index: {}]
  %s4 = inlined_call_operand.vmem [shape: f32[88,64], index: 4, kind: input, shape index: {}]
  %s5 = inlined_call_operand.vmem [shape: f32[8,128], index: 5, kind: input, shape index: {}]
  %s6 = inlined_call_operand.vmem [shape: f32[2,256], index: 6, kind: input, shape index: {}]
  %s7 = inlined_call_operand.vmem [shape: f32[16,128], index: 7, kind: input, shape index: {}]
  %s8 = inlined_call_operand.vmem [shape: f32[256,64], index: 8, kind: input, shape index: {}]
  %s9 = inlined_call_operand.vmem [shape: f32[2,64,128], index: 9, kind: input, shape index: {}]
  %s10 = inlined_call_operand.vmem [shape: f32[2,64,64], index: 10, kind: input, shape index: {}]
  %s11 = inlined_call_operand.vmem [shape: f32[2,64,256], index: 11, kind: input, shape index: {}]
  %s12 = inlined_call_operand.vmem [shape: f32[2,256,64], index: 12, kind: input, shape index: {}]
  %s13 = inlined_call_operand.vmem [shape: f32[64,128], index: 13, kind: input, shape index: {}]
  %s14 = inlined_call_operand.vmem [shape: f32[48,12], index: 14, kind: input, shape index: {}]
  %s15 = inlined_call_operand.vmem [shape: f32[2,48,1], index: 15, kind: output, shape index: {}]
  %s16 = sld [smem:[#allocation0]]
  $region93: #{transformer_forward.1} parent=0
    _
  %s18 = ssub.s32 1, %s16
  %s19 = scalar_select 0, %s18, %s16
  loop: start=0, step=1, limit=4
  $region2: #{transformer_forward.1} parent=0 // loop_pre_header
    _
  $region3: #{transformer_forward.1} parent=0 // loop_header
    %s21 = sphi 0, %s25
    %p22 = scmp.ge.s32.totalorder %s21, 4
    %s31 = sphi 0, %s33
    %s34 = sphi 0, %s31
    %s35 = sphi 0, %s34
    %s51 = sphi 0, %s35
    %s57 = sphi 0, %s59
    %s60 = sphi 0, %s57
    %s61 = sphi 0, %s60
    %s77 = sphi 0, %s61
    %s83 = sphi 0, %s85
    %s86 = sphi 0, %s83
    %s87 = sphi 0, %s86
    %s103 = sphi 0, %s87
    %s109 = sphi 0, %s111
    %s112 = sphi 0, %s109
    %s113 = sphi 0, %s112
    %s129 = sphi 0, %s113
    %s133 = sphi 0, %s133
    %s135 = sphi 0, %s133
    %s136 = sphi 0, %s135
    %s150 = sphi 0, %s136
    %s154 = sphi 0, %s154
    %s156 = sphi 0, %s154
    %s157 = sphi 0, %s156
    %s171 = sphi 0, %s157
    %s175 = sphi 0, %s175
    %s177 = sphi 0, %s175
    %s178 = sphi 0, %s177
    %s192 = sphi 0, %s178
    %s196 = sphi 0, %s196
    %s198 = sphi 0, %s196
    %s199 = sphi 0, %s198
    %s213 = sphi 0, %s199
    %s217 = sphi 0, %s217
    %s219 = sphi 0, %s217
    %s220 = sphi 0, %s219
    %s234 = sphi 0, %s220
    %s238 = sphi 0, %s238
    %s240 = sphi 0, %s238
    %s241 = sphi 0, %s240
    %s255 = sphi 0, %s241
    %s259 = sphi 0, %s259
    %s261 = sphi 0, %s259
    %s262 = sphi 0, %s261
    %s276 = sphi 0, %s262
    %s280 = sphi 0, %s280
    %s282 = sphi 0, %s280
    %s283 = sphi 0, %s282
    %s297 = sphi 0, %s283
    %s301 = sphi 0, %s301
    %s303 = sphi 0, %s301
    %s304 = sphi 0, %s303
    %s318 = sphi 0, %s304
    %s322 = sphi 0, %s322
    %s324 = sphi 0, %s322
    %s325 = sphi 0, %s324
    %s339 = sphi 0, %s325
    %s343 = sphi 0, %s343
    %s345 = sphi 0, %s343
    %s346 = sphi 0, %s345
    %s360 = sphi 0, %s346
    %s366 = sphi 0, %s368
    %s369 = sphi 0, %s366
    %s370 = sphi 0, %s369
    %s386 = sphi 0, %s370
  $region4: #{transformer_forward.1} parent=0 // loop_header_branch
    %24 = sbr.rel (%p22) target = $region8
  $region5: #{transformer_forward.1} parent=0 // loop_body
    %s26 = ssub.s32 %s21, 1
    %s27 = ssub.s32 %s21, 2
    %s28 = sadd.s32 %s21, 1
    %s29 = ssub.s32 %s21, %s28
    %p30 = scmp.eq.s32.totalorder %s29, 0
    %s32 = sadd.s32 %s31, 1
    %s33 = scalar_select %p30, %s31, %s32
    %p36 = pneg %p30
    %p37 = scmp.eq.s32.totalorder %s21, 1
    %p38 = por %p36, %p37
    %p39 = scmp.ne.s32.totalorder %s31, %s34
    %p40 = scmp.eq.s32.totalorder %s21, 0
    %p41 = por %p39, %p40
    %p42 = scmp.ne.s32.totalorder %s31, %s34
    %p43 = scmp.eq.s32.totalorder %s26, 1
    %p44 = por %p42, %p43
    %p45 = scmp.ne.s32.totalorder %s34, %s35
    %p46 = scmp.eq.s32.totalorder %s26, 0
    %p47 = por %p45, %p46
    %p48 = scmp.ne.s32.totalorder %s34, %s35
    %p49 = scmp.eq.s32.totalorder %s27, 1
    %p50 = por %p48, %p49
    %p52 = scmp.ne.s32.totalorder %s35, %s51
    %p53 = scmp.eq.s32.totalorder %s27, 0
    %p54 = por %p52, %p53
    %s55 = ssub.s32 %s21, %s28
    %p56 = scmp.eq.s32.totalorder %s55, 0
    %s58 = sadd.s32 %s57, 1
    %s59 = scalar_select %p56, %s57, %s58
    %p62 = pneg %p56
    %p63 = scmp.eq.s32.totalorder %s21, 1
    %p64 = por %p62, %p63
    %p65 = scmp.ne.s32.totalorder %s57, %s60
    %p66 = scmp.eq.s32.totalorder %s21, 0
    %p67 = por %p65, %p66
    %p68 = scmp.ne.s32.totalorder %s57, %s60
    %p69 = scmp.eq.s32.totalorder %s26, 1
    %p70 = por %p68, %p69
    %p71 = scmp.ne.s32.totalorder %s60, %s61
    %p72 = scmp.eq.s32.totalorder %s26, 0
    %p73 = por %p71, %p72
    %p74 = scmp.ne.s32.totalorder %s60, %s61
    %p75 = scmp.eq.s32.totalorder %s27, 1
    %p76 = por %p74, %p75
    %p78 = scmp.ne.s32.totalorder %s61, %s77
    %p79 = scmp.eq.s32.totalorder %s27, 0
    %p80 = por %p78, %p79
    %s81 = ssub.s32 %s21, %s28
    %p82 = scmp.eq.s32.totalorder %s81, 0
    %s84 = sadd.s32 %s83, 1
    %s85 = scalar_select %p82, %s83, %s84
    %p88 = pneg %p82
    %p89 = scmp.eq.s32.totalorder %s21, 1
    %p90 = por %p88, %p89
    %p91 = scmp.ne.s32.totalorder %s83, %s86
    %p92 = scmp.eq.s32.totalorder %s21, 0
    %p93 = por %p91, %p92
    %p94 = scmp.ne.s32.totalorder %s83, %s86
    %p95 = scmp.eq.s32.totalorder %s26, 1
    %p96 = por %p94, %p95
    %p97 = scmp.ne.s32.totalorder %s86, %s87
    %p98 = scmp.eq.s32.totalorder %s26, 0
    %p99 = por %p97, %p98
    %p100 = scmp.ne.s32.totalorder %s86, %s87
    %p101 = scmp.eq.s32.totalorder %s27, 1
    %p102 = por %p100, %p101
    %p104 = scmp.ne.s32.totalorder %s87, %s103
    %p105 = scmp.eq.s32.totalorder %s27, 0
    %p106 = por %p104, %p105
    %s107 = ssub.s32 %s21, %s28
    %p108 = scmp.eq.s32.totalorder %s107, 0
    %s110 = sadd.s32 %s109, 1
    %s111 = scalar_select %p108, %s109, %s110
    %p114 = pneg %p108
    %p115 = scmp.eq.s32.totalorder %s21, 1
    %p116 = por %p114, %p115
    %p117 = scmp.ne.s32.totalorder %s109, %s112
    %p118 = scmp.eq.s32.totalorder %s21, 0
    %p119 = por %p117, %p118
    %p120 = scmp.ne.s32.totalorder %s109, %s112
    %p121 = scmp.eq.s32.totalorder %s26, 1
    %p122 = por %p120, %p121
    %p123 = scmp.ne.s32.totalorder %s112, %s113
    %p124 = scmp.eq.s32.totalorder %s26, 0
    %p125 = por %p123, %p124
    %p126 = scmp.ne.s32.totalorder %s112, %s113
    %p127 = scmp.eq.s32.totalorder %s27, 1
    %p128 = por %p126, %p127
    %p130 = scmp.ne.s32.totalorder %s113, %s129
    %p131 = scmp.eq.s32.totalorder %s27, 0
    %p132 = por %p130, %p131
    %s134 = sadd.s32 %s133, 1
    %p137 = scmp.eq.s32.totalorder %s21, 1
    %p138 = scmp.ne.s32.totalorder %s133, %s135
    %p139 = scmp.eq.s32.totalorder %s21, 0
    %p140 = por %p138, %p139
    %p141 = scmp.ne.s32.totalorder %s133, %s135
    %p142 = scmp.eq.s32.totalorder %s26, 1
    %p143 = por %p141, %p142
    %p144 = scmp.ne.s32.totalorder %s135, %s136
    %p145 = scmp.eq.s32.totalorder %s26, 0
    %p146 = por %p144, %p145
    %p147 = scmp.ne.s32.totalorder %s135, %s136
    %p148 = scmp.eq.s32.totalorder %s27, 1
    %p149 = por %p147, %p148
    %p151 = scmp.ne.s32.totalorder %s136, %s150
    %p152 = scmp.eq.s32.totalorder %s27, 0
    %p153 = por %p151, %p152
    %s155 = sadd.s32 %s154, 1
    %p158 = scmp.eq.s32.totalorder %s21, 1
    %p159 = scmp.ne.s32.totalorder %s154, %s156
    %p160 = scmp.eq.s32.totalorder %s21, 0
    %p161 = por %p159, %p160
    %p162 = scmp.ne.s32.totalorder %s154, %s156
    %p163 = scmp.eq.s32.totalorder %s26, 1
    %p164 = por %p162, %p163
    %p165 = scmp.ne.s32.totalorder %s156, %s157
    %p166 = scmp.eq.s32.totalorder %s26, 0
    %p167 = por %p165, %p166
    %p168 = scmp.ne.s32.totalorder %s156, %s157
    %p169 = scmp.eq.s32.totalorder %s27, 1
    %p170 = por %p168, %p169
    %p172 = scmp.ne.s32.totalorder %s157, %s171
    %p173 = scmp.eq.s32.totalorder %s27, 0
    %p174 = por %p172, %p173
    %s176 = sadd.s32 %s175, 1
    %p179 = scmp.eq.s32.totalorder %s21, 1
    %p180 = scmp.ne.s32.totalorder %s175, %s177
    %p181 = scmp.eq.s32.totalorder %s21, 0
    %p182 = por %p180, %p181
    %p183 = scmp.ne.s32.totalorder %s175, %s177
    %p184 = scmp.eq.s32.totalorder %s26, 1
    %p185 = por %p183, %p184
    %p186 = scmp.ne.s32.totalorder %s177, %s178
    %p187 = scmp.eq.s32.totalorder %s26, 0
    %p188 = por %p186, %p187
    %p189 = scmp.ne.s32.totalorder %s177, %s178
    %p190 = scmp.eq.s32.totalorder %s27, 1
    %p191 = por %p189, %p190
    %p193 = scmp.ne.s32.totalorder %s178, %s192
    %p194 = scmp.eq.s32.totalorder %s27, 0
    %p195 = por %p193, %p194
    %s197 = sadd.s32 %s196, 1
    %p200 = scmp.eq.s32.totalorder %s21, 1
    %p201 = scmp.ne.s32.totalorder %s196, %s198
    %p202 = scmp.eq.s32.totalorder %s21, 0
    %p203 = por %p201, %p202
    %p204 = scmp.ne.s32.totalorder %s196, %s198
    %p205 = scmp.eq.s32.totalorder %s26, 1
    %p206 = por %p204, %p205
    %p207 = scmp.ne.s32.totalorder %s198, %s199
    %p208 = scmp.eq.s32.totalorder %s26, 0
    %p209 = por %p207, %p208
    %p210 = scmp.ne.s32.totalorder %s198, %s199
    %p211 = scmp.eq.s32.totalorder %s27, 1
    %p212 = por %p210, %p211
    %p214 = scmp.ne.s32.totalorder %s199, %s213
    %p215 = scmp.eq.s32.totalorder %s27, 0
    %p216 = por %p214, %p215
    %s218 = sadd.s32 %s217, 1
    %p221 = scmp.eq.s32.totalorder %s21, 1
    %p222 = scmp.ne.s32.totalorder %s217, %s219
    %p223 = scmp.eq.s32.totalorder %s21, 0
    %p224 = por %p222, %p223
    %p225 = scmp.ne.s32.totalorder %s217, %s219
    %p226 = scmp.eq.s32.totalorder %s26, 1
    %p227 = por %p225, %p226
    %p228 = scmp.ne.s32.totalorder %s219, %s220
    %p229 = scmp.eq.s32.totalorder %s26, 0
    %p230 = por %p228, %p229
    %p231 = scmp.ne.s32.totalorder %s219, %s220
    %p232 = scmp.eq.s32.totalorder %s27, 1
    %p233 = por %p231, %p232
    %p235 = scmp.ne.s32.totalorder %s220, %s234
    %p236 = scmp.eq.s32.totalorder %s27, 0
    %p237 = por %p235, %p236
    %s239 = sadd.s32 %s238, 1
    %p242 = scmp.eq.s32.totalorder %s21, 1
    %p243 = scmp.ne.s32.totalorder %s238, %s240
    %p244 = scmp.eq.s32.totalorder %s21, 0
    %p245 = por %p243, %p244
    %p246 = scmp.ne.s32.totalorder %s238, %s240
    %p247 = scmp.eq.s32.totalorder %s26, 1
    %p248 = por %p246, %p247
    %p249 = scmp.ne.s32.totalorder %s240, %s241
    %p250 = scmp.eq.s32.totalorder %s26, 0
    %p251 = por %p249, %p250
    %p252 = scmp.ne.s32.totalorder %s240, %s241
    %p253 = scmp.eq.s32.totalorder %s27, 1
    %p254 = por %p252, %p253
    %p256 = scmp.ne.s32.totalorder %s241, %s255
    %p257 = scmp.eq.s32.totalorder %s27, 0
    %p258 = por %p256, %p257
    %s260 = sadd.s32 %s259, 1
    %p263 = scmp.eq.s32.totalorder %s21, 1
    %p264 = scmp.ne.s32.totalorder %s259, %s261
    %p265 = scmp.eq.s32.totalorder %s21, 0
    %p266 = por %p264, %p265
    %p267 = scmp.ne.s32.totalorder %s259, %s261
    %p268 = scmp.eq.s32.totalorder %s26, 1
    %p269 = por %p267, %p268
    %p270 = scmp.ne.s32.totalorder %s261, %s262
    %p271 = scmp.eq.s32.totalorder %s26, 0
    %p272 = por %p270, %p271
    %p273 = scmp.ne.s32.totalorder %s261, %s262
    %p274 = scmp.eq.s32.totalorder %s27, 1
    %p275 = por %p273, %p274
    %p277 = scmp.ne.s32.totalorder %s262, %s276
    %p278 = scmp.eq.s32.totalorder %s27, 0
    %p279 = por %p277, %p278
    %s281 = sadd.s32 %s280, 1
    %p284 = scmp.eq.s32.totalorder %s21, 1
    %p285 = scmp.ne.s32.totalorder %s280, %s282
    %p286 = scmp.eq.s32.totalorder %s21, 0
    %p287 = por %p285, %p286
    %p288 = scmp.ne.s32.totalorder %s280, %s282
    %p289 = scmp.eq.s32.totalorder %s26, 1
    %p290 = por %p288, %p289
    %p291 = scmp.ne.s32.totalorder %s282, %s283
    %p292 = scmp.eq.s32.totalorder %s26, 0
    %p293 = por %p291, %p292
    %p294 = scmp.ne.s32.totalorder %s282, %s283
    %p295 = scmp.eq.s32.totalorder %s27, 1
    %p296 = por %p294, %p295
    %p298 = scmp.ne.s32.totalorder %s283, %s297
    %p299 = scmp.eq.s32.totalorder %s27, 0
    %p300 = por %p298, %p299
    %s302 = sadd.s32 %s301, 1
    %p305 = scmp.eq.s32.totalorder %s21, 1
    %p306 = scmp.ne.s32.totalorder %s301, %s303
    %p307 = scmp.eq.s32.totalorder %s21, 0
    %p308 = por %p306, %p307
    %p309 = scmp.ne.s32.totalorder %s301, %s303
    %p310 = scmp.eq.s32.totalorder %s26, 1
    %p311 = por %p309, %p310
    %p312 = scmp.ne.s32.totalorder %s303, %s304
    %p313 = scmp.eq.s32.totalorder %s26, 0
    %p314 = por %p312, %p313
    %p315 = scmp.ne.s32.totalorder %s303, %s304
    %p316 = scmp.eq.s32.totalorder %s27, 1
    %p317 = por %p315, %p316
    %p319 = scmp.ne.s32.totalorder %s304, %s318
    %p320 = scmp.eq.s32.totalorder %s27, 0
    %p321 = por %p319, %p320
    %s323 = sadd.s32 %s322, 1
    %p326 = scmp.eq.s32.totalorder %s21, 1
    %p327 = scmp.ne.s32.totalorder %s322, %s324
    %p328 = scmp.eq.s32.totalorder %s21, 0
    %p329 = por %p327, %p328
    %p330 = scmp.ne.s32.totalorder %s322, %s324
    %p331 = scmp.eq.s32.totalorder %s26, 1
    %p332 = por %p330, %p331
    %p333 = scmp.ne.s32.totalorder %s324, %s325
    %p334 = scmp.eq.s32.totalorder %s26, 0
    %p335 = por %p333, %p334
    %p336 = scmp.ne.s32.totalorder %s324, %s325
    %p337 = scmp.eq.s32.totalorder %s27, 1
    %p338 = por %p336, %p337
    %p340 = scmp.ne.s32.totalorder %s325, %s339
    %p341 = scmp.eq.s32.totalorder %s27, 0
    %p342 = por %p340, %p341
    %s344 = sadd.s32 %s343, 1
    %p347 = scmp.eq.s32.totalorder %s21, 1
    %p348 = scmp.ne.s32.totalorder %s343, %s345
    %p349 = scmp.eq.s32.totalorder %s21, 0
    %p350 = por %p348, %p349
    %p351 = scmp.ne.s32.totalorder %s343, %s345
    %p352 = scmp.eq.s32.totalorder %s26, 1
    %p353 = por %p351, %p352
    %p354 = scmp.ne.s32.totalorder %s345, %s346
    %p355 = scmp.eq.s32.totalorder %s26, 0
    %p356 = por %p354, %p355
    %p357 = scmp.ne.s32.totalorder %s345, %s346
    %p358 = scmp.eq.s32.totalorder %s27, 1
    %p359 = por %p357, %p358
    %p361 = scmp.ne.s32.totalorder %s346, %s360
    %p362 = scmp.eq.s32.totalorder %s27, 0
    %p363 = por %p361, %p362
    %s364 = ssub.s32 %s21, %s28
    %p365 = scmp.eq.s32.totalorder %s364, 0
    %s367 = sadd.s32 %s366, 1
    %s368 = scalar_select %p365, %s366, %s367
    %p371 = pneg %p365
    %p372 = scmp.eq.s32.totalorder %s21, 1
    %p373 = por %p371, %p372
    %p374 = scmp.ne.s32.totalorder %s366, %s369
    %p375 = scmp.eq.s32.totalorder %s21, 0
    %p376 = por %p374, %p375
    %p377 = scmp.ne.s32.totalorder %s366, %s369
    %p378 = scmp.eq.s32.totalorder %s26, 1
    %p379 = por %p377, %p378
    %p380 = scmp.ne.s32.totalorder %s369, %s370
    %p381 = scmp.eq.s32.totalorder %s26, 0
    %p382 = por %p380, %p381
    %p383 = scmp.ne.s32.totalorder %s369, %s370
    %p384 = scmp.eq.s32.totalorder %s27, 1
    %p385 = por %p383, %p384
    %p387 = scmp.ne.s32.totalorder %s370, %s386
    %p388 = scmp.eq.s32.totalorder %s27, 0
    %p389 = por %p387, %p388
    %p390 = scmp.le.s32.totalorder 1, %s21
    %p391 = scmp.lt.s32.totalorder %s21, 3
    %p392 = pnand %p390, %p391
    %p393 = pneg %p392
    // Predicated region
    $region9: #{transformer_forward.1} parent=5 // pred_check
      _
    $region10: #{transformer_forward.1} parent=5 // pred_check_branch
      %395 = sbr.rel (%p392) target = $region12
    $region11: #{transformer_forward.1} parent=5 // pred_region
      %s396 = ssub.s32 %s21, 1
      // Predicated region
      $region13: #{transformer_forward.1} parent=11 // pred_check
        %p397 = pneg %p146
      $region14: #{transformer_forward.1} parent=11 // pred_check_branch
        %399 = sbr.rel (%p397) target = $region16
      $region15: #{transformer_forward.1} parent=11 // pred_region
        _
      $region16: #{transformer_forward.1} parent=11 // pred_fallthru
        _
      // Predicated region
      $region17: #{transformer_forward.1} parent=11 // pred_check
        %p400 = pneg %p167
      $region18: #{transformer_forward.1} parent=11 // pred_check_branch
        %402 = sbr.rel (%p400) target = $region20
      $region19: #{transformer_forward.1} parent=11 // pred_region
        _
      $region20: #{transformer_forward.1} parent=11 // pred_fallthru
        _
      // Predicated region
      $region21: #{transformer_forward.1} parent=11 // pred_check
        %p403 = pneg %p188
      $region22: #{transformer_forward.1} parent=11 // pred_check_branch
        %405 = sbr.rel (%p403) target = $region24
      $region23: #{transformer_forward.1} parent=11 // pred_region
        _
      $region24: #{transformer_forward.1} parent=11 // pred_fallthru
        _
      // Predicated region
      $region25: #{transformer_forward.1} parent=11 // pred_check
        %p406 = pneg %p209
      $region26: #{transformer_forward.1} parent=11 // pred_check_branch
        %408 = sbr.rel (%p406) target = $region28
      $region27: #{transformer_forward.1} parent=11 // pred_region
        _
      $region28: #{transformer_forward.1} parent=11 // pred_fallthru
        _
      // Predicated region
      $region29: #{transformer_forward.1} parent=11 // pred_check
        %p409 = pneg %p230
      $region30: #{transformer_forward.1} parent=11 // pred_check_branch
        %411 = sbr.rel (%p409) target = $region32
      $region31: #{transformer_forward.1} parent=11 // pred_region
        _
      $region32: #{transformer_forward.1} parent=11 // pred_fallthru
        _
      // Predicated region
      $region33: #{transformer_forward.1} parent=11 // pred_check
        %p412 = pneg %p251
      $region34: #{transformer_forward.1} parent=11 // pred_check_branch
        %414 = sbr.rel (%p412) target = $region36
      $region35: #{transformer_forward.1} parent=11 // pred_region
        _
      $region36: #{transformer_forward.1} parent=11 // pred_fallthru
        _
      // Predicated region
      $region37: #{transformer_forward.1} parent=11 // pred_check
        %p415 = pneg %p272
      $region38: #{transformer_forward.1} parent=11 // pred_check_branch
        %417 = sbr.rel (%p415) target = $region40
      $region39: #{transformer_forward.1} parent=11 // pred_region
        _
      $region40: #{transformer_forward.1} parent=11 // pred_fallthru
        _
      // Predicated region
      $region41: #{transformer_forward.1} parent=11 // pred_check
        %p418 = pneg %p293
      $region42: #{transformer_forward.1} parent=11 // pred_check_branch
        %420 = sbr.rel (%p418) target = $region44
      $region43: #{transformer_forward.1} parent=11 // pred_region
        _
      $region44: #{transformer_forward.1} parent=11 // pred_fallthru
        _
      // Predicated region
      $region45: #{transformer_forward.1} parent=11 // pred_check
        %p421 = pneg %p314
      $region46: #{transformer_forward.1} parent=11 // pred_check_branch
        %423 = sbr.rel (%p421) target = $region48
      $region47: #{transformer_forward.1} parent=11 // pred_region
        _
      $region48: #{transformer_forward.1} parent=11 // pred_fallthru
        _
      // Predicated region
      $region49: #{transformer_forward.1} parent=11 // pred_check
        %p424 = pneg %p335
      $region50: #{transformer_forward.1} parent=11 // pred_check_branch
        %426 = sbr.rel (%p424) target = $region52
      $region51: #{transformer_forward.1} parent=11 // pred_region
        _
      $region52: #{transformer_forward.1} parent=11 // pred_fallthru
        _
      // Predicated region
      $region53: #{transformer_forward.1} parent=11 // pred_check
        %p427 = pneg %p356
      $region54: #{transformer_forward.1} parent=11 // pred_check_branch
        %429 = sbr.rel (%p427) target = $region56
      $region55: #{transformer_forward.1} parent=11 // pred_region
        _
      $region56: #{transformer_forward.1} parent=11 // pred_fallthru
        _
    $region12: #{transformer_forward.1} parent=5 // pred_fallthru
      _
    %p430 = scmp.lt.s32.totalorder %s21, 2
    // Predicated region
    $region57: #{transformer_forward.1} parent=5 // pred_check
      %p431 = pneg %p430
    $region58: #{transformer_forward.1} parent=5 // pred_check_branch
      %433 = sbr.rel (%p431) target = $region60
    $region59: #{transformer_forward.1} parent=5 // pred_region
      // Predicated region
      $region61: #{transformer_forward.1} parent=59 // pred_check
        %p434 = pneg %p41
      $region62: #{transformer_forward.1} parent=59 // pred_check_branch
        %436 = sbr.rel (%p434) target = $region64
      $region63: #{transformer_forward.1} parent=59 // pred_region
        %p437 = scmp.lt.s32.totalorder %s21, 1
        %s438 = scalar_select %p437, %s21, 1
        %s439 = smul.addr %s438, 2
        %s440 = smul.addr %s439, 8
        %s441 = scalar_lea.vmem %s0, %s440
      $region64: #{transformer_forward.1} parent=59 // pred_fallthru
        _
      // Predicated region
      $region65: #{transformer_forward.1} parent=59 // pred_check
        %p442 = pneg %p67
      $region66: #{transformer_forward.1} parent=59 // pred_check_branch
        %444 = sbr.rel (%p442) target = $region68
      $region67: #{transformer_forward.1} parent=59 // pred_region
        %p445 = scmp.lt.s32.totalorder %s21, 1
        %s446 = scalar_select %p445, %s21, 1
        %s447 = scalar_lea.vmem %s1, %s446
      $region68: #{transformer_forward.1} parent=59 // pred_fallthru
        _
      // Predicated region
      $region69: #{transformer_forward.1} parent=59 // pred_check
        %p448 = pneg %p93
      $region70: #{transformer_forward.1} parent=59 // pred_check_branch
        %450 = sbr.rel (%p448) target = $region72
      $region71: #{transformer_forward.1} parent=59 // pred_region
        %p451 = scmp.lt.s32.totalorder %s21, 1
        %s452 = scalar_select %p451, %s21, 1
        %s453 = smul.addr %s452, 8
        %s454 = smul.addr %s453, 8
        %s455 = scalar_lea.vmem %s2, %s454
      $region72: #{transformer_forward.1} parent=59 // pred_fallthru
        _
      // Predicated region
      $region73: #{transformer_forward.1} parent=59 // pred_check
        %p456 = pneg %p119
      $region74: #{transformer_forward.1} parent=59 // pred_check_branch
        %458 = sbr.rel (%p456) target = $region76
      $region75: #{transformer_forward.1} parent=59 // pred_region
        %p459 = scmp.lt.s32.totalorder %s21, 1
        %s460 = scalar_select %p459, %s21, 1
        %s461 = smul.addr %s460, 2
        %s462 = smul.addr %s461, 8
        %s463 = scalar_lea.vmem %s3, %s462
      $region76: #{transformer_forward.1} parent=59 // pred_fallthru
        _
    $region60: #{transformer_forward.1} parent=5 // pred_fallthru
      _
    %p464 = scmp.le.s32.totalorder 1, %s21
    %p465 = scmp.lt.s32.totalorder %s21, 3
    %p466 = pnand %p464, %p465
    %p467 = pneg %p466
    // Predicated region
    $region77: #{transformer_forward.1} parent=5 // pred_check
      _
    $region78: #{transformer_forward.1} parent=5 // pred_check_branch
      %469 = sbr.rel (%p466) target = $region80
    $region79: #{transformer_forward.1} parent=5 // pred_region
      %s470 = ssub.s32 %s21, 1
      %p471 = scmp.lt.s32.totalorder %s26, 1
      %s472 = scalar_select %p471, %s26, 1
      %s473 = smul.addr %s472, 2
      %s474 = smul.addr %s473, 8
      %s475 = scalar_lea.vmem %s0, %s474
      %p476 = pneg %p47
      %p477 = pneg %p44
      %p478 = scmp.lt.s32.totalorder %s26, 1
      %s479 = scalar_select %p478, %s26, 1
      %s480 = scalar_lea.vmem %s1, %s479
      %p481 = pneg %p73
      %p482 = pneg %p70
      %p483 = scmp.lt.s32.totalorder %s26, 1
      %s484 = scalar_select %p483, %s26, 1
      %s485 = smul.addr %s484, 8
      %s486 = smul.addr %s485, 8
      %s487 = scalar_lea.vmem %s2, %s486
      %p488 = pneg %p99
      %p489 = pneg %p96
      %p490 = scmp.lt.s32.totalorder %s26, 1
      %s491 = scalar_select %p490, %s26, 1
      %s492 = smul.addr %s491, 2
      %s493 = smul.addr %s492, 8
      %s494 = scalar_lea.vmem %s3, %s493
      %p495 = pneg %p125
      %p496 = pneg %p122
      %p497 = pneg %p146
      %p498 = pneg %p143
      %p499 = pneg %p167
      %p500 = pneg %p164
      %p501 = pneg %p188
      %p502 = pneg %p185
      %p503 = pneg %p209
      %p504 = pneg %p206
      %p505 = pneg %p230
      %p506 = pneg %p227
      %p507 = pneg %p251
      %p508 = pneg %p248
      %p509 = pneg %p272
      %p510 = pneg %p269
      %p511 = pneg %p293
      %p512 = pneg %p290
      %p513 = pneg %p314
      %p514 = pneg %p311
      %p515 = pneg %p335
      %p516 = pneg %p332
      %p517 = pneg %p356
      %p518 = pneg %p353
      %p519 = pneg %p382
      %p520 = pneg %p379
      %p521 = scmp.lt.s32.totalorder %s26, 1
      %s522 = scalar_select %p521, %s26, 1
      %s523 = smul.addr %s522, 6
      %s524 = smul.addr %s523, 8
      %s525 = scalar_lea.vmem %s15, %s524
      %p526 = scmp.lt.s32.totalorder %s26, 1
      %s527 = scalar_select %p526, %s26, 1
      %s528 = smul.addr %s527, 2
      %s529 = smul.addr %s528, 8
      %s530 = scalar_lea.vmem %s0, %s529
      %p531 = scmp.lt.s32.totalorder %s26, 1
      %s532 = scalar_select %p531, %s26, 1
      %s533 = scalar_lea.vmem %s1, %s532
      %p534 = scmp.lt.s32.totalorder %s26, 1
      %s535 = scalar_select %p534, %s26, 1
      %s536 = smul.addr %s535, 8
      %s537 = smul.addr %s536, 8
      %s538 = scalar_lea.vmem %s2, %s537
      %p539 = scmp.lt.s32.totalorder %s26, 1
      %s540 = scalar_select %p539, %s26, 1
      %s541 = smul.addr %s540, 2
      %s542 = smul.addr %s541, 8
      %s543 = scalar_lea.vmem %s3, %s542
      %p544 = scmp.lt.s32.totalorder %s26, 1
      %s545 = scalar_select %p544, %s26, 1
      %s546 = smul.addr %s545, 6
      %s547 = smul.addr %s546, 8
      %s548 = scalar_lea.vmem %s15, %s547
      %v549 = vld [vmem:[%s530] sm:$0xff]
      %v550 = vld [vmem:[%s530 + $0x8] sm:$0xf]
      %v551 = vld [vmem:[%s4 + $0x8] sm:$0xff]
      %v552 = vld [vmem:[%s4 + $0x10] sm:$0xf]
      %v553 = vld [vmem:[%s4 + $0x18] sm:$0xff]
      %v554 = vld [vmem:[%s4 + $0x20] sm:$0xff]
      %v555 = vld [vmem:[%s4 + $0x28] sm:$0xff]
      %v556 = vld [vmem:[%s4 + $0x30] sm:$0xff]
      %v557 = vld [vmem:[%s4 + $0x38] sm:$0xff]
      %v558 = vld [vmem:[%s4 + $0x40] sm:$0xff]
      %v559 = vld [vmem:[%s4] sm:$0x1]
      %561 = vset.pattern.permute.xlu0 0
      %562 = vperm.xlu0 %561, %v549
      %v563 = vpop.permute.xlu0 %562
      %566 = vset.pattern.permute.xlu0 0
      %567 = vperm.xlu0 %566, %v550
      %v568 = vpop.permute.xlu0 %567
      %v570 = vperm.slane %v559, 0
      %v571 = vmul.f32 %v563, %v570
      %v572 = vmul.f32 %v568, %v570
      %v573 = vld [vmem:[%s4 + $0x1] sm:$0x1]
      %v574 = vperm.slane %v573, 0
      %v575 = vadd.f32 %v571, %v574
      %v576 = vadd.f32 %v572, %v574
      %v577 = vadd.f32 %v575, %v551
      %v578 = vadd.f32 %v576, %v552
      %v579 = vld [vmem:[%s4 + $0x2] sm:$0x1]
      %580 = vset.pattern.permute.xlu0 1
      %581 = vperm.xlu0 %580, %v549
      %v582 = vpop.permute.xlu0 %581
      %584 = vset.pattern.permute.xlu0 1
      %585 = vperm.xlu0 %584, %v550
      %v586 = vpop.permute.xlu0 %585
      %v588 = vperm.slane %v579, 0
      %v589 = vmul.f32 %v582, %v588
      %v590 = vmul.f32 %v586, %v588
      %v591 = vld [vmem:[%s4 + $0x3] sm:$0x1]
      %v592 = vperm.slane %v591, 0
      %v593 = vadd.f32 %v589, %v592
      %v594 = vadd.f32 %v590, %v592
      %v595 = vadd.f32 %v593, %v551
      %v596 = vadd.f32 %v594, %v552
      %v597 = vld [vmem:[%s538] sm:$0xff]
      %v598 = vld [vmem:[%s538 + $0x8] sm:$0xff]
      %v599 = vld [vmem:[%s538 + $0x10] sm:$0xff]
      %v600 = vld [vmem:[%s538 + $0x18] sm:$0xff]
      %v601 = vld [vmem:[%s538 + $0x20] sm:$0xff]
      %v602 = vld [vmem:[%s538 + $0x28] sm:$0xff]
      %v603 = vld [vmem:[%s538 + $0x30] sm:$0xff]
      %v604 = vld [vmem:[%s538 + $0x38] sm:$0xf]
      %v605 = vld [vmem:[%s7] sm:$0xff]
      %v606 = vld [vmem:[%s5] sm:$0x1]
      %v607 = vperm.slane %v606, 0
      %vm608 = vcmask 64512
      %v610 = vsel %vm608, %v597, 0
      %v613 = vsel %vm608, %v598, 0
      %v616 = vsel %vm608, %v599, 0
      %v619 = vsel %vm608, %v600, 0
      %v622 = vsel %vm608, %v601, 0
      %v625 = vsel %vm608, %v602, 0
      %v628 = vsel %vm608, %v603, 0
      %v631 = vsel %vm608, %v604, 0
      %633 = vmatpush.msra.mxu0 0.0
      %634 = vmatpush.msra.mxu0 0.0
      %635 = vmatpush.msra.mxu0 0.0
      %636 = vmatpush.msra.mxu0 0.0
      %637 = vmatpush.msra.mxu0 0.0
      %638 = vmatpush.msra.mxu0 0.0
      %639 = vmatpush.msra.mxu0 0.0
      %640 = vmatpush.msra.mxu0 0.0
      %641 = vmatpush.msra.mxu0 0.0
      %642 = vmatpush.msra.mxu0 0.0
      %643 = vmatpush.msra.mxu0 0.0
      %644 = vmatpush.msra.mxu0 0.0
      %645 = vmatpush.msra.mxu0 0.0
      %646 = vmatpush.msra.mxu0 0.0
      %647 = vmatpush.msra.mxu0 0.0
      %648 = vmatpush.msra.mxu0 %v605
      %649 = vmatmul.f32.gmra.mxu0 %v610
      %v650 = vpop.f32.mrf.mxu0
      %v651 = vadd.f32 %v607, %v650
      %652 = vmatmul.f32.gmra.mxu0 %v613
      %v653 = vpop.f32.mrf.mxu0
      %v654 = vadd.f32 %v607, %v653
      %655 = vmatmul.f32.gmra.mxu0 %v616
      %v656 = vpop.f32.mrf.mxu0
      %v657 = vadd.f32 %v607, %v656
      %658 = vmatmul.f32.gmra.mxu0 %v619
      %v659 = vpop.f32.mrf.mxu0
      %v660 = vadd.f32 %v607, %v659
      %661 = vmatmul.f32.gmra.mxu0 %v622
      %v662 = vpop.f32.mrf.mxu0
      %v663 = vadd.f32 %v607, %v662
      %664 = vmatmul.f32.gmra.mxu0 %v625
      %v665 = vpop.f32.mrf.mxu0
      %v666 = vadd.f32 %v607, %v665
      %667 = vmatmul.f32.gmra.mxu0 %v628
      %v668 = vpop.f32.mrf.mxu0
      %v669 = vadd.f32 %v607, %v668
      %670 = vmatmul.f32.gmra.mxu0 %v631
      %v671 = vpop.f32.mrf.mxu0
      %v672 = vadd.f32 %v607, %v671
      %673 = vdwg.mxu0
      %v674 = vxor.u32 %v651, 2147483648
      %v675 = vxor.u32 %v654, 2147483648
      %v676 = vxor.u32 %v657, 2147483648
      %v677 = vxor.u32 %v660, 2147483648
      %v678 = vxor.u32 %v663, 2147483648
      %v679 = vxor.u32 %v666, 2147483648
      %v680 = vxor.u32 %v669, 2147483648
      %v681 = vxor.u32 %v672, 2147483648
      %v682 = vmul.f32 %v674, 1.442695
      %v683 = vpow.pop %v682
      %v684 = vmul.f32 %v675, 1.442695
      %v685 = vpow.pop %v684
      %v686 = vmul.f32 %v676, 1.442695
      %v687 = vpow.pop %v686
      %v688 = vmul.f32 %v677, 1.442695
      %v689 = vpow.pop %v688
      %v690 = vmul.f32 %v678, 1.442695
      %v691 = vpow.pop %v690
      %v692 = vmul.f32 %v679, 1.442695
      %v693 = vpow.pop %v692
      %v694 = vmul.f32 %v680, 1.442695
      %v695 = vpow.pop %v694
      %v696 = vmul.f32 %v681, 1.442695
      %v697 = vpow.pop %v696
      %v698 = vadd.f32 %v683, 1.0
      %v699 = vadd.f32 %v685, 1.0
      %v700 = vadd.f32 %v687, 1.0
      %v701 = vadd.f32 %v689, 1.0
      %v702 = vadd.f32 %v691, 1.0
      %v703 = vadd.f32 %v693, 1.0
      %v704 = vadd.f32 %v695, 1.0
      %v705 = vadd.f32 %v697, 1.0
      %v706 = vrcp.pop %v698
      %v707 = vmul.f32 %v698, %v706
      %v708 = vsub.f32 1.0, %v707
      %v709 = vmul.f32 %v706, %v708
      %v710 = vadd.f32 %v706, %v709
      %vm711 = vweird.f32 %v698
      %vm712 = vweird.f32 %v706
      %vm713 = vmor %vm711, %vm712
      %v714 = vsel %vm713, %v706, %v710
      %v715 = vand.u32 2147483647, %v698
      %vm716 = vcmp.eq.f32.partialorder %v715, 8.507059e+37
      %v717 = vand.u32 %v698, 2147483648
      %v718 = vor.u32 1.1754944e-38, %v717
      %v719 = vsel %vm716, %v718, %v714
      %v720 = vmul.f32 1.0, %v719
      %v721 = vrcp.pop %v699
      %v722 = vmul.f32 %v699, %v721
      %v723 = vsub.f32 1.0, %v722
      %v724 = vmul.f32 %v721, %v723
      %v725 = vadd.f32 %v721, %v724
      %vm726 = vweird.f32 %v699
      %vm727 = vweird.f32 %v721
      %vm728 = vmor %vm726, %vm727
      %v729 = vsel %vm728, %v721, %v725
      %v730 = vand.u32 2147483647, %v699
      %vm731 = vcmp.eq.f32.partialorder %v730, 8.507059e+37
      %v732 = vand.u32 %v699, 2147483648
      %v733 = vor.u32 1.1754944e-38, %v732
      %v734 = vsel %vm731, %v733, %v729
      %v735 = vmul.f32 1.0, %v734
      %v736 = vrcp.pop %v700
      %v737 = vmul.f32 %v700, %v736
      %v738 = vsub.f32 1.0, %v737
      %v739 = vmul.f32 %v736, %v738
      %v740 = vadd.f32 %v736, %v739
      %vm741 = vweird.f32 %v700
      %vm742 = vweird.f32 %v736
      %vm743 = vmor %vm741, %vm742
      %v744 = vsel %vm743, %v736, %v740
      %v745 = vand.u32 2147483647, %v700
      %vm746 = vcmp.eq.f32.partialorder %v745, 8.507059e+37
      %v747 = vand.u32 %v700, 2147483648
      %v748 = vor.u32 1.1754944e-38, %v747
      %v749 = vsel %vm746, %v748, %v744
      %v750 = vmul.f32 1.0, %v749
      %v751 = vrcp.pop %v701
      %v752 = vmul.f32 %v701, %v751
      %v753 = vsub.f32 1.0, %v752
      %v754 = vmul.f32 %v751, %v753
      %v755 = vadd.f32 %v751, %v754
      %vm756 = vweird.f32 %v701
      %vm757 = vweird.f32 %v751
      %vm758 = vmor %vm756, %vm757
      %v759 = vsel %vm758, %v751, %v755
      %v760 = vand.u32 2147483647, %v701
      %vm761 = vcmp.eq.f32.partialorder %v760, 8.507059e+37
      %v762 = vand.u32 %v701, 2147483648
      %v763 = vor.u32 1.1754944e-38, %v762
      %v764 = vsel %vm761, %v763, %v759
      %v765 = vmul.f32 1.0, %v764
      %v766 = vrcp.pop %v702
      %v767 = vmul.f32 %v702, %v766
      %v768 = vsub.f32 1.0, %v767
      %v769 = vmul.f32 %v766, %v768
      %v770 = vadd.f32 %v766, %v769
      %vm771 = vweird.f32 %v702
      %vm772 = vweird.f32 %v766
      %vm773 = vmor %vm771, %vm772
      %v774 = vsel %vm773, %v766, %v770
      %v775 = vand.u32 2147483647, %v702
      %vm776 = vcmp.eq.f32.partialorder %v775, 8.507059e+37
      %v777 = vand.u32 %v702, 2147483648
      %v778 = vor.u32 1.1754944e-38, %v777
      %v779 = vsel %vm776, %v778, %v774
      %v780 = vmul.f32 1.0, %v779
      %v781 = vrcp.pop %v703
      %v782 = vmul.f32 %v703, %v781
      %v783 = vsub.f32 1.0, %v782
      %v784 = vmul.f32 %v781, %v783
      %v785 = vadd.f32 %v781, %v784
      %vm786 = vweird.f32 %v703
      %vm787 = vweird.f32 %v781
      %vm788 = vmor %vm786, %vm787
      %v789 = vsel %vm788, %v781, %v785
      %v790 = vand.u32 2147483647, %v703
      %vm791 = vcmp.eq.f32.partialorder %v790, 8.507059e+37
      %v792 = vand.u32 %v703, 2147483648
      %v793 = vor.u32 1.1754944e-38, %v792
      %v794 = vsel %vm791, %v793, %v789
      %v795 = vmul.f32 1.0, %v794
      %v796 = vrcp.pop %v704
      %v797 = vmul.f32 %v704, %v796
      %v798 = vsub.f32 1.0, %v797
      %v799 = vmul.f32 %v796, %v798
      %v800 = vadd.f32 %v796, %v799
      %vm801 = vweird.f32 %v704
      %vm802 = vweird.f32 %v796
      %vm803 = vmor %vm801, %vm802
      %v804 = vsel %vm803, %v796, %v800
      %v805 = vand.u32 2147483647, %v704
      %vm806 = vcmp.eq.f32.partialorder %v805, 8.507059e+37
      %v807 = vand.u32 %v704, 2147483648
      %v808 = vor.u32 1.1754944e-38, %v807
      %v809 = vsel %vm806, %v808, %v804
      %v810 = vmul.f32 1.0, %v809
      %v811 = vrcp.pop %v705
      %v812 = vmul.f32 %v705, %v811
      %v813 = vsub.f32 1.0, %v812
      %v814 = vmul.f32 %v811, %v813
      %v815 = vadd.f32 %v811, %v814
      %vm816 = vweird.f32 %v705
      %vm817 = vweird.f32 %v811
      %vm818 = vmor %vm816, %vm817
      %v819 = vsel %vm818, %v811, %v815
      %v820 = vand.u32 2147483647, %v705
      %vm821 = vcmp.eq.f32.partialorder %v820, 8.507059e+37
      %v822 = vand.u32 %v705, 2147483648
      %v823 = vor.u32 1.1754944e-38, %v822
      %v824 = vsel %vm821, %v823, %v819
      %v825 = vmul.f32 1.0, %v824
      %v826 = vmul.f32 %v651, %v720
      %v827 = vmul.f32 %v654, %v735
      %v828 = vmul.f32 %v657, %v750
      %v829 = vmul.f32 %v660, %v765
      %v830 = vmul.f32 %v663, %v780
      %v831 = vmul.f32 %v666, %v795
      %v832 = vmul.f32 %v669, %v810
      %v833 = vmul.f32 %v672, %v825
      %v834 = vld [vmem:[%s8] sm:$0xff]
      %v835 = vld [vmem:[%s8 + $0x8] sm:$0xff]
      %v836 = vld [vmem:[%s8 + $0x10] sm:$0xff]
      %v837 = vld [vmem:[%s8 + $0x18] sm:$0xff]
      %v838 = vld [vmem:[%s8 + $0x20] sm:$0xff]
      %v839 = vld [vmem:[%s8 + $0x28] sm:$0xff]
      %v840 = vld [vmem:[%s8 + $0x30] sm:$0xff]
      %v841 = vld [vmem:[%s8 + $0x38] sm:$0xff]
      %v842 = vld [vmem:[%s8 + $0x40] sm:$0xff]
      %v843 = vld [vmem:[%s8 + $0x48] sm:$0xff]
      %v844 = vld [vmem:[%s8 + $0x50] sm:$0xff]
      %v845 = vld [vmem:[%s8 + $0x58] sm:$0xff]
      %v846 = vld [vmem:[%s8 + $0x60] sm:$0xff]
      %v847 = vld [vmem:[%s8 + $0x68] sm:$0xff]
      %v848 = vld [vmem:[%s8 + $0x70] sm:$0xff]
      %v849 = vld [vmem:[%s8 + $0x78] sm:$0xff]
      %v850 = vld [vmem:[%s4 + $0x6] sm:$0x1]
      %v851 = vperm.slane %v850, 0
      %852 = vmatpush.msra.mxu0 %v849
      %853 = vmatpush.msra.mxu0 %v848
      %854 = vmatpush.msra.mxu0 %v847
      %855 = vmatpush.msra.mxu0 %v846
      %856 = vmatpush.msra.mxu0 %v845
      %857 = vmatpush.msra.mxu0 %v844
      %858 = vmatpush.msra.mxu0 %v843
      %859 = vmatpush.msra.mxu0 %v842
      %860 = vmatpush.msra.mxu0 %v841
      %861 = vmatpush.msra.mxu0 %v840
      %862 = vmatpush.msra.mxu0 %v839
      %863 = vmatpush.msra.mxu0 %v838
      %864 = vmatpush.msra.mxu0 %v837
      %865 = vmatpush.msra.mxu0 %v836
      %866 = vmatpush.msra.mxu0 %v835
      %867 = vmatpush.msra.mxu0 %v834
      %868 = vmatmul.f32.gmra.mxu0 %v826
      %v869 = vpop.f32.mrf.mxu0
      %v870 = vadd.f32 %v851, %v869
      %871 = vmatmul.f32.gmra.mxu0 %v827
      %v872 = vpop.f32.mrf.mxu0
      %v873 = vadd.f32 %v851, %v872
      %874 = vmatmul.f32.gmra.mxu0 %v828
      %v875 = vpop.f32.mrf.mxu0
      %v876 = vadd.f32 %v851, %v875
      %877 = vmatmul.f32.gmra.mxu0 %v829
      %v878 = vpop.f32.mrf.mxu0
      %v879 = vadd.f32 %v851, %v878
      %880 = vmatmul.f32.gmra.mxu0 %v830
      %v881 = vpop.f32.mrf.mxu0
      %v882 = vadd.f32 %v851, %v881
      %883 = vmatmul.f32.gmra.mxu0 %v831
      %v884 = vpop.f32.mrf.mxu0
      %v885 = vadd.f32 %v851, %v884
      %886 = vmatmul.f32.gmra.mxu0 %v832
      %v887 = vpop.f32.mrf.mxu0
      %v888 = vadd.f32 %v851, %v887
      %889 = vmatmul.f32.gmra.mxu0 %v833
      %v890 = vpop.f32.mrf.mxu0
      %v891 = vadd.f32 %v851, %v890
      %892 = vdwg.mxu0
      %v893 = vxor.u32 %v870, 2147483648
      %v894 = vxor.u32 %v873, 2147483648
      %v895 = vxor.u32 %v876, 2147483648
      %v896 = vxor.u32 %v879, 2147483648
      %v897 = vxor.u32 %v882, 2147483648
      %v898 = vxor.u32 %v885, 2147483648
      %v899 = vxor.u32 %v888, 2147483648
      %v900 = vxor.u32 %v891, 2147483648
      %v901 = vmul.f32 %v893, 1.442695
      %v902 = vpow.pop %v901
      %v903 = vmul.f32 %v894, 1.442695
      %v904 = vpow.pop %v903
      %v905 = vmul.f32 %v895, 1.442695
      %v906 = vpow.pop %v905
      %v907 = vmul.f32 %v896, 1.442695
      %v908 = vpow.pop %v907
      %v909 = vmul.f32 %v897, 1.442695
      %v910 = vpow.pop %v909
      %v911 = vmul.f32 %v898, 1.442695
      %v912 = vpow.pop %v911
      %v913 = vmul.f32 %v899, 1.442695
      %v914 = vpow.pop %v913
      %v915 = vmul.f32 %v900, 1.442695
      %v916 = vpow.pop %v915
      %v917 = vadd.f32 %v902, 1.0
      %v918 = vadd.f32 %v904, 1.0
      %v919 = vadd.f32 %v906, 1.0
      %v920 = vadd.f32 %v908, 1.0
      %v921 = vadd.f32 %v910, 1.0
      %v922 = vadd.f32 %v912, 1.0
      %v923 = vadd.f32 %v914, 1.0
      %v924 = vadd.f32 %v916, 1.0
      %v925 = vrcp.pop %v917
      %v926 = vmul.f32 %v917, %v925
      %v927 = vsub.f32 1.0, %v926
      %v928 = vmul.f32 %v925, %v927
      %v929 = vadd.f32 %v925, %v928
      %vm930 = vweird.f32 %v917
      %vm931 = vweird.f32 %v925
      %vm932 = vmor %vm930, %vm931
      %v933 = vsel %vm932, %v925, %v929
      %v934 = vand.u32 2147483647, %v917
      %vm935 = vcmp.eq.f32.partialorder %v934, 8.507059e+37
      %v936 = vand.u32 %v917, 2147483648
      %v937 = vor.u32 1.1754944e-38, %v936
      %v938 = vsel %vm935, %v937, %v933
      %v939 = vmul.f32 1.0, %v938
      %v940 = vrcp.pop %v918
      %v941 = vmul.f32 %v918, %v940
      %v942 = vsub.f32 1.0, %v941
      %v943 = vmul.f32 %v940, %v942
      %v944 = vadd.f32 %v940, %v943
      %vm945 = vweird.f32 %v918
      %vm946 = vweird.f32 %v940
      %vm947 = vmor %vm945, %vm946
      %v948 = vsel %vm947, %v940, %v944
      %v949 = vand.u32 2147483647, %v918
      %vm950 = vcmp.eq.f32.partialorder %v949, 8.507059e+37
      %v951 = vand.u32 %v918, 2147483648
      %v952 = vor.u32 1.1754944e-38, %v951
      %v953 = vsel %vm950, %v952, %v948
      %v954 = vmul.f32 1.0, %v953
      %v955 = vrcp.pop %v919
      %v956 = vmul.f32 %v919, %v955
      %v957 = vsub.f32 1.0, %v956
      %v958 = vmul.f32 %v955, %v957
      %v959 = vadd.f32 %v955, %v958
      %vm960 = vweird.f32 %v919
      %vm961 = vweird.f32 %v955
      %vm962 = vmor %vm960, %vm961
      %v963 = vsel %vm962, %v955, %v959
      %v964 = vand.u32 2147483647, %v919
      %vm965 = vcmp.eq.f32.partialorder %v964, 8.507059e+37
      %v966 = vand.u32 %v919, 2147483648
      %v967 = vor.u32 1.1754944e-38, %v966
      %v968 = vsel %vm965, %v967, %v963
      %v969 = vmul.f32 1.0, %v968
      %v970 = vrcp.pop %v920
      %v971 = vmul.f32 %v920, %v970
      %v972 = vsub.f32 1.0, %v971
      %v973 = vmul.f32 %v970, %v972
      %v974 = vadd.f32 %v970, %v973
      %vm975 = vweird.f32 %v920
      %vm976 = vweird.f32 %v970
      %vm977 = vmor %vm975, %vm976
      %v978 = vsel %vm977, %v970, %v974
      %v979 = vand.u32 2147483647, %v920
      %vm980 = vcmp.eq.f32.partialorder %v979, 8.507059e+37
      %v981 = vand.u32 %v920, 2147483648
      %v982 = vor.u32 1.1754944e-38, %v981
      %v983 = vsel %vm980, %v982, %v978
      %v984 = vmul.f32 1.0, %v983
      %v985 = vrcp.pop %v921
      %v986 = vmul.f32 %v921, %v985
      %v987 = vsub.f32 1.0, %v986
      %v988 = vmul.f32 %v985, %v987
      %v989 = vadd.f32 %v985, %v988
      %vm990 = vweird.f32 %v921
      %vm991 = vweird.f32 %v985
      %vm992 = vmor %vm990, %vm991
      %v993 = vsel %vm992, %v985, %v989
      %v994 = vand.u32 2147483647, %v921
      %vm995 = vcmp.eq.f32.partialorder %v994, 8.507059e+37
      %v996 = vand.u32 %v921, 2147483648
      %v997 = vor.u32 1.1754944e-38, %v996
      %v998 = vsel %vm995, %v997, %v993
      %v999 = vmul.f32 1.0, %v998
      %v1000 = vrcp.pop %v922
      %v1001 = vmul.f32 %v922, %v1000
      %v1002 = vsub.f32 1.0, %v1001
      %v1003 = vmul.f32 %v1000, %v1002
      %v1004 = vadd.f32 %v1000, %v1003
      %vm1005 = vweird.f32 %v922
      %vm1006 = vweird.f32 %v1000
      %vm1007 = vmor %vm1005, %vm1006
      %v1008 = vsel %vm1007, %v1000, %v1004
      %v1009 = vand.u32 2147483647, %v922
      %vm1010 = vcmp.eq.f32.partialorder %v1009, 8.507059e+37
      %v1011 = vand.u32 %v922, 2147483648
      %v1012 = vor.u32 1.1754944e-38, %v1011
      %v1013 = vsel %vm1010, %v1012, %v1008
      %v1014 = vmul.f32 1.0, %v1013
      %v1015 = vrcp.pop %v923
      %v1016 = vmul.f32 %v923, %v1015
      %v1017 = vsub.f32 1.0, %v1016
      %v1018 = vmul.f32 %v1015, %v1017
      %v1019 = vadd.f32 %v1015, %v1018
      %vm1020 = vweird.f32 %v923
      %vm1021 = vweird.f32 %v1015
      %vm1022 = vmor %vm1020, %vm1021
      %v1023 = vsel %vm1022, %v1015, %v1019
      %v1024 = vand.u32 2147483647, %v923
      %vm1025 = vcmp.eq.f32.partialorder %v1024, 8.507059e+37
      %v1026 = vand.u32 %v923, 2147483648
      %v1027 = vor.u32 1.1754944e-38, %v1026
      %v1028 = vsel %vm1025, %v1027, %v1023
      %v1029 = vmul.f32 1.0, %v1028
      %v1030 = vrcp.pop %v924
      %v1031 = vmul.f32 %v924, %v1030
      %v1032 = vsub.f32 1.0, %v1031
      %v1033 = vmul.f32 %v1030, %v1032
      %v1034 = vadd.f32 %v1030, %v1033
      %vm1035 = vweird.f32 %v924
      %vm1036 = vweird.f32 %v1030
      %vm1037 = vmor %vm1035, %vm1036
      %v1038 = vsel %vm1037, %v1030, %v1034
      %v1039 = vand.u32 2147483647, %v924
      %vm1040 = vcmp.eq.f32.partialorder %v1039, 8.507059e+37
      %v1041 = vand.u32 %v924, 2147483648
      %v1042 = vor.u32 1.1754944e-38, %v1041
      %v1043 = vsel %vm1040, %v1042, %v1038
      %v1044 = vmul.f32 1.0, %v1043
      %v1045 = vmul.f32 %v870, %v939
      %v1046 = vmul.f32 %v873, %v954
      %v1047 = vmul.f32 %v876, %v969
      %v1048 = vmul.f32 %v879, %v984
      %v1049 = vmul.f32 %v882, %v999
      %v1050 = vmul.f32 %v885, %v1014
      %v1051 = vmul.f32 %v888, %v1029
      %v1052 = vmul.f32 %v891, %v1044
      %v1053 = vld [vmem:[%s4 + $0x4] sm:$0x1]
      %v1054 = vperm.slane %v1053, 0
      %v1055 = vadd.f32 %v1045, %v1054
      %v1056 = vadd.f32 %v1046, %v1054
      %v1057 = vadd.f32 %v1055, %v551
      %v1058 = vadd.f32 %v1056, %v552
      %vm1065 = vcmask 1043456
      %v1066 = vrot.slane %v553, 4
      %v1067 = vrot.slane %v554, 4
      %v1068 = vsel %vm1065, %v1066, %v1067
      %v1069 = vrot.slane %v555, 4
      %v1070 = vsel %vm1065, %v1067, %v1069
      %v1071 = vrot.slane %v556, 4
      %v1072 = vsel %vm1065, %v1069, %v1071
      %v1073 = vrot.slane %v557, 4
      %v1074 = vsel %vm1065, %v1071, %v1073
      %v1075 = vrot.slane %v558, 4
      %v1076 = vsel %vm1065, %v1073, %v1075
      %v1084 = vadd.f32 %v1046, %v1066
      %v1085 = vadd.f32 %v1047, %v1068
      %v1086 = vadd.f32 %v1048, %v1070
      %v1087 = vadd.f32 %v1049, %v1072
      %v1088 = vadd.f32 %v1050, %v1074
      %v1089 = vadd.f32 %v1051, %v1076
      %v1090 = vadd.f32 %v1052, %v1075
      %v1091 = vld [vmem:[%s543] sm:$0xff]
      %v1092 = vld [vmem:[%s543 + $0x8] sm:$0xf]
      %v1093 = vld [vmem:[%s7 + $0x8] sm:$0xff]
      %v1094 = vld [vmem:[%s5 + $0x1] sm:$0x1]
      %v1095 = vperm.slane %v1094, 0
      %v1097 = vsel %vm608, %v1091, 0
      %v1100 = vsel %vm608, %v1092, 0
      %1102 = vmatpush.msra.mxu0 0.0
      %1103 = vmatpush.msra.mxu0 0.0
      %1104 = vmatpush.msra.mxu0 0.0
      %1105 = vmatpush.msra.mxu0 0.0
      %1106 = vmatpush.msra.mxu0 0.0
      %1107 = vmatpush.msra.mxu0 0.0
      %1108 = vmatpush.msra.mxu0 0.0
      %1109 = vmatpush.msra.mxu0 0.0
      %1110 = vmatpush.msra.mxu0 0.0
      %1111 = vmatpush.msra.mxu0 0.0
      %1112 = vmatpush.msra.mxu0 0.0
      %1113 = vmatpush.msra.mxu0 0.0
      %1114 = vmatpush.msra.mxu0 0.0
      %1115 = vmatpush.msra.mxu0 0.0
      %1116 = vmatpush.msra.mxu0 0.0
      %1117 = vmatpush.msra.mxu0 %v1093
      %1118 = vmatmul.f32.gmra.mxu0 %v1097
      %v1119 = vpop.f32.mrf.mxu0
      %v1120 = vadd.f32 %v1095, %v1119
      %1121 = vmatmul.f32.gmra.mxu0 %v1100
      %v1122 = vpop.f32.mrf.mxu0
      %v1123 = vadd.f32 %v1095, %v1122
      %1124 = vdwg.mxu0
      %v1125 = vxor.u32 %v1120, 2147483648
      %v1126 = vxor.u32 %v1123, 2147483648
      %v1127 = vmul.f32 %v1125, 1.442695
      %v1128 = vpow.pop %v1127
      %v1129 = vmul.f32 %v1126, 1.442695
      %v1130 = vpow.pop %v1129
      %v1131 = vadd.f32 %v1128, 1.0
      %v1132 = vadd.f32 %v1130, 1.0
      %v1133 = vrcp.pop %v1131
      %v1134 = vmul.f32 %v1131, %v1133
      %v1135 = vsub.f32 1.0, %v1134
      %v1136 = vmul.f32 %v1133, %v1135
      %v1137 = vadd.f32 %v1133, %v1136
      %vm1138 = vweird.f32 %v1131
      %vm1139 = vweird.f32 %v1133
      %vm1140 = vmor %vm1138, %vm1139
      %v1141 = vsel %vm1140, %v1133, %v1137
      %v1142 = vand.u32 2147483647, %v1131
      %vm1143 = vcmp.eq.f32.partialorder %v1142, 8.507059e+37
      %v1144 = vand.u32 %v1131, 2147483648
      %v1145 = vor.u32 1.1754944e-38, %v1144
      %v1146 = vsel %vm1143, %v1145, %v1141
      %v1147 = vmul.f32 1.0, %v1146
      %v1148 = vrcp.pop %v1132
      %v1149 = vmul.f32 %v1132, %v1148
      %v1150 = vsub.f32 1.0, %v1149
      %v1151 = vmul.f32 %v1148, %v1150
      %v1152 = vadd.f32 %v1148, %v1151
      %vm1153 = vweird.f32 %v1132
      %vm1154 = vweird.f32 %v1148
      %vm1155 = vmor %vm1153, %vm1154
      %v1156 = vsel %vm1155, %v1148, %v1152
      %v1157 = vand.u32 2147483647, %v1132
      %vm1158 = vcmp.eq.f32.partialorder %v1157, 8.507059e+37
      %v1159 = vand.u32 %v1132, 2147483648
      %v1160 = vor.u32 1.1754944e-38, %v1159
      %v1161 = vsel %vm1158, %v1160, %v1156
      %v1162 = vmul.f32 1.0, %v1161
      %v1163 = vmul.f32 %v1120, %v1147
      %v1164 = vmul.f32 %v1123, %v1162
      %v1165 = vld [vmem:[%s8 + $0x80] sm:$0xff]
      %v1166 = vld [vmem:[%s8 + $0x88] sm:$0xff]
      %v1167 = vld [vmem:[%s8 + $0x90] sm:$0xff]
      %v1168 = vld [vmem:[%s8 + $0x98] sm:$0xff]
      %v1169 = vld [vmem:[%s8 + $0xa0] sm:$0xff]
      %v1170 = vld [vmem:[%s8 + $0xa8] sm:$0xff]
      %v1171 = vld [vmem:[%s8 + $0xb0] sm:$0xff]
      %v1172 = vld [vmem:[%s8 + $0xb8] sm:$0xff]
      %v1173 = vld [vmem:[%s8 + $0xc0] sm:$0xff]
      %v1174 = vld [vmem:[%s8 + $0xc8] sm:$0xff]
      %v1175 = vld [vmem:[%s8 + $0xd0] sm:$0xff]
      %v1176 = vld [vmem:[%s8 + $0xd8] sm:$0xff]
      %v1177 = vld [vmem:[%s8 + $0xe0] sm:$0xff]
      %v1178 = vld [vmem:[%s8 + $0xe8] sm:$0xff]
      %v1179 = vld [vmem:[%s8 + $0xf0] sm:$0xff]
      %v1180 = vld [vmem:[%s8 + $0xf8] sm:$0xff]
      %v1181 = vld [vmem:[%s4 + $0x7] sm:$0x1]
      %v1182 = vperm.slane %v1181, 0
      %1183 = vmatpush.msra.mxu0 %v1180
      %1184 = vmatpush.msra.mxu0 %v1179
      %1185 = vmatpush.msra.mxu0 %v1178
      %1186 = vmatpush.msra.mxu0 %v1177
      %1187 = vmatpush.msra.mxu0 %v1176
      %1188 = vmatpush.msra.mxu0 %v1175
      %1189 = vmatpush.msra.mxu0 %v1174
      %1190 = vmatpush.msra.mxu0 %v1173
      %1191 = vmatpush.msra.mxu0 %v1172
      %1192 = vmatpush.msra.mxu0 %v1171
      %1193 = vmatpush.msra.mxu0 %v1170
      %1194 = vmatpush.msra.mxu0 %v1169
      %1195 = vmatpush.msra.mxu0 %v1168
      %1196 = vmatpush.msra.mxu0 %v1167
      %1197 = vmatpush.msra.mxu0 %v1166
      %1198 = vmatpush.msra.mxu0 %v1165
      %1199 = vmatmul.f32.gmra.mxu0 %v1163
      %v1200 = vpop.f32.mrf.mxu0
      %v1201 = vadd.f32 %v1182, %v1200
      %1202 = vmatmul.f32.gmra.mxu0 %v1164
      %v1203 = vpop.f32.mrf.mxu0
      %v1204 = vadd.f32 %v1182, %v1203
      %1205 = vdwg.mxu0
      %v1206 = vxor.u32 %v1201, 2147483648
      %v1207 = vxor.u32 %v1204, 2147483648
      %v1208 = vmul.f32 %v1206, 1.442695
      %v1209 = vpow.pop %v1208
      %v1210 = vmul.f32 %v1207, 1.442695
      %v1211 = vpow.pop %v1210
      %v1212 = vadd.f32 %v1209, 1.0
      %v1213 = vadd.f32 %v1211, 1.0
      %v1214 = vrcp.pop %v1212
      %v1215 = vmul.f32 %v1212, %v1214
      %v1216 = vsub.f32 1.0, %v1215
      %v1217 = vmul.f32 %v1214, %v1216
      %v1218 = vadd.f32 %v1214, %v1217
      %vm1219 = vweird.f32 %v1212
      %vm1220 = vweird.f32 %v1214
      %vm1221 = vmor %vm1219, %vm1220
      %v1222 = vsel %vm1221, %v1214, %v1218
      %v1223 = vand.u32 2147483647, %v1212
      %vm1224 = vcmp.eq.f32.partialorder %v1223, 8.507059e+37
      %v1225 = vand.u32 %v1212, 2147483648
      %v1226 = vor.u32 1.1754944e-38, %v1225
      %v1227 = vsel %vm1224, %v1226, %v1222
      %v1228 = vmul.f32 1.0, %v1227
      %v1229 = vrcp.pop %v1213
      %v1230 = vmul.f32 %v1213, %v1229
      %v1231 = vsub.f32 1.0, %v1230
      %v1232 = vmul.f32 %v1229, %v1231
      %v1233 = vadd.f32 %v1229, %v1232
      %vm1234 = vweird.f32 %v1213
      %vm1235 = vweird.f32 %v1229
      %vm1236 = vmor %vm1234, %vm1235
      %v1237 = vsel %vm1236, %v1229, %v1233
      %v1238 = vand.u32 2147483647, %v1213
      %vm1239 = vcmp.eq.f32.partialorder %v1238, 8.507059e+37
      %v1240 = vand.u32 %v1213, 2147483648
      %v1241 = vor.u32 1.1754944e-38, %v1240
      %v1242 = vsel %vm1239, %v1241, %v1237
      %v1243 = vmul.f32 1.0, %v1242
      %v1244 = vmul.f32 %v1201, %v1228
      %v1245 = vmul.f32 %v1204, %v1243
      %v1246 = vld [vmem:[%s4 + $0x5] sm:$0x1]
      %v1247 = vperm.slane %v1246, 0
      %v1248 = vadd.f32 %v1244, %v1247
      %v1249 = vadd.f32 %v1245, %v1247
      %v1252 = vrot.slane %v595, 4
      %v1253 = vrot.slane %v596, 4
      %v1254 = vsel %vm1065, %v1252, %v1253
      %v1259 = vrot.slane %v1248, 4
      %v1260 = vrot.slane %v1249, 4
      %v1261 = vsel %vm1065, %v1259, %v1260
      %v1264 = vsel %vm1065, %v578, %v1252
      %v1265 = vsel %vm1065, %v1058, %v1259
      %v1266 = vld [vmem:[%s4 + $0x48] sm:$0x1]
      %v1267 = vld [vmem:[%s4 + $0x49] sm:$0x1]
      %v1268 = vld [vmem:[%s4 + $0x4a] sm:$0x1]
      %v1269 = vld [vmem:[%s4 + $0x4b] sm:$0x1]
      %v1270 = vld [vmem:[%s4 + $0x4c] sm:$0x1]
      %v1271 = vld [vmem:[%s4 + $0x4d] sm:$0x1]
      %v1272 = vld [vmem:[%s5 + $0x4] sm:$0x1]
      %v1273 = vld [vmem:[%s9] sm:$0xff]
      %v1274 = vld [vmem:[%s9 + $0x8] sm:$0xff]
      %v1275 = vld [vmem:[%s9 + $0x10] sm:$0xff]
      %v1276 = vld [vmem:[%s9 + $0x18] sm:$0xff]
      %v1277 = vld [vmem:[%s9 + $0x20] sm:$0xff]
      %v1278 = vld [vmem:[%s9 + $0x28] sm:$0xff]
      %v1279 = vld [vmem:[%s9 + $0x30] sm:$0xff]
      %v1280 = vld [vmem:[%s9 + $0x38] sm:$0xff]
      %v1281 = vld [vmem:[%s10] sm:$0xff]
      %v1282 = vld [vmem:[%s10 + $0x8] sm:$0xff]
      %v1283 = vld [vmem:[%s10 + $0x10] sm:$0xff]
      %v1284 = vld [vmem:[%s10 + $0x18] sm:$0xff]
      %v1285 = vld [vmem:[%s10 + $0x20] sm:$0xff]
      %v1286 = vld [vmem:[%s10 + $0x28] sm:$0xff]
      %v1287 = vld [vmem:[%s10 + $0x30] sm:$0xff]
      %v1288 = vld [vmem:[%s10 + $0x38] sm:$0xff]
      %v1289 = vld [vmem:[%s11] sm:$0xff]
      %v1290 = vld [vmem:[%s11 + $0x8] sm:$0xff]
      %v1291 = vld [vmem:[%s11 + $0x10] sm:$0xff]
      %v1292 = vld [vmem:[%s11 + $0x18] sm:$0xff]
      %v1293 = vld [vmem:[%s11 + $0x20] sm:$0xff]
      %v1294 = vld [vmem:[%s11 + $0x28] sm:$0xff]
      %v1295 = vld [vmem:[%s11 + $0x30] sm:$0xff]
      %v1296 = vld [vmem:[%s11 + $0x38] sm:$0xff]
      %v1297 = vld [vmem:[%s11 + $0x40] sm:$0xff]
      %v1298 = vld [vmem:[%s11 + $0x48] sm:$0xff]
      %v1299 = vld [vmem:[%s11 + $0x50] sm:$0xff]
      %v1300 = vld [vmem:[%s11 + $0x58] sm:$0xff]
      %v1301 = vld [vmem:[%s11 + $0x60] sm:$0xff]
      %v1302 = vld [vmem:[%s11 + $0x68] sm:$0xff]
      %v1303 = vld [vmem:[%s11 + $0x70] sm:$0xff]
      %v1304 = vld [vmem:[%s11 + $0x78] sm:$0xff]
      %v1305 = vld [vmem:[%s6] ss:$2 sm:$0x3]
      %v1306 = vld [vmem:[%s12] sm:$0xff]
      %v1307 = vld [vmem:[%s12 + $0x8] sm:$0xff]
      %v1308 = vld [vmem:[%s12 + $0x10] sm:$0xff]
      %v1309 = vld [vmem:[%s12 + $0x18] sm:$0xff]
      %v1310 = vld [vmem:[%s12 + $0x20] sm:$0xff]
      %v1311 = vld [vmem:[%s12 + $0x28] sm:$0xff]
      %v1312 = vld [vmem:[%s12 + $0x30] sm:$0xff]
      %v1313 = vld [vmem:[%s12 + $0x38] sm:$0xff]
      %v1314 = vld [vmem:[%s12 + $0x40] sm:$0xff]
      %v1315 = vld [vmem:[%s12 + $0x48] sm:$0xff]
      %v1316 = vld [vmem:[%s12 + $0x50] sm:$0xff]
      %v1317 = vld [vmem:[%s12 + $0x58] sm:$0xff]
      %v1318 = vld [vmem:[%s12 + $0x60] sm:$0xff]
      %v1319 = vld [vmem:[%s12 + $0x68] sm:$0xff]
      %v1320 = vld [vmem:[%s12 + $0x70] sm:$0xff]
      %v1321 = vld [vmem:[%s12 + $0x78] sm:$0xff]
      %v1322 = vld [vmem:[%s12 + $0x80] sm:$0xff]
      %v1323 = vld [vmem:[%s12 + $0x88] sm:$0xff]
      %v1324 = vld [vmem:[%s12 + $0x90] sm:$0xff]
      %v1325 = vld [vmem:[%s12 + $0x98] sm:$0xff]
      %v1326 = vld [vmem:[%s12 + $0xa0] sm:$0xff]
      %v1327 = vld [vmem:[%s12 + $0xa8] sm:$0xff]
      %v1328 = vld [vmem:[%s12 + $0xb0] sm:$0xff]
      %v1329 = vld [vmem:[%s12 + $0xb8] sm:$0xff]
      %v1330 = vld [vmem:[%s12 + $0xc0] sm:$0xff]
      %v1331 = vld [vmem:[%s12 + $0xc8] sm:$0xff]
      %v1332 = vld [vmem:[%s12 + $0xd0] sm:$0xff]
      %v1333 = vld [vmem:[%s12 + $0xd8] sm:$0xff]
      %v1334 = vld [vmem:[%s12 + $0xe0] sm:$0xff]
      %v1335 = vld [vmem:[%s12 + $0xe8] sm:$0xff]
      %v1336 = vld [vmem:[%s12 + $0xf0] sm:$0xff]
      %v1337 = vld [vmem:[%s12 + $0xf8] sm:$0xff]
      %vm1338 = vcmask 523264
      %v1339 = vsel %vm1338, %v577, 0.0
      %1340 = vadd.xlane.f32.xlu0 %v1339
      %v1341 = vpop.xlane.xlu0 %1340
      %v1342 = vsel %vm1338, %v1264, 0.0
      %1343 = vadd.xlane.f32.xlu0 %v1342
      %v1344 = vpop.xlane.xlu0 %1343
      %v1345 = vsel %vm1338, %v1254, 0.0
      %1346 = vadd.xlane.f32.xlu0 %v1345
      %v1347 = vpop.xlane.xlu0 %1346
      %v1348 = vsel %vm1338, %v1057, 0.0
      %1349 = vadd.xlane.f32.xlu0 %v1348
      %v1350 = vpop.xlane.xlu0 %1349
      %v1351 = vsel %vm1338, %v1265, 0.0
      %1352 = vadd.xlane.f32.xlu0 %v1351
      %v1353 = vpop.xlane.xlu0 %1352
      %v1354 = vsel %vm1338, %v1261, 0.0
      %1355 = vadd.xlane.f32.xlu0 %v1354
      %v1356 = vpop.xlane.xlu0 %1355
      %v1357 = vrcp.pop 64.0
      %v1358 = vmul.f32 64.0, %v1357
      %v1359 = vsub.f32 1.0, %v1358
      %v1360 = vmul.f32 %v1357, %v1359
      %v1361 = vadd.f32 %v1357, %v1360
      %vm1362 = vweird.f32 %v1357
      %v1363 = vsel %vm1362, %v1357, %v1361
      %v1364 = vmul.f32 %v1341, %v1363
      %v1365 = vmul.f32 %v1344, %v1363
      %v1366 = vmul.f32 %v1347, %v1363
      %v1367 = vmul.f32 %v1350, %v1363
      %v1368 = vmul.f32 %v1353, %v1363
      %v1369 = vmul.f32 %v1356, %v1363
      %v1370 = vsub.f32 %v577, %v1364
      %v1371 = vsub.f32 %v1264, %v1365
      %v1372 = vsub.f32 %v1254, %v1366
      %v1373 = vsub.f32 %v1057, %v1367
      %v1374 = vsub.f32 %v1265, %v1368
      %v1375 = vsub.f32 %v1261, %v1369
      %v1376 = vmul.f32 %v1370, %v1370
      %v1377 = vmul.f32 %v1371, %v1371
      %v1378 = vmul.f32 %v1372, %v1372
      %v1379 = vmul.f32 %v1373, %v1373
      %v1380 = vmul.f32 %v1374, %v1374
      %v1381 = vmul.f32 %v1375, %v1375
      %v1382 = vsel %vm1338, %v1376, 0.0
      %1383 = vadd.xlane.f32.xlu0 %v1382
      %v1384 = vpop.xlane.xlu0 %1383
      %v1385 = vsel %vm1338, %v1377, 0.0
      %1386 = vadd.xlane.f32.xlu0 %v1385
      %v1387 = vpop.xlane.xlu0 %1386
      %v1388 = vsel %vm1338, %v1378, 0.0
      %1389 = vadd.xlane.f32.xlu0 %v1388
      %v1390 = vpop.xlane.xlu0 %1389
      %v1391 = vsel %vm1338, %v1379, 0.0
      %1392 = vadd.xlane.f32.xlu0 %v1391
      %v1393 = vpop.xlane.xlu0 %1392
      %v1394 = vsel %vm1338, %v1380, 0.0
      %1395 = vadd.xlane.f32.xlu0 %v1394
      %v1396 = vpop.xlane.xlu0 %1395
      %v1397 = vsel %vm1338, %v1381, 0.0
      %1398 = vadd.xlane.f32.xlu0 %v1397
      %v1399 = vpop.xlane.xlu0 %1398
      %v1400 = vmul.f32 %v1384, %v1363
      %v1401 = vmul.f32 %v1387, %v1363
      %v1402 = vmul.f32 %v1390, %v1363
      %v1403 = vmul.f32 %v1393, %v1363
      %v1404 = vmul.f32 %v1396, %v1363
      %v1405 = vmul.f32 %v1399, %v1363
      %v1406 = vadd.f32 %v1400, 1e-05
      %v1407 = vadd.f32 %v1401, 1e-05
      %v1408 = vadd.f32 %v1402, 1e-05
      %v1409 = vadd.f32 %v1403, 1e-05
      %v1410 = vadd.f32 %v1404, 1e-05
      %v1411 = vadd.f32 %v1405, 1e-05
      %v1412 = vrsqrt.pop %v1406
      %v1413 = vmul.f32 %v1412, %v1406
      %v1414 = vmul.f32 %v1413, %v1412
      %v1415 = vmul.f32 0.5, %v1414
      %v1416 = vsub.f32 1.5, %v1415
      %v1417 = vmul.f32 %v1412, %v1416
      %vm1418 = vweird.f32 %v1406
      %vm1419 = vweird.f32 %v1412
      %vm1420 = vmor %vm1418, %vm1419
      %v1421 = vsel %vm1420, %v1412, %v1417
      %v1422 = vrsqrt.pop %v1407
      %v1423 = vmul.f32 %v1422, %v1407
      %v1424 = vmul.f32 %v1423, %v1422
      %v1425 = vmul.f32 0.5, %v1424
      %v1426 = vsub.f32 1.5, %v1425
      %v1427 = vmul.f32 %v1422, %v1426
      %vm1428 = vweird.f32 %v1407
      %vm1429 = vweird.f32 %v1422
      %vm1430 = vmor %vm1428, %vm1429
      %v1431 = vsel %vm1430, %v1422, %v1427
      %v1432 = vrsqrt.pop %v1408
      %v1433 = vmul.f32 %v1432, %v1408
      %v1434 = vmul.f32 %v1433, %v1432
      %v1435 = vmul.f32 0.5, %v1434
      %v1436 = vsub.f32 1.5, %v1435
      %v1437 = vmul.f32 %v1432, %v1436
      %vm1438 = vweird.f32 %v1408
      %vm1439 = vweird.f32 %v1432
      %vm1440 = vmor %vm1438, %vm1439
      %v1441 = vsel %vm1440, %v1432, %v1437
      %v1442 = vrsqrt.pop %v1409
      %v1443 = vmul.f32 %v1442, %v1409
      %v1444 = vmul.f32 %v1443, %v1442
      %v1445 = vmul.f32 0.5, %v1444
      %v1446 = vsub.f32 1.5, %v1445
      %v1447 = vmul.f32 %v1442, %v1446
      %vm1448 = vweird.f32 %v1409
      %vm1449 = vweird.f32 %v1442
      %vm1450 = vmor %vm1448, %vm1449
      %v1451 = vsel %vm1450, %v1442, %v1447
      %v1452 = vrsqrt.pop %v1410
      %v1453 = vmul.f32 %v1452, %v1410
      %v1454 = vmul.f32 %v1453, %v1452
      %v1455 = vmul.f32 0.5, %v1454
      %v1456 = vsub.f32 1.5, %v1455
      %v1457 = vmul.f32 %v1452, %v1456
      %vm1458 = vweird.f32 %v1410
      %vm1459 = vweird.f32 %v1452
      %vm1460 = vmor %vm1458, %vm1459
      %v1461 = vsel %vm1460, %v1452, %v1457
      %v1462 = vrsqrt.pop %v1411
      %v1463 = vmul.f32 %v1462, %v1411
      %v1464 = vmul.f32 %v1463, %v1462
      %v1465 = vmul.f32 0.5, %v1464
      %v1466 = vsub.f32 1.5, %v1465
      %v1467 = vmul.f32 %v1462, %v1466
      %vm1468 = vweird.f32 %v1411
      %vm1469 = vweird.f32 %v1462
      %vm1470 = vmor %vm1468, %vm1469
      %v1471 = vsel %vm1470, %v1462, %v1467
      %v1472 = vmul.f32 %v1370, %v1421
      %v1473 = vmul.f32 %v1371, %v1431
      %v1474 = vmul.f32 %v1372, %v1441
      %v1475 = vmul.f32 %v1373, %v1451
      %v1476 = vmul.f32 %v1374, %v1461
      %v1477 = vmul.f32 %v1375, %v1471
      %v1478 = vperm.slane %v1266, 0
      %v1479 = vmul.f32 %v1472, %v1478
      %v1480 = vmul.f32 %v1473, %v1478
      %v1481 = vmul.f32 %v1474, %v1478
      %v1482 = vmul.f32 %v1475, %v1478
      %v1483 = vmul.f32 %v1476, %v1478
      %v1484 = vmul.f32 %v1477, %v1478
      %v1485 = vperm.slane %v1267, 0
      %v1486 = vadd.f32 %v1479, %v1485
      %v1487 = vadd.f32 %v1480, %v1485
      %v1488 = vadd.f32 %v1481, %v1485
      %v1489 = vadd.f32 %v1482, %v1485
      %v1490 = vadd.f32 %v1483, %v1485
      %v1491 = vadd.f32 %v1484, %v1485
      %v1492 = vperm.slane %v1272, 0
      %v1494 = vsel %vm1338, %v1486, 0
      %v1497 = vsel %vm1338, %v1487, 0
      %v1500 = vsel %vm1338, %v1488, 0
      %v1503 = vsel %vm1338, %v1489, 0
      %v1506 = vsel %vm1338, %v1490, 0
      %v1509 = vsel %vm1338, %v1491, 0
      %1511 = vmatpush.msra.mxu0 0.0
      %1512 = vmatpush.msra.mxu0 0.0
      %1513 = vmatpush.msra.mxu0 0.0
      %1514 = vmatpush.msra.mxu0 0.0
      %1515 = vmatpush.msra.mxu0 0.0
      %1516 = vmatpush.msra.mxu0 0.0
      %1517 = vmatpush.msra.mxu0 0.0
      %1518 = vmatpush.msra.mxu0 0.0
      %1519 = vmatpush.msra.mxu0 %v1280
      %1520 = vmatpush.msra.mxu0 %v1279
      %1521 = vmatpush.msra.mxu0 %v1278
      %1522 = vmatpush.msra.mxu0 %v1277
      %1523 = vmatpush.msra.mxu0 %v1276
      %1524 = vmatpush.msra.mxu0 %v1275
      %1525 = vmatpush.msra.mxu0 %v1274
      %1526 = vmatpush.msra.mxu0 %v1273
      %1527 = vmatmul.f32.gmra.mxu0 %v1494
      %v1528 = vpop.f32.mrf.mxu0
      %v1529 = vadd.f32 %v1492, %v1528
      %1530 = vmatmul.f32.gmra.mxu0 %v1497
      %v1531 = vpop.f32.mrf.mxu0
      %v1532 = vadd.f32 %v1492, %v1531
      %1533 = vmatmul.f32.gmra.mxu0 %v1500
      %v1534 = vpop.f32.mrf.mxu0
      %v1535 = vadd.f32 %v1492, %v1534
      %1536 = vmatmul.f32.gmra.mxu0 %v1503
      %v1537 = vpop.f32.mrf.mxu0
      %v1538 = vadd.f32 %v1492, %v1537
      %1539 = vmatmul.f32.gmra.mxu0 %v1506
      %v1540 = vpop.f32.mrf.mxu0
      %v1541 = vadd.f32 %v1492, %v1540
      %1542 = vmatmul.f32.gmra.mxu0 %v1509
      %v1543 = vpop.f32.mrf.mxu0
      %v1544 = vadd.f32 %v1492, %v1543
      %1545 = vdwg.mxu0
      %1552 = vrot.lane.b32.xlu0 %v1529, 64
      %v1553 = vpop.permute.xlu0 %1552
      %1554 = vrot.lane.b32.xlu0 %v1532, 64
      %v1555 = vpop.permute.xlu0 %1554
      %1556 = vrot.lane.b32.xlu0 %v1535, 64
      %v1557 = vpop.permute.xlu0 %1556
      %1558 = vrot.lane.b32.xlu0 %v1538, 64
      %v1559 = vpop.permute.xlu0 %1558
      %1560 = vrot.lane.b32.xlu0 %v1541, 64
      %v1561 = vpop.permute.xlu0 %1560
      %1562 = vrot.lane.b32.xlu0 %v1544, 64
      %v1563 = vpop.permute.xlu0 %1562
      %v1564 = vsel %vm608, %v1529, 0
      %v1566 = vsel %vm608, %v1532, 0
      %v1568 = vsel %vm608, %v1535, 0
      %v1570 = vsel %vm608, %v1538, 0
      %v1572 = vsel %vm608, %v1541, 0
      %v1574 = vsel %vm608, %v1544, 0
      %v1576 = vsel %vm608, %v1553, 0
      %v1578 = vsel %vm608, %v1555, 0
      %v1580 = vsel %vm608, %v1557, 0
      %v1582 = vsel %vm608, %v1559, 0
      %v1584 = vsel %vm608, %v1561, 0
      %v1586 = vsel %vm608, %v1563, 0
      %1588 = vmatpush.xpose.msra.mxu0 0.0
      %1589 = vmatpush.xpose.msra.mxu0 0.0
      %1590 = vmatpush.xpose.msra.mxu0 0.0
      %1591 = vmatpush.xpose.msra.mxu0 0.0
      %1592 = vmatpush.xpose.msra.mxu0 0.0
      %1593 = vmatpush.xpose.msra.mxu0 0.0
      %1594 = vmatpush.xpose.msra.mxu0 0.0
      %1595 = vmatpush.xpose.msra.mxu0 0.0
      %1596 = vmatpush.xpose.msra.mxu0 0.0
      %1597 = vmatpush.xpose.msra.mxu0 0.0
      %1598 = vmatpush.xpose.msra.mxu0 %v1586
      %1599 = vmatpush.xpose.msra.mxu0 %v1584
      %1600 = vmatpush.xpose.msra.mxu0 %v1582
      %1601 = vmatpush.xpose.msra.mxu0 %v1580
      %1602 = vmatpush.xpose.msra.mxu0 %v1578
      %1603 = vmatpush.xpose.msra.mxu0 %v1576
      %1604 = vmatmul.f32.gmra.mxu0 %v1564
      %v1605 = vpop.f32.mrf.mxu0
      %v1606 = vadd.f32 0.0, %v1605
      %1607 = vmatmul.f32.gmra.mxu0 %v1566
      %v1608 = vpop.f32.mrf.mxu0
      %v1609 = vadd.f32 0.0, %v1608
      %1610 = vmatmul.f32.gmra.mxu0 %v1568
      %v1611 = vpop.f32.mrf.mxu0
      %v1612 = vadd.f32 0.0, %v1611
      %1613 = vmatmul.f32.gmra.mxu0 %v1570
      %v1614 = vpop.f32.mrf.mxu0
      %v1615 = vadd.f32 0.0, %v1614
      %1616 = vmatmul.f32.gmra.mxu0 %v1572
      %v1617 = vpop.f32.mrf.mxu0
      %v1618 = vadd.f32 0.0, %v1617
      %1619 = vmatmul.f32.gmra.mxu0 %v1574
      %v1620 = vpop.f32.mrf.mxu0
      %v1621 = vadd.f32 0.0, %v1620
      %1622 = vdwg.mxu0
      %v1623 = vmul.f32 %v1606, 0.35355338
      %v1624 = vmul.f32 %v1609, 0.35355338
      %v1625 = vmul.f32 %v1612, 0.35355338
      %v1626 = vmul.f32 %v1615, 0.35355338
      %v1627 = vmul.f32 %v1618, 0.35355338
      %v1628 = vmul.f32 %v1621, 0.35355338
      %vm1629 = vcmask 392192
      %v1630 = vsel %vm1629, %v1623, -inf
      %1631 = vmax.xlane.f32.xlu0 %v1630
      %v1632 = vpop.xlane.xlu0 %1631
      %v1633 = vsel %vm1629, %v1624, -inf
      %1634 = vmax.xlane.f32.xlu0 %v1633
      %v1635 = vpop.xlane.xlu0 %1634
      %v1636 = vsel %vm1629, %v1625, -inf
      %1637 = vmax.xlane.f32.xlu0 %v1636
      %v1638 = vpop.xlane.xlu0 %1637
      %v1639 = vsel %vm1629, %v1626, -inf
      %1640 = vmax.xlane.f32.xlu0 %v1639
      %v1641 = vpop.xlane.xlu0 %1640
      %v1642 = vsel %vm1629, %v1627, -inf
      %1643 = vmax.xlane.f32.xlu0 %v1642
      %v1644 = vpop.xlane.xlu0 %1643
      %v1645 = vsel %vm1629, %v1628, -inf
      %1646 = vmax.xlane.f32.xlu0 %v1645
      %v1647 = vpop.xlane.xlu0 %1646
      %v1648 = vsub.f32 %v1623, %v1632
      %v1649 = vsub.f32 %v1624, %v1635
      %v1650 = vsub.f32 %v1625, %v1638
      %v1651 = vsub.f32 %v1626, %v1641
      %v1652 = vsub.f32 %v1627, %v1644
      %v1653 = vsub.f32 %v1628, %v1647
      %v1654 = vmul.f32 %v1648, 1.442695
      %v1655 = vpow.pop %v1654
      %v1656 = vmul.f32 %v1649, 1.442695
      %v1657 = vpow.pop %v1656
      %v1658 = vmul.f32 %v1650, 1.442695
      %v1659 = vpow.pop %v1658
      %v1660 = vmul.f32 %v1651, 1.442695
      %v1661 = vpow.pop %v1660
      %v1662 = vmul.f32 %v1652, 1.442695
      %v1663 = vpow.pop %v1662
      %v1664 = vmul.f32 %v1653, 1.442695
      %v1665 = vpow.pop %v1664
      %v1666 = vsel %vm1629, %v1655, 0.0
      %1667 = vadd.xlane.f32.xlu0 %v1666
      %v1668 = vpop.xlane.xlu0 %1667
      %v1669 = vsel %vm1629, %v1657, 0.0
      %1670 = vadd.xlane.f32.xlu0 %v1669
      %v1671 = vpop.xlane.xlu0 %1670
      %v1672 = vsel %vm1629, %v1659, 0.0
      %1673 = vadd.xlane.f32.xlu0 %v1672
      %v1674 = vpop.xlane.xlu0 %1673
      %v1675 = vsel %vm1629, %v1661, 0.0
      %1676 = vadd.xlane.f32.xlu0 %v1675
      %v1677 = vpop.xlane.xlu0 %1676
      %v1678 = vsel %vm1629, %v1663, 0.0
      %1679 = vadd.xlane.f32.xlu0 %v1678
      %v1680 = vpop.xlane.xlu0 %1679
      %v1681 = vsel %vm1629, %v1665, 0.0
      %1682 = vadd.xlane.f32.xlu0 %v1681
      %v1683 = vpop.xlane.xlu0 %1682
      %v1684 = vrcp.pop %v1668
      %v1685 = vrcp.pop %v1671
      %v1686 = vrcp.pop %v1674
      %v1687 = vrcp.pop %v1677
      %v1688 = vrcp.pop %v1680
      %v1689 = vrcp.pop %v1683
      %v1690 = vmul.f32 %v1655, %v1684
      %v1691 = vmul.f32 %v1657, %v1685
      %v1692 = vmul.f32 %v1659, %v1686
      %v1693 = vmul.f32 %v1661, %v1687
      %v1694 = vmul.f32 %v1663, %v1688
      %v1695 = vmul.f32 %v1665, %v1689
      %1696 = vrot.lane.b32.xlu0 %v1529, 32
      %v1697 = vpop.permute.xlu0 %1696
      %1698 = vrot.lane.b32.xlu0 %v1532, 32
      %v1699 = vpop.permute.xlu0 %1698
      %1700 = vrot.lane.b32.xlu0 %v1535, 32
      %v1701 = vpop.permute.xlu0 %1700
      %1702 = vrot.lane.b32.xlu0 %v1538, 32
      %v1703 = vpop.permute.xlu0 %1702
      %1704 = vrot.lane.b32.xlu0 %v1541, 32
      %v1705 = vpop.permute.xlu0 %1704
      %1706 = vrot.lane.b32.xlu0 %v1544, 32
      %v1707 = vpop.permute.xlu0 %1706
      %v1715 = vsel %vm1629, %v1690, 0
      %v1718 = vsel %vm1629, %v1691, 0
      %v1721 = vsel %vm1629, %v1692, 0
      %v1724 = vsel %vm1629, %v1693, 0
      %v1727 = vsel %vm1629, %v1694, 0
      %v1730 = vsel %vm1629, %v1695, 0
      %1732 = vmatpush.msra.mxu0 0.0
      %1733 = vmatpush.msra.mxu0 0.0
      %1734 = vmatpush.msra.mxu0 0.0
      %1735 = vmatpush.msra.mxu0 0.0
      %1736 = vmatpush.msra.mxu0 0.0
      %1737 = vmatpush.msra.mxu0 0.0
      %1738 = vmatpush.msra.mxu0 0.0
      %1739 = vmatpush.msra.mxu0 0.0
      %1740 = vmatpush.msra.mxu0 0.0
      %1741 = vmatpush.msra.mxu0 0.0
      %1742 = vmatpush.msra.mxu0 %v1707
      %1743 = vmatpush.msra.mxu0 %v1705
      %1744 = vmatpush.msra.mxu0 %v1703
      %1745 = vmatpush.msra.mxu0 %v1701
      %1746 = vmatpush.msra.mxu0 %v1699
      %1747 = vmatpush.msra.mxu0 %v1697
      %1748 = vmatmul.f32.gmra.mxu0 %v1715
      %v1749 = vpop.f32.mrf.mxu0
      %v1750 = vadd.f32 0.0, %v1749
      %1751 = vmatmul.f32.gmra.mxu0 %v1718
      %v1752 = vpop.f32.mrf.mxu0
      %v1753 = vadd.f32 0.0, %v1752
      %1754 = vmatmul.f32.gmra.mxu0 %v1721
      %v1755 = vpop.f32.mrf.mxu0
      %v1756 = vadd.f32 0.0, %v1755
      %1757 = vmatmul.f32.gmra.mxu0 %v1724
      %v1758 = vpop.f32.mrf.mxu0
      %v1759 = vadd.f32 0.0, %v1758
      %1760 = vmatmul.f32.gmra.mxu0 %v1727
      %v1761 = vpop.f32.mrf.mxu0
      %v1762 = vadd.f32 0.0, %v1761
      %1763 = vmatmul.f32.gmra.mxu0 %v1730
      %v1764 = vpop.f32.mrf.mxu0
      %v1765 = vadd.f32 0.0, %v1764
      %1766 = vdwg.mxu0
      %1767 = vrot.lane.b32.xlu0 %v1529, 120
      %v1768 = vpop.permute.xlu0 %1767
      %1769 = vrot.lane.b32.xlu0 %v1532, 120
      %v1770 = vpop.permute.xlu0 %1769
      %1771 = vrot.lane.b32.xlu0 %v1535, 120
      %v1772 = vpop.permute.xlu0 %1771
      %1773 = vrot.lane.b32.xlu0 %v1538, 120
      %v1774 = vpop.permute.xlu0 %1773
      %1775 = vrot.lane.b32.xlu0 %v1541, 120
      %v1776 = vpop.permute.xlu0 %1775
      %1777 = vrot.lane.b32.xlu0 %v1544, 120
      %v1778 = vpop.permute.xlu0 %1777
      %v1779 = vsel %vm608, %v1768, 0
      %v1781 = vsel %vm608, %v1770, 0
      %v1783 = vsel %vm608, %v1772, 0
      %v1785 = vsel %vm608, %v1774, 0
      %v1787 = vsel %vm608, %v1776, 0
      %v1789 = vsel %vm608, %v1778, 0
      %1791 = vmatpush.xpose.msra.mxu0 0.0
      %1792 = vmatpush.xpose.msra.mxu0 0.0
      %1793 = vmatpush.xpose.msra.mxu0 0.0
      %1794 = vmatpush.xpose.msra.mxu0 0.0
      %1795 = vmatpush.xpose.msra.mxu0 0.0
      %1796 = vmatpush.xpose.msra.mxu0 0.0
      %1797 = vmatpush.xpose.msra.mxu0 0.0
      %1798 = vmatpush.xpose.msra.mxu0 0.0
      %1799 = vmatpush.xpose.msra.mxu0 0.0
      %1800 = vmatpush.xpose.msra.mxu0 0.0
      %1801 = vmatpush.xpose.msra.mxu0 %v1586
      %1802 = vmatpush.xpose.msra.mxu0 %v1584
      %1803 = vmatpush.xpose.msra.mxu0 %v1582
      %1804 = vmatpush.xpose.msra.mxu0 %v1580
      %1805 = vmatpush.xpose.msra.mxu0 %v1578
      %1806 = vmatpush.xpose.msra.mxu0 %v1576
      %1807 = vmatmul.f32.gmra.mxu0 %v1779
      %v1808 = vpop.f32.mrf.mxu0
      %v1809 = vadd.f32 0.0, %v1808
      %1810 = vmatmul.f32.gmra.mxu0 %v1781
      %v1811 = vpop.f32.mrf.mxu0
      %v1812 = vadd.f32 0.0, %v1811
      %1813 = vmatmul.f32.gmra.mxu0 %v1783
      %v1814 = vpop.f32.mrf.mxu0
      %v1815 = vadd.f32 0.0, %v1814
      %1816 = vmatmul.f32.gmra.mxu0 %v1785
      %v1817 = vpop.f32.mrf.mxu0
      %v1818 = vadd.f32 0.0, %v1817
      %1819 = vmatmul.f32.gmra.mxu0 %v1787
      %v1820 = vpop.f32.mrf.mxu0
      %v1821 = vadd.f32 0.0, %v1820
      %1822 = vmatmul.f32.gmra.mxu0 %v1789
      %v1823 = vpop.f32.mrf.mxu0
      %v1824 = vadd.f32 0.0, %v1823
      %1825 = vdwg.mxu0
      %v1826 = vmul.f32 %v1809, 0.35355338
      %v1827 = vmul.f32 %v1812, 0.35355338
      %v1828 = vmul.f32 %v1815, 0.35355338
      %v1829 = vmul.f32 %v1818, 0.35355338
      %v1830 = vmul.f32 %v1821, 0.35355338
      %v1831 = vmul.f32 %v1824, 0.35355338
      %v1832 = vsel %vm1629, %v1826, -inf
      %1833 = vmax.xlane.f32.xlu0 %v1832
      %v1834 = vpop.xlane.xlu0 %1833
      %v1835 = vsel %vm1629, %v1827, -inf
      %1836 = vmax.xlane.f32.xlu0 %v1835
      %v1837 = vpop.xlane.xlu0 %1836
      %v1838 = vsel %vm1629, %v1828, -inf
      %1839 = vmax.xlane.f32.xlu0 %v1838
      %v1840 = vpop.xlane.xlu0 %1839
      %v1841 = vsel %vm1629, %v1829, -inf
      %1842 = vmax.xlane.f32.xlu0 %v1841
      %v1843 = vpop.xlane.xlu0 %1842
      %v1844 = vsel %vm1629, %v1830, -inf
      %1845 = vmax.xlane.f32.xlu0 %v1844
      %v1846 = vpop.xlane.xlu0 %1845
      %v1847 = vsel %vm1629, %v1831, -inf
      %1848 = vmax.xlane.f32.xlu0 %v1847
      %v1849 = vpop.xlane.xlu0 %1848
      %v1850 = vsub.f32 %v1826, %v1834
      %v1851 = vsub.f32 %v1827, %v1837
      %v1852 = vsub.f32 %v1828, %v1840
      %v1853 = vsub.f32 %v1829, %v1843
      %v1854 = vsub.f32 %v1830, %v1846
      %v1855 = vsub.f32 %v1831, %v1849
      %v1856 = vmul.f32 %v1850, 1.442695
      %v1857 = vpow.pop %v1856
      %v1858 = vmul.f32 %v1851, 1.442695
      %v1859 = vpow.pop %v1858
      %v1860 = vmul.f32 %v1852, 1.442695
      %v1861 = vpow.pop %v1860
      %v1862 = vmul.f32 %v1853, 1.442695
      %v1863 = vpow.pop %v1862
      %v1864 = vmul.f32 %v1854, 1.442695
      %v1865 = vpow.pop %v1864
      %v1866 = vmul.f32 %v1855, 1.442695
      %v1867 = vpow.pop %v1866
      %v1868 = vsel %vm1629, %v1857, 0.0
      %1869 = vadd.xlane.f32.xlu0 %v1868
      %v1870 = vpop.xlane.xlu0 %1869
      %v1871 = vsel %vm1629, %v1859, 0.0
      %1872 = vadd.xlane.f32.xlu0 %v1871
      %v1873 = vpop.xlane.xlu0 %1872
      %v1874 = vsel %vm1629, %v1861, 0.0
      %1875 = vadd.xlane.f32.xlu0 %v1874
      %v1876 = vpop.xlane.xlu0 %1875
      %v1877 = vsel %vm1629, %v1863, 0.0
      %1878 = vadd.xlane.f32.xlu0 %v1877
      %v1879 = vpop.xlane.xlu0 %1878
      %v1880 = vsel %vm1629, %v1865, 0.0
      %1881 = vadd.xlane.f32.xlu0 %v1880
      %v1882 = vpop.xlane.xlu0 %1881
      %v1883 = vsel %vm1629, %v1867, 0.0
      %1884 = vadd.xlane.f32.xlu0 %v1883
      %v1885 = vpop.xlane.xlu0 %1884
      %v1886 = vrcp.pop %v1870
      %v1887 = vrcp.pop %v1873
      %v1888 = vrcp.pop %v1876
      %v1889 = vrcp.pop %v1879
      %v1890 = vrcp.pop %v1882
      %v1891 = vrcp.pop %v1885
      %v1892 = vmul.f32 %v1857, %v1886
      %v1893 = vmul.f32 %v1859, %v1887
      %v1894 = vmul.f32 %v1861, %v1888
      %v1895 = vmul.f32 %v1863, %v1889
      %v1896 = vmul.f32 %v1865, %v1890
      %v1897 = vmul.f32 %v1867, %v1891
      %v1899 = vsel %vm1629, %v1892, 0
      %v1902 = vsel %vm1629, %v1893, 0
      %v1905 = vsel %vm1629, %v1894, 0
      %v1908 = vsel %vm1629, %v1895, 0
      %v1911 = vsel %vm1629, %v1896, 0
      %v1914 = vsel %vm1629, %v1897, 0
      %1916 = vmatpush.msra.mxu0 0.0
      %1917 = vmatpush.msra.mxu0 0.0
      %1918 = vmatpush.msra.mxu0 0.0
      %1919 = vmatpush.msra.mxu0 0.0
      %1920 = vmatpush.msra.mxu0 0.0
      %1921 = vmatpush.msra.mxu0 0.0
      %1922 = vmatpush.msra.mxu0 0.0
      %1923 = vmatpush.msra.mxu0 0.0
      %1924 = vmatpush.msra.mxu0 0.0
      %1925 = vmatpush.msra.mxu0 0.0
      %1926 = vmatpush.msra.mxu0 %v1707
      %1927 = vmatpush.msra.mxu0 %v1705
      %1928 = vmatpush.msra.mxu0 %v1703
      %1929 = vmatpush.msra.mxu0 %v1701
      %1930 = vmatpush.msra.mxu0 %v1699
      %1931 = vmatpush.msra.mxu0 %v1697
      %1932 = vmatmul.f32.gmra.mxu0 %v1899
      %v1933 = vpop.f32.mrf.mxu0
      %v1934 = vadd.f32 0.0, %v1933
      %1935 = vmatmul.f32.gmra.mxu0 %v1902
      %v1936 = vpop.f32.mrf.mxu0
      %v1937 = vadd.f32 0.0, %v1936
      %1938 = vmatmul.f32.gmra.mxu0 %v1905
      %v1939 = vpop.f32.mrf.mxu0
      %v1940 = vadd.f32 0.0, %v1939
      %1941 = vmatmul.f32.gmra.mxu0 %v1908
      %v1942 = vpop.f32.mrf.mxu0
      %v1943 = vadd.f32 0.0, %v1942
      %1944 = vmatmul.f32.gmra.mxu0 %v1911
      %v1945 = vpop.f32.mrf.mxu0
      %v1946 = vadd.f32 0.0, %v1945
      %1947 = vmatmul.f32.gmra.mxu0 %v1914
      %v1948 = vpop.f32.mrf.mxu0
      %v1949 = vadd.f32 0.0, %v1948
      %1950 = vdwg.mxu0
      %v1952 = vsel %vm608, %v1934, 0
      %v1955 = vsel %vm608, %v1937, 0
      %v1958 = vsel %vm608, %v1940, 0
      %v1961 = vsel %vm608, %v1943, 0
      %v1964 = vsel %vm608, %v1946, 0
      %v1967 = vsel %vm608, %v1949, 0
      %1969 = vmatpush.msra.mxu0 0.0
      %1970 = vmatpush.msra.mxu0 0.0
      %1971 = vmatpush.msra.mxu0 0.0
      %1972 = vmatpush.msra.mxu0 0.0
      %1973 = vmatpush.msra.mxu0 0.0
      %1974 = vmatpush.msra.mxu0 0.0
      %1975 = vmatpush.msra.mxu0 0.0
      %1976 = vmatpush.msra.mxu0 0.0
      %1977 = vmatpush.msra.mxu0 0.0
      %1978 = vmatpush.msra.mxu0 0.0
      %1979 = vmatpush.msra.mxu0 0.0
      %1980 = vmatpush.msra.mxu0 0.0
      %1981 = vmatpush.msra.mxu0 0.0
      %1982 = vmatpush.msra.mxu0 0.0
      %1983 = vmatpush.msra.mxu0 0.0
      %1984 = vmatpush.msra.mxu0 %v1282
      %1985 = vmatmul.f32.gmra.mxu0 %v1952
      %v1986 = vpop.f32.mrf.mxu0
      %v1987 = vadd.f32 0.0, %v1986
      %1988 = vmatmul.f32.gmra.mxu0 %v1955
      %v1989 = vpop.f32.mrf.mxu0
      %v1990 = vadd.f32 0.0, %v1989
      %1991 = vmatmul.f32.gmra.mxu0 %v1958
      %v1992 = vpop.f32.mrf.mxu0
      %v1993 = vadd.f32 0.0, %v1992
      %1994 = vmatmul.f32.gmra.mxu0 %v1961
      %v1995 = vpop.f32.mrf.mxu0
      %v1996 = vadd.f32 0.0, %v1995
      %1997 = vmatmul.f32.gmra.mxu0 %v1964
      %v1998 = vpop.f32.mrf.mxu0
      %v1999 = vadd.f32 0.0, %v1998
      %2000 = vmatmul.f32.gmra.mxu0 %v1967
      %v2001 = vpop.f32.mrf.mxu0
      %v2002 = vadd.f32 0.0, %v2001
      %2003 = vdwg.mxu0
      %v2005 = vsel %vm608, %v1750, 0
      %v2008 = vsel %vm608, %v1753, 0
      %v2011 = vsel %vm608, %v1756, 0
      %v2014 = vsel %vm608, %v1759, 0
      %v2017 = vsel %vm608, %v1762, 0
      %v2020 = vsel %vm608, %v1765, 0
      %2022 = vmatpush.msra.mxu0 0.0
      %2023 = vmatpush.msra.mxu0 0.0
      %2024 = vmatpush.msra.mxu0 0.0
      %2025 = vmatpush.msra.mxu0 0.0
      %2026 = vmatpush.msra.mxu0 0.0
      %2027 = vmatpush.msra.mxu0 0.0
      %2028 = vmatpush.msra.mxu0 0.0
      %2029 = vmatpush.msra.mxu0 0.0
      %2030 = vmatpush.msra.mxu0 0.0
      %2031 = vmatpush.msra.mxu0 0.0
      %2032 = vmatpush.msra.mxu0 0.0
      %2033 = vmatpush.msra.mxu0 0.0
      %2034 = vmatpush.msra.mxu0 0.0
      %2035 = vmatpush.msra.mxu0 0.0
      %2036 = vmatpush.msra.mxu0 0.0
      %2037 = vmatpush.msra.mxu0 %v1281
      %2038 = vmatmul.f32.gmra.mxu0 %v2005
      %v2039 = vpop.f32.mrf.mxu0
      %v2040 = vadd.f32 %v1987, %v2039
      %2041 = vmatmul.f32.gmra.mxu0 %v2008
      %v2042 = vpop.f32.mrf.mxu0
      %v2043 = vadd.f32 %v1990, %v2042
      %2044 = vmatmul.f32.gmra.mxu0 %v2011
      %v2045 = vpop.f32.mrf.mxu0
      %v2046 = vadd.f32 %v1993, %v2045
      %2047 = vmatmul.f32.gmra.mxu0 %v2014
      %v2048 = vpop.f32.mrf.mxu0
      %v2049 = vadd.f32 %v1996, %v2048
      %2050 = vmatmul.f32.gmra.mxu0 %v2017
      %v2051 = vpop.f32.mrf.mxu0
      %v2052 = vadd.f32 %v1999, %v2051
      %2053 = vmatmul.f32.gmra.mxu0 %v2020
      %v2054 = vpop.f32.mrf.mxu0
      %v2055 = vadd.f32 %v2002, %v2054
      %2056 = vdwg.mxu0
      %2057 = vrot.lane.b32.xlu0 %v1529, 112
      %v2058 = vpop.permute.xlu0 %2057
      %2059 = vrot.lane.b32.xlu0 %v1532, 112
      %v2060 = vpop.permute.xlu0 %2059
      %2061 = vrot.lane.b32.xlu0 %v1535, 112
      %v2062 = vpop.permute.xlu0 %2061
      %2063 = vrot.lane.b32.xlu0 %v1538, 112
      %v2064 = vpop.permute.xlu0 %2063
      %2065 = vrot.lane.b32.xlu0 %v1541, 112
      %v2066 = vpop.permute.xlu0 %2065
      %2067 = vrot.lane.b32.xlu0 %v1544, 112
      %v2068 = vpop.permute.xlu0 %2067
      %2069 = vrot.lane.b32.xlu0 %v1529, 56
      %v2070 = vpop.permute.xlu0 %2069
      %2071 = vrot.lane.b32.xlu0 %v1532, 56
      %v2072 = vpop.permute.xlu0 %2071
      %2073 = vrot.lane.b32.xlu0 %v1535, 56
      %v2074 = vpop.permute.xlu0 %2073
      %2075 = vrot.lane.b32.xlu0 %v1538, 56
      %v2076 = vpop.permute.xlu0 %2075
      %2077 = vrot.lane.b32.xlu0 %v1541, 56
      %v2078 = vpop.permute.xlu0 %2077
      %2079 = vrot.lane.b32.xlu0 %v1544, 56
      %v2080 = vpop.permute.xlu0 %2079
      %v2081 = vsel %vm608, %v2058, 0
      %v2083 = vsel %vm608, %v2060, 0
      %v2085 = vsel %vm608, %v2062, 0
      %v2087 = vsel %vm608, %v2064, 0
      %v2089 = vsel %vm608, %v2066, 0
      %v2091 = vsel %vm608, %v2068, 0
      %v2093 = vsel %vm608, %v2070, 0
      %v2095 = vsel %vm608, %v2072, 0
      %v2097 = vsel %vm608, %v2074, 0
      %v2099 = vsel %vm608, %v2076, 0
      %v2101 = vsel %vm608, %v2078, 0
      %v2103 = vsel %vm608, %v2080, 0
      %2105 = vmatpush.xpose.msra.mxu0 0.0
      %2106 = vmatpush.xpose.msra.mxu0 0.0
      %2107 = vmatpush.xpose.msra.mxu0 0.0
      %2108 = vmatpush.xpose.msra.mxu0 0.0
      %2109 = vmatpush.xpose.msra.mxu0 0.0
      %2110 = vmatpush.xpose.msra.mxu0 0.0
      %2111 = vmatpush.xpose.msra.mxu0 0.0
      %2112 = vmatpush.xpose.msra.mxu0 0.0
      %2113 = vmatpush.xpose.msra.mxu0 0.0
      %2114 = vmatpush.xpose.msra.mxu0 0.0
      %2115 = vmatpush.xpose.msra.mxu0 %v2103
      %2116 = vmatpush.xpose.msra.mxu0 %v2101
      %2117 = vmatpush.xpose.msra.mxu0 %v2099
      %2118 = vmatpush.xpose.msra.mxu0 %v2097
      %2119 = vmatpush.xpose.msra.mxu0 %v2095
      %2120 = vmatpush.xpose.msra.mxu0 %v2093
      %2121 = vmatmul.f32.gmra.mxu0 %v2081
      %v2122 = vpop.f32.mrf.mxu0
      %v2123 = vadd.f32 0.0, %v2122
      %2124 = vmatmul.f32.gmra.mxu0 %v2083
      %v2125 = vpop.f32.mrf.mxu0
      %v2126 = vadd.f32 0.0, %v2125
      %2127 = vmatmul.f32.gmra.mxu0 %v2085
      %v2128 = vpop.f32.mrf.mxu0
      %v2129 = vadd.f32 0.0, %v2128
      %2130 = vmatmul.f32.gmra.mxu0 %v2087
      %v2131 = vpop.f32.mrf.mxu0
      %v2132 = vadd.f32 0.0, %v2131
      %2133 = vmatmul.f32.gmra.mxu0 %v2089
      %v2134 = vpop.f32.mrf.mxu0
      %v2135 = vadd.f32 0.0, %v2134
      %2136 = vmatmul.f32.gmra.mxu0 %v2091
      %v2137 = vpop.f32.mrf.mxu0
      %v2138 = vadd.f32 0.0, %v2137
      %2139 = vdwg.mxu0
      %v2140 = vmul.f32 %v2123, 0.35355338
      %v2141 = vmul.f32 %v2126, 0.35355338
      %v2142 = vmul.f32 %v2129, 0.35355338
      %v2143 = vmul.f32 %v2132, 0.35355338
      %v2144 = vmul.f32 %v2135, 0.35355338
      %v2145 = vmul.f32 %v2138, 0.35355338
      %v2146 = vsel %vm1629, %v2140, -inf
      %2147 = vmax.xlane.f32.xlu0 %v2146
      %v2148 = vpop.xlane.xlu0 %2147
      %v2149 = vsel %vm1629, %v2141, -inf
      %2150 = vmax.xlane.f32.xlu0 %v2149
      %v2151 = vpop.xlane.xlu0 %2150
      %v2152 = vsel %vm1629, %v2142, -inf
      %2153 = vmax.xlane.f32.xlu0 %v2152
      %v2154 = vpop.xlane.xlu0 %2153
      %v2155 = vsel %vm1629, %v2143, -inf
      %2156 = vmax.xlane.f32.xlu0 %v2155
      %v2157 = vpop.xlane.xlu0 %2156
      %v2158 = vsel %vm1629, %v2144, -inf
      %2159 = vmax.xlane.f32.xlu0 %v2158
      %v2160 = vpop.xlane.xlu0 %2159
      %v2161 = vsel %vm1629, %v2145, -inf
      %2162 = vmax.xlane.f32.xlu0 %v2161
      %v2163 = vpop.xlane.xlu0 %2162
      %v2164 = vsub.f32 %v2140, %v2148
      %v2165 = vsub.f32 %v2141, %v2151
      %v2166 = vsub.f32 %v2142, %v2154
      %v2167 = vsub.f32 %v2143, %v2157
      %v2168 = vsub.f32 %v2144, %v2160
      %v2169 = vsub.f32 %v2145, %v2163
      %v2170 = vmul.f32 %v2164, 1.442695
      %v2171 = vpow.pop %v2170
      %v2172 = vmul.f32 %v2165, 1.442695
      %v2173 = vpow.pop %v2172
      %v2174 = vmul.f32 %v2166, 1.442695
      %v2175 = vpow.pop %v2174
      %v2176 = vmul.f32 %v2167, 1.442695
      %v2177 = vpow.pop %v2176
      %v2178 = vmul.f32 %v2168, 1.442695
      %v2179 = vpow.pop %v2178
      %v2180 = vmul.f32 %v2169, 1.442695
      %v2181 = vpow.pop %v2180
      %v2182 = vsel %vm1629, %v2171, 0.0
      %2183 = vadd.xlane.f32.xlu0 %v2182
      %v2184 = vpop.xlane.xlu0 %2183
      %v2185 = vsel %vm1629, %v2173, 0.0
      %2186 = vadd.xlane.f32.xlu0 %v2185
      %v2187 = vpop.xlane.xlu0 %2186
      %v2188 = vsel %vm1629, %v2175, 0.0
      %2189 = vadd.xlane.f32.xlu0 %v2188
      %v2190 = vpop.xlane.xlu0 %2189
      %v2191 = vsel %vm1629, %v2177, 0.0
      %2192 = vadd.xlane.f32.xlu0 %v2191
      %v2193 = vpop.xlane.xlu0 %2192
      %v2194 = vsel %vm1629, %v2179, 0.0
      %2195 = vadd.xlane.f32.xlu0 %v2194
      %v2196 = vpop.xlane.xlu0 %2195
      %v2197 = vsel %vm1629, %v2181, 0.0
      %2198 = vadd.xlane.f32.xlu0 %v2197
      %v2199 = vpop.xlane.xlu0 %2198
      %v2200 = vrcp.pop %v2184
      %v2201 = vrcp.pop %v2187
      %v2202 = vrcp.pop %v2190
      %v2203 = vrcp.pop %v2193
      %v2204 = vrcp.pop %v2196
      %v2205 = vrcp.pop %v2199
      %v2206 = vmul.f32 %v2171, %v2200
      %v2207 = vmul.f32 %v2173, %v2201
      %v2208 = vmul.f32 %v2175, %v2202
      %v2209 = vmul.f32 %v2177, %v2203
      %v2210 = vmul.f32 %v2179, %v2204
      %v2211 = vmul.f32 %v2181, %v2205
      %2212 = vrot.lane.b32.xlu0 %v1529, 24
      %v2213 = vpop.permute.xlu0 %2212
      %2214 = vrot.lane.b32.xlu0 %v1532, 24
      %v2215 = vpop.permute.xlu0 %2214
      %2216 = vrot.lane.b32.xlu0 %v1535, 24
      %v2217 = vpop.permute.xlu0 %2216
      %2218 = vrot.lane.b32.xlu0 %v1538, 24
      %v2219 = vpop.permute.xlu0 %2218
      %2220 = vrot.lane.b32.xlu0 %v1541, 24
      %v2221 = vpop.permute.xlu0 %2220
      %2222 = vrot.lane.b32.xlu0 %v1544, 24
      %v2223 = vpop.permute.xlu0 %2222
      %v2231 = vsel %vm1629, %v2206, 0
      %v2234 = vsel %vm1629, %v2207, 0
      %v2237 = vsel %vm1629, %v2208, 0
      %v2240 = vsel %vm1629, %v2209, 0
      %v2243 = vsel %vm1629, %v2210, 0
      %v2246 = vsel %vm1629, %v2211, 0
      %2248 = vmatpush.msra.mxu0 0.0
      %2249 = vmatpush.msra.mxu0 0.0
      %2250 = vmatpush.msra.mxu0 0.0
      %2251 = vmatpush.msra.mxu0 0.0
      %2252 = vmatpush.msra.mxu0 0.0
      %2253 = vmatpush.msra.mxu0 0.0
      %2254 = vmatpush.msra.mxu0 0.0
      %2255 = vmatpush.msra.mxu0 0.0
      %2256 = vmatpush.msra.mxu0 0.0
      %2257 = vmatpush.msra.mxu0 0.0
      %2258 = vmatpush.msra.mxu0 %v2223
      %2259 = vmatpush.msra.mxu0 %v2221
      %2260 = vmatpush.msra.mxu0 %v2219
      %2261 = vmatpush.msra.mxu0 %v2217
      %2262 = vmatpush.msra.mxu0 %v2215
      %2263 = vmatpush.msra.mxu0 %v2213
      %2264 = vmatmul.f32.gmra.mxu0 %v2231
      %v2265 = vpop.f32.mrf.mxu0
      %v2266 = vadd.f32 0.0, %v2265
      %2267 = vmatmul.f32.gmra.mxu0 %v2234
      %v2268 = vpop.f32.mrf.mxu0
      %v2269 = vadd.f32 0.0, %v2268
      %2270 = vmatmul.f32.gmra.mxu0 %v2237
      %v2271 = vpop.f32.mrf.mxu0
      %v2272 = vadd.f32 0.0, %v2271
      %2273 = vmatmul.f32.gmra.mxu0 %v2240
      %v2274 = vpop.f32.mrf.mxu0
      %v2275 = vadd.f32 0.0, %v2274
      %2276 = vmatmul.f32.gmra.mxu0 %v2243
      %v2277 = vpop.f32.mrf.mxu0
      %v2278 = vadd.f32 0.0, %v2277
      %2279 = vmatmul.f32.gmra.mxu0 %v2246
      %v2280 = vpop.f32.mrf.mxu0
      %v2281 = vadd.f32 0.0, %v2280
      %2282 = vdwg.mxu0
      %v2284 = vsel %vm608, %v2266, 0
      %v2287 = vsel %vm608, %v2269, 0
      %v2290 = vsel %vm608, %v2272, 0
      %v2293 = vsel %vm608, %v2275, 0
      %v2296 = vsel %vm608, %v2278, 0
      %v2299 = vsel %vm608, %v2281, 0
      %2301 = vmatpush.msra.mxu0 0.0
      %2302 = vmatpush.msra.mxu0 0.0
      %2303 = vmatpush.msra.mxu0 0.0
      %2304 = vmatpush.msra.mxu0 0.0
      %2305 = vmatpush.msra.mxu0 0.0
      %2306 = vmatpush.msra.mxu0 0.0
      %2307 = vmatpush.msra.mxu0 0.0
      %2308 = vmatpush.msra.mxu0 0.0
      %2309 = vmatpush.msra.mxu0 0.0
      %2310 = vmatpush.msra.mxu0 0.0
      %2311 = vmatpush.msra.mxu0 0.0
      %2312 = vmatpush.msra.mxu0 0.0
      %2313 = vmatpush.msra.mxu0 0.0
      %2314 = vmatpush.msra.mxu0 0.0
      %2315 = vmatpush.msra.mxu0 0.0
      %2316 = vmatpush.msra.mxu0 %v1283
      %2317 = vmatmul.f32.gmra.mxu0 %v2284
      %v2318 = vpop.f32.mrf.mxu0
      %v2319 = vadd.f32 0.0, %v2318
      %2320 = vmatmul.f32.gmra.mxu0 %v2287
      %v2321 = vpop.f32.mrf.mxu0
      %v2322 = vadd.f32 0.0, %v2321
      %2323 = vmatmul.f32.gmra.mxu0 %v2290
      %v2324 = vpop.f32.mrf.mxu0
      %v2325 = vadd.f32 0.0, %v2324
      %2326 = vmatmul.f32.gmra.mxu0 %v2293
      %v2327 = vpop.f32.mrf.mxu0
      %v2328 = vadd.f32 0.0, %v2327
      %2329 = vmatmul.f32.gmra.mxu0 %v2296
      %v2330 = vpop.f32.mrf.mxu0
      %v2331 = vadd.f32 0.0, %v2330
      %2332 = vmatmul.f32.gmra.mxu0 %v2299
      %v2333 = vpop.f32.mrf.mxu0
      %v2334 = vadd.f32 0.0, %v2333
      %2335 = vdwg.mxu0
      %v2336 = vadd.f32 %v2040, %v2319
      %v2337 = vadd.f32 %v2043, %v2322
      %v2338 = vadd.f32 %v2046, %v2325
      %v2339 = vadd.f32 %v2049, %v2328
      %v2340 = vadd.f32 %v2052, %v2331
      %v2341 = vadd.f32 %v2055, %v2334
      %2342 = vrot.lane.b32.xlu0 %v1529, 104
      %v2343 = vpop.permute.xlu0 %2342
      %2344 = vrot.lane.b32.xlu0 %v1532, 104
      %v2345 = vpop.permute.xlu0 %2344
      %2346 = vrot.lane.b32.xlu0 %v1535, 104
      %v2347 = vpop.permute.xlu0 %2346
      %2348 = vrot.lane.b32.xlu0 %v1538, 104
      %v2349 = vpop.permute.xlu0 %2348
      %2350 = vrot.lane.b32.xlu0 %v1541, 104
      %v2351 = vpop.permute.xlu0 %2350
      %2352 = vrot.lane.b32.xlu0 %v1544, 104
      %v2353 = vpop.permute.xlu0 %2352
      %v2354 = vsel %vm608, %v2343, 0
      %v2356 = vsel %vm608, %v2345, 0
      %v2358 = vsel %vm608, %v2347, 0
      %v2360 = vsel %vm608, %v2349, 0
      %v2362 = vsel %vm608, %v2351, 0
      %v2364 = vsel %vm608, %v2353, 0
      %2366 = vmatpush.xpose.msra.mxu0 0.0
      %2367 = vmatpush.xpose.msra.mxu0 0.0
      %2368 = vmatpush.xpose.msra.mxu0 0.0
      %2369 = vmatpush.xpose.msra.mxu0 0.0
      %2370 = vmatpush.xpose.msra.mxu0 0.0
      %2371 = vmatpush.xpose.msra.mxu0 0.0
      %2372 = vmatpush.xpose.msra.mxu0 0.0
      %2373 = vmatpush.xpose.msra.mxu0 0.0
      %2374 = vmatpush.xpose.msra.mxu0 0.0
      %2375 = vmatpush.xpose.msra.mxu0 0.0
      %2376 = vmatpush.xpose.msra.mxu0 %v2103
      %2377 = vmatpush.xpose.msra.mxu0 %v2101
      %2378 = vmatpush.xpose.msra.mxu0 %v2099
      %2379 = vmatpush.xpose.msra.mxu0 %v2097
      %2380 = vmatpush.xpose.msra.mxu0 %v2095
      %2381 = vmatpush.xpose.msra.mxu0 %v2093
      %2382 = vmatmul.f32.gmra.mxu0 %v2354
      %v2383 = vpop.f32.mrf.mxu0
      %v2384 = vadd.f32 0.0, %v2383
      %2385 = vmatmul.f32.gmra.mxu0 %v2356
      %v2386 = vpop.f32.mrf.mxu0
      %v2387 = vadd.f32 0.0, %v2386
      %2388 = vmatmul.f32.gmra.mxu0 %v2358
      %v2389 = vpop.f32.mrf.mxu0
      %v2390 = vadd.f32 0.0, %v2389
      %2391 = vmatmul.f32.gmra.mxu0 %v2360
      %v2392 = vpop.f32.mrf.mxu0
      %v2393 = vadd.f32 0.0, %v2392
      %2394 = vmatmul.f32.gmra.mxu0 %v2362
      %v2395 = vpop.f32.mrf.mxu0
      %v2396 = vadd.f32 0.0, %v2395
      %2397 = vmatmul.f32.gmra.mxu0 %v2364
      %v2398 = vpop.f32.mrf.mxu0
      %v2399 = vadd.f32 0.0, %v2398
      %2400 = vdwg.mxu0
      %v2401 = vmul.f32 %v2384, 0.35355338
      %v2402 = vmul.f32 %v2387, 0.35355338
      %v2403 = vmul.f32 %v2390, 0.35355338
      %v2404 = vmul.f32 %v2393, 0.35355338
      %v2405 = vmul.f32 %v2396, 0.35355338
      %v2406 = vmul.f32 %v2399, 0.35355338
      %v2407 = vsel %vm1629, %v2401, -inf
      %2408 = vmax.xlane.f32.xlu0 %v2407
      %v2409 = vpop.xlane.xlu0 %2408
      %v2410 = vsel %vm1629, %v2402, -inf
      %2411 = vmax.xlane.f32.xlu0 %v2410
      %v2412 = vpop.xlane.xlu0 %2411
      %v2413 = vsel %vm1629, %v2403, -inf
      %2414 = vmax.xlane.f32.xlu0 %v2413
      %v2415 = vpop.xlane.xlu0 %2414
      %v2416 = vsel %vm1629, %v2404, -inf
      %2417 = vmax.xlane.f32.xlu0 %v2416
      %v2418 = vpop.xlane.xlu0 %2417
      %v2419 = vsel %vm1629, %v2405, -inf
      %2420 = vmax.xlane.f32.xlu0 %v2419
      %v2421 = vpop.xlane.xlu0 %2420
      %v2422 = vsel %vm1629, %v2406, -inf
      %2423 = vmax.xlane.f32.xlu0 %v2422
      %v2424 = vpop.xlane.xlu0 %2423
      %v2425 = vsub.f32 %v2401, %v2409
      %v2426 = vsub.f32 %v2402, %v2412
      %v2427 = vsub.f32 %v2403, %v2415
      %v2428 = vsub.f32 %v2404, %v2418
      %v2429 = vsub.f32 %v2405, %v2421
      %v2430 = vsub.f32 %v2406, %v2424
      %v2431 = vmul.f32 %v2425, 1.442695
      %v2432 = vpow.pop %v2431
      %v2433 = vmul.f32 %v2426, 1.442695
      %v2434 = vpow.pop %v2433
      %v2435 = vmul.f32 %v2427, 1.442695
      %v2436 = vpow.pop %v2435
      %v2437 = vmul.f32 %v2428, 1.442695
      %v2438 = vpow.pop %v2437
      %v2439 = vmul.f32 %v2429, 1.442695
      %v2440 = vpow.pop %v2439
      %v2441 = vmul.f32 %v2430, 1.442695
      %v2442 = vpow.pop %v2441
      %v2443 = vsel %vm1629, %v2432, 0.0
      %2444 = vadd.xlane.f32.xlu0 %v2443
      %v2445 = vpop.xlane.xlu0 %2444
      %v2446 = vsel %vm1629, %v2434, 0.0
      %2447 = vadd.xlane.f32.xlu0 %v2446
      %v2448 = vpop.xlane.xlu0 %2447
      %v2449 = vsel %vm1629, %v2436, 0.0
      %2450 = vadd.xlane.f32.xlu0 %v2449
      %v2451 = vpop.xlane.xlu0 %2450
      %v2452 = vsel %vm1629, %v2438, 0.0
      %2453 = vadd.xlane.f32.xlu0 %v2452
      %v2454 = vpop.xlane.xlu0 %2453
      %v2455 = vsel %vm1629, %v2440, 0.0
      %2456 = vadd.xlane.f32.xlu0 %v2455
      %v2457 = vpop.xlane.xlu0 %2456
      %v2458 = vsel %vm1629, %v2442, 0.0
      %2459 = vadd.xlane.f32.xlu0 %v2458
      %v2460 = vpop.xlane.xlu0 %2459
      %v2461 = vrcp.pop %v2445
      %v2462 = vrcp.pop %v2448
      %v2463 = vrcp.pop %v2451
      %v2464 = vrcp.pop %v2454
      %v2465 = vrcp.pop %v2457
      %v2466 = vrcp.pop %v2460
      %v2467 = vmul.f32 %v2432, %v2461
      %v2468 = vmul.f32 %v2434, %v2462
      %v2469 = vmul.f32 %v2436, %v2463
      %v2470 = vmul.f32 %v2438, %v2464
      %v2471 = vmul.f32 %v2440, %v2465
      %v2472 = vmul.f32 %v2442, %v2466
      %v2474 = vsel %vm1629, %v2467, 0
      %v2477 = vsel %vm1629, %v2468, 0
      %v2480 = vsel %vm1629, %v2469, 0
      %v2483 = vsel %vm1629, %v2470, 0
      %v2486 = vsel %vm1629, %v2471, 0
      %v2489 = vsel %vm1629, %v2472, 0
      %2491 = vmatpush.msra.mxu0 0.0
      %2492 = vmatpush.msra.mxu0 0.0
      %2493 = vmatpush.msra.mxu0 0.0
      %2494 = vmatpush.msra.mxu0 0.0
      %2495 = vmatpush.msra.mxu0 0.0
      %2496 = vmatpush.msra.mxu0 0.0
      %2497 = vmatpush.msra.mxu0 0.0
      %2498 = vmatpush.msra.mxu0 0.0
      %2499 = vmatpush.msra.mxu0 0.0
      %2500 = vmatpush.msra.mxu0 0.0
      %2501 = vmatpush.msra.mxu0 %v2223
      %2502 = vmatpush.msra.mxu0 %v2221
      %2503 = vmatpush.msra.mxu0 %v2219
      %2504 = vmatpush.msra.mxu0 %v2217
      %2505 = vmatpush.msra.mxu0 %v2215
      %2506 = vmatpush.msra.mxu0 %v2213
      %2507 = vmatmul.f32.gmra.mxu0 %v2474
      %v2508 = vpop.f32.mrf.mxu0
      %v2509 = vadd.f32 0.0, %v2508
      %2510 = vmatmul.f32.gmra.mxu0 %v2477
      %v2511 = vpop.f32.mrf.mxu0
      %v2512 = vadd.f32 0.0, %v2511
      %2513 = vmatmul.f32.gmra.mxu0 %v2480
      %v2514 = vpop.f32.mrf.mxu0
      %v2515 = vadd.f32 0.0, %v2514
      %2516 = vmatmul.f32.gmra.mxu0 %v2483
      %v2517 = vpop.f32.mrf.mxu0
      %v2518 = vadd.f32 0.0, %v2517
      %2519 = vmatmul.f32.gmra.mxu0 %v2486
      %v2520 = vpop.f32.mrf.mxu0
      %v2521 = vadd.f32 0.0, %v2520
      %2522 = vmatmul.f32.gmra.mxu0 %v2489
      %v2523 = vpop.f32.mrf.mxu0
      %v2524 = vadd.f32 0.0, %v2523
      %2525 = vdwg.mxu0
      %v2527 = vsel %vm608, %v2509, 0
      %v2530 = vsel %vm608, %v2512, 0
      %v2533 = vsel %vm608, %v2515, 0
      %v2536 = vsel %vm608, %v2518, 0
      %v2539 = vsel %vm608, %v2521, 0
      %v2542 = vsel %vm608, %v2524, 0
      %2544 = vmatpush.msra.mxu0 0.0
      %2545 = vmatpush.msra.mxu0 0.0
      %2546 = vmatpush.msra.mxu0 0.0
      %2547 = vmatpush.msra.mxu0 0.0
      %2548 = vmatpush.msra.mxu0 0.0
      %2549 = vmatpush.msra.mxu0 0.0
      %2550 = vmatpush.msra.mxu0 0.0
      %2551 = vmatpush.msra.mxu0 0.0
      %2552 = vmatpush.msra.mxu0 0.0
      %2553 = vmatpush.msra.mxu0 0.0
      %2554 = vmatpush.msra.mxu0 0.0
      %2555 = vmatpush.msra.mxu0 0.0
      %2556 = vmatpush.msra.mxu0 0.0
      %2557 = vmatpush.msra.mxu0 0.0
      %2558 = vmatpush.msra.mxu0 0.0
      %2559 = vmatpush.msra.mxu0 %v1284
      %2560 = vmatmul.f32.gmra.mxu0 %v2527
      %v2561 = vpop.f32.mrf.mxu0
      %v2562 = vadd.f32 0.0, %v2561
      %2563 = vmatmul.f32.gmra.mxu0 %v2530
      %v2564 = vpop.f32.mrf.mxu0
      %v2565 = vadd.f32 0.0, %v2564
      %2566 = vmatmul.f32.gmra.mxu0 %v2533
      %v2567 = vpop.f32.mrf.mxu0
      %v2568 = vadd.f32 0.0, %v2567
      %2569 = vmatmul.f32.gmra.mxu0 %v2536
      %v2570 = vpop.f32.mrf.mxu0
      %v2571 = vadd.f32 0.0, %v2570
      %2572 = vmatmul.f32.gmra.mxu0 %v2539
      %v2573 = vpop.f32.mrf.mxu0
      %v2574 = vadd.f32 0.0, %v2573
      %2575 = vmatmul.f32.gmra.mxu0 %v2542
      %v2576 = vpop.f32.mrf.mxu0
      %v2577 = vadd.f32 0.0, %v2576
      %2578 = vdwg.mxu0
      %v2579 = vadd.f32 %v2336, %v2562
      %v2580 = vadd.f32 %v2337, %v2565
      %v2581 = vadd.f32 %v2338, %v2568
      %v2582 = vadd.f32 %v2339, %v2571
      %v2583 = vadd.f32 %v2340, %v2574
      %v2584 = vadd.f32 %v2341, %v2577
      %2585 = vrot.lane.b32.xlu0 %v1529, 96
      %v2586 = vpop.permute.xlu0 %2585
      %2587 = vrot.lane.b32.xlu0 %v1532, 96
      %v2588 = vpop.permute.xlu0 %2587
      %2589 = vrot.lane.b32.xlu0 %v1535, 96
      %v2590 = vpop.permute.xlu0 %2589
      %2591 = vrot.lane.b32.xlu0 %v1538, 96
      %v2592 = vpop.permute.xlu0 %2591
      %2593 = vrot.lane.b32.xlu0 %v1541, 96
      %v2594 = vpop.permute.xlu0 %2593
      %2595 = vrot.lane.b32.xlu0 %v1544, 96
      %v2596 = vpop.permute.xlu0 %2595
      %2597 = vrot.lane.b32.xlu0 %v1529, 48
      %v2598 = vpop.permute.xlu0 %2597
      %2599 = vrot.lane.b32.xlu0 %v1532, 48
      %v2600 = vpop.permute.xlu0 %2599
      %2601 = vrot.lane.b32.xlu0 %v1535, 48
      %v2602 = vpop.permute.xlu0 %2601
      %2603 = vrot.lane.b32.xlu0 %v1538, 48
      %v2604 = vpop.permute.xlu0 %2603
      %2605 = vrot.lane.b32.xlu0 %v1541, 48
      %v2606 = vpop.permute.xlu0 %2605
      %2607 = vrot.lane.b32.xlu0 %v1544, 48
      %v2608 = vpop.permute.xlu0 %2607
      %v2609 = vsel %vm608, %v2586, 0
      %v2611 = vsel %vm608, %v2588, 0
      %v2613 = vsel %vm608, %v2590, 0
      %v2615 = vsel %vm608, %v2592, 0
      %v2617 = vsel %vm608, %v2594, 0
      %v2619 = vsel %vm608, %v2596, 0
      %v2621 = vsel %vm608, %v2598, 0
      %v2623 = vsel %vm608, %v2600, 0
      %v2625 = vsel %vm608, %v2602, 0
      %v2627 = vsel %vm608, %v2604, 0
      %v2629 = vsel %vm608, %v2606, 0
      %v2631 = vsel %vm608, %v2608, 0
      %2633 = vmatpush.xpose.msra.mxu0 0.0
      %2634 = vmatpush.xpose.msra.mxu0 0.0
      %2635 = vmatpush.xpose.msra.mxu0 0.0
      %2636 = vmatpush.xpose.msra.mxu0 0.0
      %2637 = vmatpush.xpose.msra.mxu0 0.0
      %2638 = vmatpush.xpose.msra.mxu0 0.0
      %2639 = vmatpush.xpose.msra.mxu0 0.0
      %2640 = vmatpush.xpose.msra.mxu0 0.0
      %2641 = vmatpush.xpose.msra.mxu0 0.0
      %2642 = vmatpush.xpose.msra.mxu0 0.0
      %2643 = vmatpush.xpose.msra.mxu0 %v2631
      %2644 = vmatpush.xpose.msra.mxu0 %v2629
      %2645 = vmatpush.xpose.msra.mxu0 %v2627
      %2646 = vmatpush.xpose.msra.mxu0 %v2625
      %2647 = vmatpush.xpose.msra.mxu0 %v2623
      %2648 = vmatpush.xpose.msra.mxu0 %v2621
      %2649 = vmatmul.f32.gmra.mxu0 %v2609
      %v2650 = vpop.f32.mrf.mxu0
      %v2651 = vadd.f32 0.0, %v2650
      %2652 = vmatmul.f32.gmra.mxu0 %v2611
      %v2653 = vpop.f32.mrf.mxu0
      %v2654 = vadd.f32 0.0, %v2653
      %2655 = vmatmul.f32.gmra.mxu0 %v2613
      %v2656 = vpop.f32.mrf.mxu0
      %v2657 = vadd.f32 0.0, %v2656
      %2658 = vmatmul.f32.gmra.mxu0 %v2615
      %v2659 = vpop.f32.mrf.mxu0
      %v2660 = vadd.f32 0.0, %v2659
      %2661 = vmatmul.f32.gmra.mxu0 %v2617
      %v2662 = vpop.f32.mrf.mxu0
      %v2663 = vadd.f32 0.0, %v2662
      %2664 = vmatmul.f32.gmra.mxu0 %v2619
      %v2665 = vpop.f32.mrf.mxu0
      %v2666 = vadd.f32 0.0, %v2665
      %2667 = vdwg.mxu0
      %v2668 = vmul.f32 %v2651, 0.35355338
      %v2669 = vmul.f32 %v2654, 0.35355338
      %v2670 = vmul.f32 %v2657, 0.35355338
      %v2671 = vmul.f32 %v2660, 0.35355338
      %v2672 = vmul.f32 %v2663, 0.35355338
      %v2673 = vmul.f32 %v2666, 0.35355338
      %v2674 = vsel %vm1629, %v2668, -inf
      %2675 = vmax.xlane.f32.xlu0 %v2674
      %v2676 = vpop.xlane.xlu0 %2675
      %v2677 = vsel %vm1629, %v2669, -inf
      %2678 = vmax.xlane.f32.xlu0 %v2677
      %v2679 = vpop.xlane.xlu0 %2678
      %v2680 = vsel %vm1629, %v2670, -inf
      %2681 = vmax.xlane.f32.xlu0 %v2680
      %v2682 = vpop.xlane.xlu0 %2681
      %v2683 = vsel %vm1629, %v2671, -inf
      %2684 = vmax.xlane.f32.xlu0 %v2683
      %v2685 = vpop.xlane.xlu0 %2684
      %v2686 = vsel %vm1629, %v2672, -inf
      %2687 = vmax.xlane.f32.xlu0 %v2686
      %v2688 = vpop.xlane.xlu0 %2687
      %v2689 = vsel %vm1629, %v2673, -inf
      %2690 = vmax.xlane.f32.xlu0 %v2689
      %v2691 = vpop.xlane.xlu0 %2690
      %v2692 = vsub.f32 %v2668, %v2676
      %v2693 = vsub.f32 %v2669, %v2679
      %v2694 = vsub.f32 %v2670, %v2682
      %v2695 = vsub.f32 %v2671, %v2685
      %v2696 = vsub.f32 %v2672, %v2688
      %v2697 = vsub.f32 %v2673, %v2691
      %v2698 = vmul.f32 %v2692, 1.442695
      %v2699 = vpow.pop %v2698
      %v2700 = vmul.f32 %v2693, 1.442695
      %v2701 = vpow.pop %v2700
      %v2702 = vmul.f32 %v2694, 1.442695
      %v2703 = vpow.pop %v2702
      %v2704 = vmul.f32 %v2695, 1.442695
      %v2705 = vpow.pop %v2704
      %v2706 = vmul.f32 %v2696, 1.442695
      %v2707 = vpow.pop %v2706
      %v2708 = vmul.f32 %v2697, 1.442695
      %v2709 = vpow.pop %v2708
      %v2710 = vsel %vm1629, %v2699, 0.0
      %2711 = vadd.xlane.f32.xlu0 %v2710
      %v2712 = vpop.xlane.xlu0 %2711
      %v2713 = vsel %vm1629, %v2701, 0.0
      %2714 = vadd.xlane.f32.xlu0 %v2713
      %v2715 = vpop.xlane.xlu0 %2714
      %v2716 = vsel %vm1629, %v2703, 0.0
      %2717 = vadd.xlane.f32.xlu0 %v2716
      %v2718 = vpop.xlane.xlu0 %2717
      %v2719 = vsel %vm1629, %v2705, 0.0
      %2720 = vadd.xlane.f32.xlu0 %v2719
      %v2721 = vpop.xlane.xlu0 %2720
      %v2722 = vsel %vm1629, %v2707, 0.0
      %2723 = vadd.xlane.f32.xlu0 %v2722
      %v2724 = vpop.xlane.xlu0 %2723
      %v2725 = vsel %vm1629, %v2709, 0.0
      %2726 = vadd.xlane.f32.xlu0 %v2725
      %v2727 = vpop.xlane.xlu0 %2726
      %v2728 = vrcp.pop %v2712
      %v2729 = vrcp.pop %v2715
      %v2730 = vrcp.pop %v2718
      %v2731 = vrcp.pop %v2721
      %v2732 = vrcp.pop %v2724
      %v2733 = vrcp.pop %v2727
      %v2734 = vmul.f32 %v2699, %v2728
      %v2735 = vmul.f32 %v2701, %v2729
      %v2736 = vmul.f32 %v2703, %v2730
      %v2737 = vmul.f32 %v2705, %v2731
      %v2738 = vmul.f32 %v2707, %v2732
      %v2739 = vmul.f32 %v2709, %v2733
      %2740 = vrot.lane.b32.xlu0 %v1529, 16
      %v2741 = vpop.permute.xlu0 %2740
      %2742 = vrot.lane.b32.xlu0 %v1532, 16
      %v2743 = vpop.permute.xlu0 %2742
      %2744 = vrot.lane.b32.xlu0 %v1535, 16
      %v2745 = vpop.permute.xlu0 %2744
      %2746 = vrot.lane.b32.xlu0 %v1538, 16
      %v2747 = vpop.permute.xlu0 %2746
      %2748 = vrot.lane.b32.xlu0 %v1541, 16
      %v2749 = vpop.permute.xlu0 %2748
      %2750 = vrot.lane.b32.xlu0 %v1544, 16
      %v2751 = vpop.permute.xlu0 %2750
      %v2759 = vsel %vm1629, %v2734, 0
      %v2762 = vsel %vm1629, %v2735, 0
      %v2765 = vsel %vm1629, %v2736, 0
      %v2768 = vsel %vm1629, %v2737, 0
      %v2771 = vsel %vm1629, %v2738, 0
      %v2774 = vsel %vm1629, %v2739, 0
      %2776 = vmatpush.msra.mxu0 0.0
      %2777 = vmatpush.msra.mxu0 0.0
      %2778 = vmatpush.msra.mxu0 0.0
      %2779 = vmatpush.msra.mxu0 0.0
      %2780 = vmatpush.msra.mxu0 0.0
      %2781 = vmatpush.msra.mxu0 0.0
      %2782 = vmatpush.msra.mxu0 0.0
      %2783 = vmatpush.msra.mxu0 0.0
      %2784 = vmatpush.msra.mxu0 0.0
      %2785 = vmatpush.msra.mxu0 0.0
      %2786 = vmatpush.msra.mxu0 %v2751
      %2787 = vmatpush.msra.mxu0 %v2749
      %2788 = vmatpush.msra.mxu0 %v2747
      %2789 = vmatpush.msra.mxu0 %v2745
      %2790 = vmatpush.msra.mxu0 %v2743
      %2791 = vmatpush.msra.mxu0 %v2741
      %2792 = vmatmul.f32.gmra.mxu0 %v2759
      %v2793 = vpop.f32.mrf.mxu0
      %v2794 = vadd.f32 0.0, %v2793
      %2795 = vmatmul.f32.gmra.mxu0 %v2762
      %v2796 = vpop.f32.mrf.mxu0
      %v2797 = vadd.f32 0.0, %v2796
      %2798 = vmatmul.f32.gmra.mxu0 %v2765
      %v2799 = vpop.f32.mrf.mxu0
      %v2800 = vadd.f32 0.0, %v2799
      %2801 = vmatmul.f32.gmra.mxu0 %v2768
      %v2802 = vpop.f32.mrf.mxu0
      %v2803 = vadd.f32 0.0, %v2802
      %2804 = vmatmul.f32.gmra.mxu0 %v2771
      %v2805 = vpop.f32.mrf.mxu0
      %v2806 = vadd.f32 0.0, %v2805
      %2807 = vmatmul.f32.gmra.mxu0 %v2774
      %v2808 = vpop.f32.mrf.mxu0
      %v2809 = vadd.f32 0.0, %v2808
      %2810 = vdwg.mxu0
      %v2812 = vsel %vm608, %v2794, 0
      %v2815 = vsel %vm608, %v2797, 0
      %v2818 = vsel %vm608, %v2800, 0
      %v2821 = vsel %vm608, %v2803, 0
      %v2824 = vsel %vm608, %v2806, 0
      %v2827 = vsel %vm608, %v2809, 0
      %2829 = vmatpush.msra.mxu0 0.0
      %2830 = vmatpush.msra.mxu0 0.0
      %2831 = vmatpush.msra.mxu0 0.0
      %2832 = vmatpush.msra.mxu0 0.0
      %2833 = vmatpush.msra.mxu0 0.0
      %2834 = vmatpush.msra.mxu0 0.0
      %2835 = vmatpush.msra.mxu0 0.0
      %2836 = vmatpush.msra.mxu0 0.0
      %2837 = vmatpush.msra.mxu0 0.0
      %2838 = vmatpush.msra.mxu0 0.0
      %2839 = vmatpush.msra.mxu0 0.0
      %2840 = vmatpush.msra.mxu0 0.0
      %2841 = vmatpush.msra.mxu0 0.0
      %2842 = vmatpush.msra.mxu0 0.0
      %2843 = vmatpush.msra.mxu0 0.0
      %2844 = vmatpush.msra.mxu0 %v1285
      %2845 = vmatmul.f32.gmra.mxu0 %v2812
      %v2846 = vpop.f32.mrf.mxu0
      %v2847 = vadd.f32 0.0, %v2846
      %2848 = vmatmul.f32.gmra.mxu0 %v2815
      %v2849 = vpop.f32.mrf.mxu0
      %v2850 = vadd.f32 0.0, %v2849
      %2851 = vmatmul.f32.gmra.mxu0 %v2818
      %v2852 = vpop.f32.mrf.mxu0
      %v2853 = vadd.f32 0.0, %v2852
      %2854 = vmatmul.f32.gmra.mxu0 %v2821
      %v2855 = vpop.f32.mrf.mxu0
      %v2856 = vadd.f32 0.0, %v2855
      %2857 = vmatmul.f32.gmra.mxu0 %v2824
      %v2858 = vpop.f32.mrf.mxu0
      %v2859 = vadd.f32 0.0, %v2858
      %2860 = vmatmul.f32.gmra.mxu0 %v2827
      %v2861 = vpop.f32.mrf.mxu0
      %v2862 = vadd.f32 0.0, %v2861
      %2863 = vdwg.mxu0
      %v2864 = vadd.f32 %v2579, %v2847
      %v2865 = vadd.f32 %v2580, %v2850
      %v2866 = vadd.f32 %v2581, %v2853
      %v2867 = vadd.f32 %v2582, %v2856
      %v2868 = vadd.f32 %v2583, %v2859
      %v2869 = vadd.f32 %v2584, %v2862
      %2870 = vrot.lane.b32.xlu0 %v1529, 88
      %v2871 = vpop.permute.xlu0 %2870
      %2872 = vrot.lane.b32.xlu0 %v1532, 88
      %v2873 = vpop.permute.xlu0 %2872
      %2874 = vrot.lane.b32.xlu0 %v1535, 88
      %v2875 = vpop.permute.xlu0 %2874
      %2876 = vrot.lane.b32.xlu0 %v1538, 88
      %v2877 = vpop.permute.xlu0 %2876
      %2878 = vrot.lane.b32.xlu0 %v1541, 88
      %v2879 = vpop.permute.xlu0 %2878
      %2880 = vrot.lane.b32.xlu0 %v1544, 88
      %v2881 = vpop.permute.xlu0 %2880
      %v2882 = vsel %vm608, %v2871, 0
      %v2884 = vsel %vm608, %v2873, 0
      %v2886 = vsel %vm608, %v2875, 0
      %v2888 = vsel %vm608, %v2877, 0
      %v2890 = vsel %vm608, %v2879, 0
      %v2892 = vsel %vm608, %v2881, 0
      %2894 = vmatpush.xpose.msra.mxu0 0.0
      %2895 = vmatpush.xpose.msra.mxu0 0.0
      %2896 = vmatpush.xpose.msra.mxu0 0.0
      %2897 = vmatpush.xpose.msra.mxu0 0.0
      %2898 = vmatpush.xpose.msra.mxu0 0.0
      %2899 = vmatpush.xpose.msra.mxu0 0.0
      %2900 = vmatpush.xpose.msra.mxu0 0.0
      %2901 = vmatpush.xpose.msra.mxu0 0.0
      %2902 = vmatpush.xpose.msra.mxu0 0.0
      %2903 = vmatpush.xpose.msra.mxu0 0.0
      %2904 = vmatpush.xpose.msra.mxu0 %v2631
      %2905 = vmatpush.xpose.msra.mxu0 %v2629
      %2906 = vmatpush.xpose.msra.mxu0 %v2627
      %2907 = vmatpush.xpose.msra.mxu0 %v2625
      %2908 = vmatpush.xpose.msra.mxu0 %v2623
      %2909 = vmatpush.xpose.msra.mxu0 %v2621
      %2910 = vmatmul.f32.gmra.mxu0 %v2882
      %v2911 = vpop.f32.mrf.mxu0
      %v2912 = vadd.f32 0.0, %v2911
      %2913 = vmatmul.f32.gmra.mxu0 %v2884
      %v2914 = vpop.f32.mrf.mxu0
      %v2915 = vadd.f32 0.0, %v2914
      %2916 = vmatmul.f32.gmra.mxu0 %v2886
      %v2917 = vpop.f32.mrf.mxu0
      %v2918 = vadd.f32 0.0, %v2917
      %2919 = vmatmul.f32.gmra.mxu0 %v2888
      %v2920 = vpop.f32.mrf.mxu0
      %v2921 = vadd.f32 0.0, %v2920
      %2922 = vmatmul.f32.gmra.mxu0 %v2890
      %v2923 = vpop.f32.mrf.mxu0
      %v2924 = vadd.f32 0.0, %v2923
      %2925 = vmatmul.f32.gmra.mxu0 %v2892
      %v2926 = vpop.f32.mrf.mxu0
      %v2927 = vadd.f32 0.0, %v2926
      %2928 = vdwg.mxu0
      %v2929 = vmul.f32 %v2912, 0.35355338
      %v2930 = vmul.f32 %v2915, 0.35355338
      %v2931 = vmul.f32 %v2918, 0.35355338
      %v2932 = vmul.f32 %v2921, 0.35355338
      %v2933 = vmul.f32 %v2924, 0.35355338
      %v2934 = vmul.f32 %v2927, 0.35355338
      %v2935 = vsel %vm1629, %v2929, -inf
      %2936 = vmax.xlane.f32.xlu0 %v2935
      %v2937 = vpop.xlane.xlu0 %2936
      %v2938 = vsel %vm1629, %v2930, -inf
      %2939 = vmax.xlane.f32.xlu0 %v2938
      %v2940 = vpop.xlane.xlu0 %2939
      %v2941 = vsel %vm1629, %v2931, -inf
      %2942 = vmax.xlane.f32.xlu0 %v2941
      %v2943 = vpop.xlane.xlu0 %2942
      %v2944 = vsel %vm1629, %v2932, -inf
      %2945 = vmax.xlane.f32.xlu0 %v2944
      %v2946 = vpop.xlane.xlu0 %2945
      %v2947 = vsel %vm1629, %v2933, -inf
      %2948 = vmax.xlane.f32.xlu0 %v2947
      %v2949 = vpop.xlane.xlu0 %2948
      %v2950 = vsel %vm1629, %v2934, -inf
      %2951 = vmax.xlane.f32.xlu0 %v2950
      %v2952 = vpop.xlane.xlu0 %2951
      %v2953 = vsub.f32 %v2929, %v2937
      %v2954 = vsub.f32 %v2930, %v2940
      %v2955 = vsub.f32 %v2931, %v2943
      %v2956 = vsub.f32 %v2932, %v2946
      %v2957 = vsub.f32 %v2933, %v2949
      %v2958 = vsub.f32 %v2934, %v2952
      %v2959 = vmul.f32 %v2953, 1.442695
      %v2960 = vpow.pop %v2959
      %v2961 = vmul.f32 %v2954, 1.442695
      %v2962 = vpow.pop %v2961
      %v2963 = vmul.f32 %v2955, 1.442695
      %v2964 = vpow.pop %v2963
      %v2965 = vmul.f32 %v2956, 1.442695
      %v2966 = vpow.pop %v2965
      %v2967 = vmul.f32 %v2957, 1.442695
      %v2968 = vpow.pop %v2967
      %v2969 = vmul.f32 %v2958, 1.442695
      %v2970 = vpow.pop %v2969
      %v2971 = vsel %vm1629, %v2960, 0.0
      %2972 = vadd.xlane.f32.xlu0 %v2971
      %v2973 = vpop.xlane.xlu0 %2972
      %v2974 = vsel %vm1629, %v2962, 0.0
      %2975 = vadd.xlane.f32.xlu0 %v2974
      %v2976 = vpop.xlane.xlu0 %2975
      %v2977 = vsel %vm1629, %v2964, 0.0
      %2978 = vadd.xlane.f32.xlu0 %v2977
      %v2979 = vpop.xlane.xlu0 %2978
      %v2980 = vsel %vm1629, %v2966, 0.0
      %2981 = vadd.xlane.f32.xlu0 %v2980
      %v2982 = vpop.xlane.xlu0 %2981
      %v2983 = vsel %vm1629, %v2968, 0.0
      %2984 = vadd.xlane.f32.xlu0 %v2983
      %v2985 = vpop.xlane.xlu0 %2984
      %v2986 = vsel %vm1629, %v2970, 0.0
      %2987 = vadd.xlane.f32.xlu0 %v2986
      %v2988 = vpop.xlane.xlu0 %2987
      %v2989 = vrcp.pop %v2973
      %v2990 = vrcp.pop %v2976
      %v2991 = vrcp.pop %v2979
      %v2992 = vrcp.pop %v2982
      %v2993 = vrcp.pop %v2985
      %v2994 = vrcp.pop %v2988
      %v2995 = vmul.f32 %v2960, %v2989
      %v2996 = vmul.f32 %v2962, %v2990
      %v2997 = vmul.f32 %v2964, %v2991
      %v2998 = vmul.f32 %v2966, %v2992
      %v2999 = vmul.f32 %v2968, %v2993
      %v3000 = vmul.f32 %v2970, %v2994
      %v3002 = vsel %vm1629, %v2995, 0
      %v3005 = vsel %vm1629, %v2996, 0
      %v3008 = vsel %vm1629, %v2997, 0
      %v3011 = vsel %vm1629, %v2998, 0
      %v3014 = vsel %vm1629, %v2999, 0
      %v3017 = vsel %vm1629, %v3000, 0
      %3019 = vmatpush.msra.mxu0 0.0
      %3020 = vmatpush.msra.mxu0 0.0
      %3021 = vmatpush.msra.mxu0 0.0
      %3022 = vmatpush.msra.mxu0 0.0
      %3023 = vmatpush.msra.mxu0 0.0
      %3024 = vmatpush.msra.mxu0 0.0
      %3025 = vmatpush.msra.mxu0 0.0
      %3026 = vmatpush.msra.mxu0 0.0
      %3027 = vmatpush.msra.mxu0 0.0
      %3028 = vmatpush.msra.mxu0 0.0
      %3029 = vmatpush.msra.mxu0 %v2751
      %3030 = vmatpush.msra.mxu0 %v2749
      %3031 = vmatpush.msra.mxu0 %v2747
      %3032 = vmatpush.msra.mxu0 %v2745
      %3033 = vmatpush.msra.mxu0 %v2743
      %3034 = vmatpush.msra.mxu0 %v2741
      %3035 = vmatmul.f32.gmra.mxu0 %v3002
      %v3036 = vpop.f32.mrf.mxu0
      %v3037 = vadd.f32 0.0, %v3036
      %3038 = vmatmul.f32.gmra.mxu0 %v3005
      %v3039 = vpop.f32.mrf.mxu0
      %v3040 = vadd.f32 0.0, %v3039
      %3041 = vmatmul.f32.gmra.mxu0 %v3008
      %v3042 = vpop.f32.mrf.mxu0
      %v3043 = vadd.f32 0.0, %v3042
      %3044 = vmatmul.f32.gmra.mxu0 %v3011
      %v3045 = vpop.f32.mrf.mxu0
      %v3046 = vadd.f32 0.0, %v3045
      %3047 = vmatmul.f32.gmra.mxu0 %v3014
      %v3048 = vpop.f32.mrf.mxu0
      %v3049 = vadd.f32 0.0, %v3048
      %3050 = vmatmul.f32.gmra.mxu0 %v3017
      %v3051 = vpop.f32.mrf.mxu0
      %v3052 = vadd.f32 0.0, %v3051
      %3053 = vdwg.mxu0
      %v3055 = vsel %vm608, %v3037, 0
      %v3058 = vsel %vm608, %v3040, 0
      %v3061 = vsel %vm608, %v3043, 0
      %v3064 = vsel %vm608, %v3046, 0
      %v3067 = vsel %vm608, %v3049, 0
      %v3070 = vsel %vm608, %v3052, 0
      %3072 = vmatpush.msra.mxu0 0.0
      %3073 = vmatpush.msra.mxu0 0.0
      %3074 = vmatpush.msra.mxu0 0.0
      %3075 = vmatpush.msra.mxu0 0.0
      %3076 = vmatpush.msra.mxu0 0.0
      %3077 = vmatpush.msra.mxu0 0.0
      %3078 = vmatpush.msra.mxu0 0.0
      %3079 = vmatpush.msra.mxu0 0.0
      %3080 = vmatpush.msra.mxu0 0.0
      %3081 = vmatpush.msra.mxu0 0.0
      %3082 = vmatpush.msra.mxu0 0.0
      %3083 = vmatpush.msra.mxu0 0.0
      %3084 = vmatpush.msra.mxu0 0.0
      %3085 = vmatpush.msra.mxu0 0.0
      %3086 = vmatpush.msra.mxu0 0.0
      %3087 = vmatpush.msra.mxu0 %v1286
      %3088 = vmatmul.f32.gmra.mxu0 %v3055
      %v3089 = vpop.f32.mrf.mxu0
      %v3090 = vadd.f32 0.0, %v3089
      %3091 = vmatmul.f32.gmra.mxu0 %v3058
      %v3092 = vpop.f32.mrf.mxu0
      %v3093 = vadd.f32 0.0, %v3092
      %3094 = vmatmul.f32.gmra.mxu0 %v3061
      %v3095 = vpop.f32.mrf.mxu0
      %v3096 = vadd.f32 0.0, %v3095
      %3097 = vmatmul.f32.gmra.mxu0 %v3064
      %v3098 = vpop.f32.mrf.mxu0
      %v3099 = vadd.f32 0.0, %v3098
      %3100 = vmatmul.f32.gmra.mxu0 %v3067
      %v3101 = vpop.f32.mrf.mxu0
      %v3102 = vadd.f32 0.0, %v3101
      %3103 = vmatmul.f32.gmra.mxu0 %v3070
      %v3104 = vpop.f32.mrf.mxu0
      %v3105 = vadd.f32 0.0, %v3104
      %3106 = vdwg.mxu0
      %v3107 = vadd.f32 %v2864, %v3090
      %v3108 = vadd.f32 %v2865, %v3093
      %v3109 = vadd.f32 %v2866, %v3096
      %v3110 = vadd.f32 %v2867, %v3099
      %v3111 = vadd.f32 %v2868, %v3102
      %v3112 = vadd.f32 %v2869, %v3105
      %3113 = vrot.lane.b32.xlu0 %v1529, 80
      %v3114 = vpop.permute.xlu0 %3113
      %3115 = vrot.lane.b32.xlu0 %v1532, 80
      %v3116 = vpop.permute.xlu0 %3115
      %3117 = vrot.lane.b32.xlu0 %v1535, 80
      %v3118 = vpop.permute.xlu0 %3117
      %3119 = vrot.lane.b32.xlu0 %v1538, 80
      %v3120 = vpop.permute.xlu0 %3119
      %3121 = vrot.lane.b32.xlu0 %v1541, 80
      %v3122 = vpop.permute.xlu0 %3121
      %3123 = vrot.lane.b32.xlu0 %v1544, 80
      %v3124 = vpop.permute.xlu0 %3123
      %3125 = vrot.lane.b32.xlu0 %v1529, 40
      %v3126 = vpop.permute.xlu0 %3125
      %3127 = vrot.lane.b32.xlu0 %v1532, 40
      %v3128 = vpop.permute.xlu0 %3127
      %3129 = vrot.lane.b32.xlu0 %v1535, 40
      %v3130 = vpop.permute.xlu0 %3129
      %3131 = vrot.lane.b32.xlu0 %v1538, 40
      %v3132 = vpop.permute.xlu0 %3131
      %3133 = vrot.lane.b32.xlu0 %v1541, 40
      %v3134 = vpop.permute.xlu0 %3133
      %3135 = vrot.lane.b32.xlu0 %v1544, 40
      %v3136 = vpop.permute.xlu0 %3135
      %v3137 = vsel %vm608, %v3114, 0
      %v3139 = vsel %vm608, %v3116, 0
      %v3141 = vsel %vm608, %v3118, 0
      %v3143 = vsel %vm608, %v3120, 0
      %v3145 = vsel %vm608, %v3122, 0
      %v3147 = vsel %vm608, %v3124, 0
      %v3149 = vsel %vm608, %v3126, 0
      %v3151 = vsel %vm608, %v3128, 0
      %v3153 = vsel %vm608, %v3130, 0
      %v3155 = vsel %vm608, %v3132, 0
      %v3157 = vsel %vm608, %v3134, 0
      %v3159 = vsel %vm608, %v3136, 0
      %3161 = vmatpush.xpose.msra.mxu0 0.0
      %3162 = vmatpush.xpose.msra.mxu0 0.0
      %3163 = vmatpush.xpose.msra.mxu0 0.0
      %3164 = vmatpush.xpose.msra.mxu0 0.0
      %3165 = vmatpush.xpose.msra.mxu0 0.0
      %3166 = vmatpush.xpose.msra.mxu0 0.0
      %3167 = vmatpush.xpose.msra.mxu0 0.0
      %3168 = vmatpush.xpose.msra.mxu0 0.0
      %3169 = vmatpush.xpose.msra.mxu0 0.0
      %3170 = vmatpush.xpose.msra.mxu0 0.0
      %3171 = vmatpush.xpose.msra.mxu0 %v3159
      %3172 = vmatpush.xpose.msra.mxu0 %v3157
      %3173 = vmatpush.xpose.msra.mxu0 %v3155
      %3174 = vmatpush.xpose.msra.mxu0 %v3153
      %3175 = vmatpush.xpose.msra.mxu0 %v3151
      %3176 = vmatpush.xpose.msra.mxu0 %v3149
      %3177 = vmatmul.f32.gmra.mxu0 %v3137
      %v3178 = vpop.f32.mrf.mxu0
      %v3179 = vadd.f32 0.0, %v3178
      %3180 = vmatmul.f32.gmra.mxu0 %v3139
      %v3181 = vpop.f32.mrf.mxu0
      %v3182 = vadd.f32 0.0, %v3181
      %3183 = vmatmul.f32.gmra.mxu0 %v3141
      %v3184 = vpop.f32.mrf.mxu0
      %v3185 = vadd.f32 0.0, %v3184
      %3186 = vmatmul.f32.gmra.mxu0 %v3143
      %v3187 = vpop.f32.mrf.mxu0
      %v3188 = vadd.f32 0.0, %v3187
      %3189 = vmatmul.f32.gmra.mxu0 %v3145
      %v3190 = vpop.f32.mrf.mxu0
      %v3191 = vadd.f32 0.0, %v3190
      %3192 = vmatmul.f32.gmra.mxu0 %v3147
      %v3193 = vpop.f32.mrf.mxu0
      %v3194 = vadd.f32 0.0, %v3193
      %3195 = vdwg.mxu0
      %v3196 = vmul.f32 %v3179, 0.35355338
      %v3197 = vmul.f32 %v3182, 0.35355338
      %v3198 = vmul.f32 %v3185, 0.35355338
      %v3199 = vmul.f32 %v3188, 0.35355338
      %v3200 = vmul.f32 %v3191, 0.35355338
      %v3201 = vmul.f32 %v3194, 0.35355338
      %v3202 = vsel %vm1629, %v3196, -inf
      %3203 = vmax.xlane.f32.xlu0 %v3202
      %v3204 = vpop.xlane.xlu0 %3203
      %v3205 = vsel %vm1629, %v3197, -inf
      %3206 = vmax.xlane.f32.xlu0 %v3205
      %v3207 = vpop.xlane.xlu0 %3206
      %v3208 = vsel %vm1629, %v3198, -inf
      %3209 = vmax.xlane.f32.xlu0 %v3208
      %v3210 = vpop.xlane.xlu0 %3209
      %v3211 = vsel %vm1629, %v3199, -inf
      %3212 = vmax.xlane.f32.xlu0 %v3211
      %v3213 = vpop.xlane.xlu0 %3212
      %v3214 = vsel %vm1629, %v3200, -inf
      %3215 = vmax.xlane.f32.xlu0 %v3214
      %v3216 = vpop.xlane.xlu0 %3215
      %v3217 = vsel %vm1629, %v3201, -inf
      %3218 = vmax.xlane.f32.xlu0 %v3217
      %v3219 = vpop.xlane.xlu0 %3218
      %v3220 = vsub.f32 %v3196, %v3204
      %v3221 = vsub.f32 %v3197, %v3207
      %v3222 = vsub.f32 %v3198, %v3210
      %v3223 = vsub.f32 %v3199, %v3213
      %v3224 = vsub.f32 %v3200, %v3216
      %v3225 = vsub.f32 %v3201, %v3219
      %v3226 = vmul.f32 %v3220, 1.442695
      %v3227 = vpow.pop %v3226
      %v3228 = vmul.f32 %v3221, 1.442695
      %v3229 = vpow.pop %v3228
      %v3230 = vmul.f32 %v3222, 1.442695
      %v3231 = vpow.pop %v3230
      %v3232 = vmul.f32 %v3223, 1.442695
      %v3233 = vpow.pop %v3232
      %v3234 = vmul.f32 %v3224, 1.442695
      %v3235 = vpow.pop %v3234
      %v3236 = vmul.f32 %v3225, 1.442695
      %v3237 = vpow.pop %v3236
      %v3238 = vsel %vm1629, %v3227, 0.0
      %3239 = vadd.xlane.f32.xlu0 %v3238
      %v3240 = vpop.xlane.xlu0 %3239
      %v3241 = vsel %vm1629, %v3229, 0.0
      %3242 = vadd.xlane.f32.xlu0 %v3241
      %v3243 = vpop.xlane.xlu0 %3242
      %v3244 = vsel %vm1629, %v3231, 0.0
      %3245 = vadd.xlane.f32.xlu0 %v3244
      %v3246 = vpop.xlane.xlu0 %3245
      %v3247 = vsel %vm1629, %v3233, 0.0
      %3248 = vadd.xlane.f32.xlu0 %v3247
      %v3249 = vpop.xlane.xlu0 %3248
      %v3250 = vsel %vm1629, %v3235, 0.0
      %3251 = vadd.xlane.f32.xlu0 %v3250
      %v3252 = vpop.xlane.xlu0 %3251
      %v3253 = vsel %vm1629, %v3237, 0.0
      %3254 = vadd.xlane.f32.xlu0 %v3253
      %v3255 = vpop.xlane.xlu0 %3254
      %v3256 = vrcp.pop %v3240
      %v3257 = vrcp.pop %v3243
      %v3258 = vrcp.pop %v3246
      %v3259 = vrcp.pop %v3249
      %v3260 = vrcp.pop %v3252
      %v3261 = vrcp.pop %v3255
      %v3262 = vmul.f32 %v3227, %v3256
      %v3263 = vmul.f32 %v3229, %v3257
      %v3264 = vmul.f32 %v3231, %v3258
      %v3265 = vmul.f32 %v3233, %v3259
      %v3266 = vmul.f32 %v3235, %v3260
      %v3267 = vmul.f32 %v3237, %v3261
      %3268 = vrot.lane.b32.xlu0 %v1529, 8
      %v3269 = vpop.permute.xlu0 %3268
      %3270 = vrot.lane.b32.xlu0 %v1532, 8
      %v3271 = vpop.permute.xlu0 %3270
      %3272 = vrot.lane.b32.xlu0 %v1535, 8
      %v3273 = vpop.permute.xlu0 %3272
      %3274 = vrot.lane.b32.xlu0 %v1538, 8
      %v3275 = vpop.permute.xlu0 %3274
      %3276 = vrot.lane.b32.xlu0 %v1541, 8
      %v3277 = vpop.permute.xlu0 %3276
      %3278 = vrot.lane.b32.xlu0 %v1544, 8
      %v3279 = vpop.permute.xlu0 %3278
      %v3287 = vsel %vm1629, %v3262, 0
      %v3290 = vsel %vm1629, %v3263, 0
      %v3293 = vsel %vm1629, %v3264, 0
      %v3296 = vsel %vm1629, %v3265, 0
      %v3299 = vsel %vm1629, %v3266, 0
      %v3302 = vsel %vm1629, %v3267, 0
      %3304 = vmatpush.msra.mxu0 0.0
      %3305 = vmatpush.msra.mxu0 0.0
      %3306 = vmatpush.msra.mxu0 0.0
      %3307 = vmatpush.msra.mxu0 0.0
      %3308 = vmatpush.msra.mxu0 0.0
      %3309 = vmatpush.msra.mxu0 0.0
      %3310 = vmatpush.msra.mxu0 0.0
      %3311 = vmatpush.msra.mxu0 0.0
      %3312 = vmatpush.msra.mxu0 0.0
      %3313 = vmatpush.msra.mxu0 0.0
      %3314 = vmatpush.msra.mxu0 %v3279
      %3315 = vmatpush.msra.mxu0 %v3277
      %3316 = vmatpush.msra.mxu0 %v3275
      %3317 = vmatpush.msra.mxu0 %v3273
      %3318 = vmatpush.msra.mxu0 %v3271
      %3319 = vmatpush.msra.mxu0 %v3269
      %3320 = vmatmul.f32.gmra.mxu0 %v3287
      %v3321 = vpop.f32.mrf.mxu0
      %v3322 = vadd.f32 0.0, %v3321
      %3323 = vmatmul.f32.gmra.mxu0 %v3290
      %v3324 = vpop.f32.mrf.mxu0
      %v3325 = vadd.f32 0.0, %v3324
      %3326 = vmatmul.f32.gmra.mxu0 %v3293
      %v3327 = vpop.f32.mrf.mxu0
      %v3328 = vadd.f32 0.0, %v3327
      %3329 = vmatmul.f32.gmra.mxu0 %v3296
      %v3330 = vpop.f32.mrf.mxu0
      %v3331 = vadd.f32 0.0, %v3330
      %3332 = vmatmul.f32.gmra.mxu0 %v3299
      %v3333 = vpop.f32.mrf.mxu0
      %v3334 = vadd.f32 0.0, %v3333
      %3335 = vmatmul.f32.gmra.mxu0 %v3302
      %v3336 = vpop.f32.mrf.mxu0
      %v3337 = vadd.f32 0.0, %v3336
      %3338 = vdwg.mxu0
      %v3340 = vsel %vm608, %v3322, 0
      %v3343 = vsel %vm608, %v3325, 0
      %v3346 = vsel %vm608, %v3328, 0
      %v3349 = vsel %vm608, %v3331, 0
      %v3352 = vsel %vm608, %v3334, 0
      %v3355 = vsel %vm608, %v3337, 0
      %3357 = vmatpush.msra.mxu0 0.0
      %3358 = vmatpush.msra.mxu0 0.0
      %3359 = vmatpush.msra.mxu0 0.0
      %3360 = vmatpush.msra.mxu0 0.0
      %3361 = vmatpush.msra.mxu0 0.0
      %3362 = vmatpush.msra.mxu0 0.0
      %3363 = vmatpush.msra.mxu0 0.0
      %3364 = vmatpush.msra.mxu0 0.0
      %3365 = vmatpush.msra.mxu0 0.0
      %3366 = vmatpush.msra.mxu0 0.0
      %3367 = vmatpush.msra.mxu0 0.0
      %3368 = vmatpush.msra.mxu0 0.0
      %3369 = vmatpush.msra.mxu0 0.0
      %3370 = vmatpush.msra.mxu0 0.0
      %3371 = vmatpush.msra.mxu0 0.0
      %3372 = vmatpush.msra.mxu0 %v1287
      %3373 = vmatmul.f32.gmra.mxu0 %v3340
      %v3374 = vpop.f32.mrf.mxu0
      %v3375 = vadd.f32 0.0, %v3374
      %3376 = vmatmul.f32.gmra.mxu0 %v3343
      %v3377 = vpop.f32.mrf.mxu0
      %v3378 = vadd.f32 0.0, %v3377
      %3379 = vmatmul.f32.gmra.mxu0 %v3346
      %v3380 = vpop.f32.mrf.mxu0
      %v3381 = vadd.f32 0.0, %v3380
      %3382 = vmatmul.f32.gmra.mxu0 %v3349
      %v3383 = vpop.f32.mrf.mxu0
      %v3384 = vadd.f32 0.0, %v3383
      %3385 = vmatmul.f32.gmra.mxu0 %v3352
      %v3386 = vpop.f32.mrf.mxu0
      %v3387 = vadd.f32 0.0, %v3386
      %3388 = vmatmul.f32.gmra.mxu0 %v3355
      %v3389 = vpop.f32.mrf.mxu0
      %v3390 = vadd.f32 0.0, %v3389
      %3391 = vdwg.mxu0
      %v3392 = vadd.f32 %v3107, %v3375
      %v3393 = vadd.f32 %v3108, %v3378
      %v3394 = vadd.f32 %v3109, %v3381
      %v3395 = vadd.f32 %v3110, %v3384
      %v3396 = vadd.f32 %v3111, %v3387
      %v3397 = vadd.f32 %v3112, %v3390
      %3398 = vrot.lane.b32.xlu0 %v1529, 72
      %v3399 = vpop.permute.xlu0 %3398
      %3400 = vrot.lane.b32.xlu0 %v1532, 72
      %v3401 = vpop.permute.xlu0 %3400
      %3402 = vrot.lane.b32.xlu0 %v1535, 72
      %v3403 = vpop.permute.xlu0 %3402
      %3404 = vrot.lane.b32.xlu0 %v1538, 72
      %v3405 = vpop.permute.xlu0 %3404
      %3406 = vrot.lane.b32.xlu0 %v1541, 72
      %v3407 = vpop.permute.xlu0 %3406
      %3408 = vrot.lane.b32.xlu0 %v1544, 72
      %v3409 = vpop.permute.xlu0 %3408
      %v3410 = vsel %vm608, %v3399, 0
      %v3412 = vsel %vm608, %v3401, 0
      %v3414 = vsel %vm608, %v3403, 0
      %v3416 = vsel %vm608, %v3405, 0
      %v3418 = vsel %vm608, %v3407, 0
      %v3420 = vsel %vm608, %v3409, 0
      %3422 = vmatpush.xpose.msra.mxu0 0.0
      %3423 = vmatpush.xpose.msra.mxu0 0.0
      %3424 = vmatpush.xpose.msra.mxu0 0.0
      %3425 = vmatpush.xpose.msra.mxu0 0.0
      %3426 = vmatpush.xpose.msra.mxu0 0.0
      %3427 = vmatpush.xpose.msra.mxu0 0.0
      %3428 = vmatpush.xpose.msra.mxu0 0.0
      %3429 = vmatpush.xpose.msra.mxu0 0.0
      %3430 = vmatpush.xpose.msra.mxu0 0.0
      %3431 = vmatpush.xpose.msra.mxu0 0.0
      %3432 = vmatpush.xpose.msra.mxu0 %v3159
      %3433 = vmatpush.xpose.msra.mxu0 %v3157
      %3434 = vmatpush.xpose.msra.mxu0 %v3155
      %3435 = vmatpush.xpose.msra.mxu0 %v3153
      %3436 = vmatpush.xpose.msra.mxu0 %v3151
      %3437 = vmatpush.xpose.msra.mxu0 %v3149
      %3438 = vmatmul.f32.gmra.mxu0 %v3410
      %v3439 = vpop.f32.mrf.mxu0
      %v3440 = vadd.f32 0.0, %v3439
      %3441 = vmatmul.f32.gmra.mxu0 %v3412
      %v3442 = vpop.f32.mrf.mxu0
      %v3443 = vadd.f32 0.0, %v3442
      %3444 = vmatmul.f32.gmra.mxu0 %v3414
      %v3445 = vpop.f32.mrf.mxu0
      %v3446 = vadd.f32 0.0, %v3445
      %3447 = vmatmul.f32.gmra.mxu0 %v3416
      %v3448 = vpop.f32.mrf.mxu0
      %v3449 = vadd.f32 0.0, %v3448
      %3450 = vmatmul.f32.gmra.mxu0 %v3418
      %v3451 = vpop.f32.mrf.mxu0
      %v3452 = vadd.f32 0.0, %v3451
      %3453 = vmatmul.f32.gmra.mxu0 %v3420
      %v3454 = vpop.f32.mrf.mxu0
      %v3455 = vadd.f32 0.0, %v3454
      %3456 = vdwg.mxu0
      %v3457 = vmul.f32 %v3440, 0.35355338
      %v3458 = vmul.f32 %v3443, 0.35355338
      %v3459 = vmul.f32 %v3446, 0.35355338
      %v3460 = vmul.f32 %v3449, 0.35355338
      %v3461 = vmul.f32 %v3452, 0.35355338
      %v3462 = vmul.f32 %v3455, 0.35355338
      %v3463 = vsel %vm1629, %v3457, -inf
      %3464 = vmax.xlane.f32.xlu0 %v3463
      %v3465 = vpop.xlane.xlu0 %3464
      %v3466 = vsel %vm1629, %v3458, -inf
      %3467 = vmax.xlane.f32.xlu0 %v3466
      %v3468 = vpop.xlane.xlu0 %3467
      %v3469 = vsel %vm1629, %v3459, -inf
      %3470 = vmax.xlane.f32.xlu0 %v3469
      %v3471 = vpop.xlane.xlu0 %3470
      %v3472 = vsel %vm1629, %v3460, -inf
      %3473 = vmax.xlane.f32.xlu0 %v3472
      %v3474 = vpop.xlane.xlu0 %3473
      %v3475 = vsel %vm1629, %v3461, -inf
      %3476 = vmax.xlane.f32.xlu0 %v3475
      %v3477 = vpop.xlane.xlu0 %3476
      %v3478 = vsel %vm1629, %v3462, -inf
      %3479 = vmax.xlane.f32.xlu0 %v3478
      %v3480 = vpop.xlane.xlu0 %3479
      %v3481 = vsub.f32 %v3457, %v3465
      %v3482 = vsub.f32 %v3458, %v3468
      %v3483 = vsub.f32 %v3459, %v3471
      %v3484 = vsub.f32 %v3460, %v3474
      %v3485 = vsub.f32 %v3461, %v3477
      %v3486 = vsub.f32 %v3462, %v3480
      %v3487 = vmul.f32 %v3481, 1.442695
      %v3488 = vpow.pop %v3487
      %v3489 = vmul.f32 %v3482, 1.442695
      %v3490 = vpow.pop %v3489
      %v3491 = vmul.f32 %v3483, 1.442695
      %v3492 = vpow.pop %v3491
      %v3493 = vmul.f32 %v3484, 1.442695
      %v3494 = vpow.pop %v3493
      %v3495 = vmul.f32 %v3485, 1.442695
      %v3496 = vpow.pop %v3495
      %v3497 = vmul.f32 %v3486, 1.442695
      %v3498 = vpow.pop %v3497
      %v3499 = vsel %vm1629, %v3488, 0.0
      %3500 = vadd.xlane.f32.xlu0 %v3499
      %v3501 = vpop.xlane.xlu0 %3500
      %v3502 = vsel %vm1629, %v3490, 0.0
      %3503 = vadd.xlane.f32.xlu0 %v3502
      %v3504 = vpop.xlane.xlu0 %3503
      %v3505 = vsel %vm1629, %v3492, 0.0
      %3506 = vadd.xlane.f32.xlu0 %v3505
      %v3507 = vpop.xlane.xlu0 %3506
      %v3508 = vsel %vm1629, %v3494, 0.0
      %3509 = vadd.xlane.f32.xlu0 %v3508
      %v3510 = vpop.xlane.xlu0 %3509
      %v3511 = vsel %vm1629, %v3496, 0.0
      %3512 = vadd.xlane.f32.xlu0 %v3511
      %v3513 = vpop.xlane.xlu0 %3512
      %v3514 = vsel %vm1629, %v3498, 0.0
      %3515 = vadd.xlane.f32.xlu0 %v3514
      %v3516 = vpop.xlane.xlu0 %3515
      %v3517 = vrcp.pop %v3501
      %v3518 = vrcp.pop %v3504
      %v3519 = vrcp.pop %v3507
      %v3520 = vrcp.pop %v3510
      %v3521 = vrcp.pop %v3513
      %v3522 = vrcp.pop %v3516
      %v3523 = vmul.f32 %v3488, %v3517
      %v3524 = vmul.f32 %v3490, %v3518
      %v3525 = vmul.f32 %v3492, %v3519
      %v3526 = vmul.f32 %v3494, %v3520
      %v3527 = vmul.f32 %v3496, %v3521
      %v3528 = vmul.f32 %v3498, %v3522
      %v3530 = vsel %vm1629, %v3523, 0
      %v3533 = vsel %vm1629, %v3524, 0
      %v3536 = vsel %vm1629, %v3525, 0
      %v3539 = vsel %vm1629, %v3526, 0
      %v3542 = vsel %vm1629, %v3527, 0
      %v3545 = vsel %vm1629, %v3528, 0
      %3547 = vmatpush.msra.mxu0 0.0
      %3548 = vmatpush.msra.mxu0 0.0
      %3549 = vmatpush.msra.mxu0 0.0
      %3550 = vmatpush.msra.mxu0 0.0
      %3551 = vmatpush.msra.mxu0 0.0
      %3552 = vmatpush.msra.mxu0 0.0
      %3553 = vmatpush.msra.mxu0 0.0
      %3554 = vmatpush.msra.mxu0 0.0
      %3555 = vmatpush.msra.mxu0 0.0
      %3556 = vmatpush.msra.mxu0 0.0
      %3557 = vmatpush.msra.mxu0 %v3279
      %3558 = vmatpush.msra.mxu0 %v3277
      %3559 = vmatpush.msra.mxu0 %v3275
      %3560 = vmatpush.msra.mxu0 %v3273
      %3561 = vmatpush.msra.mxu0 %v3271
      %3562 = vmatpush.msra.mxu0 %v3269
      %3563 = vmatmul.f32.gmra.mxu0 %v3530
      %v3564 = vpop.f32.mrf.mxu0
      %v3565 = vadd.f32 0.0, %v3564
      %3566 = vmatmul.f32.gmra.mxu0 %v3533
      %v3567 = vpop.f32.mrf.mxu0
      %v3568 = vadd.f32 0.0, %v3567
      %3569 = vmatmul.f32.gmra.mxu0 %v3536
      %v3570 = vpop.f32.mrf.mxu0
      %v3571 = vadd.f32 0.0, %v3570
      %3572 = vmatmul.f32.gmra.mxu0 %v3539
      %v3573 = vpop.f32.mrf.mxu0
      %v3574 = vadd.f32 0.0, %v3573
      %3575 = vmatmul.f32.gmra.mxu0 %v3542
      %v3576 = vpop.f32.mrf.mxu0
      %v3577 = vadd.f32 0.0, %v3576
      %3578 = vmatmul.f32.gmra.mxu0 %v3545
      %v3579 = vpop.f32.mrf.mxu0
      %v3580 = vadd.f32 0.0, %v3579
      %3581 = vdwg.mxu0
      %v3583 = vsel %vm608, %v3565, 0
      %v3586 = vsel %vm608, %v3568, 0
      %v3589 = vsel %vm608, %v3571, 0
      %v3592 = vsel %vm608, %v3574, 0
      %v3595 = vsel %vm608, %v3577, 0
      %v3598 = vsel %vm608, %v3580, 0
      %3600 = vmatpush.msra.mxu0 0.0
      %3601 = vmatpush.msra.mxu0 0.0
      %3602 = vmatpush.msra.mxu0 0.0
      %3603 = vmatpush.msra.mxu0 0.0
      %3604 = vmatpush.msra.mxu0 0.0
      %3605 = vmatpush.msra.mxu0 0.0
      %3606 = vmatpush.msra.mxu0 0.0
      %3607 = vmatpush.msra.mxu0 0.0
      %3608 = vmatpush.msra.mxu0 0.0
      %3609 = vmatpush.msra.mxu0 0.0
      %3610 = vmatpush.msra.mxu0 0.0
      %3611 = vmatpush.msra.mxu0 0.0
      %3612 = vmatpush.msra.mxu0 0.0
      %3613 = vmatpush.msra.mxu0 0.0
      %3614 = vmatpush.msra.mxu0 0.0
      %3615 = vmatpush.msra.mxu0 %v1288
      %3616 = vmatmul.f32.gmra.mxu0 %v3583
      %v3617 = vpop.f32.mrf.mxu0
      %v3618 = vadd.f32 0.0, %v3617
      %3619 = vmatmul.f32.gmra.mxu0 %v3586
      %v3620 = vpop.f32.mrf.mxu0
      %v3621 = vadd.f32 0.0, %v3620
      %3622 = vmatmul.f32.gmra.mxu0 %v3589
      %v3623 = vpop.f32.mrf.mxu0
      %v3624 = vadd.f32 0.0, %v3623
      %3625 = vmatmul.f32.gmra.mxu0 %v3592
      %v3626 = vpop.f32.mrf.mxu0
      %v3627 = vadd.f32 0.0, %v3626
      %3628 = vmatmul.f32.gmra.mxu0 %v3595
      %v3629 = vpop.f32.mrf.mxu0
      %v3630 = vadd.f32 0.0, %v3629
      %3631 = vmatmul.f32.gmra.mxu0 %v3598
      %v3632 = vpop.f32.mrf.mxu0
      %v3633 = vadd.f32 0.0, %v3632
      %3634 = vdwg.mxu0
      %v3635 = vadd.f32 %v3392, %v3618
      %v3636 = vadd.f32 %v3393, %v3621
      %v3637 = vadd.f32 %v3394, %v3624
      %v3638 = vadd.f32 %v3395, %v3627
      %v3639 = vadd.f32 %v3396, %v3630
      %v3640 = vadd.f32 %v3397, %v3633
      %v3641 = vperm.slane %v1270, 0
      %v3642 = vadd.f32 %v3635, %v3641
      %v3643 = vadd.f32 %v3636, %v3641
      %v3644 = vadd.f32 %v3637, %v3641
      %v3645 = vadd.f32 %v3638, %v3641
      %v3646 = vadd.f32 %v3639, %v3641
      %v3647 = vadd.f32 %v3640, %v3641
      %v3648 = vmul.f32 %v3642, 0.50381875
      %v3649 = vmul.f32 %v3643, 0.50381875
      %v3650 = vmul.f32 %v3644, 0.50381875
      %v3651 = vmul.f32 %v3645, 0.50381875
      %v3652 = vmul.f32 %v3646, 0.50381875
      %v3653 = vmul.f32 %v3647, 0.50381875
      %v3654 = vadd.f32 %v577, %v3648
      %v3655 = vadd.f32 %v1264, %v3649
      %v3656 = vadd.f32 %v1254, %v3650
      %v3657 = vadd.f32 %v1057, %v3651
      %v3658 = vadd.f32 %v1265, %v3652
      %v3659 = vadd.f32 %v1261, %v3653
      %v3660 = vsel %vm1338, %v3654, 0.0
      %3661 = vadd.xlane.f32.xlu0 %v3660
      %v3662 = vpop.xlane.xlu0 %3661
      %v3663 = vsel %vm1338, %v3655, 0.0
      %3664 = vadd.xlane.f32.xlu0 %v3663
      %v3665 = vpop.xlane.xlu0 %3664
      %v3666 = vsel %vm1338, %v3656, 0.0
      %3667 = vadd.xlane.f32.xlu0 %v3666
      %v3668 = vpop.xlane.xlu0 %3667
      %v3669 = vsel %vm1338, %v3657, 0.0
      %3670 = vadd.xlane.f32.xlu0 %v3669
      %v3671 = vpop.xlane.xlu0 %3670
      %v3672 = vsel %vm1338, %v3658, 0.0
      %3673 = vadd.xlane.f32.xlu0 %v3672
      %v3674 = vpop.xlane.xlu0 %3673
      %v3675 = vsel %vm1338, %v3659, 0.0
      %3676 = vadd.xlane.f32.xlu0 %v3675
      %v3677 = vpop.xlane.xlu0 %3676
      %v3678 = vmul.f32 %v3662, %v1363
      %v3679 = vmul.f32 %v3665, %v1363
      %v3680 = vmul.f32 %v3668, %v1363
      %v3681 = vmul.f32 %v3671, %v1363
      %v3682 = vmul.f32 %v3674, %v1363
      %v3683 = vmul.f32 %v3677, %v1363
      %v3684 = vsub.f32 %v3654, %v3678
      %v3685 = vsub.f32 %v3655, %v3679
      %v3686 = vsub.f32 %v3656, %v3680
      %v3687 = vsub.f32 %v3657, %v3681
      %v3688 = vsub.f32 %v3658, %v3682
      %v3689 = vsub.f32 %v3659, %v3683
      %v3690 = vmul.f32 %v3684, %v3684
      %v3691 = vmul.f32 %v3685, %v3685
      %v3692 = vmul.f32 %v3686, %v3686
      %v3693 = vmul.f32 %v3687, %v3687
      %v3694 = vmul.f32 %v3688, %v3688
      %v3695 = vmul.f32 %v3689, %v3689
      %v3696 = vsel %vm1338, %v3690, 0.0
      %3697 = vadd.xlane.f32.xlu0 %v3696
      %v3698 = vpop.xlane.xlu0 %3697
      %v3699 = vsel %vm1338, %v3691, 0.0
      %3700 = vadd.xlane.f32.xlu0 %v3699
      %v3701 = vpop.xlane.xlu0 %3700
      %v3702 = vsel %vm1338, %v3692, 0.0
      %3703 = vadd.xlane.f32.xlu0 %v3702
      %v3704 = vpop.xlane.xlu0 %3703
      %v3705 = vsel %vm1338, %v3693, 0.0
      %3706 = vadd.xlane.f32.xlu0 %v3705
      %v3707 = vpop.xlane.xlu0 %3706
      %v3708 = vsel %vm1338, %v3694, 0.0
      %3709 = vadd.xlane.f32.xlu0 %v3708
      %v3710 = vpop.xlane.xlu0 %3709
      %v3711 = vsel %vm1338, %v3695, 0.0
      %3712 = vadd.xlane.f32.xlu0 %v3711
      %v3713 = vpop.xlane.xlu0 %3712
      %v3714 = vmul.f32 %v3698, %v1363
      %v3715 = vmul.f32 %v3701, %v1363
      %v3716 = vmul.f32 %v3704, %v1363
      %v3717 = vmul.f32 %v3707, %v1363
      %v3718 = vmul.f32 %v3710, %v1363
      %v3719 = vmul.f32 %v3713, %v1363
      %v3720 = vadd.f32 %v3714, 1e-05
      %v3721 = vadd.f32 %v3715, 1e-05
      %v3722 = vadd.f32 %v3716, 1e-05
      %v3723 = vadd.f32 %v3717, 1e-05
      %v3724 = vadd.f32 %v3718, 1e-05
      %v3725 = vadd.f32 %v3719, 1e-05
      %v3726 = vrsqrt.pop %v3720
      %v3727 = vmul.f32 %v3726, %v3720
      %v3728 = vmul.f32 %v3727, %v3726
      %v3729 = vmul.f32 0.5, %v3728
      %v3730 = vsub.f32 1.5, %v3729
      %v3731 = vmul.f32 %v3726, %v3730
      %vm3732 = vweird.f32 %v3720
      %vm3733 = vweird.f32 %v3726
      %vm3734 = vmor %vm3732, %vm3733
      %v3735 = vsel %vm3734, %v3726, %v3731
      %v3736 = vrsqrt.pop %v3721
      %v3737 = vmul.f32 %v3736, %v3721
      %v3738 = vmul.f32 %v3737, %v3736
      %v3739 = vmul.f32 0.5, %v3738
      %v3740 = vsub.f32 1.5, %v3739
      %v3741 = vmul.f32 %v3736, %v3740
      %vm3742 = vweird.f32 %v3721
      %vm3743 = vweird.f32 %v3736
      %vm3744 = vmor %vm3742, %vm3743
      %v3745 = vsel %vm3744, %v3736, %v3741
      %v3746 = vrsqrt.pop %v3722
      %v3747 = vmul.f32 %v3746, %v3722
      %v3748 = vmul.f32 %v3747, %v3746
      %v3749 = vmul.f32 0.5, %v3748
      %v3750 = vsub.f32 1.5, %v3749
      %v3751 = vmul.f32 %v3746, %v3750
      %vm3752 = vweird.f32 %v3722
      %vm3753 = vweird.f32 %v3746
      %vm3754 = vmor %vm3752, %vm3753
      %v3755 = vsel %vm3754, %v3746, %v3751
      %v3756 = vrsqrt.pop %v3723
      %v3757 = vmul.f32 %v3756, %v3723
      %v3758 = vmul.f32 %v3757, %v3756
      %v3759 = vmul.f32 0.5, %v3758
      %v3760 = vsub.f32 1.5, %v3759
      %v3761 = vmul.f32 %v3756, %v3760
      %vm3762 = vweird.f32 %v3723
      %vm3763 = vweird.f32 %v3756
      %vm3764 = vmor %vm3762, %vm3763
      %v3765 = vsel %vm3764, %v3756, %v3761
      %v3766 = vrsqrt.pop %v3724
      %v3767 = vmul.f32 %v3766, %v3724
      %v3768 = vmul.f32 %v3767, %v3766
      %v3769 = vmul.f32 0.5, %v3768
      %v3770 = vsub.f32 1.5, %v3769
      %v3771 = vmul.f32 %v3766, %v3770
      %vm3772 = vweird.f32 %v3724
      %vm3773 = vweird.f32 %v3766
      %vm3774 = vmor %vm3772, %vm3773
      %v3775 = vsel %vm3774, %v3766, %v3771
      %v3776 = vrsqrt.pop %v3725
      %v3777 = vmul.f32 %v3776, %v3725
      %v3778 = vmul.f32 %v3777, %v3776
      %v3779 = vmul.f32 0.5, %v3778
      %v3780 = vsub.f32 1.5, %v3779
      %v3781 = vmul.f32 %v3776, %v3780
      %vm3782 = vweird.f32 %v3725
      %vm3783 = vweird.f32 %v3776
      %vm3784 = vmor %vm3782, %vm3783
      %v3785 = vsel %vm3784, %v3776, %v3781
      %v3786 = vmul.f32 %v3684, %v3735
      %v3787 = vmul.f32 %v3685, %v3745
      %v3788 = vmul.f32 %v3686, %v3755
      %v3789 = vmul.f32 %v3687, %v3765
      %v3790 = vmul.f32 %v3688, %v3775
      %v3791 = vmul.f32 %v3689, %v3785
      %v3792 = vperm.slane %v1268, 0
      %v3793 = vmul.f32 %v3786, %v3792
      %v3794 = vmul.f32 %v3787, %v3792
      %v3795 = vmul.f32 %v3788, %v3792
      %v3796 = vmul.f32 %v3789, %v3792
      %v3797 = vmul.f32 %v3790, %v3792
      %v3798 = vmul.f32 %v3791, %v3792
      %v3799 = vperm.slane %v1269, 0
      %v3800 = vadd.f32 %v3793, %v3799
      %v3801 = vadd.f32 %v3794, %v3799
      %v3802 = vadd.f32 %v3795, %v3799
      %v3803 = vadd.f32 %v3796, %v3799
      %v3804 = vadd.f32 %v3797, %v3799
      %v3805 = vadd.f32 %v3798, %v3799
      %v3807 = vperm.slane %v1305, 0
      %v3808 = vperm.slane %v1305, 1
      %v3812 = vsel %vm1338, %v3800, 0
      %v3815 = vsel %vm1338, %v3801, 0
      %v3818 = vsel %vm1338, %v3802, 0
      %v3821 = vsel %vm1338, %v3803, 0
      %v3824 = vsel %vm1338, %v3804, 0
      %v3827 = vsel %vm1338, %v3805, 0
      %3829 = vmatpush.msra.mxu0 0.0
      %3830 = vmatpush.msra.mxu0 0.0
      %3831 = vmatpush.msra.mxu0 0.0
      %3832 = vmatpush.msra.mxu0 0.0
      %3833 = vmatpush.msra.mxu0 0.0
      %3834 = vmatpush.msra.mxu0 0.0
      %3835 = vmatpush.msra.mxu0 0.0
      %3836 = vmatpush.msra.mxu0 0.0
      %3837 = vmatpush.msra.mxu0 %v1303
      %3838 = vmatpush.msra.mxu0 %v1301
      %3839 = vmatpush.msra.mxu0 %v1299
      %3840 = vmatpush.msra.mxu0 %v1297
      %3841 = vmatpush.msra.mxu0 %v1295
      %3842 = vmatpush.msra.mxu0 %v1293
      %3843 = vmatpush.msra.mxu0 %v1291
      %3844 = vmatpush.msra.mxu0 %v1289
      %3845 = vmatmul.f32.gmra.mxu0 %v3812
      %v3846 = vpop.f32.mrf.mxu0
      %v3847 = vadd.f32 %v3807, %v3846
      %3848 = vmatmul.f32.gmra.mxu0 %v3815
      %v3849 = vpop.f32.mrf.mxu0
      %v3850 = vadd.f32 %v3807, %v3849
      %3851 = vmatmul.f32.gmra.mxu0 %v3818
      %v3852 = vpop.f32.mrf.mxu0
      %v3853 = vadd.f32 %v3807, %v3852
      %3854 = vmatmul.f32.gmra.mxu0 %v3821
      %v3855 = vpop.f32.mrf.mxu0
      %v3856 = vadd.f32 %v3807, %v3855
      %3857 = vmatmul.f32.gmra.mxu0 %v3824
      %v3858 = vpop.f32.mrf.mxu0
      %v3859 = vadd.f32 %v3807, %v3858
      %3860 = vmatmul.f32.gmra.mxu0 %v3827
      %v3861 = vpop.f32.mrf.mxu0
      %v3862 = vadd.f32 %v3807, %v3861
      %3863 = vdwg.mxu0
      %3864 = vmatpush.msra.mxu0 0.0
      %3865 = vmatpush.msra.mxu0 0.0
      %3866 = vmatpush.msra.mxu0 0.0
      %3867 = vmatpush.msra.mxu0 0.0
      %3868 = vmatpush.msra.mxu0 0.0
      %3869 = vmatpush.msra.mxu0 0.0
      %3870 = vmatpush.msra.mxu0 0.0
      %3871 = vmatpush.msra.mxu0 0.0
      %3872 = vmatpush.msra.mxu0 %v1304
      %3873 = vmatpush.msra.mxu0 %v1302
      %3874 = vmatpush.msra.mxu0 %v1300
      %3875 = vmatpush.msra.mxu0 %v1298
      %3876 = vmatpush.msra.mxu0 %v1296
      %3877 = vmatpush.msra.mxu0 %v1294
      %3878 = vmatpush.msra.mxu0 %v1292
      %3879 = vmatpush.msra.mxu0 %v1290
      %3880 = vmatmul.f32.gmra.mxu0 %v3812
      %v3881 = vpop.f32.mrf.mxu0
      %v3882 = vadd.f32 %v3808, %v3881
      %3883 = vmatmul.f32.gmra.mxu0 %v3815
      %v3884 = vpop.f32.mrf.mxu0
      %v3885 = vadd.f32 %v3808, %v3884
      %3886 = vmatmul.f32.gmra.mxu0 %v3818
      %v3887 = vpop.f32.mrf.mxu0
      %v3888 = vadd.f32 %v3808, %v3887
      %3889 = vmatmul.f32.gmra.mxu0 %v3821
      %v3890 = vpop.f32.mrf.mxu0
      %v3891 = vadd.f32 %v3808, %v3890
      %3892 = vmatmul.f32.gmra.mxu0 %v3824
      %v3893 = vpop.f32.mrf.mxu0
      %v3894 = vadd.f32 %v3808, %v3893
      %3895 = vmatmul.f32.gmra.mxu0 %v3827
      %v3896 = vpop.f32.mrf.mxu0
      %v3897 = vadd.f32 %v3808, %v3896
      %3898 = vdwg.mxu0
      %v3899 = vxor.u32 %v3847, 2147483648
      %v3900 = vxor.u32 %v3882, 2147483648
      %v3901 = vxor.u32 %v3850, 2147483648
      %v3902 = vxor.u32 %v3885, 2147483648
      %v3903 = vxor.u32 %v3853, 2147483648
      %v3904 = vxor.u32 %v3888, 2147483648
      %v3905 = vxor.u32 %v3856, 2147483648
      %v3906 = vxor.u32 %v3891, 2147483648
      %v3907 = vxor.u32 %v3859, 2147483648
      %v3908 = vxor.u32 %v3894, 2147483648
      %v3909 = vxor.u32 %v3862, 2147483648
      %v3910 = vxor.u32 %v3897, 2147483648
      %v3911 = vmul.f32 %v3899, 1.442695
      %v3912 = vpow.pop %v3911
      %v3913 = vmul.f32 %v3900, 1.442695
      %v3914 = vpow.pop %v3913
      %v3915 = vmul.f32 %v3901, 1.442695
      %v3916 = vpow.pop %v3915
      %v3917 = vmul.f32 %v3902, 1.442695
      %v3918 = vpow.pop %v3917
      %v3919 = vmul.f32 %v3903, 1.442695
      %v3920 = vpow.pop %v3919
      %v3921 = vmul.f32 %v3904, 1.442695
      %v3922 = vpow.pop %v3921
      %v3923 = vmul.f32 %v3905, 1.442695
      %v3924 = vpow.pop %v3923
      %v3925 = vmul.f32 %v3906, 1.442695
      %v3926 = vpow.pop %v3925
      %v3927 = vmul.f32 %v3907, 1.442695
      %v3928 = vpow.pop %v3927
      %v3929 = vmul.f32 %v3908, 1.442695
      %v3930 = vpow.pop %v3929
      %v3931 = vmul.f32 %v3909, 1.442695
      %v3932 = vpow.pop %v3931
      %v3933 = vmul.f32 %v3910, 1.442695
      %v3934 = vpow.pop %v3933
      %v3935 = vadd.f32 %v3912, 1.0
      %v3936 = vadd.f32 %v3914, 1.0
      %v3937 = vadd.f32 %v3916, 1.0
      %v3938 = vadd.f32 %v3918, 1.0
      %v3939 = vadd.f32 %v3920, 1.0
      %v3940 = vadd.f32 %v3922, 1.0
      %v3941 = vadd.f32 %v3924, 1.0
      %v3942 = vadd.f32 %v3926, 1.0
      %v3943 = vadd.f32 %v3928, 1.0
      %v3944 = vadd.f32 %v3930, 1.0
      %v3945 = vadd.f32 %v3932, 1.0
      %v3946 = vadd.f32 %v3934, 1.0
      %v3947 = vrcp.pop %v3935
      %v3948 = vmul.f32 %v3935, %v3947
      %v3949 = vsub.f32 1.0, %v3948
      %v3950 = vmul.f32 %v3947, %v3949
      %v3951 = vadd.f32 %v3947, %v3950
      %vm3952 = vweird.f32 %v3935
      %vm3953 = vweird.f32 %v3947
      %vm3954 = vmor %vm3952, %vm3953
      %v3955 = vsel %vm3954, %v3947, %v3951
      %v3956 = vand.u32 2147483647, %v3935
      %vm3957 = vcmp.eq.f32.partialorder %v3956, 8.507059e+37
      %v3958 = vand.u32 %v3935, 2147483648
      %v3959 = vor.u32 1.1754944e-38, %v3958
      %v3960 = vsel %vm3957, %v3959, %v3955
      %v3961 = vmul.f32 1.0, %v3960
      %v3962 = vrcp.pop %v3936
      %v3963 = vmul.f32 %v3936, %v3962
      %v3964 = vsub.f32 1.0, %v3963
      %v3965 = vmul.f32 %v3962, %v3964
      %v3966 = vadd.f32 %v3962, %v3965
      %vm3967 = vweird.f32 %v3936
      %vm3968 = vweird.f32 %v3962
      %vm3969 = vmor %vm3967, %vm3968
      %v3970 = vsel %vm3969, %v3962, %v3966
      %v3971 = vand.u32 2147483647, %v3936
      %vm3972 = vcmp.eq.f32.partialorder %v3971, 8.507059e+37
      %v3973 = vand.u32 %v3936, 2147483648
      %v3974 = vor.u32 1.1754944e-38, %v3973
      %v3975 = vsel %vm3972, %v3974, %v3970
      %v3976 = vmul.f32 1.0, %v3975
      %v3977 = vrcp.pop %v3937
      %v3978 = vmul.f32 %v3937, %v3977
      %v3979 = vsub.f32 1.0, %v3978
      %v3980 = vmul.f32 %v3977, %v3979
      %v3981 = vadd.f32 %v3977, %v3980
      %vm3982 = vweird.f32 %v3937
      %vm3983 = vweird.f32 %v3977
      %vm3984 = vmor %vm3982, %vm3983
      %v3985 = vsel %vm3984, %v3977, %v3981
      %v3986 = vand.u32 2147483647, %v3937
      %vm3987 = vcmp.eq.f32.partialorder %v3986, 8.507059e+37
      %v3988 = vand.u32 %v3937, 2147483648
      %v3989 = vor.u32 1.1754944e-38, %v3988
      %v3990 = vsel %vm3987, %v3989, %v3985
      %v3991 = vmul.f32 1.0, %v3990
      %v3992 = vrcp.pop %v3938
      %v3993 = vmul.f32 %v3938, %v3992
      %v3994 = vsub.f32 1.0, %v3993
      %v3995 = vmul.f32 %v3992, %v3994
      %v3996 = vadd.f32 %v3992, %v3995
      %vm3997 = vweird.f32 %v3938
      %vm3998 = vweird.f32 %v3992
      %vm3999 = vmor %vm3997, %vm3998
      %v4000 = vsel %vm3999, %v3992, %v3996
      %v4001 = vand.u32 2147483647, %v3938
      %vm4002 = vcmp.eq.f32.partialorder %v4001, 8.507059e+37
      %v4003 = vand.u32 %v3938, 2147483648
      %v4004 = vor.u32 1.1754944e-38, %v4003
      %v4005 = vsel %vm4002, %v4004, %v4000
      %v4006 = vmul.f32 1.0, %v4005
      %v4007 = vrcp.pop %v3939
      %v4008 = vmul.f32 %v3939, %v4007
      %v4009 = vsub.f32 1.0, %v4008
      %v4010 = vmul.f32 %v4007, %v4009
      %v4011 = vadd.f32 %v4007, %v4010
      %vm4012 = vweird.f32 %v3939
      %vm4013 = vweird.f32 %v4007
      %vm4014 = vmor %vm4012, %vm4013
      %v4015 = vsel %vm4014, %v4007, %v4011
      %v4016 = vand.u32 2147483647, %v3939
      %vm4017 = vcmp.eq.f32.partialorder %v4016, 8.507059e+37
      %v4018 = vand.u32 %v3939, 2147483648
      %v4019 = vor.u32 1.1754944e-38, %v4018
      %v4020 = vsel %vm4017, %v4019, %v4015
      %v4021 = vmul.f32 1.0, %v4020
      %v4022 = vrcp.pop %v3940
      %v4023 = vmul.f32 %v3940, %v4022
      %v4024 = vsub.f32 1.0, %v4023
      %v4025 = vmul.f32 %v4022, %v4024
      %v4026 = vadd.f32 %v4022, %v4025
      %vm4027 = vweird.f32 %v3940
      %vm4028 = vweird.f32 %v4022
      %vm4029 = vmor %vm4027, %vm4028
      %v4030 = vsel %vm4029, %v4022, %v4026
      %v4031 = vand.u32 2147483647, %v3940
      %vm4032 = vcmp.eq.f32.partialorder %v4031, 8.507059e+37
      %v4033 = vand.u32 %v3940, 2147483648
      %v4034 = vor.u32 1.1754944e-38, %v4033
      %v4035 = vsel %vm4032, %v4034, %v4030
      %v4036 = vmul.f32 1.0, %v4035
      %v4037 = vrcp.pop %v3941
      %v4038 = vmul.f32 %v3941, %v4037
      %v4039 = vsub.f32 1.0, %v4038
      %v4040 = vmul.f32 %v4037, %v4039
      %v4041 = vadd.f32 %v4037, %v4040
      %vm4042 = vweird.f32 %v3941
      %vm4043 = vweird.f32 %v4037
      %vm4044 = vmor %vm4042, %vm4043
      %v4045 = vsel %vm4044, %v4037, %v4041
      %v4046 = vand.u32 2147483647, %v3941
      %vm4047 = vcmp.eq.f32.partialorder %v4046, 8.507059e+37
      %v4048 = vand.u32 %v3941, 2147483648
      %v4049 = vor.u32 1.1754944e-38, %v4048
      %v4050 = vsel %vm4047, %v4049, %v4045
      %v4051 = vmul.f32 1.0, %v4050
      %v4052 = vrcp.pop %v3942
      %v4053 = vmul.f32 %v3942, %v4052
      %v4054 = vsub.f32 1.0, %v4053
      %v4055 = vmul.f32 %v4052, %v4054
      %v4056 = vadd.f32 %v4052, %v4055
      %vm4057 = vweird.f32 %v3942
      %vm4058 = vweird.f32 %v4052
      %vm4059 = vmor %vm4057, %vm4058
      %v4060 = vsel %vm4059, %v4052, %v4056
      %v4061 = vand.u32 2147483647, %v3942
      %vm4062 = vcmp.eq.f32.partialorder %v4061, 8.507059e+37
      %v4063 = vand.u32 %v3942, 2147483648
      %v4064 = vor.u32 1.1754944e-38, %v4063
      %v4065 = vsel %vm4062, %v4064, %v4060
      %v4066 = vmul.f32 1.0, %v4065
      %v4067 = vrcp.pop %v3943
      %v4068 = vmul.f32 %v3943, %v4067
      %v4069 = vsub.f32 1.0, %v4068
      %v4070 = vmul.f32 %v4067, %v4069
      %v4071 = vadd.f32 %v4067, %v4070
      %vm4072 = vweird.f32 %v3943
      %vm4073 = vweird.f32 %v4067
      %vm4074 = vmor %vm4072, %vm4073
      %v4075 = vsel %vm4074, %v4067, %v4071
      %v4076 = vand.u32 2147483647, %v3943
      %vm4077 = vcmp.eq.f32.partialorder %v4076, 8.507059e+37
      %v4078 = vand.u32 %v3943, 2147483648
      %v4079 = vor.u32 1.1754944e-38, %v4078
      %v4080 = vsel %vm4077, %v4079, %v4075
      %v4081 = vmul.f32 1.0, %v4080
      %v4082 = vrcp.pop %v3944
      %v4083 = vmul.f32 %v3944, %v4082
      %v4084 = vsub.f32 1.0, %v4083
      %v4085 = vmul.f32 %v4082, %v4084
      %v4086 = vadd.f32 %v4082, %v4085
      %vm4087 = vweird.f32 %v3944
      %vm4088 = vweird.f32 %v4082
      %vm4089 = vmor %vm4087, %vm4088
      %v4090 = vsel %vm4089, %v4082, %v4086
      %v4091 = vand.u32 2147483647, %v3944
      %vm4092 = vcmp.eq.f32.partialorder %v4091, 8.507059e+37
      %v4093 = vand.u32 %v3944, 2147483648
      %v4094 = vor.u32 1.1754944e-38, %v4093
      %v4095 = vsel %vm4092, %v4094, %v4090
      %v4096 = vmul.f32 1.0, %v4095
      %v4097 = vrcp.pop %v3945
      %v4098 = vmul.f32 %v3945, %v4097
      %v4099 = vsub.f32 1.0, %v4098
      %v4100 = vmul.f32 %v4097, %v4099
      %v4101 = vadd.f32 %v4097, %v4100
      %vm4102 = vweird.f32 %v3945
      %vm4103 = vweird.f32 %v4097
      %vm4104 = vmor %vm4102, %vm4103
      %v4105 = vsel %vm4104, %v4097, %v4101
      %v4106 = vand.u32 2147483647, %v3945
      %vm4107 = vcmp.eq.f32.partialorder %v4106, 8.507059e+37
      %v4108 = vand.u32 %v3945, 2147483648
      %v4109 = vor.u32 1.1754944e-38, %v4108
      %v4110 = vsel %vm4107, %v4109, %v4105
      %v4111 = vmul.f32 1.0, %v4110
      %v4112 = vrcp.pop %v3946
      %v4113 = vmul.f32 %v3946, %v4112
      %v4114 = vsub.f32 1.0, %v4113
      %v4115 = vmul.f32 %v4112, %v4114
      %v4116 = vadd.f32 %v4112, %v4115
      %vm4117 = vweird.f32 %v3946
      %vm4118 = vweird.f32 %v4112
      %vm4119 = vmor %vm4117, %vm4118
      %v4120 = vsel %vm4119, %v4112, %v4116
      %v4121 = vand.u32 2147483647, %v3946
      %vm4122 = vcmp.eq.f32.partialorder %v4121, 8.507059e+37
      %v4123 = vand.u32 %v3946, 2147483648
      %v4124 = vor.u32 1.1754944e-38, %v4123
      %v4125 = vsel %vm4122, %v4124, %v4120
      %v4126 = vmul.f32 1.0, %v4125
      %v4127 = vmul.f32 %v3847, %v3961
      %v4128 = vmul.f32 %v3882, %v3976
      %v4129 = vmul.f32 %v3850, %v3991
      %v4130 = vmul.f32 %v3885, %v4006
      %v4131 = vmul.f32 %v3853, %v4021
      %v4132 = vmul.f32 %v3888, %v4036
      %v4133 = vmul.f32 %v3856, %v4051
      %v4134 = vmul.f32 %v3891, %v4066
      %v4135 = vmul.f32 %v3859, %v4081
      %v4136 = vmul.f32 %v3894, %v4096
      %v4137 = vmul.f32 %v3862, %v4111
      %v4138 = vmul.f32 %v3897, %v4126
      %v4139 = vperm.slane %v1271, 0
      %4140 = vmatpush.msra.mxu0 %v1321
      %4141 = vmatpush.msra.mxu0 %v1320
      %4142 = vmatpush.msra.mxu0 %v1319
      %4143 = vmatpush.msra.mxu0 %v1318
      %4144 = vmatpush.msra.mxu0 %v1317
      %4145 = vmatpush.msra.mxu0 %v1316
      %4146 = vmatpush.msra.mxu0 %v1315
      %4147 = vmatpush.msra.mxu0 %v1314
      %4148 = vmatpush.msra.mxu0 %v1313
      %4149 = vmatpush.msra.mxu0 %v1312
      %4150 = vmatpush.msra.mxu0 %v1311
      %4151 = vmatpush.msra.mxu0 %v1310
      %4152 = vmatpush.msra.mxu0 %v1309
      %4153 = vmatpush.msra.mxu0 %v1308
      %4154 = vmatpush.msra.mxu0 %v1307
      %4155 = vmatpush.msra.mxu0 %v1306
      %4156 = vmatmul.f32.gmra.mxu0 %v4127
      %v4157 = vpop.f32.mrf.mxu0
      %v4158 = vadd.f32 %v4139, %v4157
      %4159 = vmatmul.f32.gmra.mxu0 %v4129
      %v4160 = vpop.f32.mrf.mxu0
      %v4161 = vadd.f32 %v4139, %v4160
      %4162 = vmatmul.f32.gmra.mxu0 %v4131
      %v4163 = vpop.f32.mrf.mxu0
      %v4164 = vadd.f32 %v4139, %v4163
      %4165 = vmatmul.f32.gmra.mxu0 %v4133
      %v4166 = vpop.f32.mrf.mxu0
      %v4167 = vadd.f32 %v4139, %v4166
      %4168 = vmatmul.f32.gmra.mxu0 %v4135
      %v4169 = vpop.f32.mrf.mxu0
      %v4170 = vadd.f32 %v4139, %v4169
      %4171 = vmatmul.f32.gmra.mxu0 %v4137
      %v4172 = vpop.f32.mrf.mxu0
      %v4173 = vadd.f32 %v4139, %v4172
      %4174 = vdwg.mxu0
      %4175 = vmatpush.msra.mxu0 %v1337
      %4176 = vmatpush.msra.mxu0 %v1336
      %4177 = vmatpush.msra.mxu0 %v1335
      %4178 = vmatpush.msra.mxu0 %v1334
      %4179 = vmatpush.msra.mxu0 %v1333
      %4180 = vmatpush.msra.mxu0 %v1332
      %4181 = vmatpush.msra.mxu0 %v1331
      %4182 = vmatpush.msra.mxu0 %v1330
      %4183 = vmatpush.msra.mxu0 %v1329
      %4184 = vmatpush.msra.mxu0 %v1328
      %4185 = vmatpush.msra.mxu0 %v1327
      %4186 = vmatpush.msra.mxu0 %v1326
      %4187 = vmatpush.msra.mxu0 %v1325
      %4188 = vmatpush.msra.mxu0 %v1324
      %4189 = vmatpush.msra.mxu0 %v1323
      %4190 = vmatpush.msra.mxu0 %v1322
      %4191 = vmatmul.f32.gmra.mxu0 %v4128
      %v4192 = vpop.f32.mrf.mxu0
      %v4193 = vadd.f32 %v4158, %v4192
      %4194 = vmatmul.f32.gmra.mxu0 %v4130
      %v4195 = vpop.f32.mrf.mxu0
      %v4196 = vadd.f32 %v4161, %v4195
      %4197 = vmatmul.f32.gmra.mxu0 %v4132
      %v4198 = vpop.f32.mrf.mxu0
      %v4199 = vadd.f32 %v4164, %v4198
      %4200 = vmatmul.f32.gmra.mxu0 %v4134
      %v4201 = vpop.f32.mrf.mxu0
      %v4202 = vadd.f32 %v4167, %v4201
      %4203 = vmatmul.f32.gmra.mxu0 %v4136
      %v4204 = vpop.f32.mrf.mxu0
      %v4205 = vadd.f32 %v4170, %v4204
      %4206 = vmatmul.f32.gmra.mxu0 %v4138
      %v4207 = vpop.f32.mrf.mxu0
      %v4208 = vadd.f32 %v4173, %v4207
      %4209 = vdwg.mxu0
      %v4210 = vmul.f32 %v4193, 0.50381875
      %v4211 = vmul.f32 %v4196, 0.50381875
      %v4212 = vmul.f32 %v4199, 0.50381875
      %v4213 = vmul.f32 %v4202, 0.50381875
      %v4214 = vmul.f32 %v4205, 0.50381875
      %v4215 = vmul.f32 %v4208, 0.50381875
      %v4216 = vadd.f32 %v3654, %v4210
      %v4217 = vadd.f32 %v3655, %v4211
      %v4218 = vadd.f32 %v3656, %v4212
      %v4219 = vadd.f32 %v3657, %v4213
      %v4220 = vadd.f32 %v3658, %v4214
      %v4221 = vadd.f32 %v3659, %v4215
      %v4222 = vld [vmem:[%s4 + $0x50] sm:$0x1]
      %v4223 = vld [vmem:[%s4 + $0x51] sm:$0x1]
      %v4224 = vld [vmem:[%s4 + $0x52] sm:$0x1]
      %v4225 = vld [vmem:[%s4 + $0x53] sm:$0x1]
      %v4226 = vld [vmem:[%s4 + $0x54] sm:$0x1]
      %v4227 = vld [vmem:[%s4 + $0x55] sm:$0x1]
      %v4228 = vld [vmem:[%s5 + $0x5] sm:$0x1]
      %s4229 = scalar_lea.vmem %s9, 64
      %v4230 = vld [vmem:[%s4229] sm:$0xff]
      %v4231 = vld [vmem:[%s4229 + $0x8] sm:$0xff]
      %v4232 = vld [vmem:[%s4229 + $0x10] sm:$0xff]
      %v4233 = vld [vmem:[%s4229 + $0x18] sm:$0xff]
      %v4234 = vld [vmem:[%s4229 + $0x20] sm:$0xff]
      %v4235 = vld [vmem:[%s4229 + $0x28] sm:$0xff]
      %v4236 = vld [vmem:[%s4229 + $0x30] sm:$0xff]
      %v4237 = vld [vmem:[%s4229 + $0x38] sm:$0xff]
      %s4238 = scalar_lea.vmem %s10, 64
      %v4239 = vld [vmem:[%s4238] sm:$0xff]
      %v4240 = vld [vmem:[%s4238 + $0x8] sm:$0xff]
      %v4241 = vld [vmem:[%s4238 + $0x10] sm:$0xff]
      %v4242 = vld [vmem:[%s4238 + $0x18] sm:$0xff]
      %v4243 = vld [vmem:[%s4238 + $0x20] sm:$0xff]
      %v4244 = vld [vmem:[%s4238 + $0x28] sm:$0xff]
      %v4245 = vld [vmem:[%s4238 + $0x30] sm:$0xff]
      %v4246 = vld [vmem:[%s4238 + $0x38] sm:$0xff]
      %s4247 = scalar_lea.vmem %s11, 128
      %v4248 = vld [vmem:[%s4247] sm:$0xff]
      %v4249 = vld [vmem:[%s4247 + $0x8] sm:$0xff]
      %v4250 = vld [vmem:[%s4247 + $0x10] sm:$0xff]
      %v4251 = vld [vmem:[%s4247 + $0x18] sm:$0xff]
      %v4252 = vld [vmem:[%s4247 + $0x20] sm:$0xff]
      %v4253 = vld [vmem:[%s4247 + $0x28] sm:$0xff]
      %v4254 = vld [vmem:[%s4247 + $0x30] sm:$0xff]
      %v4255 = vld [vmem:[%s4247 + $0x38] sm:$0xff]
      %v4256 = vld [vmem:[%s4247 + $0x40] sm:$0xff]
      %v4257 = vld [vmem:[%s4247 + $0x48] sm:$0xff]
      %v4258 = vld [vmem:[%s4247 + $0x50] sm:$0xff]
      %v4259 = vld [vmem:[%s4247 + $0x58] sm:$0xff]
      %v4260 = vld [vmem:[%s4247 + $0x60] sm:$0xff]
      %v4261 = vld [vmem:[%s4247 + $0x68] sm:$0xff]
      %v4262 = vld [vmem:[%s4247 + $0x70] sm:$0xff]
      %v4263 = vld [vmem:[%s4247 + $0x78] sm:$0xff]
      %s4264 = scalar_lea.vmem %s6, 1
      %v4265 = vld [vmem:[%s4264] ss:$2 sm:$0x3]
      %s4266 = scalar_lea.vmem %s12, 256
      %v4267 = vld [vmem:[%s4266] sm:$0xff]
      %v4268 = vld [vmem:[%s4266 + $0x8] sm:$0xff]
      %v4269 = vld [vmem:[%s4266 + $0x10] sm:$0xff]
      %v4270 = vld [vmem:[%s4266 + $0x18] sm:$0xff]
      %v4271 = vld [vmem:[%s4266 + $0x20] sm:$0xff]
      %v4272 = vld [vmem:[%s4266 + $0x28] sm:$0xff]
      %v4273 = vld [vmem:[%s4266 + $0x30] sm:$0xff]
      %v4274 = vld [vmem:[%s4266 + $0x38] sm:$0xff]
      %v4275 = vld [vmem:[%s4266 + $0x40] sm:$0xff]
      %v4276 = vld [vmem:[%s4266 + $0x48] sm:$0xff]
      %v4277 = vld [vmem:[%s4266 + $0x50] sm:$0xff]
      %v4278 = vld [vmem:[%s4266 + $0x58] sm:$0xff]
      %v4279 = vld [vmem:[%s4266 + $0x60] sm:$0xff]
      %v4280 = vld [vmem:[%s4266 + $0x68] sm:$0xff]
      %v4281 = vld [vmem:[%s4266 + $0x70] sm:$0xff]
      %v4282 = vld [vmem:[%s4266 + $0x78] sm:$0xff]
      %v4283 = vld [vmem:[%s4266 + $0x80] sm:$0xff]
      %v4284 = vld [vmem:[%s4266 + $0x88] sm:$0xff]
      %v4285 = vld [vmem:[%s4266 + $0x90] sm:$0xff]
      %v4286 = vld [vmem:[%s4266 + $0x98] sm:$0xff]
      %v4287 = vld [vmem:[%s4266 + $0xa0] sm:$0xff]
      %v4288 = vld [vmem:[%s4266 + $0xa8] sm:$0xff]
      %v4289 = vld [vmem:[%s4266 + $0xb0] sm:$0xff]
      %v4290 = vld [vmem:[%s4266 + $0xb8] sm:$0xff]
      %v4291 = vld [vmem:[%s4266 + $0xc0] sm:$0xff]
      %v4292 = vld [vmem:[%s4266 + $0xc8] sm:$0xff]
      %v4293 = vld [vmem:[%s4266 + $0xd0] sm:$0xff]
      %v4294 = vld [vmem:[%s4266 + $0xd8] sm:$0xff]
      %v4295 = vld [vmem:[%s4266 + $0xe0] sm:$0xff]
      %v4296 = vld [vmem:[%s4266 + $0xe8] sm:$0xff]
      %v4297 = vld [vmem:[%s4266 + $0xf0] sm:$0xff]
      %v4298 = vld [vmem:[%s4266 + $0xf8] sm:$0xff]
      %vm4299 = vcmask 523268
      %v4300 = vsel %vm4299, %v1084, 0.0
      %4301 = vadd.xlane.f32.xlu0 %v4300
      %v4302 = vpop.xlane.xlu0 %4301
      %v4303 = vsel %vm1338, %v1085, 0.0
      %4304 = vadd.xlane.f32.xlu0 %v4303
      %v4305 = vpop.xlane.xlu0 %4304
      %v4306 = vsel %vm1338, %v1086, 0.0
      %4307 = vadd.xlane.f32.xlu0 %v4306
      %v4308 = vpop.xlane.xlu0 %4307
      %v4309 = vsel %vm1338, %v1087, 0.0
      %4310 = vadd.xlane.f32.xlu0 %v4309
      %v4311 = vpop.xlane.xlu0 %4310
      %v4312 = vsel %vm1338, %v1088, 0.0
      %4313 = vadd.xlane.f32.xlu0 %v4312
      %v4314 = vpop.xlane.xlu0 %4313
      %v4315 = vsel %vm1338, %v1089, 0.0
      %4316 = vadd.xlane.f32.xlu0 %v4315
      %v4317 = vpop.xlane.xlu0 %4316
      %vm4318 = vcmask 519168
      %v4319 = vsel %vm4318, %v1090, 0.0
      %4320 = vadd.xlane.f32.xlu0 %v4319
      %v4321 = vpop.xlane.xlu0 %4320
      %v4322 = vmul.f32 %v4302, %v1363
      %v4323 = vmul.f32 %v4305, %v1363
      %v4324 = vmul.f32 %v4308, %v1363
      %v4325 = vmul.f32 %v4311, %v1363
      %v4326 = vmul.f32 %v4314, %v1363
      %v4327 = vmul.f32 %v4317, %v1363
      %v4328 = vmul.f32 %v4321, %v1363
      %v4329 = vsub.f32 %v1084, %v4322
      %v4330 = vsub.f32 %v1085, %v4323
      %v4331 = vsub.f32 %v1086, %v4324
      %v4332 = vsub.f32 %v1087, %v4325
      %v4333 = vsub.f32 %v1088, %v4326
      %v4334 = vsub.f32 %v1089, %v4327
      %v4335 = vsub.f32 %v1090, %v4328
      %v4336 = vmul.f32 %v4329, %v4329
      %v4337 = vmul.f32 %v4330, %v4330
      %v4338 = vmul.f32 %v4331, %v4331
      %v4339 = vmul.f32 %v4332, %v4332
      %v4340 = vmul.f32 %v4333, %v4333
      %v4341 = vmul.f32 %v4334, %v4334
      %v4342 = vmul.f32 %v4335, %v4335
      %v4343 = vsel %vm4299, %v4336, 0.0
      %4344 = vadd.xlane.f32.xlu0 %v4343
      %v4345 = vpop.xlane.xlu0 %4344
      %v4346 = vsel %vm1338, %v4337, 0.0
      %4347 = vadd.xlane.f32.xlu0 %v4346
      %v4348 = vpop.xlane.xlu0 %4347
      %v4349 = vsel %vm1338, %v4338, 0.0
      %4350 = vadd.xlane.f32.xlu0 %v4349
      %v4351 = vpop.xlane.xlu0 %4350
      %v4352 = vsel %vm1338, %v4339, 0.0
      %4353 = vadd.xlane.f32.xlu0 %v4352
      %v4354 = vpop.xlane.xlu0 %4353
      %v4355 = vsel %vm1338, %v4340, 0.0
      %4356 = vadd.xlane.f32.xlu0 %v4355
      %v4357 = vpop.xlane.xlu0 %4356
      %v4358 = vsel %vm1338, %v4341, 0.0
      %4359 = vadd.xlane.f32.xlu0 %v4358
      %v4360 = vpop.xlane.xlu0 %4359
      %v4361 = vsel %vm4318, %v4342, 0.0
      %4362 = vadd.xlane.f32.xlu0 %v4361
      %v4363 = vpop.xlane.xlu0 %4362
      %v4364 = vmul.f32 %v4345, %v1363
      %v4365 = vmul.f32 %v4348, %v1363
      %v4366 = vmul.f32 %v4351, %v1363
      %v4367 = vmul.f32 %v4354, %v1363
      %v4368 = vmul.f32 %v4357, %v1363
      %v4369 = vmul.f32 %v4360, %v1363
      %v4370 = vmul.f32 %v4363, %v1363
      %v4371 = vadd.f32 %v4364, 1e-05
      %v4372 = vadd.f32 %v4365, 1e-05
      %v4373 = vadd.f32 %v4366, 1e-05
      %v4374 = vadd.f32 %v4367, 1e-05
      %v4375 = vadd.f32 %v4368, 1e-05
      %v4376 = vadd.f32 %v4369, 1e-05
      %v4377 = vadd.f32 %v4370, 1e-05
      %v4378 = vrsqrt.pop %v4371
      %v4379 = vmul.f32 %v4378, %v4371
      %v4380 = vmul.f32 %v4379, %v4378
      %v4381 = vmul.f32 0.5, %v4380
      %v4382 = vsub.f32 1.5, %v4381
      %v4383 = vmul.f32 %v4378, %v4382
      %vm4384 = vweird.f32 %v4371
      %vm4385 = vweird.f32 %v4378
      %vm4386 = vmor %vm4384, %vm4385
      %v4387 = vsel %vm4386, %v4378, %v4383
      %v4388 = vrsqrt.pop %v4372
      %v4389 = vmul.f32 %v4388, %v4372
      %v4390 = vmul.f32 %v4389, %v4388
      %v4391 = vmul.f32 0.5, %v4390
      %v4392 = vsub.f32 1.5, %v4391
      %v4393 = vmul.f32 %v4388, %v4392
      %vm4394 = vweird.f32 %v4372
      %vm4395 = vweird.f32 %v4388
      %vm4396 = vmor %vm4394, %vm4395
      %v4397 = vsel %vm4396, %v4388, %v4393
      %v4398 = vrsqrt.pop %v4373
      %v4399 = vmul.f32 %v4398, %v4373
      %v4400 = vmul.f32 %v4399, %v4398
      %v4401 = vmul.f32 0.5, %v4400
      %v4402 = vsub.f32 1.5, %v4401
      %v4403 = vmul.f32 %v4398, %v4402
      %vm4404 = vweird.f32 %v4373
      %vm4405 = vweird.f32 %v4398
      %vm4406 = vmor %vm4404, %vm4405
      %v4407 = vsel %vm4406, %v4398, %v4403
      %v4408 = vrsqrt.pop %v4374
      %v4409 = vmul.f32 %v4408, %v4374
      %v4410 = vmul.f32 %v4409, %v4408
      %v4411 = vmul.f32 0.5, %v4410
      %v4412 = vsub.f32 1.5, %v4411
      %v4413 = vmul.f32 %v4408, %v4412
      %vm4414 = vweird.f32 %v4374
      %vm4415 = vweird.f32 %v4408
      %vm4416 = vmor %vm4414, %vm4415
      %v4417 = vsel %vm4416, %v4408, %v4413
      %v4418 = vrsqrt.pop %v4375
      %v4419 = vmul.f32 %v4418, %v4375
      %v4420 = vmul.f32 %v4419, %v4418
      %v4421 = vmul.f32 0.5, %v4420
      %v4422 = vsub.f32 1.5, %v4421
      %v4423 = vmul.f32 %v4418, %v4422
      %vm4424 = vweird.f32 %v4375
      %vm4425 = vweird.f32 %v4418
      %vm4426 = vmor %vm4424, %vm4425
      %v4427 = vsel %vm4426, %v4418, %v4423
      %v4428 = vrsqrt.pop %v4376
      %v4429 = vmul.f32 %v4428, %v4376
      %v4430 = vmul.f32 %v4429, %v4428
      %v4431 = vmul.f32 0.5, %v4430
      %v4432 = vsub.f32 1.5, %v4431
      %v4433 = vmul.f32 %v4428, %v4432
      %vm4434 = vweird.f32 %v4376
      %vm4435 = vweird.f32 %v4428
      %vm4436 = vmor %vm4434, %vm4435
      %v4437 = vsel %vm4436, %v4428, %v4433
      %v4438 = vrsqrt.pop %v4377
      %v4439 = vmul.f32 %v4438, %v4377
      %v4440 = vmul.f32 %v4439, %v4438
      %v4441 = vmul.f32 0.5, %v4440
      %v4442 = vsub.f32 1.5, %v4441
      %v4443 = vmul.f32 %v4438, %v4442
      %vm4444 = vweird.f32 %v4377
      %vm4445 = vweird.f32 %v4438
      %vm4446 = vmor %vm4444, %vm4445
      %v4447 = vsel %vm4446, %v4438, %v4443
      %v4448 = vmul.f32 %v4329, %v4387
      %v4449 = vmul.f32 %v4330, %v4397
      %v4450 = vmul.f32 %v4331, %v4407
      %v4451 = vmul.f32 %v4332, %v4417
      %v4452 = vmul.f32 %v4333, %v4427
      %v4453 = vmul.f32 %v4334, %v4437
      %v4454 = vmul.f32 %v4335, %v4447
      %v4455 = vperm.slane %v4222, 0
      %v4456 = vmul.f32 %v4448, %v4455
      %v4457 = vmul.f32 %v4449, %v4455
      %v4458 = vmul.f32 %v4450, %v4455
      %v4459 = vmul.f32 %v4451, %v4455
      %v4460 = vmul.f32 %v4452, %v4455
      %v4461 = vmul.f32 %v4453, %v4455
      %v4462 = vmul.f32 %v4454, %v4455
      %v4463 = vperm.slane %v4223, 0
      %v4464 = vadd.f32 %v4456, %v4463
      %v4465 = vadd.f32 %v4457, %v4463
      %v4466 = vadd.f32 %v4458, %v4463
      %v4467 = vadd.f32 %v4459, %v4463
      %v4468 = vadd.f32 %v4460, %v4463
      %v4469 = vadd.f32 %v4461, %v4463
      %v4470 = vadd.f32 %v4462, %v4463
      %v4471 = vperm.slane %v4228, 0
      %v4479 = vrot.slane %v4464, 4
      %v4480 = vrot.slane %v4465, 4
      %v4481 = vsel %vm1065, %v4479, %v4480
      %v4482 = vrot.slane %v4466, 4
      %v4483 = vsel %vm1065, %v4480, %v4482
      %v4484 = vrot.slane %v4467, 4
      %v4485 = vsel %vm1065, %v4482, %v4484
      %v4486 = vrot.slane %v4468, 4
      %v4487 = vsel %vm1065, %v4484, %v4486
      %v4488 = vrot.slane %v4469, 4
      %v4489 = vsel %vm1065, %v4486, %v4488
      %v4490 = vrot.slane %v4470, 4
      %v4491 = vsel %vm1065, %v4488, %v4490
      %v4492 = vsel %vm1338, %v4481, 0
      %v4494 = vsel %vm1338, %v4483, 0
      %v4496 = vsel %vm1338, %v4485, 0
      %v4498 = vsel %vm1338, %v4487, 0
      %v4500 = vsel %vm1338, %v4489, 0
      %v4502 = vsel %vm1338, %v4491, 0
      %4504 = vmatpush.msra.mxu0 0.0
      %4505 = vmatpush.msra.mxu0 0.0
      %4506 = vmatpush.msra.mxu0 0.0
      %4507 = vmatpush.msra.mxu0 0.0
      %4508 = vmatpush.msra.mxu0 0.0
      %4509 = vmatpush.msra.mxu0 0.0
      %4510 = vmatpush.msra.mxu0 0.0
      %4511 = vmatpush.msra.mxu0 0.0
      %4512 = vmatpush.msra.mxu0 %v4237
      %4513 = vmatpush.msra.mxu0 %v4236
      %4514 = vmatpush.msra.mxu0 %v4235
      %4515 = vmatpush.msra.mxu0 %v4234
      %4516 = vmatpush.msra.mxu0 %v4233
      %4517 = vmatpush.msra.mxu0 %v4232
      %4518 = vmatpush.msra.mxu0 %v4231
      %4519 = vmatpush.msra.mxu0 %v4230
      %4520 = vmatmul.f32.gmra.mxu0 %v4492
      %v4521 = vpop.f32.mrf.mxu0
      %v4522 = vadd.f32 %v4471, %v4521
      %4523 = vmatmul.f32.gmra.mxu0 %v4494
      %v4524 = vpop.f32.mrf.mxu0
      %v4525 = vadd.f32 %v4471, %v4524
      %4526 = vmatmul.f32.gmra.mxu0 %v4496
      %v4527 = vpop.f32.mrf.mxu0
      %v4528 = vadd.f32 %v4471, %v4527
      %4529 = vmatmul.f32.gmra.mxu0 %v4498
      %v4530 = vpop.f32.mrf.mxu0
      %v4531 = vadd.f32 %v4471, %v4530
      %4532 = vmatmul.f32.gmra.mxu0 %v4500
      %v4533 = vpop.f32.mrf.mxu0
      %v4534 = vadd.f32 %v4471, %v4533
      %4535 = vmatmul.f32.gmra.mxu0 %v4502
      %v4536 = vpop.f32.mrf.mxu0
      %v4537 = vadd.f32 %v4471, %v4536
      %4538 = vdwg.mxu0
      %4547 = vrot.lane.b32.xlu0 %v4230, 64
      %v4548 = vpop.permute.xlu0 %4547
      %4549 = vrot.lane.b32.xlu0 %v4231, 64
      %v4550 = vpop.permute.xlu0 %4549
      %4551 = vrot.lane.b32.xlu0 %v4232, 64
      %v4552 = vpop.permute.xlu0 %4551
      %4553 = vrot.lane.b32.xlu0 %v4233, 64
      %v4554 = vpop.permute.xlu0 %4553
      %4555 = vrot.lane.b32.xlu0 %v4234, 64
      %v4556 = vpop.permute.xlu0 %4555
      %4557 = vrot.lane.b32.xlu0 %v4235, 64
      %v4558 = vpop.permute.xlu0 %4557
      %4559 = vrot.lane.b32.xlu0 %v4236, 64
      %v4560 = vpop.permute.xlu0 %4559
      %4561 = vrot.lane.b32.xlu0 %v4237, 64
      %v4562 = vpop.permute.xlu0 %4561
      %4572 = vrot.lane.b32.xlu0 %v4471, 64
      %v4573 = vpop.permute.xlu0 %4572
      %v4576 = vsel %vm1338, %v4216, 0
      %v4579 = vsel %vm1338, %v4217, 0
      %v4582 = vsel %vm1338, %v4218, 0
      %v4585 = vsel %vm1338, %v4219, 0
      %v4588 = vsel %vm1338, %v4220, 0
      %v4591 = vsel %vm1338, %v4221, 0
      %4593 = vmatpush.msra.mxu0 0.0
      %4594 = vmatpush.msra.mxu0 0.0
      %4595 = vmatpush.msra.mxu0 0.0
      %4596 = vmatpush.msra.mxu0 0.0
      %4597 = vmatpush.msra.mxu0 0.0
      %4598 = vmatpush.msra.mxu0 0.0
      %4599 = vmatpush.msra.mxu0 0.0
      %4600 = vmatpush.msra.mxu0 0.0
      %4601 = vmatpush.msra.mxu0 %v4562
      %4602 = vmatpush.msra.mxu0 %v4560
      %4603 = vmatpush.msra.mxu0 %v4558
      %4604 = vmatpush.msra.mxu0 %v4556
      %4605 = vmatpush.msra.mxu0 %v4554
      %4606 = vmatpush.msra.mxu0 %v4552
      %4607 = vmatpush.msra.mxu0 %v4550
      %4608 = vmatpush.msra.mxu0 %v4548
      %4609 = vmatmul.f32.gmra.mxu0 %v4576
      %v4610 = vpop.f32.mrf.mxu0
      %v4611 = vadd.f32 %v4573, %v4610
      %4612 = vmatmul.f32.gmra.mxu0 %v4579
      %v4613 = vpop.f32.mrf.mxu0
      %v4614 = vadd.f32 %v4573, %v4613
      %4615 = vmatmul.f32.gmra.mxu0 %v4582
      %v4616 = vpop.f32.mrf.mxu0
      %v4617 = vadd.f32 %v4573, %v4616
      %4618 = vmatmul.f32.gmra.mxu0 %v4585
      %v4619 = vpop.f32.mrf.mxu0
      %v4620 = vadd.f32 %v4573, %v4619
      %4621 = vmatmul.f32.gmra.mxu0 %v4588
      %v4622 = vpop.f32.mrf.mxu0
      %v4623 = vadd.f32 %v4573, %v4622
      %4624 = vmatmul.f32.gmra.mxu0 %v4591
      %v4625 = vpop.f32.mrf.mxu0
      %v4626 = vadd.f32 %v4573, %v4625
      %4627 = vdwg.mxu0
      %v4629 = vsel %vm608, %v4522, 0
      %v4632 = vsel %vm608, %v4525, 0
      %v4635 = vsel %vm608, %v4528, 0
      %v4638 = vsel %vm608, %v4531, 0
      %v4641 = vsel %vm608, %v4534, 0
      %v4644 = vsel %vm608, %v4537, 0
      %v4647 = vsel %vm608, %v4611, 0
      %v4650 = vsel %vm608, %v4614, 0
      %v4653 = vsel %vm608, %v4617, 0
      %v4656 = vsel %vm608, %v4620, 0
      %v4659 = vsel %vm608, %v4623, 0
      %v4662 = vsel %vm608, %v4626, 0
      %4664 = vmatpush.xpose.msra.mxu0 0.0
      %4665 = vmatpush.xpose.msra.mxu0 0.0
      %4666 = vmatpush.xpose.msra.mxu0 0.0
      %4667 = vmatpush.xpose.msra.mxu0 0.0
      %4668 = vmatpush.xpose.msra.mxu0 0.0
      %4669 = vmatpush.xpose.msra.mxu0 0.0
      %4670 = vmatpush.xpose.msra.mxu0 0.0
      %4671 = vmatpush.xpose.msra.mxu0 0.0
      %4672 = vmatpush.xpose.msra.mxu0 0.0
      %4673 = vmatpush.xpose.msra.mxu0 0.0
      %4674 = vmatpush.xpose.msra.mxu0 %v4662
      %4675 = vmatpush.xpose.msra.mxu0 %v4659
      %4676 = vmatpush.xpose.msra.mxu0 %v4656
      %4677 = vmatpush.xpose.msra.mxu0 %v4653
      %4678 = vmatpush.xpose.msra.mxu0 %v4650
      %4679 = vmatpush.xpose.msra.mxu0 %v4647
      %4680 = vmatmul.f32.gmra.mxu0 %v4629
      %v4681 = vpop.f32.mrf.mxu0
      %v4682 = vadd.f32 0.0, %v4681
      %4683 = vmatmul.f32.gmra.mxu0 %v4632
      %v4684 = vpop.f32.mrf.mxu0
      %v4685 = vadd.f32 0.0, %v4684
      %4686 = vmatmul.f32.gmra.mxu0 %v4635
      %v4687 = vpop.f32.mrf.mxu0
      %v4688 = vadd.f32 0.0, %v4687
      %4689 = vmatmul.f32.gmra.mxu0 %v4638
      %v4690 = vpop.f32.mrf.mxu0
      %v4691 = vadd.f32 0.0, %v4690
      %4692 = vmatmul.f32.gmra.mxu0 %v4641
      %v4693 = vpop.f32.mrf.mxu0
      %v4694 = vadd.f32 0.0, %v4693
      %4695 = vmatmul.f32.gmra.mxu0 %v4644
      %v4696 = vpop.f32.mrf.mxu0
      %v4697 = vadd.f32 0.0, %v4696
      %4698 = vdwg.mxu0
      %v4699 = vmul.f32 %v4682, 0.35355338
      %v4700 = vmul.f32 %v4685, 0.35355338
      %v4701 = vmul.f32 %v4688, 0.35355338
      %v4702 = vmul.f32 %v4691, 0.35355338
      %v4703 = vmul.f32 %v4694, 0.35355338
      %v4704 = vmul.f32 %v4697, 0.35355338
      %v4705 = vsel %vm1629, %v4699, -inf
      %4706 = vmax.xlane.f32.xlu0 %v4705
      %v4707 = vpop.xlane.xlu0 %4706
      %v4708 = vsel %vm1629, %v4700, -inf
      %4709 = vmax.xlane.f32.xlu0 %v4708
      %v4710 = vpop.xlane.xlu0 %4709
      %v4711 = vsel %vm1629, %v4701, -inf
      %4712 = vmax.xlane.f32.xlu0 %v4711
      %v4713 = vpop.xlane.xlu0 %4712
      %v4714 = vsel %vm1629, %v4702, -inf
      %4715 = vmax.xlane.f32.xlu0 %v4714
      %v4716 = vpop.xlane.xlu0 %4715
      %v4717 = vsel %vm1629, %v4703, -inf
      %4718 = vmax.xlane.f32.xlu0 %v4717
      %v4719 = vpop.xlane.xlu0 %4718
      %v4720 = vsel %vm1629, %v4704, -inf
      %4721 = vmax.xlane.f32.xlu0 %v4720
      %v4722 = vpop.xlane.xlu0 %4721
      %v4723 = vsub.f32 %v4699, %v4707
      %v4724 = vsub.f32 %v4700, %v4710
      %v4725 = vsub.f32 %v4701, %v4713
      %v4726 = vsub.f32 %v4702, %v4716
      %v4727 = vsub.f32 %v4703, %v4719
      %v4728 = vsub.f32 %v4704, %v4722
      %v4729 = vmul.f32 %v4723, 1.442695
      %v4730 = vpow.pop %v4729
      %v4731 = vmul.f32 %v4724, 1.442695
      %v4732 = vpow.pop %v4731
      %v4733 = vmul.f32 %v4725, 1.442695
      %v4734 = vpow.pop %v4733
      %v4735 = vmul.f32 %v4726, 1.442695
      %v4736 = vpow.pop %v4735
      %v4737 = vmul.f32 %v4727, 1.442695
      %v4738 = vpow.pop %v4737
      %v4739 = vmul.f32 %v4728, 1.442695
      %v4740 = vpow.pop %v4739
      %v4741 = vsel %vm1629, %v4730, 0.0
      %4742 = vadd.xlane.f32.xlu0 %v4741
      %v4743 = vpop.xlane.xlu0 %4742
      %v4744 = vsel %vm1629, %v4732, 0.0
      %4745 = vadd.xlane.f32.xlu0 %v4744
      %v4746 = vpop.xlane.xlu0 %4745
      %v4747 = vsel %vm1629, %v4734, 0.0
      %4748 = vadd.xlane.f32.xlu0 %v4747
      %v4749 = vpop.xlane.xlu0 %4748
      %v4750 = vsel %vm1629, %v4736, 0.0
      %4751 = vadd.xlane.f32.xlu0 %v4750
      %v4752 = vpop.xlane.xlu0 %4751
      %v4753 = vsel %vm1629, %v4738, 0.0
      %4754 = vadd.xlane.f32.xlu0 %v4753
      %v4755 = vpop.xlane.xlu0 %4754
      %v4756 = vsel %vm1629, %v4740, 0.0
      %4757 = vadd.xlane.f32.xlu0 %v4756
      %v4758 = vpop.xlane.xlu0 %4757
      %v4759 = vrcp.pop %v4743
      %v4760 = vrcp.pop %v4746
      %v4761 = vrcp.pop %v4749
      %v4762 = vrcp.pop %v4752
      %v4763 = vrcp.pop %v4755
      %v4764 = vrcp.pop %v4758
      %v4765 = vmul.f32 %v4730, %v4759
      %v4766 = vmul.f32 %v4732, %v4760
      %v4767 = vmul.f32 %v4734, %v4761
      %v4768 = vmul.f32 %v4736, %v4762
      %v4769 = vmul.f32 %v4738, %v4763
      %v4770 = vmul.f32 %v4740, %v4764
      %4771 = vrot.lane.b32.xlu0 %v4611, 96
      %v4772 = vpop.permute.xlu0 %4771
      %4773 = vrot.lane.b32.xlu0 %v4614, 96
      %v4774 = vpop.permute.xlu0 %4773
      %4775 = vrot.lane.b32.xlu0 %v4617, 96
      %v4776 = vpop.permute.xlu0 %4775
      %4777 = vrot.lane.b32.xlu0 %v4620, 96
      %v4778 = vpop.permute.xlu0 %4777
      %4779 = vrot.lane.b32.xlu0 %v4623, 96
      %v4780 = vpop.permute.xlu0 %4779
      %4781 = vrot.lane.b32.xlu0 %v4626, 96
      %v4782 = vpop.permute.xlu0 %4781
      %v4790 = vsel %vm1629, %v4765, 0
      %v4793 = vsel %vm1629, %v4766, 0
      %v4796 = vsel %vm1629, %v4767, 0
      %v4799 = vsel %vm1629, %v4768, 0
      %v4802 = vsel %vm1629, %v4769, 0
      %v4805 = vsel %vm1629, %v4770, 0
      %4807 = vmatpush.msra.mxu0 0.0
      %4808 = vmatpush.msra.mxu0 0.0
      %4809 = vmatpush.msra.mxu0 0.0
      %4810 = vmatpush.msra.mxu0 0.0
      %4811 = vmatpush.msra.mxu0 0.0
      %4812 = vmatpush.msra.mxu0 0.0
      %4813 = vmatpush.msra.mxu0 0.0
      %4814 = vmatpush.msra.mxu0 0.0
      %4815 = vmatpush.msra.mxu0 0.0
      %4816 = vmatpush.msra.mxu0 0.0
      %4817 = vmatpush.msra.mxu0 %v4782
      %4818 = vmatpush.msra.mxu0 %v4780
      %4819 = vmatpush.msra.mxu0 %v4778
      %4820 = vmatpush.msra.mxu0 %v4776
      %4821 = vmatpush.msra.mxu0 %v4774
      %4822 = vmatpush.msra.mxu0 %v4772
      %4823 = vmatmul.f32.gmra.mxu0 %v4790
      %v4824 = vpop.f32.mrf.mxu0
      %v4825 = vadd.f32 0.0, %v4824
      %4826 = vmatmul.f32.gmra.mxu0 %v4793
      %v4827 = vpop.f32.mrf.mxu0
      %v4828 = vadd.f32 0.0, %v4827
      %4829 = vmatmul.f32.gmra.mxu0 %v4796
      %v4830 = vpop.f32.mrf.mxu0
      %v4831 = vadd.f32 0.0, %v4830
      %4832 = vmatmul.f32.gmra.mxu0 %v4799
      %v4833 = vpop.f32.mrf.mxu0
      %v4834 = vadd.f32 0.0, %v4833
      %4835 = vmatmul.f32.gmra.mxu0 %v4802
      %v4836 = vpop.f32.mrf.mxu0
      %v4837 = vadd.f32 0.0, %v4836
      %4838 = vmatmul.f32.gmra.mxu0 %v4805
      %v4839 = vpop.f32.mrf.mxu0
      %v4840 = vadd.f32 0.0, %v4839
      %4841 = vdwg.mxu0
      %4842 = vrot.lane.b32.xlu0 %v4522, 120
      %v4843 = vpop.permute.xlu0 %4842
      %4844 = vrot.lane.b32.xlu0 %v4525, 120
      %v4845 = vpop.permute.xlu0 %4844
      %4846 = vrot.lane.b32.xlu0 %v4528, 120
      %v4847 = vpop.permute.xlu0 %4846
      %4848 = vrot.lane.b32.xlu0 %v4531, 120
      %v4849 = vpop.permute.xlu0 %4848
      %4850 = vrot.lane.b32.xlu0 %v4534, 120
      %v4851 = vpop.permute.xlu0 %4850
      %4852 = vrot.lane.b32.xlu0 %v4537, 120
      %v4853 = vpop.permute.xlu0 %4852
      %v4854 = vsel %vm608, %v4843, 0
      %v4856 = vsel %vm608, %v4845, 0
      %v4858 = vsel %vm608, %v4847, 0
      %v4860 = vsel %vm608, %v4849, 0
      %v4862 = vsel %vm608, %v4851, 0
      %v4864 = vsel %vm608, %v4853, 0
      %4866 = vmatpush.xpose.msra.mxu0 0.0
      %4867 = vmatpush.xpose.msra.mxu0 0.0
      %4868 = vmatpush.xpose.msra.mxu0 0.0
      %4869 = vmatpush.xpose.msra.mxu0 0.0
      %4870 = vmatpush.xpose.msra.mxu0 0.0
      %4871 = vmatpush.xpose.msra.mxu0 0.0
      %4872 = vmatpush.xpose.msra.mxu0 0.0
      %4873 = vmatpush.xpose.msra.mxu0 0.0
      %4874 = vmatpush.xpose.msra.mxu0 0.0
      %4875 = vmatpush.xpose.msra.mxu0 0.0
      %4876 = vmatpush.xpose.msra.mxu0 %v4662
      %4877 = vmatpush.xpose.msra.mxu0 %v4659
      %4878 = vmatpush.xpose.msra.mxu0 %v4656
      %4879 = vmatpush.xpose.msra.mxu0 %v4653
      %4880 = vmatpush.xpose.msra.mxu0 %v4650
      %4881 = vmatpush.xpose.msra.mxu0 %v4647
      %4882 = vmatmul.f32.gmra.mxu0 %v4854
      %v4883 = vpop.f32.mrf.mxu0
      %v4884 = vadd.f32 0.0, %v4883
      %4885 = vmatmul.f32.gmra.mxu0 %v4856
      %v4886 = vpop.f32.mrf.mxu0
      %v4887 = vadd.f32 0.0, %v4886
      %4888 = vmatmul.f32.gmra.mxu0 %v4858
      %v4889 = vpop.f32.mrf.mxu0
      %v4890 = vadd.f32 0.0, %v4889
      %4891 = vmatmul.f32.gmra.mxu0 %v4860
      %v4892 = vpop.f32.mrf.mxu0
      %v4893 = vadd.f32 0.0, %v4892
      %4894 = vmatmul.f32.gmra.mxu0 %v4862
      %v4895 = vpop.f32.mrf.mxu0
      %v4896 = vadd.f32 0.0, %v4895
      %4897 = vmatmul.f32.gmra.mxu0 %v4864
      %v4898 = vpop.f32.mrf.mxu0
      %v4899 = vadd.f32 0.0, %v4898
      %4900 = vdwg.mxu0
      %v4901 = vmul.f32 %v4884, 0.35355338
      %v4902 = vmul.f32 %v4887, 0.35355338
      %v4903 = vmul.f32 %v4890, 0.35355338
      %v4904 = vmul.f32 %v4893, 0.35355338
      %v4905 = vmul.f32 %v4896, 0.35355338
      %v4906 = vmul.f32 %v4899, 0.35355338
      %v4907 = vsel %vm1629, %v4901, -inf
      %4908 = vmax.xlane.f32.xlu0 %v4907
      %v4909 = vpop.xlane.xlu0 %4908
      %v4910 = vsel %vm1629, %v4902, -inf
      %4911 = vmax.xlane.f32.xlu0 %v4910
      %v4912 = vpop.xlane.xlu0 %4911
      %v4913 = vsel %vm1629, %v4903, -inf
      %4914 = vmax.xlane.f32.xlu0 %v4913
      %v4915 = vpop.xlane.xlu0 %4914
      %v4916 = vsel %vm1629, %v4904, -inf
      %4917 = vmax.xlane.f32.xlu0 %v4916
      %v4918 = vpop.xlane.xlu0 %4917
      %v4919 = vsel %vm1629, %v4905, -inf
      %4920 = vmax.xlane.f32.xlu0 %v4919
      %v4921 = vpop.xlane.xlu0 %4920
      %v4922 = vsel %vm1629, %v4906, -inf
      %4923 = vmax.xlane.f32.xlu0 %v4922
      %v4924 = vpop.xlane.xlu0 %4923
      %v4925 = vsub.f32 %v4901, %v4909
      %v4926 = vsub.f32 %v4902, %v4912
      %v4927 = vsub.f32 %v4903, %v4915
      %v4928 = vsub.f32 %v4904, %v4918
      %v4929 = vsub.f32 %v4905, %v4921
      %v4930 = vsub.f32 %v4906, %v4924
      %v4931 = vmul.f32 %v4925, 1.442695
      %v4932 = vpow.pop %v4931
      %v4933 = vmul.f32 %v4926, 1.442695
      %v4934 = vpow.pop %v4933
      %v4935 = vmul.f32 %v4927, 1.442695
      %v4936 = vpow.pop %v4935
      %v4937 = vmul.f32 %v4928, 1.442695
      %v4938 = vpow.pop %v4937
      %v4939 = vmul.f32 %v4929, 1.442695
      %v4940 = vpow.pop %v4939
      %v4941 = vmul.f32 %v4930, 1.442695
      %v4942 = vpow.pop %v4941
      %v4943 = vsel %vm1629, %v4932, 0.0
      %4944 = vadd.xlane.f32.xlu0 %v4943
      %v4945 = vpop.xlane.xlu0 %4944
      %v4946 = vsel %vm1629, %v4934, 0.0
      %4947 = vadd.xlane.f32.xlu0 %v4946
      %v4948 = vpop.xlane.xlu0 %4947
      %v4949 = vsel %vm1629, %v4936, 0.0
      %4950 = vadd.xlane.f32.xlu0 %v4949
      %v4951 = vpop.xlane.xlu0 %4950
      %v4952 = vsel %vm1629, %v4938, 0.0
      %4953 = vadd.xlane.f32.xlu0 %v4952
      %v4954 = vpop.xlane.xlu0 %4953
      %v4955 = vsel %vm1629, %v4940, 0.0
      %4956 = vadd.xlane.f32.xlu0 %v4955
      %v4957 = vpop.xlane.xlu0 %4956
      %v4958 = vsel %vm1629, %v4942, 0.0
      %4959 = vadd.xlane.f32.xlu0 %v4958
      %v4960 = vpop.xlane.xlu0 %4959
      %v4961 = vrcp.pop %v4945
      %v4962 = vrcp.pop %v4948
      %v4963 = vrcp.pop %v4951
      %v4964 = vrcp.pop %v4954
      %v4965 = vrcp.pop %v4957
      %v4966 = vrcp.pop %v4960
      %v4967 = vmul.f32 %v4932, %v4961
      %v4968 = vmul.f32 %v4934, %v4962
      %v4969 = vmul.f32 %v4936, %v4963
      %v4970 = vmul.f32 %v4938, %v4964
      %v4971 = vmul.f32 %v4940, %v4965
      %v4972 = vmul.f32 %v4942, %v4966
      %v4974 = vsel %vm1629, %v4967, 0
      %v4977 = vsel %vm1629, %v4968, 0
      %v4980 = vsel %vm1629, %v4969, 0
      %v4983 = vsel %vm1629, %v4970, 0
      %v4986 = vsel %vm1629, %v4971, 0
      %v4989 = vsel %vm1629, %v4972, 0
      %4991 = vmatpush.msra.mxu0 0.0
      %4992 = vmatpush.msra.mxu0 0.0
      %4993 = vmatpush.msra.mxu0 0.0
      %4994 = vmatpush.msra.mxu0 0.0
      %4995 = vmatpush.msra.mxu0 0.0
      %4996 = vmatpush.msra.mxu0 0.0
      %4997 = vmatpush.msra.mxu0 0.0
      %4998 = vmatpush.msra.mxu0 0.0
      %4999 = vmatpush.msra.mxu0 0.0
      %5000 = vmatpush.msra.mxu0 0.0
      %5001 = vmatpush.msra.mxu0 %v4782
      %5002 = vmatpush.msra.mxu0 %v4780
      %5003 = vmatpush.msra.mxu0 %v4778
      %5004 = vmatpush.msra.mxu0 %v4776
      %5005 = vmatpush.msra.mxu0 %v4774
      %5006 = vmatpush.msra.mxu0 %v4772
      %5007 = vmatmul.f32.gmra.mxu0 %v4974
      %v5008 = vpop.f32.mrf.mxu0
      %v5009 = vadd.f32 0.0, %v5008
      %5010 = vmatmul.f32.gmra.mxu0 %v4977
      %v5011 = vpop.f32.mrf.mxu0
      %v5012 = vadd.f32 0.0, %v5011
      %5013 = vmatmul.f32.gmra.mxu0 %v4980
      %v5014 = vpop.f32.mrf.mxu0
      %v5015 = vadd.f32 0.0, %v5014
      %5016 = vmatmul.f32.gmra.mxu0 %v4983
      %v5017 = vpop.f32.mrf.mxu0
      %v5018 = vadd.f32 0.0, %v5017
      %5019 = vmatmul.f32.gmra.mxu0 %v4986
      %v5020 = vpop.f32.mrf.mxu0
      %v5021 = vadd.f32 0.0, %v5020
      %5022 = vmatmul.f32.gmra.mxu0 %v4989
      %v5023 = vpop.f32.mrf.mxu0
      %v5024 = vadd.f32 0.0, %v5023
      %5025 = vdwg.mxu0
      %v5027 = vsel %vm608, %v5009, 0
      %v5030 = vsel %vm608, %v5012, 0
      %v5033 = vsel %vm608, %v5015, 0
      %v5036 = vsel %vm608, %v5018, 0
      %v5039 = vsel %vm608, %v5021, 0
      %v5042 = vsel %vm608, %v5024, 0
      %5044 = vmatpush.msra.mxu0 0.0
      %5045 = vmatpush.msra.mxu0 0.0
      %5046 = vmatpush.msra.mxu0 0.0
      %5047 = vmatpush.msra.mxu0 0.0
      %5048 = vmatpush.msra.mxu0 0.0
      %5049 = vmatpush.msra.mxu0 0.0
      %5050 = vmatpush.msra.mxu0 0.0
      %5051 = vmatpush.msra.mxu0 0.0
      %5052 = vmatpush.msra.mxu0 0.0
      %5053 = vmatpush.msra.mxu0 0.0
      %5054 = vmatpush.msra.mxu0 0.0
      %5055 = vmatpush.msra.mxu0 0.0
      %5056 = vmatpush.msra.mxu0 0.0
      %5057 = vmatpush.msra.mxu0 0.0
      %5058 = vmatpush.msra.mxu0 0.0
      %5059 = vmatpush.msra.mxu0 %v4240
      %5060 = vmatmul.f32.gmra.mxu0 %v5027
      %v5061 = vpop.f32.mrf.mxu0
      %v5062 = vadd.f32 0.0, %v5061
      %5063 = vmatmul.f32.gmra.mxu0 %v5030
      %v5064 = vpop.f32.mrf.mxu0
      %v5065 = vadd.f32 0.0, %v5064
      %5066 = vmatmul.f32.gmra.mxu0 %v5033
      %v5067 = vpop.f32.mrf.mxu0
      %v5068 = vadd.f32 0.0, %v5067
      %5069 = vmatmul.f32.gmra.mxu0 %v5036
      %v5070 = vpop.f32.mrf.mxu0
      %v5071 = vadd.f32 0.0, %v5070
      %5072 = vmatmul.f32.gmra.mxu0 %v5039
      %v5073 = vpop.f32.mrf.mxu0
      %v5074 = vadd.f32 0.0, %v5073
      %5075 = vmatmul.f32.gmra.mxu0 %v5042
      %v5076 = vpop.f32.mrf.mxu0
      %v5077 = vadd.f32 0.0, %v5076
      %5078 = vdwg.mxu0
      %v5080 = vsel %vm608, %v4825, 0
      %v5083 = vsel %vm608, %v4828, 0
      %v5086 = vsel %vm608, %v4831, 0
      %v5089 = vsel %vm608, %v4834, 0
      %v5092 = vsel %vm608, %v4837, 0
      %v5095 = vsel %vm608, %v4840, 0
      %5097 = vmatpush.msra.mxu0 0.0
      %5098 = vmatpush.msra.mxu0 0.0
      %5099 = vmatpush.msra.mxu0 0.0
      %5100 = vmatpush.msra.mxu0 0.0
      %5101 = vmatpush.msra.mxu0 0.0
      %5102 = vmatpush.msra.mxu0 0.0
      %5103 = vmatpush.msra.mxu0 0.0
      %5104 = vmatpush.msra.mxu0 0.0
      %5105 = vmatpush.msra.mxu0 0.0
      %5106 = vmatpush.msra.mxu0 0.0
      %5107 = vmatpush.msra.mxu0 0.0
      %5108 = vmatpush.msra.mxu0 0.0
      %5109 = vmatpush.msra.mxu0 0.0
      %5110 = vmatpush.msra.mxu0 0.0
      %5111 = vmatpush.msra.mxu0 0.0
      %5112 = vmatpush.msra.mxu0 %v4239
      %5113 = vmatmul.f32.gmra.mxu0 %v5080
      %v5114 = vpop.f32.mrf.mxu0
      %v5115 = vadd.f32 %v5062, %v5114
      %5116 = vmatmul.f32.gmra.mxu0 %v5083
      %v5117 = vpop.f32.mrf.mxu0
      %v5118 = vadd.f32 %v5065, %v5117
      %5119 = vmatmul.f32.gmra.mxu0 %v5086
      %v5120 = vpop.f32.mrf.mxu0
      %v5121 = vadd.f32 %v5068, %v5120
      %5122 = vmatmul.f32.gmra.mxu0 %v5089
      %v5123 = vpop.f32.mrf.mxu0
      %v5124 = vadd.f32 %v5071, %v5123
      %5125 = vmatmul.f32.gmra.mxu0 %v5092
      %v5126 = vpop.f32.mrf.mxu0
      %v5127 = vadd.f32 %v5074, %v5126
      %5128 = vmatmul.f32.gmra.mxu0 %v5095
      %v5129 = vpop.f32.mrf.mxu0
      %v5130 = vadd.f32 %v5077, %v5129
      %5131 = vdwg.mxu0
      %5132 = vrot.lane.b32.xlu0 %v4522, 112
      %v5133 = vpop.permute.xlu0 %5132
      %5134 = vrot.lane.b32.xlu0 %v4525, 112
      %v5135 = vpop.permute.xlu0 %5134
      %5136 = vrot.lane.b32.xlu0 %v4528, 112
      %v5137 = vpop.permute.xlu0 %5136
      %5138 = vrot.lane.b32.xlu0 %v4531, 112
      %v5139 = vpop.permute.xlu0 %5138
      %5140 = vrot.lane.b32.xlu0 %v4534, 112
      %v5141 = vpop.permute.xlu0 %5140
      %5142 = vrot.lane.b32.xlu0 %v4537, 112
      %v5143 = vpop.permute.xlu0 %5142
      %5144 = vrot.lane.b32.xlu0 %v4611, 120
      %v5145 = vpop.permute.xlu0 %5144
      %5146 = vrot.lane.b32.xlu0 %v4614, 120
      %v5147 = vpop.permute.xlu0 %5146
      %5148 = vrot.lane.b32.xlu0 %v4617, 120
      %v5149 = vpop.permute.xlu0 %5148
      %5150 = vrot.lane.b32.xlu0 %v4620, 120
      %v5151 = vpop.permute.xlu0 %5150
      %5152 = vrot.lane.b32.xlu0 %v4623, 120
      %v5153 = vpop.permute.xlu0 %5152
      %5154 = vrot.lane.b32.xlu0 %v4626, 120
      %v5155 = vpop.permute.xlu0 %5154
      %v5156 = vsel %vm608, %v5133, 0
      %v5158 = vsel %vm608, %v5135, 0
      %v5160 = vsel %vm608, %v5137, 0
      %v5162 = vsel %vm608, %v5139, 0
      %v5164 = vsel %vm608, %v5141, 0
      %v5166 = vsel %vm608, %v5143, 0
      %v5168 = vsel %vm608, %v5145, 0
      %v5170 = vsel %vm608, %v5147, 0
      %v5172 = vsel %vm608, %v5149, 0
      %v5174 = vsel %vm608, %v5151, 0
      %v5176 = vsel %vm608, %v5153, 0
      %v5178 = vsel %vm608, %v5155, 0
      %5180 = vmatpush.xpose.msra.mxu0 0.0
      %5181 = vmatpush.xpose.msra.mxu0 0.0
      %5182 = vmatpush.xpose.msra.mxu0 0.0
      %5183 = vmatpush.xpose.msra.mxu0 0.0
      %5184 = vmatpush.xpose.msra.mxu0 0.0
      %5185 = vmatpush.xpose.msra.mxu0 0.0
      %5186 = vmatpush.xpose.msra.mxu0 0.0
      %5187 = vmatpush.xpose.msra.mxu0 0.0
      %5188 = vmatpush.xpose.msra.mxu0 0.0
      %5189 = vmatpush.xpose.msra.mxu0 0.0
      %5190 = vmatpush.xpose.msra.mxu0 %v5178
      %5191 = vmatpush.xpose.msra.mxu0 %v5176
      %5192 = vmatpush.xpose.msra.mxu0 %v5174
      %5193 = vmatpush.xpose.msra.mxu0 %v5172
      %5194 = vmatpush.xpose.msra.mxu0 %v5170
      %5195 = vmatpush.xpose.msra.mxu0 %v5168
      %5196 = vmatmul.f32.gmra.mxu0 %v5156
      %v5197 = vpop.f32.mrf.mxu0
      %v5198 = vadd.f32 0.0, %v5197
      %5199 = vmatmul.f32.gmra.mxu0 %v5158
      %v5200 = vpop.f32.mrf.mxu0
      %v5201 = vadd.f32 0.0, %v5200
      %5202 = vmatmul.f32.gmra.mxu0 %v5160
      %v5203 = vpop.f32.mrf.mxu0
      %v5204 = vadd.f32 0.0, %v5203
      %5205 = vmatmul.f32.gmra.mxu0 %v5162
      %v5206 = vpop.f32.mrf.mxu0
      %v5207 = vadd.f32 0.0, %v5206
      %5208 = vmatmul.f32.gmra.mxu0 %v5164
      %v5209 = vpop.f32.mrf.mxu0
      %v5210 = vadd.f32 0.0, %v5209
      %5211 = vmatmul.f32.gmra.mxu0 %v5166
      %v5212 = vpop.f32.mrf.mxu0
      %v5213 = vadd.f32 0.0, %v5212
      %5214 = vdwg.mxu0
      %v5215 = vmul.f32 %v5198, 0.35355338
      %v5216 = vmul.f32 %v5201, 0.35355338
      %v5217 = vmul.f32 %v5204, 0.35355338
      %v5218 = vmul.f32 %v5207, 0.35355338
      %v5219 = vmul.f32 %v5210, 0.35355338
      %v5220 = vmul.f32 %v5213, 0.35355338
      %v5221 = vsel %vm1629, %v5215, -inf
      %5222 = vmax.xlane.f32.xlu0 %v5221
      %v5223 = vpop.xlane.xlu0 %5222
      %v5224 = vsel %vm1629, %v5216, -inf
      %5225 = vmax.xlane.f32.xlu0 %v5224
      %v5226 = vpop.xlane.xlu0 %5225
      %v5227 = vsel %vm1629, %v5217, -inf
      %5228 = vmax.xlane.f32.xlu0 %v5227
      %v5229 = vpop.xlane.xlu0 %5228
      %v5230 = vsel %vm1629, %v5218, -inf
      %5231 = vmax.xlane.f32.xlu0 %v5230
      %v5232 = vpop.xlane.xlu0 %5231
      %v5233 = vsel %vm1629, %v5219, -inf
      %5234 = vmax.xlane.f32.xlu0 %v5233
      %v5235 = vpop.xlane.xlu0 %5234
      %v5236 = vsel %vm1629, %v5220, -inf
      %5237 = vmax.xlane.f32.xlu0 %v5236
      %v5238 = vpop.xlane.xlu0 %5237
      %v5239 = vsub.f32 %v5215, %v5223
      %v5240 = vsub.f32 %v5216, %v5226
      %v5241 = vsub.f32 %v5217, %v5229
      %v5242 = vsub.f32 %v5218, %v5232
      %v5243 = vsub.f32 %v5219, %v5235
      %v5244 = vsub.f32 %v5220, %v5238
      %v5245 = vmul.f32 %v5239, 1.442695
      %v5246 = vpow.pop %v5245
      %v5247 = vmul.f32 %v5240, 1.442695
      %v5248 = vpow.pop %v5247
      %v5249 = vmul.f32 %v5241, 1.442695
      %v5250 = vpow.pop %v5249
      %v5251 = vmul.f32 %v5242, 1.442695
      %v5252 = vpow.pop %v5251
      %v5253 = vmul.f32 %v5243, 1.442695
      %v5254 = vpow.pop %v5253
      %v5255 = vmul.f32 %v5244, 1.442695
      %v5256 = vpow.pop %v5255
      %v5257 = vsel %vm1629, %v5246, 0.0
      %5258 = vadd.xlane.f32.xlu0 %v5257
      %v5259 = vpop.xlane.xlu0 %5258
      %v5260 = vsel %vm1629, %v5248, 0.0
      %5261 = vadd.xlane.f32.xlu0 %v5260
      %v5262 = vpop.xlane.xlu0 %5261
      %v5263 = vsel %vm1629, %v5250, 0.0
      %5264 = vadd.xlane.f32.xlu0 %v5263
      %v5265 = vpop.xlane.xlu0 %5264
      %v5266 = vsel %vm1629, %v5252, 0.0
      %5267 = vadd.xlane.f32.xlu0 %v5266
      %v5268 = vpop.xlane.xlu0 %5267
      %v5269 = vsel %vm1629, %v5254, 0.0
      %5270 = vadd.xlane.f32.xlu0 %v5269
      %v5271 = vpop.xlane.xlu0 %5270
      %v5272 = vsel %vm1629, %v5256, 0.0
      %5273 = vadd.xlane.f32.xlu0 %v5272
      %v5274 = vpop.xlane.xlu0 %5273
      %v5275 = vrcp.pop %v5259
      %v5276 = vrcp.pop %v5262
      %v5277 = vrcp.pop %v5265
      %v5278 = vrcp.pop %v5268
      %v5279 = vrcp.pop %v5271
      %v5280 = vrcp.pop %v5274
      %v5281 = vmul.f32 %v5246, %v5275
      %v5282 = vmul.f32 %v5248, %v5276
      %v5283 = vmul.f32 %v5250, %v5277
      %v5284 = vmul.f32 %v5252, %v5278
      %v5285 = vmul.f32 %v5254, %v5279
      %v5286 = vmul.f32 %v5256, %v5280
      %5287 = vrot.lane.b32.xlu0 %v4611, 88
      %v5288 = vpop.permute.xlu0 %5287
      %5289 = vrot.lane.b32.xlu0 %v4614, 88
      %v5290 = vpop.permute.xlu0 %5289
      %5291 = vrot.lane.b32.xlu0 %v4617, 88
      %v5292 = vpop.permute.xlu0 %5291
      %5293 = vrot.lane.b32.xlu0 %v4620, 88
      %v5294 = vpop.permute.xlu0 %5293
      %5295 = vrot.lane.b32.xlu0 %v4623, 88
      %v5296 = vpop.permute.xlu0 %5295
      %5297 = vrot.lane.b32.xlu0 %v4626, 88
      %v5298 = vpop.permute.xlu0 %5297
      %v5306 = vsel %vm1629, %v5281, 0
      %v5309 = vsel %vm1629, %v5282, 0
      %v5312 = vsel %vm1629, %v5283, 0
      %v5315 = vsel %vm1629, %v5284, 0
      %v5318 = vsel %vm1629, %v5285, 0
      %v5321 = vsel %vm1629, %v5286, 0
      %5323 = vmatpush.msra.mxu0 0.0
      %5324 = vmatpush.msra.mxu0 0.0
      %5325 = vmatpush.msra.mxu0 0.0
      %5326 = vmatpush.msra.mxu0 0.0
      %5327 = vmatpush.msra.mxu0 0.0
      %5328 = vmatpush.msra.mxu0 0.0
      %5329 = vmatpush.msra.mxu0 0.0
      %5330 = vmatpush.msra.mxu0 0.0
      %5331 = vmatpush.msra.mxu0 0.0
      %5332 = vmatpush.msra.mxu0 0.0
      %5333 = vmatpush.msra.mxu0 %v5298
      %5334 = vmatpush.msra.mxu0 %v5296
      %5335 = vmatpush.msra.mxu0 %v5294
      %5336 = vmatpush.msra.mxu0 %v5292
      %5337 = vmatpush.msra.mxu0 %v5290
      %5338 = vmatpush.msra.mxu0 %v5288
      %5339 = vmatmul.f32.gmra.mxu0 %v5306
      %v5340 = vpop.f32.mrf.mxu0
      %v5341 = vadd.f32 0.0, %v5340
      %5342 = vmatmul.f32.gmra.mxu0 %v5309
      %v5343 = vpop.f32.mrf.mxu0
      %v5344 = vadd.f32 0.0, %v5343
      %5345 = vmatmul.f32.gmra.mxu0 %v5312
      %v5346 = vpop.f32.mrf.mxu0
      %v5347 = vadd.f32 0.0, %v5346
      %5348 = vmatmul.f32.gmra.mxu0 %v5315
      %v5349 = vpop.f32.mrf.mxu0
      %v5350 = vadd.f32 0.0, %v5349
      %5351 = vmatmul.f32.gmra.mxu0 %v5318
      %v5352 = vpop.f32.mrf.mxu0
      %v5353 = vadd.f32 0.0, %v5352
      %5354 = vmatmul.f32.gmra.mxu0 %v5321
      %v5355 = vpop.f32.mrf.mxu0
      %v5356 = vadd.f32 0.0, %v5355
      %5357 = vdwg.mxu0
      %v5359 = vsel %vm608, %v5341, 0
      %v5362 = vsel %vm608, %v5344, 0
      %v5365 = vsel %vm608, %v5347, 0
      %v5368 = vsel %vm608, %v5350, 0
      %v5371 = vsel %vm608, %v5353, 0
      %v5374 = vsel %vm608, %v5356, 0
      %5376 = vmatpush.msra.mxu0 0.0
      %5377 = vmatpush.msra.mxu0 0.0
      %5378 = vmatpush.msra.mxu0 0.0
      %5379 = vmatpush.msra.mxu0 0.0
      %5380 = vmatpush.msra.mxu0 0.0
      %5381 = vmatpush.msra.mxu0 0.0
      %5382 = vmatpush.msra.mxu0 0.0
      %5383 = vmatpush.msra.mxu0 0.0
      %5384 = vmatpush.msra.mxu0 0.0
      %5385 = vmatpush.msra.mxu0 0.0
      %5386 = vmatpush.msra.mxu0 0.0
      %5387 = vmatpush.msra.mxu0 0.0
      %5388 = vmatpush.msra.mxu0 0.0
      %5389 = vmatpush.msra.mxu0 0.0
      %5390 = vmatpush.msra.mxu0 0.0
      %5391 = vmatpush.msra.mxu0 %v4241
      %5392 = vmatmul.f32.gmra.mxu0 %v5359
      %v5393 = vpop.f32.mrf.mxu0
      %v5394 = vadd.f32 0.0, %v5393
      %5395 = vmatmul.f32.gmra.mxu0 %v5362
      %v5396 = vpop.f32.mrf.mxu0
      %v5397 = vadd.f32 0.0, %v5396
      %5398 = vmatmul.f32.gmra.mxu0 %v5365
      %v5399 = vpop.f32.mrf.mxu0
      %v5400 = vadd.f32 0.0, %v5399
      %5401 = vmatmul.f32.gmra.mxu0 %v5368
      %v5402 = vpop.f32.mrf.mxu0
      %v5403 = vadd.f32 0.0, %v5402
      %5404 = vmatmul.f32.gmra.mxu0 %v5371
      %v5405 = vpop.f32.mrf.mxu0
      %v5406 = vadd.f32 0.0, %v5405
      %5407 = vmatmul.f32.gmra.mxu0 %v5374
      %v5408 = vpop.f32.mrf.mxu0
      %v5409 = vadd.f32 0.0, %v5408
      %5410 = vdwg.mxu0
      %v5411 = vadd.f32 %v5115, %v5394
      %v5412 = vadd.f32 %v5118, %v5397
      %v5413 = vadd.f32 %v5121, %v5400
      %v5414 = vadd.f32 %v5124, %v5403
      %v5415 = vadd.f32 %v5127, %v5406
      %v5416 = vadd.f32 %v5130, %v5409
      %5417 = vrot.lane.b32.xlu0 %v4522, 104
      %v5418 = vpop.permute.xlu0 %5417
      %5419 = vrot.lane.b32.xlu0 %v4525, 104
      %v5420 = vpop.permute.xlu0 %5419
      %5421 = vrot.lane.b32.xlu0 %v4528, 104
      %v5422 = vpop.permute.xlu0 %5421
      %5423 = vrot.lane.b32.xlu0 %v4531, 104
      %v5424 = vpop.permute.xlu0 %5423
      %5425 = vrot.lane.b32.xlu0 %v4534, 104
      %v5426 = vpop.permute.xlu0 %5425
      %5427 = vrot.lane.b32.xlu0 %v4537, 104
      %v5428 = vpop.permute.xlu0 %5427
      %v5429 = vsel %vm608, %v5418, 0
      %v5431 = vsel %vm608, %v5420, 0
      %v5433 = vsel %vm608, %v5422, 0
      %v5435 = vsel %vm608, %v5424, 0
      %v5437 = vsel %vm608, %v5426, 0
      %v5439 = vsel %vm608, %v5428, 0
      %5441 = vmatpush.xpose.msra.mxu0 0.0
      %5442 = vmatpush.xpose.msra.mxu0 0.0
      %5443 = vmatpush.xpose.msra.mxu0 0.0
      %5444 = vmatpush.xpose.msra.mxu0 0.0
      %5445 = vmatpush.xpose.msra.mxu0 0.0
      %5446 = vmatpush.xpose.msra.mxu0 0.0
      %5447 = vmatpush.xpose.msra.mxu0 0.0
      %5448 = vmatpush.xpose.msra.mxu0 0.0
      %5449 = vmatpush.xpose.msra.mxu0 0.0
      %5450 = vmatpush.xpose.msra.mxu0 0.0
      %5451 = vmatpush.xpose.msra.mxu0 %v5178
      %5452 = vmatpush.xpose.msra.mxu0 %v5176
      %5453 = vmatpush.xpose.msra.mxu0 %v5174
      %5454 = vmatpush.xpose.msra.mxu0 %v5172
      %5455 = vmatpush.xpose.msra.mxu0 %v5170
      %5456 = vmatpush.xpose.msra.mxu0 %v5168
      %5457 = vmatmul.f32.gmra.mxu0 %v5429
      %v5458 = vpop.f32.mrf.mxu0
      %v5459 = vadd.f32 0.0, %v5458
      %5460 = vmatmul.f32.gmra.mxu0 %v5431
      %v5461 = vpop.f32.mrf.mxu0
      %v5462 = vadd.f32 0.0, %v5461
      %5463 = vmatmul.f32.gmra.mxu0 %v5433
      %v5464 = vpop.f32.mrf.mxu0
      %v5465 = vadd.f32 0.0, %v5464
      %5466 = vmatmul.f32.gmra.mxu0 %v5435
      %v5467 = vpop.f32.mrf.mxu0
      %v5468 = vadd.f32 0.0, %v5467
      %5469 = vmatmul.f32.gmra.mxu0 %v5437
      %v5470 = vpop.f32.mrf.mxu0
      %v5471 = vadd.f32 0.0, %v5470
      %5472 = vmatmul.f32.gmra.mxu0 %v5439
      %v5473 = vpop.f32.mrf.mxu0
      %v5474 = vadd.f32 0.0, %v5473
      %5475 = vdwg.mxu0
      %v5476 = vmul.f32 %v5459, 0.35355338
      %v5477 = vmul.f32 %v5462, 0.35355338
      %v5478 = vmul.f32 %v5465, 0.35355338
      %v5479 = vmul.f32 %v5468, 0.35355338
      %v5480 = vmul.f32 %v5471, 0.35355338
      %v5481 = vmul.f32 %v5474, 0.35355338
      %v5482 = vsel %vm1629, %v5476, -inf
      %5483 = vmax.xlane.f32.xlu0 %v5482
      %v5484 = vpop.xlane.xlu0 %5483
      %v5485 = vsel %vm1629, %v5477, -inf
      %5486 = vmax.xlane.f32.xlu0 %v5485
      %v5487 = vpop.xlane.xlu0 %5486
      %v5488 = vsel %vm1629, %v5478, -inf
      %5489 = vmax.xlane.f32.xlu0 %v5488
      %v5490 = vpop.xlane.xlu0 %5489
      %v5491 = vsel %vm1629, %v5479, -inf
      %5492 = vmax.xlane.f32.xlu0 %v5491
      %v5493 = vpop.xlane.xlu0 %5492
      %v5494 = vsel %vm1629, %v5480, -inf
      %5495 = vmax.xlane.f32.xlu0 %v5494
      %v5496 = vpop.xlane.xlu0 %5495
      %v5497 = vsel %vm1629, %v5481, -inf
      %5498 = vmax.xlane.f32.xlu0 %v5497
      %v5499 = vpop.xlane.xlu0 %5498
      %v5500 = vsub.f32 %v5476, %v5484
      %v5501 = vsub.f32 %v5477, %v5487
      %v5502 = vsub.f32 %v5478, %v5490
      %v5503 = vsub.f32 %v5479, %v5493
      %v5504 = vsub.f32 %v5480, %v5496
      %v5505 = vsub.f32 %v5481, %v5499
      %v5506 = vmul.f32 %v5500, 1.442695
      %v5507 = vpow.pop %v5506
      %v5508 = vmul.f32 %v5501, 1.442695
      %v5509 = vpow.pop %v5508
      %v5510 = vmul.f32 %v5502, 1.442695
      %v5511 = vpow.pop %v5510
      %v5512 = vmul.f32 %v5503, 1.442695
      %v5513 = vpow.pop %v5512
      %v5514 = vmul.f32 %v5504, 1.442695
      %v5515 = vpow.pop %v5514
      %v5516 = vmul.f32 %v5505, 1.442695
      %v5517 = vpow.pop %v5516
      %v5518 = vsel %vm1629, %v5507, 0.0
      %5519 = vadd.xlane.f32.xlu0 %v5518
      %v5520 = vpop.xlane.xlu0 %5519
      %v5521 = vsel %vm1629, %v5509, 0.0
      %5522 = vadd.xlane.f32.xlu0 %v5521
      %v5523 = vpop.xlane.xlu0 %5522
      %v5524 = vsel %vm1629, %v5511, 0.0
      %5525 = vadd.xlane.f32.xlu0 %v5524
      %v5526 = vpop.xlane.xlu0 %5525
      %v5527 = vsel %vm1629, %v5513, 0.0
      %5528 = vadd.xlane.f32.xlu0 %v5527
      %v5529 = vpop.xlane.xlu0 %5528
      %v5530 = vsel %vm1629, %v5515, 0.0
      %5531 = vadd.xlane.f32.xlu0 %v5530
      %v5532 = vpop.xlane.xlu0 %5531
      %v5533 = vsel %vm1629, %v5517, 0.0
      %5534 = vadd.xlane.f32.xlu0 %v5533
      %v5535 = vpop.xlane.xlu0 %5534
      %v5536 = vrcp.pop %v5520
      %v5537 = vrcp.pop %v5523
      %v5538 = vrcp.pop %v5526
      %v5539 = vrcp.pop %v5529
      %v5540 = vrcp.pop %v5532
      %v5541 = vrcp.pop %v5535
      %v5542 = vmul.f32 %v5507, %v5536
      %v5543 = vmul.f32 %v5509, %v5537
      %v5544 = vmul.f32 %v5511, %v5538
      %v5545 = vmul.f32 %v5513, %v5539
      %v5546 = vmul.f32 %v5515, %v5540
      %v5547 = vmul.f32 %v5517, %v5541
      %v5549 = vsel %vm1629, %v5542, 0
      %v5552 = vsel %vm1629, %v5543, 0
      %v5555 = vsel %vm1629, %v5544, 0
      %v5558 = vsel %vm1629, %v5545, 0
      %v5561 = vsel %vm1629, %v5546, 0
      %v5564 = vsel %vm1629, %v5547, 0
      %5566 = vmatpush.msra.mxu0 0.0
      %5567 = vmatpush.msra.mxu0 0.0
      %5568 = vmatpush.msra.mxu0 0.0
      %5569 = vmatpush.msra.mxu0 0.0
      %5570 = vmatpush.msra.mxu0 0.0
      %5571 = vmatpush.msra.mxu0 0.0
      %5572 = vmatpush.msra.mxu0 0.0
      %5573 = vmatpush.msra.mxu0 0.0
      %5574 = vmatpush.msra.mxu0 0.0
      %5575 = vmatpush.msra.mxu0 0.0
      %5576 = vmatpush.msra.mxu0 %v5298
      %5577 = vmatpush.msra.mxu0 %v5296
      %5578 = vmatpush.msra.mxu0 %v5294
      %5579 = vmatpush.msra.mxu0 %v5292
      %5580 = vmatpush.msra.mxu0 %v5290
      %5581 = vmatpush.msra.mxu0 %v5288
      %5582 = vmatmul.f32.gmra.mxu0 %v5549
      %v5583 = vpop.f32.mrf.mxu0
      %v5584 = vadd.f32 0.0, %v5583
      %5585 = vmatmul.f32.gmra.mxu0 %v5552
      %v5586 = vpop.f32.mrf.mxu0
      %v5587 = vadd.f32 0.0, %v5586
      %5588 = vmatmul.f32.gmra.mxu0 %v5555
      %v5589 = vpop.f32.mrf.mxu0
      %v5590 = vadd.f32 0.0, %v5589
      %5591 = vmatmul.f32.gmra.mxu0 %v5558
      %v5592 = vpop.f32.mrf.mxu0
      %v5593 = vadd.f32 0.0, %v5592
      %5594 = vmatmul.f32.gmra.mxu0 %v5561
      %v5595 = vpop.f32.mrf.mxu0
      %v5596 = vadd.f32 0.0, %v5595
      %5597 = vmatmul.f32.gmra.mxu0 %v5564
      %v5598 = vpop.f32.mrf.mxu0
      %v5599 = vadd.f32 0.0, %v5598
      %5600 = vdwg.mxu0
      %v5602 = vsel %vm608, %v5584, 0
      %v5605 = vsel %vm608, %v5587, 0
      %v5608 = vsel %vm608, %v5590, 0
      %v5611 = vsel %vm608, %v5593, 0
      %v5614 = vsel %vm608, %v5596, 0
      %v5617 = vsel %vm608, %v5599, 0
      %5619 = vmatpush.msra.mxu0 0.0
      %5620 = vmatpush.msra.mxu0 0.0
      %5621 = vmatpush.msra.mxu0 0.0
      %5622 = vmatpush.msra.mxu0 0.0
      %5623 = vmatpush.msra.mxu0 0.0
      %5624 = vmatpush.msra.mxu0 0.0
      %5625 = vmatpush.msra.mxu0 0.0
      %5626 = vmatpush.msra.mxu0 0.0
      %5627 = vmatpush.msra.mxu0 0.0
      %5628 = vmatpush.msra.mxu0 0.0
      %5629 = vmatpush.msra.mxu0 0.0
      %5630 = vmatpush.msra.mxu0 0.0
      %5631 = vmatpush.msra.mxu0 0.0
      %5632 = vmatpush.msra.mxu0 0.0
      %5633 = vmatpush.msra.mxu0 0.0
      %5634 = vmatpush.msra.mxu0 %v4242
      %5635 = vmatmul.f32.gmra.mxu0 %v5602
      %v5636 = vpop.f32.mrf.mxu0
      %v5637 = vadd.f32 0.0, %v5636
      %5638 = vmatmul.f32.gmra.mxu0 %v5605
      %v5639 = vpop.f32.mrf.mxu0
      %v5640 = vadd.f32 0.0, %v5639
      %5641 = vmatmul.f32.gmra.mxu0 %v5608
      %v5642 = vpop.f32.mrf.mxu0
      %v5643 = vadd.f32 0.0, %v5642
      %5644 = vmatmul.f32.gmra.mxu0 %v5611
      %v5645 = vpop.f32.mrf.mxu0
      %v5646 = vadd.f32 0.0, %v5645
      %5647 = vmatmul.f32.gmra.mxu0 %v5614
      %v5648 = vpop.f32.mrf.mxu0
      %v5649 = vadd.f32 0.0, %v5648
      %5650 = vmatmul.f32.gmra.mxu0 %v5617
      %v5651 = vpop.f32.mrf.mxu0
      %v5652 = vadd.f32 0.0, %v5651
      %5653 = vdwg.mxu0
      %v5654 = vadd.f32 %v5411, %v5637
      %v5655 = vadd.f32 %v5412, %v5640
      %v5656 = vadd.f32 %v5413, %v5643
      %v5657 = vadd.f32 %v5414, %v5646
      %v5658 = vadd.f32 %v5415, %v5649
      %v5659 = vadd.f32 %v5416, %v5652
      %5660 = vrot.lane.b32.xlu0 %v4522, 96
      %v5661 = vpop.permute.xlu0 %5660
      %5662 = vrot.lane.b32.xlu0 %v4525, 96
      %v5663 = vpop.permute.xlu0 %5662
      %5664 = vrot.lane.b32.xlu0 %v4528, 96
      %v5665 = vpop.permute.xlu0 %5664
      %5666 = vrot.lane.b32.xlu0 %v4531, 96
      %v5667 = vpop.permute.xlu0 %5666
      %5668 = vrot.lane.b32.xlu0 %v4534, 96
      %v5669 = vpop.permute.xlu0 %5668
      %5670 = vrot.lane.b32.xlu0 %v4537, 96
      %v5671 = vpop.permute.xlu0 %5670
      %5672 = vrot.lane.b32.xlu0 %v4611, 112
      %v5673 = vpop.permute.xlu0 %5672
      %5674 = vrot.lane.b32.xlu0 %v4614, 112
      %v5675 = vpop.permute.xlu0 %5674
      %5676 = vrot.lane.b32.xlu0 %v4617, 112
      %v5677 = vpop.permute.xlu0 %5676
      %5678 = vrot.lane.b32.xlu0 %v4620, 112
      %v5679 = vpop.permute.xlu0 %5678
      %5680 = vrot.lane.b32.xlu0 %v4623, 112
      %v5681 = vpop.permute.xlu0 %5680
      %5682 = vrot.lane.b32.xlu0 %v4626, 112
      %v5683 = vpop.permute.xlu0 %5682
      %v5684 = vsel %vm608, %v5661, 0
      %v5686 = vsel %vm608, %v5663, 0
      %v5688 = vsel %vm608, %v5665, 0
      %v5690 = vsel %vm608, %v5667, 0
      %v5692 = vsel %vm608, %v5669, 0
      %v5694 = vsel %vm608, %v5671, 0
      %v5696 = vsel %vm608, %v5673, 0
      %v5698 = vsel %vm608, %v5675, 0
      %v5700 = vsel %vm608, %v5677, 0
      %v5702 = vsel %vm608, %v5679, 0
      %v5704 = vsel %vm608, %v5681, 0
      %v5706 = vsel %vm608, %v5683, 0
      %5708 = vmatpush.xpose.msra.mxu0 0.0
      %5709 = vmatpush.xpose.msra.mxu0 0.0
      %5710 = vmatpush.xpose.msra.mxu0 0.0
      %5711 = vmatpush.xpose.msra.mxu0 0.0
      %5712 = vmatpush.xpose.msra.mxu0 0.0
      %5713 = vmatpush.xpose.msra.mxu0 0.0
      %5714 = vmatpush.xpose.msra.mxu0 0.0
      %5715 = vmatpush.xpose.msra.mxu0 0.0
      %5716 = vmatpush.xpose.msra.mxu0 0.0
      %5717 = vmatpush.xpose.msra.mxu0 0.0
      %5718 = vmatpush.xpose.msra.mxu0 %v5706
      %5719 = vmatpush.xpose.msra.mxu0 %v5704
      %5720 = vmatpush.xpose.msra.mxu0 %v5702
      %5721 = vmatpush.xpose.msra.mxu0 %v5700
      %5722 = vmatpush.xpose.msra.mxu0 %v5698
      %5723 = vmatpush.xpose.msra.mxu0 %v5696
      %5724 = vmatmul.f32.gmra.mxu0 %v5684
      %v5725 = vpop.f32.mrf.mxu0
      %v5726 = vadd.f32 0.0, %v5725
      %5727 = vmatmul.f32.gmra.mxu0 %v5686
      %v5728 = vpop.f32.mrf.mxu0
      %v5729 = vadd.f32 0.0, %v5728
      %5730 = vmatmul.f32.gmra.mxu0 %v5688
      %v5731 = vpop.f32.mrf.mxu0
      %v5732 = vadd.f32 0.0, %v5731
      %5733 = vmatmul.f32.gmra.mxu0 %v5690
      %v5734 = vpop.f32.mrf.mxu0
      %v5735 = vadd.f32 0.0, %v5734
      %5736 = vmatmul.f32.gmra.mxu0 %v5692
      %v5737 = vpop.f32.mrf.mxu0
      %v5738 = vadd.f32 0.0, %v5737
      %5739 = vmatmul.f32.gmra.mxu0 %v5694
      %v5740 = vpop.f32.mrf.mxu0
      %v5741 = vadd.f32 0.0, %v5740
      %5742 = vdwg.mxu0
      %v5743 = vmul.f32 %v5726, 0.35355338
      %v5744 = vmul.f32 %v5729, 0.35355338
      %v5745 = vmul.f32 %v5732, 0.35355338
      %v5746 = vmul.f32 %v5735, 0.35355338
      %v5747 = vmul.f32 %v5738, 0.35355338
      %v5748 = vmul.f32 %v5741, 0.35355338
      %v5749 = vsel %vm1629, %v5743, -inf
      %5750 = vmax.xlane.f32.xlu0 %v5749
      %v5751 = vpop.xlane.xlu0 %5750
      %v5752 = vsel %vm1629, %v5744, -inf
      %5753 = vmax.xlane.f32.xlu0 %v5752
      %v5754 = vpop.xlane.xlu0 %5753
      %v5755 = vsel %vm1629, %v5745, -inf
      %5756 = vmax.xlane.f32.xlu0 %v5755
      %v5757 = vpop.xlane.xlu0 %5756
      %v5758 = vsel %vm1629, %v5746, -inf
      %5759 = vmax.xlane.f32.xlu0 %v5758
      %v5760 = vpop.xlane.xlu0 %5759
      %v5761 = vsel %vm1629, %v5747, -inf
      %5762 = vmax.xlane.f32.xlu0 %v5761
      %v5763 = vpop.xlane.xlu0 %5762
      %v5764 = vsel %vm1629, %v5748, -inf
      %5765 = vmax.xlane.f32.xlu0 %v5764
      %v5766 = vpop.xlane.xlu0 %5765
      %v5767 = vsub.f32 %v5743, %v5751
      %v5768 = vsub.f32 %v5744, %v5754
      %v5769 = vsub.f32 %v5745, %v5757
      %v5770 = vsub.f32 %v5746, %v5760
      %v5771 = vsub.f32 %v5747, %v5763
      %v5772 = vsub.f32 %v5748, %v5766
      %v5773 = vmul.f32 %v5767, 1.442695
      %v5774 = vpow.pop %v5773
      %v5775 = vmul.f32 %v5768, 1.442695
      %v5776 = vpow.pop %v5775
      %v5777 = vmul.f32 %v5769, 1.442695
      %v5778 = vpow.pop %v5777
      %v5779 = vmul.f32 %v5770, 1.442695
      %v5780 = vpow.pop %v5779
      %v5781 = vmul.f32 %v5771, 1.442695
      %v5782 = vpow.pop %v5781
      %v5783 = vmul.f32 %v5772, 1.442695
      %v5784 = vpow.pop %v5783
      %v5785 = vsel %vm1629, %v5774, 0.0
      %5786 = vadd.xlane.f32.xlu0 %v5785
      %v5787 = vpop.xlane.xlu0 %5786
      %v5788 = vsel %vm1629, %v5776, 0.0
      %5789 = vadd.xlane.f32.xlu0 %v5788
      %v5790 = vpop.xlane.xlu0 %5789
      %v5791 = vsel %vm1629, %v5778, 0.0
      %5792 = vadd.xlane.f32.xlu0 %v5791
      %v5793 = vpop.xlane.xlu0 %5792
      %v5794 = vsel %vm1629, %v5780, 0.0
      %5795 = vadd.xlane.f32.xlu0 %v5794
      %v5796 = vpop.xlane.xlu0 %5795
      %v5797 = vsel %vm1629, %v5782, 0.0
      %5798 = vadd.xlane.f32.xlu0 %v5797
      %v5799 = vpop.xlane.xlu0 %5798
      %v5800 = vsel %vm1629, %v5784, 0.0
      %5801 = vadd.xlane.f32.xlu0 %v5800
      %v5802 = vpop.xlane.xlu0 %5801
      %v5803 = vrcp.pop %v5787
      %v5804 = vrcp.pop %v5790
      %v5805 = vrcp.pop %v5793
      %v5806 = vrcp.pop %v5796
      %v5807 = vrcp.pop %v5799
      %v5808 = vrcp.pop %v5802
      %v5809 = vmul.f32 %v5774, %v5803
      %v5810 = vmul.f32 %v5776, %v5804
      %v5811 = vmul.f32 %v5778, %v5805
      %v5812 = vmul.f32 %v5780, %v5806
      %v5813 = vmul.f32 %v5782, %v5807
      %v5814 = vmul.f32 %v5784, %v5808
      %5815 = vrot.lane.b32.xlu0 %v4611, 80
      %v5816 = vpop.permute.xlu0 %5815
      %5817 = vrot.lane.b32.xlu0 %v4614, 80
      %v5818 = vpop.permute.xlu0 %5817
      %5819 = vrot.lane.b32.xlu0 %v4617, 80
      %v5820 = vpop.permute.xlu0 %5819
      %5821 = vrot.lane.b32.xlu0 %v4620, 80
      %v5822 = vpop.permute.xlu0 %5821
      %5823 = vrot.lane.b32.xlu0 %v4623, 80
      %v5824 = vpop.permute.xlu0 %5823
      %5825 = vrot.lane.b32.xlu0 %v4626, 80
      %v5826 = vpop.permute.xlu0 %5825
      %v5834 = vsel %vm1629, %v5809, 0
      %v5837 = vsel %vm1629, %v5810, 0
      %v5840 = vsel %vm1629, %v5811, 0
      %v5843 = vsel %vm1629, %v5812, 0
      %v5846 = vsel %vm1629, %v5813, 0
      %v5849 = vsel %vm1629, %v5814, 0
      %5851 = vmatpush.msra.mxu0 0.0
      %5852 = vmatpush.msra.mxu0 0.0
      %5853 = vmatpush.msra.mxu0 0.0
      %5854 = vmatpush.msra.mxu0 0.0
      %5855 = vmatpush.msra.mxu0 0.0
      %5856 = vmatpush.msra.mxu0 0.0
      %5857 = vmatpush.msra.mxu0 0.0
      %5858 = vmatpush.msra.mxu0 0.0
      %5859 = vmatpush.msra.mxu0 0.0
      %5860 = vmatpush.msra.mxu0 0.0
      %5861 = vmatpush.msra.mxu0 %v5826
      %5862 = vmatpush.msra.mxu0 %v5824
      %5863 = vmatpush.msra.mxu0 %v5822
      %5864 = vmatpush.msra.mxu0 %v5820
      %5865 = vmatpush.msra.mxu0 %v5818
      %5866 = vmatpush.msra.mxu0 %v5816
      %5867 = vmatmul.f32.gmra.mxu0 %v5834
      %v5868 = vpop.f32.mrf.mxu0
      %v5869 = vadd.f32 0.0, %v5868
      %5870 = vmatmul.f32.gmra.mxu0 %v5837
      %v5871 = vpop.f32.mrf.mxu0
      %v5872 = vadd.f32 0.0, %v5871
      %5873 = vmatmul.f32.gmra.mxu0 %v5840
      %v5874 = vpop.f32.mrf.mxu0
      %v5875 = vadd.f32 0.0, %v5874
      %5876 = vmatmul.f32.gmra.mxu0 %v5843
      %v5877 = vpop.f32.mrf.mxu0
      %v5878 = vadd.f32 0.0, %v5877
      %5879 = vmatmul.f32.gmra.mxu0 %v5846
      %v5880 = vpop.f32.mrf.mxu0
      %v5881 = vadd.f32 0.0, %v5880
      %5882 = vmatmul.f32.gmra.mxu0 %v5849
      %v5883 = vpop.f32.mrf.mxu0
      %v5884 = vadd.f32 0.0, %v5883
      %5885 = vdwg.mxu0
      %v5887 = vsel %vm608, %v5869, 0
      %v5890 = vsel %vm608, %v5872, 0
      %v5893 = vsel %vm608, %v5875, 0
      %v5896 = vsel %vm608, %v5878, 0
      %v5899 = vsel %vm608, %v5881, 0
      %v5902 = vsel %vm608, %v5884, 0
      %5904 = vmatpush.msra.mxu0 0.0
      %5905 = vmatpush.msra.mxu0 0.0
      %5906 = vmatpush.msra.mxu0 0.0
      %5907 = vmatpush.msra.mxu0 0.0
      %5908 = vmatpush.msra.mxu0 0.0
      %5909 = vmatpush.msra.mxu0 0.0
      %5910 = vmatpush.msra.mxu0 0.0
      %5911 = vmatpush.msra.mxu0 0.0
      %5912 = vmatpush.msra.mxu0 0.0
      %5913 = vmatpush.msra.mxu0 0.0
      %5914 = vmatpush.msra.mxu0 0.0
      %5915 = vmatpush.msra.mxu0 0.0
      %5916 = vmatpush.msra.mxu0 0.0
      %5917 = vmatpush.msra.mxu0 0.0
      %5918 = vmatpush.msra.mxu0 0.0
      %5919 = vmatpush.msra.mxu0 %v4243
      %5920 = vmatmul.f32.gmra.mxu0 %v5887
      %v5921 = vpop.f32.mrf.mxu0
      %v5922 = vadd.f32 0.0, %v5921
      %5923 = vmatmul.f32.gmra.mxu0 %v5890
      %v5924 = vpop.f32.mrf.mxu0
      %v5925 = vadd.f32 0.0, %v5924
      %5926 = vmatmul.f32.gmra.mxu0 %v5893
      %v5927 = vpop.f32.mrf.mxu0
      %v5928 = vadd.f32 0.0, %v5927
      %5929 = vmatmul.f32.gmra.mxu0 %v5896
      %v5930 = vpop.f32.mrf.mxu0
      %v5931 = vadd.f32 0.0, %v5930
      %5932 = vmatmul.f32.gmra.mxu0 %v5899
      %v5933 = vpop.f32.mrf.mxu0
      %v5934 = vadd.f32 0.0, %v5933
      %5935 = vmatmul.f32.gmra.mxu0 %v5902
      %v5936 = vpop.f32.mrf.mxu0
      %v5937 = vadd.f32 0.0, %v5936
      %5938 = vdwg.mxu0
      %v5939 = vadd.f32 %v5654, %v5922
      %v5940 = vadd.f32 %v5655, %v5925
      %v5941 = vadd.f32 %v5656, %v5928
      %v5942 = vadd.f32 %v5657, %v5931
      %v5943 = vadd.f32 %v5658, %v5934
      %v5944 = vadd.f32 %v5659, %v5937
      %5945 = vrot.lane.b32.xlu0 %v4522, 88
      %v5946 = vpop.permute.xlu0 %5945
      %5947 = vrot.lane.b32.xlu0 %v4525, 88
      %v5948 = vpop.permute.xlu0 %5947
      %5949 = vrot.lane.b32.xlu0 %v4528, 88
      %v5950 = vpop.permute.xlu0 %5949
      %5951 = vrot.lane.b32.xlu0 %v4531, 88
      %v5952 = vpop.permute.xlu0 %5951
      %5953 = vrot.lane.b32.xlu0 %v4534, 88
      %v5954 = vpop.permute.xlu0 %5953
      %5955 = vrot.lane.b32.xlu0 %v4537, 88
      %v5956 = vpop.permute.xlu0 %5955
      %v5957 = vsel %vm608, %v5946, 0
      %v5959 = vsel %vm608, %v5948, 0
      %v5961 = vsel %vm608, %v5950, 0
      %v5963 = vsel %vm608, %v5952, 0
      %v5965 = vsel %vm608, %v5954, 0
      %v5967 = vsel %vm608, %v5956, 0
      %5969 = vmatpush.xpose.msra.mxu0 0.0
      %5970 = vmatpush.xpose.msra.mxu0 0.0
      %5971 = vmatpush.xpose.msra.mxu0 0.0
      %5972 = vmatpush.xpose.msra.mxu0 0.0
      %5973 = vmatpush.xpose.msra.mxu0 0.0
      %5974 = vmatpush.xpose.msra.mxu0 0.0
      %5975 = vmatpush.xpose.msra.mxu0 0.0
      %5976 = vmatpush.xpose.msra.mxu0 0.0
      %5977 = vmatpush.xpose.msra.mxu0 0.0
      %5978 = vmatpush.xpose.msra.mxu0 0.0
      %5979 = vmatpush.xpose.msra.mxu0 %v5706
      %5980 = vmatpush.xpose.msra.mxu0 %v5704
      %5981 = vmatpush.xpose.msra.mxu0 %v5702
      %5982 = vmatpush.xpose.msra.mxu0 %v5700
      %5983 = vmatpush.xpose.msra.mxu0 %v5698
      %5984 = vmatpush.xpose.msra.mxu0 %v5696
      %5985 = vmatmul.f32.gmra.mxu0 %v5957
      %v5986 = vpop.f32.mrf.mxu0
      %v5987 = vadd.f32 0.0, %v5986
      %5988 = vmatmul.f32.gmra.mxu0 %v5959
      %v5989 = vpop.f32.mrf.mxu0
      %v5990 = vadd.f32 0.0, %v5989
      %5991 = vmatmul.f32.gmra.mxu0 %v5961
      %v5992 = vpop.f32.mrf.mxu0
      %v5993 = vadd.f32 0.0, %v5992
      %5994 = vmatmul.f32.gmra.mxu0 %v5963
      %v5995 = vpop.f32.mrf.mxu0
      %v5996 = vadd.f32 0.0, %v5995
      %5997 = vmatmul.f32.gmra.mxu0 %v5965
      %v5998 = vpop.f32.mrf.mxu0
      %v5999 = vadd.f32 0.0, %v5998
      %6000 = vmatmul.f32.gmra.mxu0 %v5967
      %v6001 = vpop.f32.mrf.mxu0
      %v6002 = vadd.f32 0.0, %v6001
      %6003 = vdwg.mxu0
      %v6004 = vmul.f32 %v5987, 0.35355338
      %v6005 = vmul.f32 %v5990, 0.35355338
      %v6006 = vmul.f32 %v5993, 0.35355338
      %v6007 = vmul.f32 %v5996, 0.35355338
      %v6008 = vmul.f32 %v5999, 0.35355338
      %v6009 = vmul.f32 %v6002, 0.35355338
      %v6010 = vsel %vm1629, %v6004, -inf
      %6011 = vmax.xlane.f32.xlu0 %v6010
      %v6012 = vpop.xlane.xlu0 %6011
      %v6013 = vsel %vm1629, %v6005, -inf
      %6014 = vmax.xlane.f32.xlu0 %v6013
      %v6015 = vpop.xlane.xlu0 %6014
      %v6016 = vsel %vm1629, %v6006, -inf
      %6017 = vmax.xlane.f32.xlu0 %v6016
      %v6018 = vpop.xlane.xlu0 %6017
      %v6019 = vsel %vm1629, %v6007, -inf
      %6020 = vmax.xlane.f32.xlu0 %v6019
      %v6021 = vpop.xlane.xlu0 %6020
      %v6022 = vsel %vm1629, %v6008, -inf
      %6023 = vmax.xlane.f32.xlu0 %v6022
      %v6024 = vpop.xlane.xlu0 %6023
      %v6025 = vsel %vm1629, %v6009, -inf
      %6026 = vmax.xlane.f32.xlu0 %v6025
      %v6027 = vpop.xlane.xlu0 %6026
      %v6028 = vsub.f32 %v6004, %v6012
      %v6029 = vsub.f32 %v6005, %v6015
      %v6030 = vsub.f32 %v6006, %v6018
      %v6031 = vsub.f32 %v6007, %v6021
      %v6032 = vsub.f32 %v6008, %v6024
      %v6033 = vsub.f32 %v6009, %v6027
      %v6034 = vmul.f32 %v6028, 1.442695
      %v6035 = vpow.pop %v6034
      %v6036 = vmul.f32 %v6029, 1.442695
      %v6037 = vpow.pop %v6036
      %v6038 = vmul.f32 %v6030, 1.442695
      %v6039 = vpow.pop %v6038
      %v6040 = vmul.f32 %v6031, 1.442695
      %v6041 = vpow.pop %v6040
      %v6042 = vmul.f32 %v6032, 1.442695
      %v6043 = vpow.pop %v6042
      %v6044 = vmul.f32 %v6033, 1.442695
      %v6045 = vpow.pop %v6044
      %v6046 = vsel %vm1629, %v6035, 0.0
      %6047 = vadd.xlane.f32.xlu0 %v6046
      %v6048 = vpop.xlane.xlu0 %6047
      %v6049 = vsel %vm1629, %v6037, 0.0
      %6050 = vadd.xlane.f32.xlu0 %v6049
      %v6051 = vpop.xlane.xlu0 %6050
      %v6052 = vsel %vm1629, %v6039, 0.0
      %6053 = vadd.xlane.f32.xlu0 %v6052
      %v6054 = vpop.xlane.xlu0 %6053
      %v6055 = vsel %vm1629, %v6041, 0.0
      %6056 = vadd.xlane.f32.xlu0 %v6055
      %v6057 = vpop.xlane.xlu0 %6056
      %v6058 = vsel %vm1629, %v6043, 0.0
      %6059 = vadd.xlane.f32.xlu0 %v6058
      %v6060 = vpop.xlane.xlu0 %6059
      %v6061 = vsel %vm1629, %v6045, 0.0
      %6062 = vadd.xlane.f32.xlu0 %v6061
      %v6063 = vpop.xlane.xlu0 %6062
      %v6064 = vrcp.pop %v6048
      %v6065 = vrcp.pop %v6051
      %v6066 = vrcp.pop %v6054
      %v6067 = vrcp.pop %v6057
      %v6068 = vrcp.pop %v6060
      %v6069 = vrcp.pop %v6063
      %v6070 = vmul.f32 %v6035, %v6064
      %v6071 = vmul.f32 %v6037, %v6065
      %v6072 = vmul.f32 %v6039, %v6066
      %v6073 = vmul.f32 %v6041, %v6067
      %v6074 = vmul.f32 %v6043, %v6068
      %v6075 = vmul.f32 %v6045, %v6069
      %v6077 = vsel %vm1629, %v6070, 0
      %v6080 = vsel %vm1629, %v6071, 0
      %v6083 = vsel %vm1629, %v6072, 0
      %v6086 = vsel %vm1629, %v6073, 0
      %v6089 = vsel %vm1629, %v6074, 0
      %v6092 = vsel %vm1629, %v6075, 0
      %6094 = vmatpush.msra.mxu0 0.0
      %6095 = vmatpush.msra.mxu0 0.0
      %6096 = vmatpush.msra.mxu0 0.0
      %6097 = vmatpush.msra.mxu0 0.0
      %6098 = vmatpush.msra.mxu0 0.0
      %6099 = vmatpush.msra.mxu0 0.0
      %6100 = vmatpush.msra.mxu0 0.0
      %6101 = vmatpush.msra.mxu0 0.0
      %6102 = vmatpush.msra.mxu0 0.0
      %6103 = vmatpush.msra.mxu0 0.0
      %6104 = vmatpush.msra.mxu0 %v5826
      %6105 = vmatpush.msra.mxu0 %v5824
      %6106 = vmatpush.msra.mxu0 %v5822
      %6107 = vmatpush.msra.mxu0 %v5820
      %6108 = vmatpush.msra.mxu0 %v5818
      %6109 = vmatpush.msra.mxu0 %v5816
      %6110 = vmatmul.f32.gmra.mxu0 %v6077
      %v6111 = vpop.f32.mrf.mxu0
      %v6112 = vadd.f32 0.0, %v6111
      %6113 = vmatmul.f32.gmra.mxu0 %v6080
      %v6114 = vpop.f32.mrf.mxu0
      %v6115 = vadd.f32 0.0, %v6114
      %6116 = vmatmul.f32.gmra.mxu0 %v6083
      %v6117 = vpop.f32.mrf.mxu0
      %v6118 = vadd.f32 0.0, %v6117
      %6119 = vmatmul.f32.gmra.mxu0 %v6086
      %v6120 = vpop.f32.mrf.mxu0
      %v6121 = vadd.f32 0.0, %v6120
      %6122 = vmatmul.f32.gmra.mxu0 %v6089
      %v6123 = vpop.f32.mrf.mxu0
      %v6124 = vadd.f32 0.0, %v6123
      %6125 = vmatmul.f32.gmra.mxu0 %v6092
      %v6126 = vpop.f32.mrf.mxu0
      %v6127 = vadd.f32 0.0, %v6126
      %6128 = vdwg.mxu0
      %v6130 = vsel %vm608, %v6112, 0
      %v6133 = vsel %vm608, %v6115, 0
      %v6136 = vsel %vm608, %v6118, 0
      %v6139 = vsel %vm608, %v6121, 0
      %v6142 = vsel %vm608, %v6124, 0
      %v6145 = vsel %vm608, %v6127, 0
      %6147 = vmatpush.msra.mxu0 0.0
      %6148 = vmatpush.msra.mxu0 0.0
      %6149 = vmatpush.msra.mxu0 0.0
      %6150 = vmatpush.msra.mxu0 0.0
      %6151 = vmatpush.msra.mxu0 0.0
      %6152 = vmatpush.msra.mxu0 0.0
      %6153 = vmatpush.msra.mxu0 0.0
      %6154 = vmatpush.msra.mxu0 0.0
      %6155 = vmatpush.msra.mxu0 0.0
      %6156 = vmatpush.msra.mxu0 0.0
      %6157 = vmatpush.msra.mxu0 0.0
      %6158 = vmatpush.msra.mxu0 0.0
      %6159 = vmatpush.msra.mxu0 0.0
      %6160 = vmatpush.msra.mxu0 0.0
      %6161 = vmatpush.msra.mxu0 0.0
      %6162 = vmatpush.msra.mxu0 %v4244
      %6163 = vmatmul.f32.gmra.mxu0 %v6130
      %v6164 = vpop.f32.mrf.mxu0
      %v6165 = vadd.f32 0.0, %v6164
      %6166 = vmatmul.f32.gmra.mxu0 %v6133
      %v6167 = vpop.f32.mrf.mxu0
      %v6168 = vadd.f32 0.0, %v6167
      %6169 = vmatmul.f32.gmra.mxu0 %v6136
      %v6170 = vpop.f32.mrf.mxu0
      %v6171 = vadd.f32 0.0, %v6170
      %6172 = vmatmul.f32.gmra.mxu0 %v6139
      %v6173 = vpop.f32.mrf.mxu0
      %v6174 = vadd.f32 0.0, %v6173
      %6175 = vmatmul.f32.gmra.mxu0 %v6142
      %v6176 = vpop.f32.mrf.mxu0
      %v6177 = vadd.f32 0.0, %v6176
      %6178 = vmatmul.f32.gmra.mxu0 %v6145
      %v6179 = vpop.f32.mrf.mxu0
      %v6180 = vadd.f32 0.0, %v6179
      %6181 = vdwg.mxu0
      %v6182 = vadd.f32 %v5939, %v6165
      %v6183 = vadd.f32 %v5940, %v6168
      %v6184 = vadd.f32 %v5941, %v6171
      %v6185 = vadd.f32 %v5942, %v6174
      %v6186 = vadd.f32 %v5943, %v6177
      %v6187 = vadd.f32 %v5944, %v6180
      %6188 = vrot.lane.b32.xlu0 %v4522, 80
      %v6189 = vpop.permute.xlu0 %6188
      %6190 = vrot.lane.b32.xlu0 %v4525, 80
      %v6191 = vpop.permute.xlu0 %6190
      %6192 = vrot.lane.b32.xlu0 %v4528, 80
      %v6193 = vpop.permute.xlu0 %6192
      %6194 = vrot.lane.b32.xlu0 %v4531, 80
      %v6195 = vpop.permute.xlu0 %6194
      %6196 = vrot.lane.b32.xlu0 %v4534, 80
      %v6197 = vpop.permute.xlu0 %6196
      %6198 = vrot.lane.b32.xlu0 %v4537, 80
      %v6199 = vpop.permute.xlu0 %6198
      %6200 = vrot.lane.b32.xlu0 %v4611, 104
      %v6201 = vpop.permute.xlu0 %6200
      %6202 = vrot.lane.b32.xlu0 %v4614, 104
      %v6203 = vpop.permute.xlu0 %6202
      %6204 = vrot.lane.b32.xlu0 %v4617, 104
      %v6205 = vpop.permute.xlu0 %6204
      %6206 = vrot.lane.b32.xlu0 %v4620, 104
      %v6207 = vpop.permute.xlu0 %6206
      %6208 = vrot.lane.b32.xlu0 %v4623, 104
      %v6209 = vpop.permute.xlu0 %6208
      %6210 = vrot.lane.b32.xlu0 %v4626, 104
      %v6211 = vpop.permute.xlu0 %6210
      %v6212 = vsel %vm608, %v6189, 0
      %v6214 = vsel %vm608, %v6191, 0
      %v6216 = vsel %vm608, %v6193, 0
      %v6218 = vsel %vm608, %v6195, 0
      %v6220 = vsel %vm608, %v6197, 0
      %v6222 = vsel %vm608, %v6199, 0
      %v6224 = vsel %vm608, %v6201, 0
      %v6226 = vsel %vm608, %v6203, 0
      %v6228 = vsel %vm608, %v6205, 0
      %v6230 = vsel %vm608, %v6207, 0
      %v6232 = vsel %vm608, %v6209, 0
      %v6234 = vsel %vm608, %v6211, 0
      %6236 = vmatpush.xpose.msra.mxu0 0.0
      %6237 = vmatpush.xpose.msra.mxu0 0.0
      %6238 = vmatpush.xpose.msra.mxu0 0.0
      %6239 = vmatpush.xpose.msra.mxu0 0.0
      %6240 = vmatpush.xpose.msra.mxu0 0.0
      %6241 = vmatpush.xpose.msra.mxu0 0.0
      %6242 = vmatpush.xpose.msra.mxu0 0.0
      %6243 = vmatpush.xpose.msra.mxu0 0.0
      %6244 = vmatpush.xpose.msra.mxu0 0.0
      %6245 = vmatpush.xpose.msra.mxu0 0.0
      %6246 = vmatpush.xpose.msra.mxu0 %v6234
      %6247 = vmatpush.xpose.msra.mxu0 %v6232
      %6248 = vmatpush.xpose.msra.mxu0 %v6230
      %6249 = vmatpush.xpose.msra.mxu0 %v6228
      %6250 = vmatpush.xpose.msra.mxu0 %v6226
      %6251 = vmatpush.xpose.msra.mxu0 %v6224
      %6252 = vmatmul.f32.gmra.mxu0 %v6212
      %v6253 = vpop.f32.mrf.mxu0
      %v6254 = vadd.f32 0.0, %v6253
      %6255 = vmatmul.f32.gmra.mxu0 %v6214
      %v6256 = vpop.f32.mrf.mxu0
      %v6257 = vadd.f32 0.0, %v6256
      %6258 = vmatmul.f32.gmra.mxu0 %v6216
      %v6259 = vpop.f32.mrf.mxu0
      %v6260 = vadd.f32 0.0, %v6259
      %6261 = vmatmul.f32.gmra.mxu0 %v6218
      %v6262 = vpop.f32.mrf.mxu0
      %v6263 = vadd.f32 0.0, %v6262
      %6264 = vmatmul.f32.gmra.mxu0 %v6220
      %v6265 = vpop.f32.mrf.mxu0
      %v6266 = vadd.f32 0.0, %v6265
      %6267 = vmatmul.f32.gmra.mxu0 %v6222
      %v6268 = vpop.f32.mrf.mxu0
      %v6269 = vadd.f32 0.0, %v6268
      %6270 = vdwg.mxu0
      %v6271 = vmul.f32 %v6254, 0.35355338
      %v6272 = vmul.f32 %v6257, 0.35355338
      %v6273 = vmul.f32 %v6260, 0.35355338
      %v6274 = vmul.f32 %v6263, 0.35355338
      %v6275 = vmul.f32 %v6266, 0.35355338
      %v6276 = vmul.f32 %v6269, 0.35355338
      %v6277 = vsel %vm1629, %v6271, -inf
      %6278 = vmax.xlane.f32.xlu0 %v6277
      %v6279 = vpop.xlane.xlu0 %6278
      %v6280 = vsel %vm1629, %v6272, -inf
      %6281 = vmax.xlane.f32.xlu0 %v6280
      %v6282 = vpop.xlane.xlu0 %6281
      %v6283 = vsel %vm1629, %v6273, -inf
      %6284 = vmax.xlane.f32.xlu0 %v6283
      %v6285 = vpop.xlane.xlu0 %6284
      %v6286 = vsel %vm1629, %v6274, -inf
      %6287 = vmax.xlane.f32.xlu0 %v6286
      %v6288 = vpop.xlane.xlu0 %6287
      %v6289 = vsel %vm1629, %v6275, -inf
      %6290 = vmax.xlane.f32.xlu0 %v6289
      %v6291 = vpop.xlane.xlu0 %6290
      %v6292 = vsel %vm1629, %v6276, -inf
      %6293 = vmax.xlane.f32.xlu0 %v6292
      %v6294 = vpop.xlane.xlu0 %6293
      %v6295 = vsub.f32 %v6271, %v6279
      %v6296 = vsub.f32 %v6272, %v6282
      %v6297 = vsub.f32 %v6273, %v6285
      %v6298 = vsub.f32 %v6274, %v6288
      %v6299 = vsub.f32 %v6275, %v6291
      %v6300 = vsub.f32 %v6276, %v6294
      %v6301 = vmul.f32 %v6295, 1.442695
      %v6302 = vpow.pop %v6301
      %v6303 = vmul.f32 %v6296, 1.442695
      %v6304 = vpow.pop %v6303
      %v6305 = vmul.f32 %v6297, 1.442695
      %v6306 = vpow.pop %v6305
      %v6307 = vmul.f32 %v6298, 1.442695
      %v6308 = vpow.pop %v6307
      %v6309 = vmul.f32 %v6299, 1.442695
      %v6310 = vpow.pop %v6309
      %v6311 = vmul.f32 %v6300, 1.442695
      %v6312 = vpow.pop %v6311
      %v6313 = vsel %vm1629, %v6302, 0.0
      %6314 = vadd.xlane.f32.xlu0 %v6313
      %v6315 = vpop.xlane.xlu0 %6314
      %v6316 = vsel %vm1629, %v6304, 0.0
      %6317 = vadd.xlane.f32.xlu0 %v6316
      %v6318 = vpop.xlane.xlu0 %6317
      %v6319 = vsel %vm1629, %v6306, 0.0
      %6320 = vadd.xlane.f32.xlu0 %v6319
      %v6321 = vpop.xlane.xlu0 %6320
      %v6322 = vsel %vm1629, %v6308, 0.0
      %6323 = vadd.xlane.f32.xlu0 %v6322
      %v6324 = vpop.xlane.xlu0 %6323
      %v6325 = vsel %vm1629, %v6310, 0.0
      %6326 = vadd.xlane.f32.xlu0 %v6325
      %v6327 = vpop.xlane.xlu0 %6326
      %v6328 = vsel %vm1629, %v6312, 0.0
      %6329 = vadd.xlane.f32.xlu0 %v6328
      %v6330 = vpop.xlane.xlu0 %6329
      %v6331 = vrcp.pop %v6315
      %v6332 = vrcp.pop %v6318
      %v6333 = vrcp.pop %v6321
      %v6334 = vrcp.pop %v6324
      %v6335 = vrcp.pop %v6327
      %v6336 = vrcp.pop %v6330
      %v6337 = vmul.f32 %v6302, %v6331
      %v6338 = vmul.f32 %v6304, %v6332
      %v6339 = vmul.f32 %v6306, %v6333
      %v6340 = vmul.f32 %v6308, %v6334
      %v6341 = vmul.f32 %v6310, %v6335
      %v6342 = vmul.f32 %v6312, %v6336
      %6343 = vrot.lane.b32.xlu0 %v4611, 72
      %v6344 = vpop.permute.xlu0 %6343
      %6345 = vrot.lane.b32.xlu0 %v4614, 72
      %v6346 = vpop.permute.xlu0 %6345
      %6347 = vrot.lane.b32.xlu0 %v4617, 72
      %v6348 = vpop.permute.xlu0 %6347
      %6349 = vrot.lane.b32.xlu0 %v4620, 72
      %v6350 = vpop.permute.xlu0 %6349
      %6351 = vrot.lane.b32.xlu0 %v4623, 72
      %v6352 = vpop.permute.xlu0 %6351
      %6353 = vrot.lane.b32.xlu0 %v4626, 72
      %v6354 = vpop.permute.xlu0 %6353
      %v6362 = vsel %vm1629, %v6337, 0
      %v6365 = vsel %vm1629, %v6338, 0
      %v6368 = vsel %vm1629, %v6339, 0
      %v6371 = vsel %vm1629, %v6340, 0
      %v6374 = vsel %vm1629, %v6341, 0
      %v6377 = vsel %vm1629, %v6342, 0
      %6379 = vmatpush.msra.mxu0 0.0
      %6380 = vmatpush.msra.mxu0 0.0
      %6381 = vmatpush.msra.mxu0 0.0
      %6382 = vmatpush.msra.mxu0 0.0
      %6383 = vmatpush.msra.mxu0 0.0
      %6384 = vmatpush.msra.mxu0 0.0
      %6385 = vmatpush.msra.mxu0 0.0
      %6386 = vmatpush.msra.mxu0 0.0
      %6387 = vmatpush.msra.mxu0 0.0
      %6388 = vmatpush.msra.mxu0 0.0
      %6389 = vmatpush.msra.mxu0 %v6354
      %6390 = vmatpush.msra.mxu0 %v6352
      %6391 = vmatpush.msra.mxu0 %v6350
      %6392 = vmatpush.msra.mxu0 %v6348
      %6393 = vmatpush.msra.mxu0 %v6346
      %6394 = vmatpush.msra.mxu0 %v6344
      %6395 = vmatmul.f32.gmra.mxu0 %v6362
      %v6396 = vpop.f32.mrf.mxu0
      %v6397 = vadd.f32 0.0, %v6396
      %6398 = vmatmul.f32.gmra.mxu0 %v6365
      %v6399 = vpop.f32.mrf.mxu0
      %v6400 = vadd.f32 0.0, %v6399
      %6401 = vmatmul.f32.gmra.mxu0 %v6368
      %v6402 = vpop.f32.mrf.mxu0
      %v6403 = vadd.f32 0.0, %v6402
      %6404 = vmatmul.f32.gmra.mxu0 %v6371
      %v6405 = vpop.f32.mrf.mxu0
      %v6406 = vadd.f32 0.0, %v6405
      %6407 = vmatmul.f32.gmra.mxu0 %v6374
      %v6408 = vpop.f32.mrf.mxu0
      %v6409 = vadd.f32 0.0, %v6408
      %6410 = vmatmul.f32.gmra.mxu0 %v6377
      %v6411 = vpop.f32.mrf.mxu0
      %v6412 = vadd.f32 0.0, %v6411
      %6413 = vdwg.mxu0
      %v6415 = vsel %vm608, %v6397, 0
      %v6418 = vsel %vm608, %v6400, 0
      %v6421 = vsel %vm608, %v6403, 0
      %v6424 = vsel %vm608, %v6406, 0
      %v6427 = vsel %vm608, %v6409, 0
      %v6430 = vsel %vm608, %v6412, 0
      %6432 = vmatpush.msra.mxu0 0.0
      %6433 = vmatpush.msra.mxu0 0.0
      %6434 = vmatpush.msra.mxu0 0.0
      %6435 = vmatpush.msra.mxu0 0.0
      %6436 = vmatpush.msra.mxu0 0.0
      %6437 = vmatpush.msra.mxu0 0.0
      %6438 = vmatpush.msra.mxu0 0.0
      %6439 = vmatpush.msra.mxu0 0.0
      %6440 = vmatpush.msra.mxu0 0.0
      %6441 = vmatpush.msra.mxu0 0.0
      %6442 = vmatpush.msra.mxu0 0.0
      %6443 = vmatpush.msra.mxu0 0.0
      %6444 = vmatpush.msra.mxu0 0.0
      %6445 = vmatpush.msra.mxu0 0.0
      %6446 = vmatpush.msra.mxu0 0.0
      %6447 = vmatpush.msra.mxu0 %v4245
      %6448 = vmatmul.f32.gmra.mxu0 %v6415
      %v6449 = vpop.f32.mrf.mxu0
      %v6450 = vadd.f32 0.0, %v6449
      %6451 = vmatmul.f32.gmra.mxu0 %v6418
      %v6452 = vpop.f32.mrf.mxu0
      %v6453 = vadd.f32 0.0, %v6452
      %6454 = vmatmul.f32.gmra.mxu0 %v6421
      %v6455 = vpop.f32.mrf.mxu0
      %v6456 = vadd.f32 0.0, %v6455
      %6457 = vmatmul.f32.gmra.mxu0 %v6424
      %v6458 = vpop.f32.mrf.mxu0
      %v6459 = vadd.f32 0.0, %v6458
      %6460 = vmatmul.f32.gmra.mxu0 %v6427
      %v6461 = vpop.f32.mrf.mxu0
      %v6462 = vadd.f32 0.0, %v6461
      %6463 = vmatmul.f32.gmra.mxu0 %v6430
      %v6464 = vpop.f32.mrf.mxu0
      %v6465 = vadd.f32 0.0, %v6464
      %6466 = vdwg.mxu0
      %v6467 = vadd.f32 %v6182, %v6450
      %v6468 = vadd.f32 %v6183, %v6453
      %v6469 = vadd.f32 %v6184, %v6456
      %v6470 = vadd.f32 %v6185, %v6459
      %v6471 = vadd.f32 %v6186, %v6462
      %v6472 = vadd.f32 %v6187, %v6465
      %6473 = vrot.lane.b32.xlu0 %v4522, 72
      %v6474 = vpop.permute.xlu0 %6473
      %6475 = vrot.lane.b32.xlu0 %v4525, 72
      %v6476 = vpop.permute.xlu0 %6475
      %6477 = vrot.lane.b32.xlu0 %v4528, 72
      %v6478 = vpop.permute.xlu0 %6477
      %6479 = vrot.lane.b32.xlu0 %v4531, 72
      %v6480 = vpop.permute.xlu0 %6479
      %6481 = vrot.lane.b32.xlu0 %v4534, 72
      %v6482 = vpop.permute.xlu0 %6481
      %6483 = vrot.lane.b32.xlu0 %v4537, 72
      %v6484 = vpop.permute.xlu0 %6483
      %v6485 = vsel %vm608, %v6474, 0
      %v6487 = vsel %vm608, %v6476, 0
      %v6489 = vsel %vm608, %v6478, 0
      %v6491 = vsel %vm608, %v6480, 0
      %v6493 = vsel %vm608, %v6482, 0
      %v6495 = vsel %vm608, %v6484, 0
      %6497 = vmatpush.xpose.msra.mxu0 0.0
      %6498 = vmatpush.xpose.msra.mxu0 0.0
      %6499 = vmatpush.xpose.msra.mxu0 0.0
      %6500 = vmatpush.xpose.msra.mxu0 0.0
      %6501 = vmatpush.xpose.msra.mxu0 0.0
      %6502 = vmatpush.xpose.msra.mxu0 0.0
      %6503 = vmatpush.xpose.msra.mxu0 0.0
      %6504 = vmatpush.xpose.msra.mxu0 0.0
      %6505 = vmatpush.xpose.msra.mxu0 0.0
      %6506 = vmatpush.xpose.msra.mxu0 0.0
      %6507 = vmatpush.xpose.msra.mxu0 %v6234
      %6508 = vmatpush.xpose.msra.mxu0 %v6232
      %6509 = vmatpush.xpose.msra.mxu0 %v6230
      %6510 = vmatpush.xpose.msra.mxu0 %v6228
      %6511 = vmatpush.xpose.msra.mxu0 %v6226
      %6512 = vmatpush.xpose.msra.mxu0 %v6224
      %6513 = vmatmul.f32.gmra.mxu0 %v6485
      %v6514 = vpop.f32.mrf.mxu0
      %v6515 = vadd.f32 0.0, %v6514
      %6516 = vmatmul.f32.gmra.mxu0 %v6487
      %v6517 = vpop.f32.mrf.mxu0
      %v6518 = vadd.f32 0.0, %v6517
      %6519 = vmatmul.f32.gmra.mxu0 %v6489
      %v6520 = vpop.f32.mrf.mxu0
      %v6521 = vadd.f32 0.0, %v6520
      %6522 = vmatmul.f32.gmra.mxu0 %v6491
      %v6523 = vpop.f32.mrf.mxu0
      %v6524 = vadd.f32 0.0, %v6523
      %6525 = vmatmul.f32.gmra.mxu0 %v6493
      %v6526 = vpop.f32.mrf.mxu0
      %v6527 = vadd.f32 0.0, %v6526
      %6528 = vmatmul.f32.gmra.mxu0 %v6495
      %v6529 = vpop.f32.mrf.mxu0
      %v6530 = vadd.f32 0.0, %v6529
      %6531 = vdwg.mxu0
      %v6532 = vmul.f32 %v6515, 0.35355338
      %v6533 = vmul.f32 %v6518, 0.35355338
      %v6534 = vmul.f32 %v6521, 0.35355338
      %v6535 = vmul.f32 %v6524, 0.35355338
      %v6536 = vmul.f32 %v6527, 0.35355338
      %v6537 = vmul.f32 %v6530, 0.35355338
      %v6538 = vsel %vm1629, %v6532, -inf
      %6539 = vmax.xlane.f32.xlu0 %v6538
      %v6540 = vpop.xlane.xlu0 %6539
      %v6541 = vsel %vm1629, %v6533, -inf
      %6542 = vmax.xlane.f32.xlu0 %v6541
      %v6543 = vpop.xlane.xlu0 %6542
      %v6544 = vsel %vm1629, %v6534, -inf
      %6545 = vmax.xlane.f32.xlu0 %v6544
      %v6546 = vpop.xlane.xlu0 %6545
      %v6547 = vsel %vm1629, %v6535, -inf
      %6548 = vmax.xlane.f32.xlu0 %v6547
      %v6549 = vpop.xlane.xlu0 %6548
      %v6550 = vsel %vm1629, %v6536, -inf
      %6551 = vmax.xlane.f32.xlu0 %v6550
      %v6552 = vpop.xlane.xlu0 %6551
      %v6553 = vsel %vm1629, %v6537, -inf
      %6554 = vmax.xlane.f32.xlu0 %v6553
      %v6555 = vpop.xlane.xlu0 %6554
      %v6556 = vsub.f32 %v6532, %v6540
      %v6557 = vsub.f32 %v6533, %v6543
      %v6558 = vsub.f32 %v6534, %v6546
      %v6559 = vsub.f32 %v6535, %v6549
      %v6560 = vsub.f32 %v6536, %v6552
      %v6561 = vsub.f32 %v6537, %v6555
      %v6562 = vmul.f32 %v6556, 1.442695
      %v6563 = vpow.pop %v6562
      %v6564 = vmul.f32 %v6557, 1.442695
      %v6565 = vpow.pop %v6564
      %v6566 = vmul.f32 %v6558, 1.442695
      %v6567 = vpow.pop %v6566
      %v6568 = vmul.f32 %v6559, 1.442695
      %v6569 = vpow.pop %v6568
      %v6570 = vmul.f32 %v6560, 1.442695
      %v6571 = vpow.pop %v6570
      %v6572 = vmul.f32 %v6561, 1.442695
      %v6573 = vpow.pop %v6572
      %v6574 = vsel %vm1629, %v6563, 0.0
      %6575 = vadd.xlane.f32.xlu0 %v6574
      %v6576 = vpop.xlane.xlu0 %6575
      %v6577 = vsel %vm1629, %v6565, 0.0
      %6578 = vadd.xlane.f32.xlu0 %v6577
      %v6579 = vpop.xlane.xlu0 %6578
      %v6580 = vsel %vm1629, %v6567, 0.0
      %6581 = vadd.xlane.f32.xlu0 %v6580
      %v6582 = vpop.xlane.xlu0 %6581
      %v6583 = vsel %vm1629, %v6569, 0.0
      %6584 = vadd.xlane.f32.xlu0 %v6583
      %v6585 = vpop.xlane.xlu0 %6584
      %v6586 = vsel %vm1629, %v6571, 0.0
      %6587 = vadd.xlane.f32.xlu0 %v6586
      %v6588 = vpop.xlane.xlu0 %6587
      %v6589 = vsel %vm1629, %v6573, 0.0
      %6590 = vadd.xlane.f32.xlu0 %v6589
      %v6591 = vpop.xlane.xlu0 %6590
      %v6592 = vrcp.pop %v6576
      %v6593 = vrcp.pop %v6579
      %v6594 = vrcp.pop %v6582
      %v6595 = vrcp.pop %v6585
      %v6596 = vrcp.pop %v6588
      %v6597 = vrcp.pop %v6591
      %v6598 = vmul.f32 %v6563, %v6592
      %v6599 = vmul.f32 %v6565, %v6593
      %v6600 = vmul.f32 %v6567, %v6594
      %v6601 = vmul.f32 %v6569, %v6595
      %v6602 = vmul.f32 %v6571, %v6596
      %v6603 = vmul.f32 %v6573, %v6597
      %v6605 = vsel %vm1629, %v6598, 0
      %v6608 = vsel %vm1629, %v6599, 0
      %v6611 = vsel %vm1629, %v6600, 0
      %v6614 = vsel %vm1629, %v6601, 0
      %v6617 = vsel %vm1629, %v6602, 0
      %v6620 = vsel %vm1629, %v6603, 0
      %6622 = vmatpush.msra.mxu0 0.0
      %6623 = vmatpush.msra.mxu0 0.0
      %6624 = vmatpush.msra.mxu0 0.0
      %6625 = vmatpush.msra.mxu0 0.0
      %6626 = vmatpush.msra.mxu0 0.0
      %6627 = vmatpush.msra.mxu0 0.0
      %6628 = vmatpush.msra.mxu0 0.0
      %6629 = vmatpush.msra.mxu0 0.0
      %6630 = vmatpush.msra.mxu0 0.0
      %6631 = vmatpush.msra.mxu0 0.0
      %6632 = vmatpush.msra.mxu0 %v6354
      %6633 = vmatpush.msra.mxu0 %v6352
      %6634 = vmatpush.msra.mxu0 %v6350
      %6635 = vmatpush.msra.mxu0 %v6348
      %6636 = vmatpush.msra.mxu0 %v6346
      %6637 = vmatpush.msra.mxu0 %v6344
      %6638 = vmatmul.f32.gmra.mxu0 %v6605
      %v6639 = vpop.f32.mrf.mxu0
      %v6640 = vadd.f32 0.0, %v6639
      %6641 = vmatmul.f32.gmra.mxu0 %v6608
      %v6642 = vpop.f32.mrf.mxu0
      %v6643 = vadd.f32 0.0, %v6642
      %6644 = vmatmul.f32.gmra.mxu0 %v6611
      %v6645 = vpop.f32.mrf.mxu0
      %v6646 = vadd.f32 0.0, %v6645
      %6647 = vmatmul.f32.gmra.mxu0 %v6614
      %v6648 = vpop.f32.mrf.mxu0
      %v6649 = vadd.f32 0.0, %v6648
      %6650 = vmatmul.f32.gmra.mxu0 %v6617
      %v6651 = vpop.f32.mrf.mxu0
      %v6652 = vadd.f32 0.0, %v6651
      %6653 = vmatmul.f32.gmra.mxu0 %v6620
      %v6654 = vpop.f32.mrf.mxu0
      %v6655 = vadd.f32 0.0, %v6654
      %6656 = vdwg.mxu0
      %v6658 = vsel %vm608, %v6640, 0
      %v6661 = vsel %vm608, %v6643, 0
      %v6664 = vsel %vm608, %v6646, 0
      %v6667 = vsel %vm608, %v6649, 0
      %v6670 = vsel %vm608, %v6652, 0
      %v6673 = vsel %vm608, %v6655, 0
      %6675 = vmatpush.msra.mxu0 0.0
      %6676 = vmatpush.msra.mxu0 0.0
      %6677 = vmatpush.msra.mxu0 0.0
      %6678 = vmatpush.msra.mxu0 0.0
      %6679 = vmatpush.msra.mxu0 0.0
      %6680 = vmatpush.msra.mxu0 0.0
      %6681 = vmatpush.msra.mxu0 0.0
      %6682 = vmatpush.msra.mxu0 0.0
      %6683 = vmatpush.msra.mxu0 0.0
      %6684 = vmatpush.msra.mxu0 0.0
      %6685 = vmatpush.msra.mxu0 0.0
      %6686 = vmatpush.msra.mxu0 0.0
      %6687 = vmatpush.msra.mxu0 0.0
      %6688 = vmatpush.msra.mxu0 0.0
      %6689 = vmatpush.msra.mxu0 0.0
      %6690 = vmatpush.msra.mxu0 %v4246
      %6691 = vmatmul.f32.gmra.mxu0 %v6658
      %v6692 = vpop.f32.mrf.mxu0
      %v6693 = vadd.f32 0.0, %v6692
      %6694 = vmatmul.f32.gmra.mxu0 %v6661
      %v6695 = vpop.f32.mrf.mxu0
      %v6696 = vadd.f32 0.0, %v6695
      %6697 = vmatmul.f32.gmra.mxu0 %v6664
      %v6698 = vpop.f32.mrf.mxu0
      %v6699 = vadd.f32 0.0, %v6698
      %6700 = vmatmul.f32.gmra.mxu0 %v6667
      %v6701 = vpop.f32.mrf.mxu0
      %v6702 = vadd.f32 0.0, %v6701
      %6703 = vmatmul.f32.gmra.mxu0 %v6670
      %v6704 = vpop.f32.mrf.mxu0
      %v6705 = vadd.f32 0.0, %v6704
      %6706 = vmatmul.f32.gmra.mxu0 %v6673
      %v6707 = vpop.f32.mrf.mxu0
      %v6708 = vadd.f32 0.0, %v6707
      %6709 = vdwg.mxu0
      %v6710 = vadd.f32 %v6467, %v6693
      %v6711 = vadd.f32 %v6468, %v6696
      %v6712 = vadd.f32 %v6469, %v6699
      %v6713 = vadd.f32 %v6470, %v6702
      %v6714 = vadd.f32 %v6471, %v6705
      %v6715 = vadd.f32 %v6472, %v6708
      %v6716 = vperm.slane %v4226, 0
      %v6717 = vadd.f32 %v6710, %v6716
      %v6718 = vadd.f32 %v6711, %v6716
      %v6719 = vadd.f32 %v6712, %v6716
      %v6720 = vadd.f32 %v6713, %v6716
      %v6721 = vadd.f32 %v6714, %v6716
      %v6722 = vadd.f32 %v6715, %v6716
      %v6723 = vmul.f32 %v6717, 1.0481471
      %v6724 = vmul.f32 %v6718, 1.0481471
      %v6725 = vmul.f32 %v6719, 1.0481471
      %v6726 = vmul.f32 %v6720, 1.0481471
      %v6727 = vmul.f32 %v6721, 1.0481471
      %v6728 = vmul.f32 %v6722, 1.0481471
      %v6735 = vrot.slane %v6723, 4
      %v6736 = vrot.slane %v6724, 4
      %v6737 = vsel %vm1065, %v6735, %v6736
      %v6738 = vrot.slane %v6725, 4
      %v6739 = vsel %vm1065, %v6736, %v6738
      %v6740 = vrot.slane %v6726, 4
      %v6741 = vsel %vm1065, %v6738, %v6740
      %v6742 = vrot.slane %v6727, 4
      %v6743 = vsel %vm1065, %v6740, %v6742
      %v6744 = vrot.slane %v6728, 4
      %v6745 = vsel %vm1065, %v6742, %v6744
      %v6753 = vadd.f32 %v1084, %v6735
      %v6754 = vadd.f32 %v1085, %v6737
      %v6755 = vadd.f32 %v1086, %v6739
      %v6756 = vadd.f32 %v1087, %v6741
      %v6757 = vadd.f32 %v1088, %v6743
      %v6758 = vadd.f32 %v1089, %v6745
      %v6759 = vadd.f32 %v1090, %v6744
      %v6760 = vsel %vm4299, %v6753, 0.0
      %6761 = vadd.xlane.f32.xlu0 %v6760
      %v6762 = vpop.xlane.xlu0 %6761
      %v6763 = vsel %vm1338, %v6754, 0.0
      %6764 = vadd.xlane.f32.xlu0 %v6763
      %v6765 = vpop.xlane.xlu0 %6764
      %v6766 = vsel %vm1338, %v6755, 0.0
      %6767 = vadd.xlane.f32.xlu0 %v6766
      %v6768 = vpop.xlane.xlu0 %6767
      %v6769 = vsel %vm1338, %v6756, 0.0
      %6770 = vadd.xlane.f32.xlu0 %v6769
      %v6771 = vpop.xlane.xlu0 %6770
      %v6772 = vsel %vm1338, %v6757, 0.0
      %6773 = vadd.xlane.f32.xlu0 %v6772
      %v6774 = vpop.xlane.xlu0 %6773
      %v6775 = vsel %vm1338, %v6758, 0.0
      %6776 = vadd.xlane.f32.xlu0 %v6775
      %v6777 = vpop.xlane.xlu0 %6776
      %v6778 = vsel %vm4318, %v6759, 0.0
      %6779 = vadd.xlane.f32.xlu0 %v6778
      %v6780 = vpop.xlane.xlu0 %6779
      %v6781 = vmul.f32 %v6762, %v1363
      %v6782 = vmul.f32 %v6765, %v1363
      %v6783 = vmul.f32 %v6768, %v1363
      %v6784 = vmul.f32 %v6771, %v1363
      %v6785 = vmul.f32 %v6774, %v1363
      %v6786 = vmul.f32 %v6777, %v1363
      %v6787 = vmul.f32 %v6780, %v1363
      %v6788 = vsub.f32 %v6753, %v6781
      %v6789 = vsub.f32 %v6754, %v6782
      %v6790 = vsub.f32 %v6755, %v6783
      %v6791 = vsub.f32 %v6756, %v6784
      %v6792 = vsub.f32 %v6757, %v6785
      %v6793 = vsub.f32 %v6758, %v6786
      %v6794 = vsub.f32 %v6759, %v6787
      %v6795 = vmul.f32 %v6788, %v6788
      %v6796 = vmul.f32 %v6789, %v6789
      %v6797 = vmul.f32 %v6790, %v6790
      %v6798 = vmul.f32 %v6791, %v6791
      %v6799 = vmul.f32 %v6792, %v6792
      %v6800 = vmul.f32 %v6793, %v6793
      %v6801 = vmul.f32 %v6794, %v6794
      %v6802 = vsel %vm4299, %v6795, 0.0
      %6803 = vadd.xlane.f32.xlu0 %v6802
      %v6804 = vpop.xlane.xlu0 %6803
      %v6805 = vsel %vm1338, %v6796, 0.0
      %6806 = vadd.xlane.f32.xlu0 %v6805
      %v6807 = vpop.xlane.xlu0 %6806
      %v6808 = vsel %vm1338, %v6797, 0.0
      %6809 = vadd.xlane.f32.xlu0 %v6808
      %v6810 = vpop.xlane.xlu0 %6809
      %v6811 = vsel %vm1338, %v6798, 0.0
      %6812 = vadd.xlane.f32.xlu0 %v6811
      %v6813 = vpop.xlane.xlu0 %6812
      %v6814 = vsel %vm1338, %v6799, 0.0
      %6815 = vadd.xlane.f32.xlu0 %v6814
      %v6816 = vpop.xlane.xlu0 %6815
      %v6817 = vsel %vm1338, %v6800, 0.0
      %6818 = vadd.xlane.f32.xlu0 %v6817
      %v6819 = vpop.xlane.xlu0 %6818
      %v6820 = vsel %vm4318, %v6801, 0.0
      %6821 = vadd.xlane.f32.xlu0 %v6820
      %v6822 = vpop.xlane.xlu0 %6821
      %v6823 = vmul.f32 %v6804, %v1363
      %v6824 = vmul.f32 %v6807, %v1363
      %v6825 = vmul.f32 %v6810, %v1363
      %v6826 = vmul.f32 %v6813, %v1363
      %v6827 = vmul.f32 %v6816, %v1363
      %v6828 = vmul.f32 %v6819, %v1363
      %v6829 = vmul.f32 %v6822, %v1363
      %v6830 = vadd.f32 %v6823, 1e-05
      %v6831 = vadd.f32 %v6824, 1e-05
      %v6832 = vadd.f32 %v6825, 1e-05
      %v6833 = vadd.f32 %v6826, 1e-05
      %v6834 = vadd.f32 %v6827, 1e-05
      %v6835 = vadd.f32 %v6828, 1e-05
      %v6836 = vadd.f32 %v6829, 1e-05
      %v6837 = vrsqrt.pop %v6830
      %v6838 = vmul.f32 %v6837, %v6830
      %v6839 = vmul.f32 %v6838, %v6837
      %v6840 = vmul.f32 0.5, %v6839
      %v6841 = vsub.f32 1.5, %v6840
      %v6842 = vmul.f32 %v6837, %v6841
      %vm6843 = vweird.f32 %v6830
      %vm6844 = vweird.f32 %v6837
      %vm6845 = vmor %vm6843, %vm6844
      %v6846 = vsel %vm6845, %v6837, %v6842
      %v6847 = vrsqrt.pop %v6831
      %v6848 = vmul.f32 %v6847, %v6831
      %v6849 = vmul.f32 %v6848, %v6847
      %v6850 = vmul.f32 0.5, %v6849
      %v6851 = vsub.f32 1.5, %v6850
      %v6852 = vmul.f32 %v6847, %v6851
      %vm6853 = vweird.f32 %v6831
      %vm6854 = vweird.f32 %v6847
      %vm6855 = vmor %vm6853, %vm6854
      %v6856 = vsel %vm6855, %v6847, %v6852
      %v6857 = vrsqrt.pop %v6832
      %v6858 = vmul.f32 %v6857, %v6832
      %v6859 = vmul.f32 %v6858, %v6857
      %v6860 = vmul.f32 0.5, %v6859
      %v6861 = vsub.f32 1.5, %v6860
      %v6862 = vmul.f32 %v6857, %v6861
      %vm6863 = vweird.f32 %v6832
      %vm6864 = vweird.f32 %v6857
      %vm6865 = vmor %vm6863, %vm6864
      %v6866 = vsel %vm6865, %v6857, %v6862
      %v6867 = vrsqrt.pop %v6833
      %v6868 = vmul.f32 %v6867, %v6833
      %v6869 = vmul.f32 %v6868, %v6867
      %v6870 = vmul.f32 0.5, %v6869
      %v6871 = vsub.f32 1.5, %v6870
      %v6872 = vmul.f32 %v6867, %v6871
      %vm6873 = vweird.f32 %v6833
      %vm6874 = vweird.f32 %v6867
      %vm6875 = vmor %vm6873, %vm6874
      %v6876 = vsel %vm6875, %v6867, %v6872
      %v6877 = vrsqrt.pop %v6834
      %v6878 = vmul.f32 %v6877, %v6834
      %v6879 = vmul.f32 %v6878, %v6877
      %v6880 = vmul.f32 0.5, %v6879
      %v6881 = vsub.f32 1.5, %v6880
      %v6882 = vmul.f32 %v6877, %v6881
      %vm6883 = vweird.f32 %v6834
      %vm6884 = vweird.f32 %v6877
      %vm6885 = vmor %vm6883, %vm6884
      %v6886 = vsel %vm6885, %v6877, %v6882
      %v6887 = vrsqrt.pop %v6835
      %v6888 = vmul.f32 %v6887, %v6835
      %v6889 = vmul.f32 %v6888, %v6887
      %v6890 = vmul.f32 0.5, %v6889
      %v6891 = vsub.f32 1.5, %v6890
      %v6892 = vmul.f32 %v6887, %v6891
      %vm6893 = vweird.f32 %v6835
      %vm6894 = vweird.f32 %v6887
      %vm6895 = vmor %vm6893, %vm6894
      %v6896 = vsel %vm6895, %v6887, %v6892
      %v6897 = vrsqrt.pop %v6836
      %v6898 = vmul.f32 %v6897, %v6836
      %v6899 = vmul.f32 %v6898, %v6897
      %v6900 = vmul.f32 0.5, %v6899
      %v6901 = vsub.f32 1.5, %v6900
      %v6902 = vmul.f32 %v6897, %v6901
      %vm6903 = vweird.f32 %v6836
      %vm6904 = vweird.f32 %v6897
      %vm6905 = vmor %vm6903, %vm6904
      %v6906 = vsel %vm6905, %v6897, %v6902
      %v6907 = vmul.f32 %v6788, %v6846
      %v6908 = vmul.f32 %v6789, %v6856
      %v6909 = vmul.f32 %v6790, %v6866
      %v6910 = vmul.f32 %v6791, %v6876
      %v6911 = vmul.f32 %v6792, %v6886
      %v6912 = vmul.f32 %v6793, %v6896
      %v6913 = vmul.f32 %v6794, %v6906
      %v6914 = vperm.slane %v4224, 0
      %v6915 = vmul.f32 %v6907, %v6914
      %v6916 = vmul.f32 %v6908, %v6914
      %v6917 = vmul.f32 %v6909, %v6914
      %v6918 = vmul.f32 %v6910, %v6914
      %v6919 = vmul.f32 %v6911, %v6914
      %v6920 = vmul.f32 %v6912, %v6914
      %v6921 = vmul.f32 %v6913, %v6914
      %v6922 = vperm.slane %v4225, 0
      %v6923 = vadd.f32 %v6915, %v6922
      %v6924 = vadd.f32 %v6916, %v6922
      %v6925 = vadd.f32 %v6917, %v6922
      %v6926 = vadd.f32 %v6918, %v6922
      %v6927 = vadd.f32 %v6919, %v6922
      %v6928 = vadd.f32 %v6920, %v6922
      %v6929 = vadd.f32 %v6921, %v6922
      %v6931 = vperm.slane %v4265, 0
      %v6932 = vperm.slane %v4265, 1
      %v6942 = vrot.slane %v6923, 4
      %v6943 = vrot.slane %v6924, 4
      %v6944 = vsel %vm1065, %v6942, %v6943
      %v6945 = vrot.slane %v6925, 4
      %v6946 = vsel %vm1065, %v6943, %v6945
      %v6947 = vrot.slane %v6926, 4
      %v6948 = vsel %vm1065, %v6945, %v6947
      %v6949 = vrot.slane %v6927, 4
      %v6950 = vsel %vm1065, %v6947, %v6949
      %v6951 = vrot.slane %v6928, 4
      %v6952 = vsel %vm1065, %v6949, %v6951
      %v6953 = vrot.slane %v6929, 4
      %v6954 = vsel %vm1065, %v6951, %v6953
      %v6955 = vsel %vm1338, %v6944, 0
      %v6957 = vsel %vm1338, %v6946, 0
      %v6959 = vsel %vm1338, %v6948, 0
      %v6961 = vsel %vm1338, %v6950, 0
      %v6963 = vsel %vm1338, %v6952, 0
      %v6965 = vsel %vm1338, %v6954, 0
      %6967 = vmatpush.msra.mxu0 0.0
      %6968 = vmatpush.msra.mxu0 0.0
      %6969 = vmatpush.msra.mxu0 0.0
      %6970 = vmatpush.msra.mxu0 0.0
      %6971 = vmatpush.msra.mxu0 0.0
      %6972 = vmatpush.msra.mxu0 0.0
      %6973 = vmatpush.msra.mxu0 0.0
      %6974 = vmatpush.msra.mxu0 0.0
      %6975 = vmatpush.msra.mxu0 %v4262
      %6976 = vmatpush.msra.mxu0 %v4260
      %6977 = vmatpush.msra.mxu0 %v4258
      %6978 = vmatpush.msra.mxu0 %v4256
      %6979 = vmatpush.msra.mxu0 %v4254
      %6980 = vmatpush.msra.mxu0 %v4252
      %6981 = vmatpush.msra.mxu0 %v4250
      %6982 = vmatpush.msra.mxu0 %v4248
      %6983 = vmatmul.f32.gmra.mxu0 %v6955
      %v6984 = vpop.f32.mrf.mxu0
      %v6985 = vadd.f32 %v6931, %v6984
      %6986 = vmatmul.f32.gmra.mxu0 %v6957
      %v6987 = vpop.f32.mrf.mxu0
      %v6988 = vadd.f32 %v6931, %v6987
      %6989 = vmatmul.f32.gmra.mxu0 %v6959
      %v6990 = vpop.f32.mrf.mxu0
      %v6991 = vadd.f32 %v6931, %v6990
      %6992 = vmatmul.f32.gmra.mxu0 %v6961
      %v6993 = vpop.f32.mrf.mxu0
      %v6994 = vadd.f32 %v6931, %v6993
      %6995 = vmatmul.f32.gmra.mxu0 %v6963
      %v6996 = vpop.f32.mrf.mxu0
      %v6997 = vadd.f32 %v6931, %v6996
      %6998 = vmatmul.f32.gmra.mxu0 %v6965
      %v6999 = vpop.f32.mrf.mxu0
      %v7000 = vadd.f32 %v6931, %v6999
      %7001 = vdwg.mxu0
      %7002 = vmatpush.msra.mxu0 0.0
      %7003 = vmatpush.msra.mxu0 0.0
      %7004 = vmatpush.msra.mxu0 0.0
      %7005 = vmatpush.msra.mxu0 0.0
      %7006 = vmatpush.msra.mxu0 0.0
      %7007 = vmatpush.msra.mxu0 0.0
      %7008 = vmatpush.msra.mxu0 0.0
      %7009 = vmatpush.msra.mxu0 0.0
      %7010 = vmatpush.msra.mxu0 %v4263
      %7011 = vmatpush.msra.mxu0 %v4261
      %7012 = vmatpush.msra.mxu0 %v4259
      %7013 = vmatpush.msra.mxu0 %v4257
      %7014 = vmatpush.msra.mxu0 %v4255
      %7015 = vmatpush.msra.mxu0 %v4253
      %7016 = vmatpush.msra.mxu0 %v4251
      %7017 = vmatpush.msra.mxu0 %v4249
      %7018 = vmatmul.f32.gmra.mxu0 %v6955
      %v7019 = vpop.f32.mrf.mxu0
      %v7020 = vadd.f32 %v6932, %v7019
      %7021 = vmatmul.f32.gmra.mxu0 %v6957
      %v7022 = vpop.f32.mrf.mxu0
      %v7023 = vadd.f32 %v6932, %v7022
      %7024 = vmatmul.f32.gmra.mxu0 %v6959
      %v7025 = vpop.f32.mrf.mxu0
      %v7026 = vadd.f32 %v6932, %v7025
      %7027 = vmatmul.f32.gmra.mxu0 %v6961
      %v7028 = vpop.f32.mrf.mxu0
      %v7029 = vadd.f32 %v6932, %v7028
      %7030 = vmatmul.f32.gmra.mxu0 %v6963
      %v7031 = vpop.f32.mrf.mxu0
      %v7032 = vadd.f32 %v6932, %v7031
      %7033 = vmatmul.f32.gmra.mxu0 %v6965
      %v7034 = vpop.f32.mrf.mxu0
      %v7035 = vadd.f32 %v6932, %v7034
      %7036 = vdwg.mxu0
      %v7037 = vxor.u32 %v6985, 2147483648
      %v7038 = vxor.u32 %v7020, 2147483648
      %v7039 = vxor.u32 %v6988, 2147483648
      %v7040 = vxor.u32 %v7023, 2147483648
      %v7041 = vxor.u32 %v6991, 2147483648
      %v7042 = vxor.u32 %v7026, 2147483648
      %v7043 = vxor.u32 %v6994, 2147483648
      %v7044 = vxor.u32 %v7029, 2147483648
      %v7045 = vxor.u32 %v6997, 2147483648
      %v7046 = vxor.u32 %v7032, 2147483648
      %v7047 = vxor.u32 %v7000, 2147483648
      %v7048 = vxor.u32 %v7035, 2147483648
      %v7049 = vmul.f32 %v7037, 1.442695
      %v7050 = vpow.pop %v7049
      %v7051 = vmul.f32 %v7038, 1.442695
      %v7052 = vpow.pop %v7051
      %v7053 = vmul.f32 %v7039, 1.442695
      %v7054 = vpow.pop %v7053
      %v7055 = vmul.f32 %v7040, 1.442695
      %v7056 = vpow.pop %v7055
      %v7057 = vmul.f32 %v7041, 1.442695
      %v7058 = vpow.pop %v7057
      %v7059 = vmul.f32 %v7042, 1.442695
      %v7060 = vpow.pop %v7059
      %v7061 = vmul.f32 %v7043, 1.442695
      %v7062 = vpow.pop %v7061
      %v7063 = vmul.f32 %v7044, 1.442695
      %v7064 = vpow.pop %v7063
      %v7065 = vmul.f32 %v7045, 1.442695
      %v7066 = vpow.pop %v7065
      %v7067 = vmul.f32 %v7046, 1.442695
      %v7068 = vpow.pop %v7067
      %v7069 = vmul.f32 %v7047, 1.442695
      %v7070 = vpow.pop %v7069
      %v7071 = vmul.f32 %v7048, 1.442695
      %v7072 = vpow.pop %v7071
      %v7073 = vadd.f32 %v7050, 1.0
      %v7074 = vadd.f32 %v7052, 1.0
      %v7075 = vadd.f32 %v7054, 1.0
      %v7076 = vadd.f32 %v7056, 1.0
      %v7077 = vadd.f32 %v7058, 1.0
      %v7078 = vadd.f32 %v7060, 1.0
      %v7079 = vadd.f32 %v7062, 1.0
      %v7080 = vadd.f32 %v7064, 1.0
      %v7081 = vadd.f32 %v7066, 1.0
      %v7082 = vadd.f32 %v7068, 1.0
      %v7083 = vadd.f32 %v7070, 1.0
      %v7084 = vadd.f32 %v7072, 1.0
      %v7085 = vrcp.pop %v7073
      %v7086 = vmul.f32 %v7073, %v7085
      %v7087 = vsub.f32 1.0, %v7086
      %v7088 = vmul.f32 %v7085, %v7087
      %v7089 = vadd.f32 %v7085, %v7088
      %vm7090 = vweird.f32 %v7073
      %vm7091 = vweird.f32 %v7085
      %vm7092 = vmor %vm7090, %vm7091
      %v7093 = vsel %vm7092, %v7085, %v7089
      %v7094 = vand.u32 2147483647, %v7073
      %vm7095 = vcmp.eq.f32.partialorder %v7094, 8.507059e+37
      %v7096 = vand.u32 %v7073, 2147483648
      %v7097 = vor.u32 1.1754944e-38, %v7096
      %v7098 = vsel %vm7095, %v7097, %v7093
      %v7099 = vmul.f32 1.0, %v7098
      %v7100 = vrcp.pop %v7074
      %v7101 = vmul.f32 %v7074, %v7100
      %v7102 = vsub.f32 1.0, %v7101
      %v7103 = vmul.f32 %v7100, %v7102
      %v7104 = vadd.f32 %v7100, %v7103
      %vm7105 = vweird.f32 %v7074
      %vm7106 = vweird.f32 %v7100
      %vm7107 = vmor %vm7105, %vm7106
      %v7108 = vsel %vm7107, %v7100, %v7104
      %v7109 = vand.u32 2147483647, %v7074
      %vm7110 = vcmp.eq.f32.partialorder %v7109, 8.507059e+37
      %v7111 = vand.u32 %v7074, 2147483648
      %v7112 = vor.u32 1.1754944e-38, %v7111
      %v7113 = vsel %vm7110, %v7112, %v7108
      %v7114 = vmul.f32 1.0, %v7113
      %v7115 = vrcp.pop %v7075
      %v7116 = vmul.f32 %v7075, %v7115
      %v7117 = vsub.f32 1.0, %v7116
      %v7118 = vmul.f32 %v7115, %v7117
      %v7119 = vadd.f32 %v7115, %v7118
      %vm7120 = vweird.f32 %v7075
      %vm7121 = vweird.f32 %v7115
      %vm7122 = vmor %vm7120, %vm7121
      %v7123 = vsel %vm7122, %v7115, %v7119
      %v7124 = vand.u32 2147483647, %v7075
      %vm7125 = vcmp.eq.f32.partialorder %v7124, 8.507059e+37
      %v7126 = vand.u32 %v7075, 2147483648
      %v7127 = vor.u32 1.1754944e-38, %v7126
      %v7128 = vsel %vm7125, %v7127, %v7123
      %v7129 = vmul.f32 1.0, %v7128
      %v7130 = vrcp.pop %v7076
      %v7131 = vmul.f32 %v7076, %v7130
      %v7132 = vsub.f32 1.0, %v7131
      %v7133 = vmul.f32 %v7130, %v7132
      %v7134 = vadd.f32 %v7130, %v7133
      %vm7135 = vweird.f32 %v7076
      %vm7136 = vweird.f32 %v7130
      %vm7137 = vmor %vm7135, %vm7136
      %v7138 = vsel %vm7137, %v7130, %v7134
      %v7139 = vand.u32 2147483647, %v7076
      %vm7140 = vcmp.eq.f32.partialorder %v7139, 8.507059e+37
      %v7141 = vand.u32 %v7076, 2147483648
      %v7142 = vor.u32 1.1754944e-38, %v7141
      %v7143 = vsel %vm7140, %v7142, %v7138
      %v7144 = vmul.f32 1.0, %v7143
      %v7145 = vrcp.pop %v7077
      %v7146 = vmul.f32 %v7077, %v7145
      %v7147 = vsub.f32 1.0, %v7146
      %v7148 = vmul.f32 %v7145, %v7147
      %v7149 = vadd.f32 %v7145, %v7148
      %vm7150 = vweird.f32 %v7077
      %vm7151 = vweird.f32 %v7145
      %vm7152 = vmor %vm7150, %vm7151
      %v7153 = vsel %vm7152, %v7145, %v7149
      %v7154 = vand.u32 2147483647, %v7077
      %vm7155 = vcmp.eq.f32.partialorder %v7154, 8.507059e+37
      %v7156 = vand.u32 %v7077, 2147483648
      %v7157 = vor.u32 1.1754944e-38, %v7156
      %v7158 = vsel %vm7155, %v7157, %v7153
      %v7159 = vmul.f32 1.0, %v7158
      %v7160 = vrcp.pop %v7078
      %v7161 = vmul.f32 %v7078, %v7160
      %v7162 = vsub.f32 1.0, %v7161
      %v7163 = vmul.f32 %v7160, %v7162
      %v7164 = vadd.f32 %v7160, %v7163
      %vm7165 = vweird.f32 %v7078
      %vm7166 = vweird.f32 %v7160
      %vm7167 = vmor %vm7165, %vm7166
      %v7168 = vsel %vm7167, %v7160, %v7164
      %v7169 = vand.u32 2147483647, %v7078
      %vm7170 = vcmp.eq.f32.partialorder %v7169, 8.507059e+37
      %v7171 = vand.u32 %v7078, 2147483648
      %v7172 = vor.u32 1.1754944e-38, %v7171
      %v7173 = vsel %vm7170, %v7172, %v7168
      %v7174 = vmul.f32 1.0, %v7173
      %v7175 = vrcp.pop %v7079
      %v7176 = vmul.f32 %v7079, %v7175
      %v7177 = vsub.f32 1.0, %v7176
      %v7178 = vmul.f32 %v7175, %v7177
      %v7179 = vadd.f32 %v7175, %v7178
      %vm7180 = vweird.f32 %v7079
      %vm7181 = vweird.f32 %v7175
      %vm7182 = vmor %vm7180, %vm7181
      %v7183 = vsel %vm7182, %v7175, %v7179
      %v7184 = vand.u32 2147483647, %v7079
      %vm7185 = vcmp.eq.f32.partialorder %v7184, 8.507059e+37
      %v7186 = vand.u32 %v7079, 2147483648
      %v7187 = vor.u32 1.1754944e-38, %v7186
      %v7188 = vsel %vm7185, %v7187, %v7183
      %v7189 = vmul.f32 1.0, %v7188
      %v7190 = vrcp.pop %v7080
      %v7191 = vmul.f32 %v7080, %v7190
      %v7192 = vsub.f32 1.0, %v7191
      %v7193 = vmul.f32 %v7190, %v7192
      %v7194 = vadd.f32 %v7190, %v7193
      %vm7195 = vweird.f32 %v7080
      %vm7196 = vweird.f32 %v7190
      %vm7197 = vmor %vm7195, %vm7196
      %v7198 = vsel %vm7197, %v7190, %v7194
      %v7199 = vand.u32 2147483647, %v7080
      %vm7200 = vcmp.eq.f32.partialorder %v7199, 8.507059e+37
      %v7201 = vand.u32 %v7080, 2147483648
      %v7202 = vor.u32 1.1754944e-38, %v7201
      %v7203 = vsel %vm7200, %v7202, %v7198
      %v7204 = vmul.f32 1.0, %v7203
      %v7205 = vrcp.pop %v7081
      %v7206 = vmul.f32 %v7081, %v7205
      %v7207 = vsub.f32 1.0, %v7206
      %v7208 = vmul.f32 %v7205, %v7207
      %v7209 = vadd.f32 %v7205, %v7208
      %vm7210 = vweird.f32 %v7081
      %vm7211 = vweird.f32 %v7205
      %vm7212 = vmor %vm7210, %vm7211
      %v7213 = vsel %vm7212, %v7205, %v7209
      %v7214 = vand.u32 2147483647, %v7081
      %vm7215 = vcmp.eq.f32.partialorder %v7214, 8.507059e+37
      %v7216 = vand.u32 %v7081, 2147483648
      %v7217 = vor.u32 1.1754944e-38, %v7216
      %v7218 = vsel %vm7215, %v7217, %v7213
      %v7219 = vmul.f32 1.0, %v7218
      %v7220 = vrcp.pop %v7082
      %v7221 = vmul.f32 %v7082, %v7220
      %v7222 = vsub.f32 1.0, %v7221
      %v7223 = vmul.f32 %v7220, %v7222
      %v7224 = vadd.f32 %v7220, %v7223
      %vm7225 = vweird.f32 %v7082
      %vm7226 = vweird.f32 %v7220
      %vm7227 = vmor %vm7225, %vm7226
      %v7228 = vsel %vm7227, %v7220, %v7224
      %v7229 = vand.u32 2147483647, %v7082
      %vm7230 = vcmp.eq.f32.partialorder %v7229, 8.507059e+37
      %v7231 = vand.u32 %v7082, 2147483648
      %v7232 = vor.u32 1.1754944e-38, %v7231
      %v7233 = vsel %vm7230, %v7232, %v7228
      %v7234 = vmul.f32 1.0, %v7233
      %v7235 = vrcp.pop %v7083
      %v7236 = vmul.f32 %v7083, %v7235
      %v7237 = vsub.f32 1.0, %v7236
      %v7238 = vmul.f32 %v7235, %v7237
      %v7239 = vadd.f32 %v7235, %v7238
      %vm7240 = vweird.f32 %v7083
      %vm7241 = vweird.f32 %v7235
      %vm7242 = vmor %vm7240, %vm7241
      %v7243 = vsel %vm7242, %v7235, %v7239
      %v7244 = vand.u32 2147483647, %v7083
      %vm7245 = vcmp.eq.f32.partialorder %v7244, 8.507059e+37
      %v7246 = vand.u32 %v7083, 2147483648
      %v7247 = vor.u32 1.1754944e-38, %v7246
      %v7248 = vsel %vm7245, %v7247, %v7243
      %v7249 = vmul.f32 1.0, %v7248
      %v7250 = vrcp.pop %v7084
      %v7251 = vmul.f32 %v7084, %v7250
      %v7252 = vsub.f32 1.0, %v7251
      %v7253 = vmul.f32 %v7250, %v7252
      %v7254 = vadd.f32 %v7250, %v7253
      %vm7255 = vweird.f32 %v7084
      %vm7256 = vweird.f32 %v7250
      %vm7257 = vmor %vm7255, %vm7256
      %v7258 = vsel %vm7257, %v7250, %v7254
      %v7259 = vand.u32 2147483647, %v7084
      %vm7260 = vcmp.eq.f32.partialorder %v7259, 8.507059e+37
      %v7261 = vand.u32 %v7084, 2147483648
      %v7262 = vor.u32 1.1754944e-38, %v7261
      %v7263 = vsel %vm7260, %v7262, %v7258
      %v7264 = vmul.f32 1.0, %v7263
      %v7265 = vmul.f32 %v6985, %v7099
      %v7266 = vmul.f32 %v7020, %v7114
      %v7267 = vmul.f32 %v6988, %v7129
      %v7268 = vmul.f32 %v7023, %v7144
      %v7269 = vmul.f32 %v6991, %v7159
      %v7270 = vmul.f32 %v7026, %v7174
      %v7271 = vmul.f32 %v6994, %v7189
      %v7272 = vmul.f32 %v7029, %v7204
      %v7273 = vmul.f32 %v6997, %v7219
      %v7274 = vmul.f32 %v7032, %v7234
      %v7275 = vmul.f32 %v7000, %v7249
      %v7276 = vmul.f32 %v7035, %v7264
      %v7277 = vperm.slane %v4227, 0
      %7278 = vmatpush.msra.mxu0 %v4282
      %7279 = vmatpush.msra.mxu0 %v4281
      %7280 = vmatpush.msra.mxu0 %v4280
      %7281 = vmatpush.msra.mxu0 %v4279
      %7282 = vmatpush.msra.mxu0 %v4278
      %7283 = vmatpush.msra.mxu0 %v4277
      %7284 = vmatpush.msra.mxu0 %v4276
      %7285 = vmatpush.msra.mxu0 %v4275
      %7286 = vmatpush.msra.mxu0 %v4274
      %7287 = vmatpush.msra.mxu0 %v4273
      %7288 = vmatpush.msra.mxu0 %v4272
      %7289 = vmatpush.msra.mxu0 %v4271
      %7290 = vmatpush.msra.mxu0 %v4270
      %7291 = vmatpush.msra.mxu0 %v4269
      %7292 = vmatpush.msra.mxu0 %v4268
      %7293 = vmatpush.msra.mxu0 %v4267
      %7294 = vmatmul.f32.gmra.mxu0 %v7265
      %v7295 = vpop.f32.mrf.mxu0
      %v7296 = vadd.f32 %v7277, %v7295
      %7297 = vmatmul.f32.gmra.mxu0 %v7267
      %v7298 = vpop.f32.mrf.mxu0
      %v7299 = vadd.f32 %v7277, %v7298
      %7300 = vmatmul.f32.gmra.mxu0 %v7269
      %v7301 = vpop.f32.mrf.mxu0
      %v7302 = vadd.f32 %v7277, %v7301
      %7303 = vmatmul.f32.gmra.mxu0 %v7271
      %v7304 = vpop.f32.mrf.mxu0
      %v7305 = vadd.f32 %v7277, %v7304
      %7306 = vmatmul.f32.gmra.mxu0 %v7273
      %v7307 = vpop.f32.mrf.mxu0
      %v7308 = vadd.f32 %v7277, %v7307
      %7309 = vmatmul.f32.gmra.mxu0 %v7275
      %v7310 = vpop.f32.mrf.mxu0
      %v7311 = vadd.f32 %v7277, %v7310
      %7312 = vdwg.mxu0
      %7313 = vmatpush.msra.mxu0 %v4298
      %7314 = vmatpush.msra.mxu0 %v4297
      %7315 = vmatpush.msra.mxu0 %v4296
      %7316 = vmatpush.msra.mxu0 %v4295
      %7317 = vmatpush.msra.mxu0 %v4294
      %7318 = vmatpush.msra.mxu0 %v4293
      %7319 = vmatpush.msra.mxu0 %v4292
      %7320 = vmatpush.msra.mxu0 %v4291
      %7321 = vmatpush.msra.mxu0 %v4290
      %7322 = vmatpush.msra.mxu0 %v4289
      %7323 = vmatpush.msra.mxu0 %v4288
      %7324 = vmatpush.msra.mxu0 %v4287
      %7325 = vmatpush.msra.mxu0 %v4286
      %7326 = vmatpush.msra.mxu0 %v4285
      %7327 = vmatpush.msra.mxu0 %v4284
      %7328 = vmatpush.msra.mxu0 %v4283
      %7329 = vmatmul.f32.gmra.mxu0 %v7266
      %v7330 = vpop.f32.mrf.mxu0
      %v7331 = vadd.f32 %v7296, %v7330
      %7332 = vmatmul.f32.gmra.mxu0 %v7268
      %v7333 = vpop.f32.mrf.mxu0
      %v7334 = vadd.f32 %v7299, %v7333
      %7335 = vmatmul.f32.gmra.mxu0 %v7270
      %v7336 = vpop.f32.mrf.mxu0
      %v7337 = vadd.f32 %v7302, %v7336
      %7338 = vmatmul.f32.gmra.mxu0 %v7272
      %v7339 = vpop.f32.mrf.mxu0
      %v7340 = vadd.f32 %v7305, %v7339
      %7341 = vmatmul.f32.gmra.mxu0 %v7274
      %v7342 = vpop.f32.mrf.mxu0
      %v7343 = vadd.f32 %v7308, %v7342
      %7344 = vmatmul.f32.gmra.mxu0 %v7276
      %v7345 = vpop.f32.mrf.mxu0
      %v7346 = vadd.f32 %v7311, %v7345
      %7347 = vdwg.mxu0
      %v7348 = vmul.f32 %v7331, 1.0481471
      %v7349 = vmul.f32 %v7334, 1.0481471
      %v7350 = vmul.f32 %v7337, 1.0481471
      %v7351 = vmul.f32 %v7340, 1.0481471
      %v7352 = vmul.f32 %v7343, 1.0481471
      %v7353 = vmul.f32 %v7346, 1.0481471
      %v7360 = vrot.slane %v7348, 4
      %v7361 = vrot.slane %v7349, 4
      %v7362 = vsel %vm1065, %v7360, %v7361
      %v7363 = vrot.slane %v7350, 4
      %v7364 = vsel %vm1065, %v7361, %v7363
      %v7365 = vrot.slane %v7351, 4
      %v7366 = vsel %vm1065, %v7363, %v7365
      %v7367 = vrot.slane %v7352, 4
      %v7368 = vsel %vm1065, %v7365, %v7367
      %v7369 = vrot.slane %v7353, 4
      %v7370 = vsel %vm1065, %v7367, %v7369
      %v7378 = vadd.f32 %v6753, %v7360
      %v7379 = vadd.f32 %v6754, %v7362
      %v7380 = vadd.f32 %v6755, %v7364
      %v7381 = vadd.f32 %v6756, %v7366
      %v7382 = vadd.f32 %v6757, %v7368
      %v7383 = vadd.f32 %v6758, %v7370
      %v7384 = vadd.f32 %v6759, %v7369
      %v7385 = vld [vmem:[%s13] sm:$0xff]
      %v7386 = vld [vmem:[%s13 + $0x8] sm:$0xff]
      %v7387 = vld [vmem:[%s13 + $0x10] sm:$0xff]
      %v7388 = vld [vmem:[%s13 + $0x18] sm:$0xff]
      %v7389 = vld [vmem:[%s13 + $0x20] sm:$0xff]
      %v7390 = vld [vmem:[%s13 + $0x28] sm:$0xff]
      %v7391 = vld [vmem:[%s13 + $0x30] sm:$0xff]
      %v7392 = vld [vmem:[%s13 + $0x38] sm:$0xff]
      %v7393 = vld [vmem:[%s5 + $0x2] sm:$0x1]
      %v7394 = vperm.slane %v7393, 0
      %v7402 = vrot.slane %v7378, 4
      %v7403 = vrot.slane %v7379, 4
      %v7404 = vsel %vm1065, %v7402, %v7403
      %v7405 = vrot.slane %v7380, 4
      %v7406 = vsel %vm1065, %v7403, %v7405
      %v7407 = vrot.slane %v7381, 4
      %v7408 = vsel %vm1065, %v7405, %v7407
      %v7409 = vrot.slane %v7382, 4
      %v7410 = vsel %vm1065, %v7407, %v7409
      %v7411 = vrot.slane %v7383, 4
      %v7412 = vsel %vm1065, %v7409, %v7411
      %v7413 = vrot.slane %v7384, 4
      %v7414 = vsel %vm1065, %v7411, %v7413
      %v7415 = vsel %vm1338, %v7404, 0
      %v7417 = vsel %vm1338, %v7406, 0
      %v7419 = vsel %vm1338, %v7408, 0
      %v7421 = vsel %vm1338, %v7410, 0
      %v7423 = vsel %vm1338, %v7412, 0
      %v7425 = vsel %vm1338, %v7414, 0
      %7427 = vmatpush.msra.mxu0 0.0
      %7428 = vmatpush.msra.mxu0 0.0
      %7429 = vmatpush.msra.mxu0 0.0
      %7430 = vmatpush.msra.mxu0 0.0
      %7431 = vmatpush.msra.mxu0 0.0
      %7432 = vmatpush.msra.mxu0 0.0
      %7433 = vmatpush.msra.mxu0 0.0
      %7434 = vmatpush.msra.mxu0 0.0
      %7435 = vmatpush.msra.mxu0 %v7392
      %7436 = vmatpush.msra.mxu0 %v7391
      %7437 = vmatpush.msra.mxu0 %v7390
      %7438 = vmatpush.msra.mxu0 %v7389
      %7439 = vmatpush.msra.mxu0 %v7388
      %7440 = vmatpush.msra.mxu0 %v7387
      %7441 = vmatpush.msra.mxu0 %v7386
      %7442 = vmatpush.msra.mxu0 %v7385
      %7443 = vmatmul.f32.gmra.mxu0 %v7415
      %v7444 = vpop.f32.mrf.mxu0
      %v7445 = vadd.f32 %v7394, %v7444
      %7446 = vmatmul.f32.gmra.mxu0 %v7417
      %v7447 = vpop.f32.mrf.mxu0
      %v7448 = vadd.f32 %v7394, %v7447
      %7449 = vmatmul.f32.gmra.mxu0 %v7419
      %v7450 = vpop.f32.mrf.mxu0
      %v7451 = vadd.f32 %v7394, %v7450
      %7452 = vmatmul.f32.gmra.mxu0 %v7421
      %v7453 = vpop.f32.mrf.mxu0
      %v7454 = vadd.f32 %v7394, %v7453
      %7455 = vmatmul.f32.gmra.mxu0 %v7423
      %v7456 = vpop.f32.mrf.mxu0
      %v7457 = vadd.f32 %v7394, %v7456
      %7458 = vmatmul.f32.gmra.mxu0 %v7425
      %v7459 = vpop.f32.mrf.mxu0
      %v7460 = vadd.f32 %v7394, %v7459
      %7461 = vdwg.mxu0
      %v7462 = vxor.u32 %v7445, 2147483648
      %v7463 = vxor.u32 %v7448, 2147483648
      %v7464 = vxor.u32 %v7451, 2147483648
      %v7465 = vxor.u32 %v7454, 2147483648
      %v7466 = vxor.u32 %v7457, 2147483648
      %v7467 = vxor.u32 %v7460, 2147483648
      %v7468 = vmul.f32 %v7462, 1.442695
      %v7469 = vpow.pop %v7468
      %v7470 = vmul.f32 %v7463, 1.442695
      %v7471 = vpow.pop %v7470
      %v7472 = vmul.f32 %v7464, 1.442695
      %v7473 = vpow.pop %v7472
      %v7474 = vmul.f32 %v7465, 1.442695
      %v7475 = vpow.pop %v7474
      %v7476 = vmul.f32 %v7466, 1.442695
      %v7477 = vpow.pop %v7476
      %v7478 = vmul.f32 %v7467, 1.442695
      %v7479 = vpow.pop %v7478
      %v7480 = vadd.f32 %v7469, 1.0
      %v7481 = vadd.f32 %v7471, 1.0
      %v7482 = vadd.f32 %v7473, 1.0
      %v7483 = vadd.f32 %v7475, 1.0
      %v7484 = vadd.f32 %v7477, 1.0
      %v7485 = vadd.f32 %v7479, 1.0
      %v7486 = vrcp.pop %v7480
      %v7487 = vmul.f32 %v7480, %v7486
      %v7488 = vsub.f32 1.0, %v7487
      %v7489 = vmul.f32 %v7486, %v7488
      %v7490 = vadd.f32 %v7486, %v7489
      %vm7491 = vweird.f32 %v7480
      %vm7492 = vweird.f32 %v7486
      %vm7493 = vmor %vm7491, %vm7492
      %v7494 = vsel %vm7493, %v7486, %v7490
      %v7495 = vand.u32 2147483647, %v7480
      %vm7496 = vcmp.eq.f32.partialorder %v7495, 8.507059e+37
      %v7497 = vand.u32 %v7480, 2147483648
      %v7498 = vor.u32 1.1754944e-38, %v7497
      %v7499 = vsel %vm7496, %v7498, %v7494
      %v7500 = vmul.f32 1.0, %v7499
      %v7501 = vrcp.pop %v7481
      %v7502 = vmul.f32 %v7481, %v7501
      %v7503 = vsub.f32 1.0, %v7502
      %v7504 = vmul.f32 %v7501, %v7503
      %v7505 = vadd.f32 %v7501, %v7504
      %vm7506 = vweird.f32 %v7481
      %vm7507 = vweird.f32 %v7501
      %vm7508 = vmor %vm7506, %vm7507
      %v7509 = vsel %vm7508, %v7501, %v7505
      %v7510 = vand.u32 2147483647, %v7481
      %vm7511 = vcmp.eq.f32.partialorder %v7510, 8.507059e+37
      %v7512 = vand.u32 %v7481, 2147483648
      %v7513 = vor.u32 1.1754944e-38, %v7512
      %v7514 = vsel %vm7511, %v7513, %v7509
      %v7515 = vmul.f32 1.0, %v7514
      %v7516 = vrcp.pop %v7482
      %v7517 = vmul.f32 %v7482, %v7516
      %v7518 = vsub.f32 1.0, %v7517
      %v7519 = vmul.f32 %v7516, %v7518
      %v7520 = vadd.f32 %v7516, %v7519
      %vm7521 = vweird.f32 %v7482
      %vm7522 = vweird.f32 %v7516
      %vm7523 = vmor %vm7521, %vm7522
      %v7524 = vsel %vm7523, %v7516, %v7520
      %v7525 = vand.u32 2147483647, %v7482
      %vm7526 = vcmp.eq.f32.partialorder %v7525, 8.507059e+37
      %v7527 = vand.u32 %v7482, 2147483648
      %v7528 = vor.u32 1.1754944e-38, %v7527
      %v7529 = vsel %vm7526, %v7528, %v7524
      %v7530 = vmul.f32 1.0, %v7529
      %v7531 = vrcp.pop %v7483
      %v7532 = vmul.f32 %v7483, %v7531
      %v7533 = vsub.f32 1.0, %v7532
      %v7534 = vmul.f32 %v7531, %v7533
      %v7535 = vadd.f32 %v7531, %v7534
      %vm7536 = vweird.f32 %v7483
      %vm7537 = vweird.f32 %v7531
      %vm7538 = vmor %vm7536, %vm7537
      %v7539 = vsel %vm7538, %v7531, %v7535
      %v7540 = vand.u32 2147483647, %v7483
      %vm7541 = vcmp.eq.f32.partialorder %v7540, 8.507059e+37
      %v7542 = vand.u32 %v7483, 2147483648
      %v7543 = vor.u32 1.1754944e-38, %v7542
      %v7544 = vsel %vm7541, %v7543, %v7539
      %v7545 = vmul.f32 1.0, %v7544
      %v7546 = vrcp.pop %v7484
      %v7547 = vmul.f32 %v7484, %v7546
      %v7548 = vsub.f32 1.0, %v7547
      %v7549 = vmul.f32 %v7546, %v7548
      %v7550 = vadd.f32 %v7546, %v7549
      %vm7551 = vweird.f32 %v7484
      %vm7552 = vweird.f32 %v7546
      %vm7553 = vmor %vm7551, %vm7552
      %v7554 = vsel %vm7553, %v7546, %v7550
      %v7555 = vand.u32 2147483647, %v7484
      %vm7556 = vcmp.eq.f32.partialorder %v7555, 8.507059e+37
      %v7557 = vand.u32 %v7484, 2147483648
      %v7558 = vor.u32 1.1754944e-38, %v7557
      %v7559 = vsel %vm7556, %v7558, %v7554
      %v7560 = vmul.f32 1.0, %v7559
      %v7561 = vrcp.pop %v7485
      %v7562 = vmul.f32 %v7485, %v7561
      %v7563 = vsub.f32 1.0, %v7562
      %v7564 = vmul.f32 %v7561, %v7563
      %v7565 = vadd.f32 %v7561, %v7564
      %vm7566 = vweird.f32 %v7485
      %vm7567 = vweird.f32 %v7561
      %vm7568 = vmor %vm7566, %vm7567
      %v7569 = vsel %vm7568, %v7561, %v7565
      %v7570 = vand.u32 2147483647, %v7485
      %vm7571 = vcmp.eq.f32.partialorder %v7570, 8.507059e+37
      %v7572 = vand.u32 %v7485, 2147483648
      %v7573 = vor.u32 1.1754944e-38, %v7572
      %v7574 = vsel %vm7571, %v7573, %v7569
      %v7575 = vmul.f32 1.0, %v7574
      %v7576 = vmul.f32 %v7445, %v7500
      %v7577 = vmul.f32 %v7448, %v7515
      %v7578 = vmul.f32 %v7451, %v7530
      %v7579 = vmul.f32 %v7454, %v7545
      %v7580 = vmul.f32 %v7457, %v7560
      %v7581 = vmul.f32 %v7460, %v7575
      %v7582 = vld [vmem:[%s5 + $0x3] sm:$0x1]
      %v7583 = vperm.slane %v7582, 0
      %v7584 = vmul.f32 %v7576, %v7583
      %v7585 = vmul.f32 %v7577, %v7583
      %v7586 = vmul.f32 %v7578, %v7583
      %v7587 = vmul.f32 %v7579, %v7583
      %v7588 = vmul.f32 %v7580, %v7583
      %v7589 = vmul.f32 %v7581, %v7583
      %7590 = vadd.xlane.f32.xlu0 %v7584
      %v7591 = vpop.xlane.xlu0 %7590
      %7592 = vadd.xlane.f32.xlu0 %v7585
      %v7593 = vpop.xlane.xlu0 %7592
      %7594 = vadd.xlane.f32.xlu0 %v7586
      %v7595 = vpop.xlane.xlu0 %7594
      %7596 = vadd.xlane.f32.xlu0 %v7587
      %v7597 = vpop.xlane.xlu0 %7596
      %7598 = vadd.xlane.f32.xlu0 %v7588
      %v7599 = vpop.xlane.xlu0 %7598
      %7600 = vadd.xlane.f32.xlu0 %v7589
      %v7601 = vpop.xlane.xlu0 %7600
      %v7602 = vld [vmem:[%s14] sm:$0xff]
      %v7603 = vld [vmem:[%s14 + $0x8] sm:$0xff]
      %v7604 = vld [vmem:[%s14 + $0x10] sm:$0xff]
      %v7605 = vld [vmem:[%s14 + $0x18] sm:$0xff]
      %v7606 = vld [vmem:[%s14 + $0x20] sm:$0xff]
      %v7607 = vld [vmem:[%s14 + $0x28] sm:$0xff]
      %v7608 = vld [vmem:[%s533] sm:$0x1]
      %v7610 = vperm.slane %v7608, 0
      %v7612 = vmul.f32 %v7602, %v7610
      %v7613 = vmul.f32 %v7603, %v7610
      %v7614 = vmul.f32 %v7604, %v7610
      %v7615 = vmul.f32 %v7605, %v7610
      %v7616 = vmul.f32 %v7606, %v7610
      %v7617 = vmul.f32 %v7607, %v7610
      %vm7618 = vcmask 97280
      %v7619 = vsel %vm7618, %v7612, 0.0
      %7620 = vadd.xlane.f32.xlu0 %v7619
      %v7621 = vpop.xlane.xlu0 %7620
      %v7622 = vsel %vm7618, %v7613, 0.0
      %7623 = vadd.xlane.f32.xlu0 %v7622
      %v7624 = vpop.xlane.xlu0 %7623
      %v7625 = vsel %vm7618, %v7614, 0.0
      %7626 = vadd.xlane.f32.xlu0 %v7625
      %v7627 = vpop.xlane.xlu0 %7626
      %v7628 = vsel %vm7618, %v7615, 0.0
      %7629 = vadd.xlane.f32.xlu0 %v7628
      %v7630 = vpop.xlane.xlu0 %7629
      %v7631 = vsel %vm7618, %v7616, 0.0
      %7632 = vadd.xlane.f32.xlu0 %v7631
      %v7633 = vpop.xlane.xlu0 %7632
      %v7634 = vsel %vm7618, %v7617, 0.0
      %7635 = vadd.xlane.f32.xlu0 %v7634
      %v7636 = vpop.xlane.xlu0 %7635
      %v7637 = vmax.f32 %v7621, 0.005
      %v7638 = vmax.f32 %v7624, 0.005
      %v7639 = vmax.f32 %v7627, 0.005
      %v7640 = vmax.f32 %v7630, 0.005
      %v7641 = vmax.f32 %v7633, 0.005
      %v7642 = vmax.f32 %v7636, 0.005
      %v7643 = vmin.f32 %v7637, 0.995
      %v7644 = vmin.f32 %v7638, 0.995
      %v7645 = vmin.f32 %v7639, 0.995
      %v7646 = vmin.f32 %v7640, 0.995
      %v7647 = vmin.f32 %v7641, 0.995
      %v7648 = vmin.f32 %v7642, 0.995
      %v7649 = vsub.f32 0.0, %v7643
      %v7650 = vsub.f32 0.0, %v7644
      %v7651 = vsub.f32 0.0, %v7645
      %v7652 = vsub.f32 0.0, %v7646
      %v7653 = vsub.f32 0.0, %v7647
      %v7654 = vsub.f32 0.0, %v7648
      %v7655 = vsub.f32 %v7643, 1.0
      %v7656 = vsub.f32 %v7644, 1.0
      %v7657 = vsub.f32 %v7645, 1.0
      %v7658 = vsub.f32 %v7646, 1.0
      %v7659 = vsub.f32 %v7647, 1.0
      %v7660 = vsub.f32 %v7648, 1.0
      %v7661 = vrcp.pop %v7655
      %v7662 = vmul.f32 %v7655, %v7661
      %v7663 = vsub.f32 1.0, %v7662
      %v7664 = vmul.f32 %v7661, %v7663
      %v7665 = vadd.f32 %v7661, %v7664
      %vm7666 = vweird.f32 %v7655
      %vm7667 = vweird.f32 %v7661
      %vm7668 = vmor %vm7666, %vm7667
      %v7669 = vsel %vm7668, %v7661, %v7665
      %v7670 = vand.u32 2147483647, %v7655
      %vm7671 = vcmp.eq.f32.partialorder %v7670, 8.507059e+37
      %v7672 = vand.u32 %v7655, 2147483648
      %v7673 = vor.u32 1.1754944e-38, %v7672
      %v7674 = vsel %vm7671, %v7673, %v7669
      %v7675 = vmul.f32 %v7649, %v7674
      %v7676 = vrcp.pop %v7656
      %v7677 = vmul.f32 %v7656, %v7676
      %v7678 = vsub.f32 1.0, %v7677
      %v7679 = vmul.f32 %v7676, %v7678
      %v7680 = vadd.f32 %v7676, %v7679
      %vm7681 = vweird.f32 %v7656
      %vm7682 = vweird.f32 %v7676
      %vm7683 = vmor %vm7681, %vm7682
      %v7684 = vsel %vm7683, %v7676, %v7680
      %v7685 = vand.u32 2147483647, %v7656
      %vm7686 = vcmp.eq.f32.partialorder %v7685, 8.507059e+37
      %v7687 = vand.u32 %v7656, 2147483648
      %v7688 = vor.u32 1.1754944e-38, %v7687
      %v7689 = vsel %vm7686, %v7688, %v7684
      %v7690 = vmul.f32 %v7650, %v7689
      %v7691 = vrcp.pop %v7657
      %v7692 = vmul.f32 %v7657, %v7691
      %v7693 = vsub.f32 1.0, %v7692
      %v7694 = vmul.f32 %v7691, %v7693
      %v7695 = vadd.f32 %v7691, %v7694
      %vm7696 = vweird.f32 %v7657
      %vm7697 = vweird.f32 %v7691
      %vm7698 = vmor %vm7696, %vm7697
      %v7699 = vsel %vm7698, %v7691, %v7695
      %v7700 = vand.u32 2147483647, %v7657
      %vm7701 = vcmp.eq.f32.partialorder %v7700, 8.507059e+37
      %v7702 = vand.u32 %v7657, 2147483648
      %v7703 = vor.u32 1.1754944e-38, %v7702
      %v7704 = vsel %vm7701, %v7703, %v7699
      %v7705 = vmul.f32 %v7651, %v7704
      %v7706 = vrcp.pop %v7658
      %v7707 = vmul.f32 %v7658, %v7706
      %v7708 = vsub.f32 1.0, %v7707
      %v7709 = vmul.f32 %v7706, %v7708
      %v7710 = vadd.f32 %v7706, %v7709
      %vm7711 = vweird.f32 %v7658
      %vm7712 = vweird.f32 %v7706
      %vm7713 = vmor %vm7711, %vm7712
      %v7714 = vsel %vm7713, %v7706, %v7710
      %v7715 = vand.u32 2147483647, %v7658
      %vm7716 = vcmp.eq.f32.partialorder %v7715, 8.507059e+37
      %v7717 = vand.u32 %v7658, 2147483648
      %v7718 = vor.u32 1.1754944e-38, %v7717
      %v7719 = vsel %vm7716, %v7718, %v7714
      %v7720 = vmul.f32 %v7652, %v7719
      %v7721 = vrcp.pop %v7659
      %v7722 = vmul.f32 %v7659, %v7721
      %v7723 = vsub.f32 1.0, %v7722
      %v7724 = vmul.f32 %v7721, %v7723
      %v7725 = vadd.f32 %v7721, %v7724
      %vm7726 = vweird.f32 %v7659
      %vm7727 = vweird.f32 %v7721
      %vm7728 = vmor %vm7726, %vm7727
      %v7729 = vsel %vm7728, %v7721, %v7725
      %v7730 = vand.u32 2147483647, %v7659
      %vm7731 = vcmp.eq.f32.partialorder %v7730, 8.507059e+37
      %v7732 = vand.u32 %v7659, 2147483648
      %v7733 = vor.u32 1.1754944e-38, %v7732
      %v7734 = vsel %vm7731, %v7733, %v7729
      %v7735 = vmul.f32 %v7653, %v7734
      %v7736 = vrcp.pop %v7660
      %v7737 = vmul.f32 %v7660, %v7736
      %v7738 = vsub.f32 1.0, %v7737
      %v7739 = vmul.f32 %v7736, %v7738
      %v7740 = vadd.f32 %v7736, %v7739
      %vm7741 = vweird.f32 %v7660
      %vm7742 = vweird.f32 %v7736
      %vm7743 = vmor %vm7741, %vm7742
      %v7744 = vsel %vm7743, %v7736, %v7740
      %v7745 = vand.u32 2147483647, %v7660
      %vm7746 = vcmp.eq.f32.partialorder %v7745, 8.507059e+37
      %v7747 = vand.u32 %v7660, 2147483648
      %v7748 = vor.u32 1.1754944e-38, %v7747
      %v7749 = vsel %vm7746, %v7748, %v7744
      %v7750 = vmul.f32 %v7654, %v7749
      %v7751 = vsub.f32 0.0, %v7591
      %v7752 = vsub.f32 0.0, %v7593
      %v7753 = vsub.f32 0.0, %v7595
      %v7754 = vsub.f32 0.0, %v7597
      %v7755 = vsub.f32 0.0, %v7599
      %v7756 = vsub.f32 0.0, %v7601
      %v7757 = vmul.f32 %v7751, 1.442695
      %v7758 = vpow.pop %v7757
      %v7759 = vmul.f32 %v7752, 1.442695
      %v7760 = vpow.pop %v7759
      %v7761 = vmul.f32 %v7753, 1.442695
      %v7762 = vpow.pop %v7761
      %v7763 = vmul.f32 %v7754, 1.442695
      %v7764 = vpow.pop %v7763
      %v7765 = vmul.f32 %v7755, 1.442695
      %v7766 = vpow.pop %v7765
      %v7767 = vmul.f32 %v7756, 1.442695
      %v7768 = vpow.pop %v7767
      %v7769 = vadd.f32 %v7675, %v7758
      %v7770 = vadd.f32 %v7690, %v7760
      %v7771 = vadd.f32 %v7705, %v7762
      %v7772 = vadd.f32 %v7720, %v7764
      %v7773 = vadd.f32 %v7735, %v7766
      %v7774 = vadd.f32 %v7750, %v7768
      %v7775 = vrcp.pop %v7769
      %v7776 = vmul.f32 %v7769, %v7775
      %v7777 = vsub.f32 1.0, %v7776
      %v7778 = vmul.f32 %v7775, %v7777
      %v7779 = vadd.f32 %v7775, %v7778
      %vm7780 = vweird.f32 %v7769
      %vm7781 = vweird.f32 %v7775
      %vm7782 = vmor %vm7780, %vm7781
      %v7783 = vsel %vm7782, %v7775, %v7779
      %v7784 = vand.u32 2147483647, %v7769
      %vm7785 = vcmp.eq.f32.partialorder %v7784, 8.507059e+37
      %v7786 = vand.u32 %v7769, 2147483648
      %v7787 = vor.u32 1.1754944e-38, %v7786
      %v7788 = vsel %vm7785, %v7787, %v7783
      %v7789 = vmul.f32 %v7675, %v7788
      %v7790 = vrcp.pop %v7770
      %v7791 = vmul.f32 %v7770, %v7790
      %v7792 = vsub.f32 1.0, %v7791
      %v7793 = vmul.f32 %v7790, %v7792
      %v7794 = vadd.f32 %v7790, %v7793
      %vm7795 = vweird.f32 %v7770
      %vm7796 = vweird.f32 %v7790
      %vm7797 = vmor %vm7795, %vm7796
      %v7798 = vsel %vm7797, %v7790, %v7794
      %v7799 = vand.u32 2147483647, %v7770
      %vm7800 = vcmp.eq.f32.partialorder %v7799, 8.507059e+37
      %v7801 = vand.u32 %v7770, 2147483648
      %v7802 = vor.u32 1.1754944e-38, %v7801
      %v7803 = vsel %vm7800, %v7802, %v7798
      %v7804 = vmul.f32 %v7690, %v7803
      %v7805 = vrcp.pop %v7771
      %v7806 = vmul.f32 %v7771, %v7805
      %v7807 = vsub.f32 1.0, %v7806
      %v7808 = vmul.f32 %v7805, %v7807
      %v7809 = vadd.f32 %v7805, %v7808
      %vm7810 = vweird.f32 %v7771
      %vm7811 = vweird.f32 %v7805
      %vm7812 = vmor %vm7810, %vm7811
      %v7813 = vsel %vm7812, %v7805, %v7809
      %v7814 = vand.u32 2147483647, %v7771
      %vm7815 = vcmp.eq.f32.partialorder %v7814, 8.507059e+37
      %v7816 = vand.u32 %v7771, 2147483648
      %v7817 = vor.u32 1.1754944e-38, %v7816
      %v7818 = vsel %vm7815, %v7817, %v7813
      %v7819 = vmul.f32 %v7705, %v7818
      %v7820 = vrcp.pop %v7772
      %v7821 = vmul.f32 %v7772, %v7820
      %v7822 = vsub.f32 1.0, %v7821
      %v7823 = vmul.f32 %v7820, %v7822
      %v7824 = vadd.f32 %v7820, %v7823
      %vm7825 = vweird.f32 %v7772
      %vm7826 = vweird.f32 %v7820
      %vm7827 = vmor %vm7825, %vm7826
      %v7828 = vsel %vm7827, %v7820, %v7824
      %v7829 = vand.u32 2147483647, %v7772
      %vm7830 = vcmp.eq.f32.partialorder %v7829, 8.507059e+37
      %v7831 = vand.u32 %v7772, 2147483648
      %v7832 = vor.u32 1.1754944e-38, %v7831
      %v7833 = vsel %vm7830, %v7832, %v7828
      %v7834 = vmul.f32 %v7720, %v7833
      %v7835 = vrcp.pop %v7773
      %v7836 = vmul.f32 %v7773, %v7835
      %v7837 = vsub.f32 1.0, %v7836
      %v7838 = vmul.f32 %v7835, %v7837
      %v7839 = vadd.f32 %v7835, %v7838
      %vm7840 = vweird.f32 %v7773
      %vm7841 = vweird.f32 %v7835
      %vm7842 = vmor %vm7840, %vm7841
      %v7843 = vsel %vm7842, %v7835, %v7839
      %v7844 = vand.u32 2147483647, %v7773
      %vm7845 = vcmp.eq.f32.partialorder %v7844, 8.507059e+37
      %v7846 = vand.u32 %v7773, 2147483648
      %v7847 = vor.u32 1.1754944e-38, %v7846
      %v7848 = vsel %vm7845, %v7847, %v7843
      %v7849 = vmul.f32 %v7735, %v7848
      %v7850 = vrcp.pop %v7774
      %v7851 = vmul.f32 %v7774, %v7850
      %v7852 = vsub.f32 1.0, %v7851
      %v7853 = vmul.f32 %v7850, %v7852
      %v7854 = vadd.f32 %v7850, %v7853
      %vm7855 = vweird.f32 %v7774
      %vm7856 = vweird.f32 %v7850
      %vm7857 = vmor %vm7855, %vm7856
      %v7858 = vsel %vm7857, %v7850, %v7854
      %v7859 = vand.u32 2147483647, %v7774
      %vm7860 = vcmp.eq.f32.partialorder %v7859, 8.507059e+37
      %v7861 = vand.u32 %v7774, 2147483648
      %v7862 = vor.u32 1.1754944e-38, %v7861
      %v7863 = vsel %vm7860, %v7862, %v7858
      %v7864 = vmul.f32 %v7750, %v7863
      %vm7865 = vcmask 7168
      %7866 = vst.msk [vmem:[%s548] sm:$0xff] %vm7865, %v7789
      %7867 = vst.msk [vmem:[%s548 + $0x8] sm:$0xff] %vm7865, %v7804
      %7868 = vst.msk [vmem:[%s548 + $0x10] sm:$0xff] %vm7865, %v7819
      %7869 = vst.msk [vmem:[%s548 + $0x18] sm:$0xff] %vm7865, %v7834
      %7870 = vst.msk [vmem:[%s548 + $0x20] sm:$0xff] %vm7865, %v7849
      %7871 = vst.msk [vmem:[%s548 + $0x28] sm:$0xff] %vm7865, %v7864
      %p7872 = scmp.lt.s32.totalorder %s26, 1
      %s7873 = scalar_select %p7872, %s26, 1
      %s7874 = smul.addr %s7873, 6
      %s7875 = smul.addr %s7874, 8
      %s7876 = scalar_lea.vmem %s15, %s7875
      // Predicated region
      $region81: #{transformer_forward.1} parent=79 // pred_check
        %p7877 = pneg %p379
      $region82: #{transformer_forward.1} parent=79 // pred_check_branch
        %7879 = sbr.rel (%p7877) target = $region84
      $region83: #{transformer_forward.1} parent=79 // pred_region
        _
      $region84: #{transformer_forward.1} parent=79 // pred_fallthru
        _
    $region80: #{transformer_forward.1} parent=5 // pred_fallthru
      _
    %p7880 = scmp.le.s32.totalorder 2, %s21
    // Predicated region
    $region85: #{transformer_forward.1} parent=5 // pred_check
      %p7881 = pneg %p7880
    $region86: #{transformer_forward.1} parent=5 // pred_check_branch
      %7883 = sbr.rel (%p7881) target = $region88
    $region87: #{transformer_forward.1} parent=5 // pred_region
      %s7884 = ssub.s32 %s21, 2
      // Predicated region
      $region89: #{transformer_forward.1} parent=87 // pred_check
        %p7885 = pneg %p385
      $region90: #{transformer_forward.1} parent=87 // pred_check_branch
        %7887 = sbr.rel (%p7885) target = $region92
      $region91: #{transformer_forward.1} parent=87 // pred_region
        %p7888 = scmp.lt.s32.totalorder %s27, 1
        %s7889 = scalar_select %p7888, %s27, 1
        %s7890 = smul.addr %s7889, 6
        %s7891 = smul.addr %s7890, 8
        %s7892 = scalar_lea.vmem %s15, %s7891
      $region92: #{transformer_forward.1} parent=87 // pred_fallthru
        _
    $region88: #{transformer_forward.1} parent=5 // pred_fallthru
      _
  $region6: #{transformer_forward.1} parent=0 // loop_footer
    %s25 = sadd.s32 1, %s21
  $region7: #{transformer_forward.1} parent=0 // loop_footer_branch
    %20 = sbr.rel target = $region3
  $region8: #{transformer_forward.1} parent=0 // loop_exit
    _

</llo_original>
